<compile_context>
chip_gen: v7x
topology: tpu7x:2x2x1
jax: 0.10.0
libtpu: 0.0.40
codegen_flags: <defaults>
</compile_context>

<pallas_src>
import functools

import numpy as np
import jax
import jax.numpy as jnp
from jax.experimental import pallas as pl
from jax.experimental.pallas import tpu as pltpu

_VMEM_LIMIT = 32 * 1024 * 1024  # per-image working set is <3 MiB; plenty of headroom


# ----------------------------------------------------------------------------
# Host-side constants: 0/1 tap-gather matrices for a 3x3, pad=1 conv.
#   G[t, ro, ri] = 1  iff tap t of output position ro reads input position ri
#   (out-of-bounds taps have all-zero rows => zero padding is built in).
# ----------------------------------------------------------------------------

def _gather_mats(H, W, stride):
    Ho, Wo = H // stride, W // stride
    G = np.zeros((9, Ho * Wo, H * W), np.float32)
    for dy in range(3):
        for dx in range(3):
            t = 3 * dy + dx
            for i in range(Ho):
                yi = i * stride + dy - 1
                if not (0 <= yi < H):
                    continue
                for j in range(Wo):
                    xi = j * stride + dx - 1
                    if 0 <= xi < W:
                        G[t, i * Wo + j, yi * W + xi] = 1.0
    return jnp.asarray(G, jnp.bfloat16)  # 0/1 values are exact in bf16


# ----------------------------------------------------------------------------
# In-kernel building blocks (operate on (HW, C) activations as jnp values)
# ----------------------------------------------------------------------------

def _dws(a, q):
    """Depthwise 3x3 (+BN+ReLU6) -> pointwise 1x1 (+BN+ReLU6). a: (HinWin, Cin) bf16."""
    Gr = q["G"]                        # ref: (9, HoWo, HinWin) bf16
    dw = q["dw"][...]                  # (9, Cin) f32
    sb1 = q["sb1"][...]                # (2, Cin) f32  (scale row 0, bias row 1)
    sb2 = q["sb2"][...]                # (2, Cout) f32
    pw = q["pw"][...]                  # (Cin, Cout) bf16

    parts = []                         # tree-add: 3 independent partial sums
    for dy in range(3):
        acc = None
        for dx in range(3):
            t = 3 * dy + dx
            tap = jnp.dot(Gr[t], a, preferred_element_type=jnp.float32)  # (HoWo, Cin)
            term = tap * dw[t:t + 1, :]
            acc = term if acc is None else acc + term
        parts.append(acc)
    h = parts[0] + parts[1] + parts[2]
    h = jnp.clip(h * sb1[0:1, :] + sb1[1:2, :], 0.0, 6.0).astype(jnp.bfloat16)
    y = jnp.dot(h, pw, preferred_element_type=jnp.float32)               # (HoWo, Cout)
    y = jnp.clip(y * sb2[0:1, :] + sb2[1:2, :], 0.0, 6.0)
    return y.astype(jnp.bfloat16)


def _stam(a, q):
    """STAM block: spatial attention then channel attention. a: (HW, C) bf16."""
    C = a.shape[1]
    xf = a.astype(jnp.float32)
    w_sp = q["w_sp"][...]                                                 # (1, C) f32
    att = jax.nn.sigmoid(jnp.sum(xf * w_sp, axis=-1, keepdims=True) + q["b_sp"][...])
    xs = xf * att                                                         # (HW, C)
    avg = jnp.mean(xs, axis=0, keepdims=True)                             # (1, C)
    mx = jnp.max(xs, axis=0, keepdims=True)                               # (1, C)
    row = jax.lax.broadcasted_iota(jnp.int32, (2, C), 0)
    pooled = jnp.where(row == 0, avg, mx).astype(jnp.bfloat16)            # (2, C) [avg; max]
    h = jnp.maximum(jnp.dot(pooled, q["w1"][...],
                            preferred_element_type=jnp.float32), 0.0)     # shared MLP, once
    z = jnp.dot(h.astype(jnp.bfloat16), q["w2"][...],
                preferred_element_type=jnp.float32)                       # (2, C)
    ca = jax.nn.sigmoid(z[0:1, :] + z[1:2, :])                            # (1, C)
    return (xs * ca).astype(jnp.bfloat16)


def _lightcnn_kernel(x_ref, *rest, treedef, n_leaves):
    p = jax.tree_util.tree_unflatten(treedef, rest[:n_leaves])
    o_ref = rest[n_leaves]

    # conv1: im2col'ed input (HW, 27) -> one MXU matmul + BN + ReLU6
    x = x_ref[...]                                                        # (256, 27) bf16
    sb = p["conv1"]["sb"][...]
    a = jnp.dot(x, p["conv1"]["w"][...], preferred_element_type=jnp.float32)
    a = jnp.clip(a * sb[0:1, :] + sb[1:2, :], 0.0, 6.0).astype(jnp.bfloat16)   # (256, 32)

    a = _dws(a, p["b1a"])            # (64, 64)
    a = _dws(a, p["b1b"])            # (64, 64)
    a = _stam(a, p["stam1"])
    a = _dws(a, p["b2a"])            # (16, 128)
    a = _dws(a, p["b2b"])            # (16, 128)
    a = _stam(a, p["stam2"])
    a = _dws(a, p["b3a"])            # (4, 256)
    a = _dws(a, p["b3b"])            # (4, 256)
    a = _stam(a, p["stam3"])
    a = _stam(a, p["final_stam"])

    # head: global average pool over spatial + Linear (Dropout = identity, eval)
    m = jnp.mean(a.astype(jnp.float32), axis=0, keepdims=True)            # (1, 256)
    logits = jnp.dot(m.astype(jnp.bfloat16), p["fc"]["w"][...],
                     preferred_element_type=jnp.float32) + p["fc"]["b"][...]
    o_ref[...] = logits                                                   # (1, num_classes)


# ----------------------------------------------------------------------------
# Parameters (BN folded into eval-mode scale/bias; random init, self-consistent)
# ----------------------------------------------------------------------------

def _conv_w(key, shape, fan_in, dtype):
    w = jax.random.normal(key, shape, jnp.float32) * jnp.sqrt(2.0 / fan_in)
    return w.astype(dtype)


def _bn_fold(key, c, eps=1e-5):
    k1, k2, k3, k4 = jax.random.split(key, 4)
    gamma = 1.0 + 0.1 * jax.random.normal(k1, (c,), jnp.float32)
    beta = 0.1 * jax.random.normal(k2, (c,), jnp.float32)
    mean = 0.1 * jax.random.normal(k3, (c,), jnp.float32)
    var = 1.0 + 0.1 * jnp.abs(jax.random.normal(k4, (c,), jnp.float32))
    scale = gamma / jnp.sqrt(var + eps)
    bias = beta - mean * scale
    return jnp.stack([scale, bias], axis=0)                               # (2, c) f32


def _dws_params(key, cin, cout, H, W, stride):
    # NOTE: importing PyTorch weights requires: depthwise (Cin,1,3,3) -> (9, Cin)
    # with row t = 3*dy+dx, and pointwise (Cout,Cin,1,1) -> (Cin, Cout) transpose.
    k = jax.random.split(key, 4)
    return {"G": _gather_mats(H, W, stride),
            "dw": _conv_w(k[0], (9, cin), 9, jnp.float32),
            "sb1": _bn_fold(k[1], cin),
            "pw": _conv_w(k[2], (cin, cout), cin, jnp.bfloat16),
            "sb2": _bn_fold(k[3], cout)}


def _stam_params(key, c, reduction=8):
    k = jax.random.split(key, 4)
    cr = c // reduction
    return {"w_sp": _conv_w(k[0], (1, c), c, jnp.float32),
            "b_sp": 0.1 * jax.random.normal(k[1], (1, 1), jnp.float32),
            "w1": _conv_w(k[2], (c, cr), c, jnp.bfloat16),
            "w2": _conv_w(k[3], (cr, c), cr, jnp.bfloat16)}


def init_params(key, base=32, num_classes=10, H=16, W=16):
    keys = jax.random.split(key, 14)
    p = {}
    # conv1 weight rows ordered (3*dy+dx)*Cin + ci, matching the wrapper im2col.
    p["conv1"] = {"w": _conv_w(keys[0], (27, base), 27, jnp.bfloat16),
                  "sb": _bn_fold(keys[1], base)}
    p["b1a"] = _dws_params(keys[2], base, base * 2, H, W, 2)
    p["b1b"] = _dws_params(keys[3], base * 2, base * 2, H // 2, W // 2, 1)
    p["stam1"] = _stam_params(keys[4], base * 2)
    p["b2a"] = _dws_params(keys[5], base * 2, base * 4, H // 2, W // 2, 2)
    p["b2b"] = _dws_params(keys[6], base * 4, base * 4, H // 4, W // 4, 1)
    p["stam2"] = _stam_params(keys[7], base * 4)
    p["b3a"] = _dws_params(keys[8], base * 4, base * 8, H // 4, W // 4, 2)
    p["b3b"] = _dws_params(keys[9], base * 8, base * 8, H // 8, W // 8, 1)
    p["stam3"] = _stam_params(keys[10], base * 8)
    p["final_stam"] = _stam_params(keys[11], base * 8)
    p["fc"] = {"w": _conv_w(keys[12], (base * 8, num_classes), base * 8, jnp.bfloat16),
               "b": 0.1 * jax.random.normal(keys[13], (1, num_classes), jnp.float32)}
    return p


# ----------------------------------------------------------------------------
# Wrapper: tiny input-side im2col (one XLA fusion on ~3 KB) + single pallas_call
# ----------------------------------------------------------------------------

def lightcnn_stam_forward(params, x_nchw):
    N, Cin, H, W = x_nchw.shape
    assert H % 8 == 0 and W % 8 == 0, "spatial dims must survive three stride-2 stages"
    ncls = params["fc"]["w"].shape[1]

    # NCHW -> NHWC -> zero-pad -> 9-tap im2col of the network INPUT only.
    x_nhwc = jnp.transpose(x_nchw, (0, 2, 3, 1))
    xp = jnp.pad(x_nhwc, ((0, 0), (1, 1), (1, 1), (0, 0)))
    cols = [xp[:, dy:dy + H, dx:dx + W, :] for dy in range(3) for dx in range(3)]
    x_col = jnp.concatenate(cols, axis=-1).reshape(N, H * W, 9 * Cin).astype(jnp.bfloat16)

    leaves, treedef = jax.tree_util.tree_flatten(params)
    x_spec = pl.BlockSpec((None, H * W, 9 * Cin), lambda n: (n, 0, 0))
    w_specs = [pl.BlockSpec(l.shape, (lambda n, _r=l.ndim: (0,) * _r)) for l in leaves]

    out = pl.pallas_call(
        functools.partial(_lightcnn_kernel, treedef=treedef, n_leaves=len(leaves)),
        out_shape=jax.ShapeDtypeStruct((N, 1, ncls), jnp.float32),
        grid=(N,),
        in_specs=[x_spec] + w_specs,
        out_specs=pl.BlockSpec((None, 1, ncls), lambda n: (n, 0, 0)),
        compiler_params=pltpu.CompilerParams(
            dimension_semantics=("parallel",),
            vmem_limit_bytes=_VMEM_LIMIT),
    )(x_col, *leaves)
    return out.reshape(N, ncls)


if __name__ == "__main__":
    key = jax.random.PRNGKey(0)
    pkey, xkey = jax.random.split(key)
    params = init_params(pkey, base=32, num_classes=10, H=16, W=16)
    x = jax.random.normal(xkey, (2, 3, 16, 16), jnp.float32)   # NCHW, like PyTorch
    fwd = jax.jit(lightcnn_stam_forward)
    out = jax.block_until_ready(fwd(params, x))
    assert out.shape == (2, 10), out.shape
    assert bool(jnp.all(jnp.isfinite(out)))
    print("KERNEL_OK")
</pallas_src>

<mosaic_0001>
module attributes {stable_mosaic.version = 11 : i64} {
  func.func @_lightcnn_kernel(%arg0: i32, %arg1: memref<1x256x27xbf16, #tpu.memory_space<vmem>>, %arg2: memref<9x64x256xbf16, #tpu.memory_space<vmem>>, %arg3: memref<9x32xf32, #tpu.memory_space<vmem>>, %arg4: memref<32x64xbf16, #tpu.memory_space<vmem>>, %arg5: memref<2x32xf32, #tpu.memory_space<vmem>>, %arg6: memref<2x64xf32, #tpu.memory_space<vmem>>, %arg7: memref<9x64x64xbf16, #tpu.memory_space<vmem>>, %arg8: memref<9x64xf32, #tpu.memory_space<vmem>>, %arg9: memref<64x64xbf16, #tpu.memory_space<vmem>>, %arg10: memref<2x64xf32, #tpu.memory_space<vmem>>, %arg11: memref<2x64xf32, #tpu.memory_space<vmem>>, %arg12: memref<9x16x64xbf16, #tpu.memory_space<vmem>>, %arg13: memref<9x64xf32, #tpu.memory_space<vmem>>, %arg14: memref<64x128xbf16, #tpu.memory_space<vmem>>, %arg15: memref<2x64xf32, #tpu.memory_space<vmem>>, %arg16: memref<2x128xf32, #tpu.memory_space<vmem>>, %arg17: memref<9x16x16xbf16, #tpu.memory_space<vmem>>, %arg18: memref<9x128xf32, #tpu.memory_space<vmem>>, %arg19: memref<128x128xbf16, #tpu.memory_space<vmem>>, %arg20: memref<2x128xf32, #tpu.memory_space<vmem>>, %arg21: memref<2x128xf32, #tpu.memory_space<vmem>>, %arg22: memref<9x4x16xbf16, #tpu.memory_space<vmem>>, %arg23: memref<9x128xf32, #tpu.memory_space<vmem>>, %arg24: memref<128x256xbf16, #tpu.memory_space<vmem>>, %arg25: memref<2x128xf32, #tpu.memory_space<vmem>>, %arg26: memref<2x256xf32, #tpu.memory_space<vmem>>, %arg27: memref<9x4x4xbf16, #tpu.memory_space<vmem>>, %arg28: memref<9x256xf32, #tpu.memory_space<vmem>>, %arg29: memref<256x256xbf16, #tpu.memory_space<vmem>>, %arg30: memref<2x256xf32, #tpu.memory_space<vmem>>, %arg31: memref<2x256xf32, #tpu.memory_space<vmem>>, %arg32: memref<2x32xf32, #tpu.memory_space<vmem>>, %arg33: memref<27x32xbf16, #tpu.memory_space<vmem>>, %arg34: memref<1x10xf32, #tpu.memory_space<vmem>>, %arg35: memref<256x10xbf16, #tpu.memory_space<vmem>>, %arg36: memref<1x1xf32, #tpu.memory_space<vmem>>, %arg37: memref<256x32xbf16, #tpu.memory_space<vmem>>, %arg38: memref<32x256xbf16, #tpu.memory_space<vmem>>, %arg39: memref<1x256xf32, #tpu.memory_space<vmem>>, %arg40: memref<1x1xf32, #tpu.memory_space<vmem>>, %arg41: memref<64x8xbf16, #tpu.memory_space<vmem>>, %arg42: memref<8x64xbf16, #tpu.memory_space<vmem>>, %arg43: memref<1x64xf32, #tpu.memory_space<vmem>>, %arg44: memref<1x1xf32, #tpu.memory_space<vmem>>, %arg45: memref<128x16xbf16, #tpu.memory_space<vmem>>, %arg46: memref<16x128xbf16, #tpu.memory_space<vmem>>, %arg47: memref<1x128xf32, #tpu.memory_space<vmem>>, %arg48: memref<1x1xf32, #tpu.memory_space<vmem>>, %arg49: memref<256x32xbf16, #tpu.memory_space<vmem>>, %arg50: memref<32x256xbf16, #tpu.memory_space<vmem>>, %arg51: memref<1x256xf32, #tpu.memory_space<vmem>>, %arg52: memref<1x1x10xf32, #tpu.memory_space<vmem>>) attributes {dimension_semantics = [#tpu.dimension_semantics<parallel>], iteration_bounds = array<i64: 2>, scalar_prefetch = 0 : i64, scratch_operands = 0 : i64, tpu.core_type = #tpu.core_type<tc>, window_params = [{transform_indices = @transform_0, window_bounds = array<i64: 1, 256, 27>}, {pipeline_mode = #tpu.pipeline_mode<synchronous>, transform_indices = @transform_1, window_bounds = array<i64: 9, 64, 256>}, {pipeline_mode = #tpu.pipeline_mode<synchronous>, transform_indices = @transform_2, window_bounds = array<i64: 9, 32>}, {pipeline_mode = #tpu.pipeline_mode<synchronous>, transform_indices = @transform_3, window_bounds = array<i64: 32, 64>}, {pipeline_mode = #tpu.pipeline_mode<synchronous>, transform_indices = @transform_4, window_bounds = array<i64: 2, 32>}, {pipeline_mode = #tpu.pipeline_mode<synchronous>, transform_indices = @transform_5, window_bounds = array<i64: 2, 64>}, {pipeline_mode = #tpu.pipeline_mode<synchronous>, transform_indices = @transform_6, window_bounds = array<i64: 9, 64, 64>}, {pipeline_mode = #tpu.pipeline_mode<synchronous>, transform_indices = @transform_7, window_bounds = array<i64: 9, 64>}, {pipeline_mode = #tpu.pipeline_mode<synchronous>, transform_indices = @transform_8, window_bounds = array<i64: 64, 64>}, {pipeline_mode = #tpu.pipeline_mode<synchronous>, transform_indices = @transform_9, window_bounds = array<i64: 2, 64>}, {pipeline_mode = #tpu.pipeline_mode<synchronous>, transform_indices = @transform_10, window_bounds = array<i64: 2, 64>}, {pipeline_mode = #tpu.pipeline_mode<synchronous>, transform_indices = @transform_11, window_bounds = array<i64: 9, 16, 64>}, {pipeline_mode = #tpu.pipeline_mode<synchronous>, transform_indices = @transform_12, window_bounds = array<i64: 9, 64>}, {pipeline_mode = #tpu.pipeline_mode<synchronous>, transform_indices = @transform_13, window_bounds = array<i64: 64, 128>}, {pipeline_mode = #tpu.pipeline_mode<synchronous>, transform_indices = @transform_14, window_bounds = array<i64: 2, 64>}, {pipeline_mode = #tpu.pipeline_mode<synchronous>, transform_indices = @transform_15, window_bounds = array<i64: 2, 128>}, {pipeline_mode = #tpu.pipeline_mode<synchronous>, transform_indices = @transform_16, window_bounds = array<i64: 9, 16, 16>}, {pipeline_mode = #tpu.pipeline_mode<synchronous>, transform_indices = @transform_17, window_bounds = array<i64: 9, 128>}, {pipeline_mode = #tpu.pipeline_mode<synchronous>, transform_indices = @transform_18, window_bounds = array<i64: 128, 128>}, {pipeline_mode = #tpu.pipeline_mode<synchronous>, transform_indices = @transform_19, window_bounds = array<i64: 2, 128>}, {pipeline_mode = #tpu.pipeline_mode<synchronous>, transform_indices = @transform_20, window_bounds = array<i64: 2, 128>}, {pipeline_mode = #tpu.pipeline_mode<synchronous>, transform_indices = @transform_21, window_bounds = array<i64: 9, 4, 16>}, {pipeline_mode = #tpu.pipeline_mode<synchronous>, transform_indices = @transform_22, window_bounds = array<i64: 9, 128>}, {pipeline_mode = #tpu.pipeline_mode<synchronous>, transform_indices = @transform_23, window_bounds = array<i64: 128, 256>}, {pipeline_mode = #tpu.pipeline_mode<synchronous>, transform_indices = @transform_24, window_bounds = array<i64: 2, 128>}, {pipeline_mode = #tpu.pipeline_mode<synchronous>, transform_indices = @transform_25, window_bounds = array<i64: 2, 256>}, {pipeline_mode = #tpu.pipeline_mode<synchronous>, transform_indices = @transform_26, window_bounds = array<i64: 9, 4, 4>}, {pipeline_mode = #tpu.pipeline_mode<synchronous>, transform_indices = @transform_27, window_bounds = array<i64: 9, 256>}, {pipeline_mode = #tpu.pipeline_mode<synchronous>, transform_indices = @transform_28, window_bounds = array<i64: 256, 256>}, {pipeline_mode = #tpu.pipeline_mode<synchronous>, transform_indices = @transform_29, window_bounds = array<i64: 2, 256>}, {pipeline_mode = #tpu.pipeline_mode<synchronous>, transform_indices = @transform_30, window_bounds = array<i64: 2, 256>}, {pipeline_mode = #tpu.pipeline_mode<synchronous>, transform_indices = @transform_31, window_bounds = array<i64: 2, 32>}, {pipeline_mode = #tpu.pipeline_mode<synchronous>, transform_indices = @transform_32, window_bounds = array<i64: 27, 32>}, {pipeline_mode = #tpu.pipeline_mode<synchronous>, transform_indices = @transform_33, window_bounds = array<i64: 1, 10>}, {pipeline_mode = #tpu.pipeline_mode<synchronous>, transform_indices = @transform_34, window_bounds = array<i64: 256, 10>}, {pipeline_mode = #tpu.pipeline_mode<synchronous>, transform_indices = @transform_35, window_bounds = array<i64: 1, 1>}, {pipeline_mode = #tpu.pipeline_mode<synchronous>, transform_indices = @transform_36, window_bounds = array<i64: 256, 32>}, {pipeline_mode = #tpu.pipeline_mode<synchronous>, transform_indices = @transform_37, window_bounds = array<i64: 32, 256>}, {pipeline_mode = #tpu.pipeline_mode<synchronous>, transform_indices = @transform_38, window_bounds = array<i64: 1, 256>}, {pipeline_mode = #tpu.pipeline_mode<synchronous>, transform_indices = @transform_39, window_bounds = array<i64: 1, 1>}, {pipeline_mode = #tpu.pipeline_mode<synchronous>, transform_indices = @transform_40, window_bounds = array<i64: 64, 8>}, {pipeline_mode = #tpu.pipeline_mode<synchronous>, transform_indices = @transform_41, window_bounds = array<i64: 8, 64>}, {pipeline_mode = #tpu.pipeline_mode<synchronous>, transform_indices = @transform_42, window_bounds = array<i64: 1, 64>}, {pipeline_mode = #tpu.pipeline_mode<synchronous>, transform_indices = @transform_43, window_bounds = array<i64: 1, 1>}, {pipeline_mode = #tpu.pipeline_mode<synchronous>, transform_indices = @transform_44, window_bounds = array<i64: 128, 16>}, {pipeline_mode = #tpu.pipeline_mode<synchronous>, transform_indices = @transform_45, window_bounds = array<i64: 16, 128>}, {pipeline_mode = #tpu.pipeline_mode<synchronous>, transform_indices = @transform_46, window_bounds = array<i64: 1, 128>}, {pipeline_mode = #tpu.pipeline_mode<synchronous>, transform_indices = @transform_47, window_bounds = array<i64: 1, 1>}, {pipeline_mode = #tpu.pipeline_mode<synchronous>, transform_indices = @transform_48, window_bounds = array<i64: 256, 32>}, {pipeline_mode = #tpu.pipeline_mode<synchronous>, transform_indices = @transform_49, window_bounds = array<i64: 32, 256>}, {pipeline_mode = #tpu.pipeline_mode<synchronous>, transform_indices = @transform_50, window_bounds = array<i64: 1, 256>}, {transform_indices = @transform_51, window_bounds = array<i64: 1, 1, 10>}]} {
    %c0 = arith.constant 0 : index
    %c0_0 = arith.constant 0 : index
    %c0_1 = arith.constant 0 : index
    %0 = vector.load %arg1[%c0, %c0_0, %c0_1] : memref<1x256x27xbf16, #tpu.memory_space<vmem>>, vector<1x256x27xbf16>
    %1 = vector.shape_cast %0 : vector<1x256x27xbf16> to vector<256x27xbf16>
    %c0_2 = arith.constant 0 : index
    %c0_3 = arith.constant 0 : index
    %2 = vector.load %arg32[%c0_2, %c0_3] : memref<2x32xf32, #tpu.memory_space<vmem>>, vector<2x32xf32>
    %c0_4 = arith.constant 0 : index
    %c0_5 = arith.constant 0 : index
    %3 = vector.load %arg33[%c0_4, %c0_5] : memref<27x32xbf16, #tpu.memory_space<vmem>>, vector<27x32xbf16>
    %cst = arith.constant dense<0.000000e+00> : vector<256x32xf32>
    %4 = tpu.matmul %1, %3, %cst {dimension_numbers = #tpu.dot_dimension_numbers<[1], [0], [0], [1], [0, 0, 1, 1], [], []>} : vector<256x27xbf16>, vector<27x32xbf16>, vector<256x32xf32> -> vector<256x32xf32>
    %5 = vector.extract_strided_slice %2 {offsets = [0, 0], sizes = [1, 32], strides = [1, 1]} : vector<2x32xf32> to vector<1x32xf32>
    %6 = vector.broadcast %5 : vector<1x32xf32> to vector<256x32xf32>
    %7 = arith.mulf %4, %6 : vector<256x32xf32>
    %8 = vector.extract_strided_slice %2 {offsets = [1, 0], sizes = [1, 32], strides = [1, 1]} : vector<2x32xf32> to vector<1x32xf32>
    %9 = vector.broadcast %8 : vector<1x32xf32> to vector<256x32xf32>
    %10 = arith.addf %7, %9 : vector<256x32xf32>
    %cst_6 = arith.constant 0.000000e+00 : f32
    %cst_7 = arith.constant 6.000000e+00 : f32
    %11 = vector.broadcast %cst_6 : f32 to vector<256x32xf32>
    %12 = arith.maximumf %11, %10 : vector<256x32xf32>
    %13 = vector.broadcast %cst_7 : f32 to vector<256x32xf32>
    %14 = arith.minimumf %13, %12 : vector<256x32xf32>
    %15 = arith.truncf %14 : vector<256x32xf32> to vector<256x32xbf16>
    %c0_8 = arith.constant 0 : index
    %c0_9 = arith.constant 0 : index
    %16 = vector.load %arg3[%c0_8, %c0_9] : memref<9x32xf32, #tpu.memory_space<vmem>>, vector<9x32xf32>
    %c0_10 = arith.constant 0 : index
    %c0_11 = arith.constant 0 : index
    %17 = vector.load %arg5[%c0_10, %c0_11] : memref<2x32xf32, #tpu.memory_space<vmem>>, vector<2x32xf32>
    %c0_12 = arith.constant 0 : index
    %c0_13 = arith.constant 0 : index
    %18 = vector.load %arg6[%c0_12, %c0_13] : memref<2x64xf32, #tpu.memory_space<vmem>>, vector<2x64xf32>
    %c0_14 = arith.constant 0 : index
    %c0_15 = arith.constant 0 : index
    %19 = vector.load %arg4[%c0_14, %c0_15] : memref<32x64xbf16, #tpu.memory_space<vmem>>, vector<32x64xbf16>
    %c0_16 = arith.constant 0 : index
    %c0_17 = arith.constant 0 : index
    %c0_18 = arith.constant 0 : index
    %20 = vector.load %arg2[%c0_16, %c0_17, %c0_18] : memref<9x64x256xbf16, #tpu.memory_space<vmem>>, vector<1x64x256xbf16>
    %21 = vector.shape_cast %20 : vector<1x64x256xbf16> to vector<64x256xbf16>
    %cst_19 = arith.constant dense<0.000000e+00> : vector<64x32xf32>
    %22 = tpu.matmul %21, %15, %cst_19 {dimension_numbers = #tpu.dot_dimension_numbers<[1], [0], [0], [1], [0, 0, 1, 1], [], []>} : vector<64x256xbf16>, vector<256x32xbf16>, vector<64x32xf32> -> vector<64x32xf32>
    %23 = vector.extract_strided_slice %16 {offsets = [0, 0], sizes = [1, 32], strides = [1, 1]} : vector<9x32xf32> to vector<1x32xf32>
    %24 = vector.broadcast %23 : vector<1x32xf32> to vector<64x32xf32>
    %25 = arith.mulf %22, %24 : vector<64x32xf32>
    %c1 = arith.constant 1 : index
    %c0_20 = arith.constant 0 : index
    %c0_21 = arith.constant 0 : index
    %26 = vector.load %arg2[%c1, %c0_20, %c0_21] : memref<9x64x256xbf16, #tpu.memory_space<vmem>>, vector<1x64x256xbf16>
    %27 = vector.shape_cast %26 : vector<1x64x256xbf16> to vector<64x256xbf16>
    %cst_22 = arith.constant dense<0.000000e+00> : vector<64x32xf32>
    %28 = tpu.matmul %27, %15, %cst_22 {dimension_numbers = #tpu.dot_dimension_numbers<[1], [0], [0], [1], [0, 0, 1, 1], [], []>} : vector<64x256xbf16>, vector<256x32xbf16>, vector<64x32xf32> -> vector<64x32xf32>
    %29 = vector.extract_strided_slice %16 {offsets = [1, 0], sizes = [1, 32], strides = [1, 1]} : vector<9x32xf32> to vector<1x32xf32>
    %30 = vector.broadcast %29 : vector<1x32xf32> to vector<64x32xf32>
    %31 = arith.mulf %28, %30 : vector<64x32xf32>
    %32 = arith.addf %25, %31 : vector<64x32xf32>
    %c2 = arith.constant 2 : index
    %c0_23 = arith.constant 0 : index
    %c0_24 = arith.constant 0 : index
    %33 = vector.load %arg2[%c2, %c0_23, %c0_24] : memref<9x64x256xbf16, #tpu.memory_space<vmem>>, vector<1x64x256xbf16>
    %34 = vector.shape_cast %33 : vector<1x64x256xbf16> to vector<64x256xbf16>
    %cst_25 = arith.constant dense<0.000000e+00> : vector<64x32xf32>
    %35 = tpu.matmul %34, %15, %cst_25 {dimension_numbers = #tpu.dot_dimension_numbers<[1], [0], [0], [1], [0, 0, 1, 1], [], []>} : vector<64x256xbf16>, vector<256x32xbf16>, vector<64x32xf32> -> vector<64x32xf32>
    %36 = vector.extract_strided_slice %16 {offsets = [2, 0], sizes = [1, 32], strides = [1, 1]} : vector<9x32xf32> to vector<1x32xf32>
    %37 = vector.broadcast %36 : vector<1x32xf32> to vector<64x32xf32>
    %38 = arith.mulf %35, %37 : vector<64x32xf32>
    %39 = arith.addf %32, %38 : vector<64x32xf32>
    %c3 = arith.constant 3 : index
    %c0_26 = arith.constant 0 : index
    %c0_27 = arith.constant 0 : index
    %40 = vector.load %arg2[%c3, %c0_26, %c0_27] : memref<9x64x256xbf16, #tpu.memory_space<vmem>>, vector<1x64x256xbf16>
    %41 = vector.shape_cast %40 : vector<1x64x256xbf16> to vector<64x256xbf16>
    %cst_28 = arith.constant dense<0.000000e+00> : vector<64x32xf32>
    %42 = tpu.matmul %41, %15, %cst_28 {dimension_numbers = #tpu.dot_dimension_numbers<[1], [0], [0], [1], [0, 0, 1, 1], [], []>} : vector<64x256xbf16>, vector<256x32xbf16>, vector<64x32xf32> -> vector<64x32xf32>
    %43 = vector.extract_strided_slice %16 {offsets = [3, 0], sizes = [1, 32], strides = [1, 1]} : vector<9x32xf32> to vector<1x32xf32>
    %44 = vector.broadcast %43 : vector<1x32xf32> to vector<64x32xf32>
    %45 = arith.mulf %42, %44 : vector<64x32xf32>
    %c4 = arith.constant 4 : index
    %c0_29 = arith.constant 0 : index
    %c0_30 = arith.constant 0 : index
    %46 = vector.load %arg2[%c4, %c0_29, %c0_30] : memref<9x64x256xbf16, #tpu.memory_space<vmem>>, vector<1x64x256xbf16>
    %47 = vector.shape_cast %46 : vector<1x64x256xbf16> to vector<64x256xbf16>
    %cst_31 = arith.constant dense<0.000000e+00> : vector<64x32xf32>
    %48 = tpu.matmul %47, %15, %cst_31 {dimension_numbers = #tpu.dot_dimension_numbers<[1], [0], [0], [1], [0, 0, 1, 1], [], []>} : vector<64x256xbf16>, vector<256x32xbf16>, vector<64x32xf32> -> vector<64x32xf32>
    %49 = vector.extract_strided_slice %16 {offsets = [4, 0], sizes = [1, 32], strides = [1, 1]} : vector<9x32xf32> to vector<1x32xf32>
    %50 = vector.broadcast %49 : vector<1x32xf32> to vector<64x32xf32>
    %51 = arith.mulf %48, %50 : vector<64x32xf32>
    %52 = arith.addf %45, %51 : vector<64x32xf32>
    %c5 = arith.constant 5 : index
    %c0_32 = arith.constant 0 : index
    %c0_33 = arith.constant 0 : index
    %53 = vector.load %arg2[%c5, %c0_32, %c0_33] : memref<9x64x256xbf16, #tpu.memory_space<vmem>>, vector<1x64x256xbf16>
    %54 = vector.shape_cast %53 : vector<1x64x256xbf16> to vector<64x256xbf16>
    %cst_34 = arith.constant dense<0.000000e+00> : vector<64x32xf32>
    %55 = tpu.matmul %54, %15, %cst_34 {dimension_numbers = #tpu.dot_dimension_numbers<[1], [0], [0], [1], [0, 0, 1, 1], [], []>} : vector<64x256xbf16>, vector<256x32xbf16>, vector<64x32xf32> -> vector<64x32xf32>
    %56 = vector.extract_strided_slice %16 {offsets = [5, 0], sizes = [1, 32], strides = [1, 1]} : vector<9x32xf32> to vector<1x32xf32>
    %57 = vector.broadcast %56 : vector<1x32xf32> to vector<64x32xf32>
    %58 = arith.mulf %55, %57 : vector<64x32xf32>
    %59 = arith.addf %52, %58 : vector<64x32xf32>
    %c6 = arith.constant 6 : index
    %c0_35 = arith.constant 0 : index
    %c0_36 = arith.constant 0 : index
    %60 = vector.load %arg2[%c6, %c0_35, %c0_36] : memref<9x64x256xbf16, #tpu.memory_space<vmem>>, vector<1x64x256xbf16>
    %61 = vector.shape_cast %60 : vector<1x64x256xbf16> to vector<64x256xbf16>
    %cst_37 = arith.constant dense<0.000000e+00> : vector<64x32xf32>
    %62 = tpu.matmul %61, %15, %cst_37 {dimension_numbers = #tpu.dot_dimension_numbers<[1], [0], [0], [1], [0, 0, 1, 1], [], []>} : vector<64x256xbf16>, vector<256x32xbf16>, vector<64x32xf32> -> vector<64x32xf32>
    %63 = vector.extract_strided_slice %16 {offsets = [6, 0], sizes = [1, 32], strides = [1, 1]} : vector<9x32xf32> to vector<1x32xf32>
    %64 = vector.broadcast %63 : vector<1x32xf32> to vector<64x32xf32>
    %65 = arith.mulf %62, %64 : vector<64x32xf32>
    %c7 = arith.constant 7 : index
    %c0_38 = arith.constant 0 : index
    %c0_39 = arith.constant 0 : index
    %66 = vector.load %arg2[%c7, %c0_38, %c0_39] : memref<9x64x256xbf16, #tpu.memory_space<vmem>>, vector<1x64x256xbf16>
    %67 = vector.shape_cast %66 : vector<1x64x256xbf16> to vector<64x256xbf16>
    %cst_40 = arith.constant dense<0.000000e+00> : vector<64x32xf32>
    %68 = tpu.matmul %67, %15, %cst_40 {dimension_numbers = #tpu.dot_dimension_numbers<[1], [0], [0], [1], [0, 0, 1, 1], [], []>} : vector<64x256xbf16>, vector<256x32xbf16>, vector<64x32xf32> -> vector<64x32xf32>
    %69 = vector.extract_strided_slice %16 {offsets = [7, 0], sizes = [1, 32], strides = [1, 1]} : vector<9x32xf32> to vector<1x32xf32>
    %70 = vector.broadcast %69 : vector<1x32xf32> to vector<64x32xf32>
    %71 = arith.mulf %68, %70 : vector<64x32xf32>
    %72 = arith.addf %65, %71 : vector<64x32xf32>
    %c8 = arith.constant 8 : index
    %c0_41 = arith.constant 0 : index
    %c0_42 = arith.constant 0 : index
    %73 = vector.load %arg2[%c8, %c0_41, %c0_42] : memref<9x64x256xbf16, #tpu.memory_space<vmem>>, vector<1x64x256xbf16>
    %74 = vector.shape_cast %73 : vector<1x64x256xbf16> to vector<64x256xbf16>
    %cst_43 = arith.constant dense<0.000000e+00> : vector<64x32xf32>
    %75 = tpu.matmul %74, %15, %cst_43 {dimension_numbers = #tpu.dot_dimension_numbers<[1], [0], [0], [1], [0, 0, 1, 1], [], []>} : vector<64x256xbf16>, vector<256x32xbf16>, vector<64x32xf32> -> vector<64x32xf32>
    %76 = vector.extract_strided_slice %16 {offsets = [8, 0], sizes = [1, 32], strides = [1, 1]} : vector<9x32xf32> to vector<1x32xf32>
    %77 = vector.broadcast %76 : vector<1x32xf32> to vector<64x32xf32>
    %78 = arith.mulf %75, %77 : vector<64x32xf32>
    %79 = arith.addf %72, %78 : vector<64x32xf32>
    %80 = arith.addf %39, %59 : vector<64x32xf32>
    %81 = arith.addf %80, %79 : vector<64x32xf32>
    %82 = vector.extract_strided_slice %17 {offsets = [0, 0], sizes = [1, 32], strides = [1, 1]} : vector<2x32xf32> to vector<1x32xf32>
    %83 = vector.broadcast %82 : vector<1x32xf32> to vector<64x32xf32>
    %84 = arith.mulf %81, %83 : vector<64x32xf32>
    %85 = vector.extract_strided_slice %17 {offsets = [1, 0], sizes = [1, 32], strides = [1, 1]} : vector<2x32xf32> to vector<1x32xf32>
    %86 = vector.broadcast %85 : vector<1x32xf32> to vector<64x32xf32>
    %87 = arith.addf %84, %86 : vector<64x32xf32>
    %cst_44 = arith.constant 0.000000e+00 : f32
    %cst_45 = arith.constant 6.000000e+00 : f32
    %88 = vector.broadcast %cst_44 : f32 to vector<64x32xf32>
    %89 = arith.maximumf %88, %87 : vector<64x32xf32>
    %90 = vector.broadcast %cst_45 : f32 to vector<64x32xf32>
    %91 = arith.minimumf %90, %89 : vector<64x32xf32>
    %92 = arith.truncf %91 : vector<64x32xf32> to vector<64x32xbf16>
    %cst_46 = arith.constant dense<0.000000e+00> : vector<64x64xf32>
    %93 = tpu.matmul %92, %19, %cst_46 {dimension_numbers = #tpu.dot_dimension_numbers<[1], [0], [0], [1], [0, 0, 1, 1], [], []>} : vector<64x32xbf16>, vector<32x64xbf16>, vector<64x64xf32> -> vector<64x64xf32>
    %94 = vector.extract_strided_slice %18 {offsets = [0, 0], sizes = [1, 64], strides = [1, 1]} : vector<2x64xf32> to vector<1x64xf32>
    %95 = vector.broadcast %94 : vector<1x64xf32> to vector<64x64xf32>
    %96 = arith.mulf %93, %95 : vector<64x64xf32>
    %97 = vector.extract_strided_slice %18 {offsets = [1, 0], sizes = [1, 64], strides = [1, 1]} : vector<2x64xf32> to vector<1x64xf32>
    %98 = vector.broadcast %97 : vector<1x64xf32> to vector<64x64xf32>
    %99 = arith.addf %96, %98 : vector<64x64xf32>
    %cst_47 = arith.constant 0.000000e+00 : f32
    %cst_48 = arith.constant 6.000000e+00 : f32
    %100 = vector.broadcast %cst_47 : f32 to vector<64x64xf32>
    %101 = arith.maximumf %100, %99 : vector<64x64xf32>
    %102 = vector.broadcast %cst_48 : f32 to vector<64x64xf32>
    %103 = arith.minimumf %102, %101 : vector<64x64xf32>
    %104 = arith.truncf %103 : vector<64x64xf32> to vector<64x64xbf16>
    %c0_49 = arith.constant 0 : index
    %c0_50 = arith.constant 0 : index
    %105 = vector.load %arg8[%c0_49, %c0_50] : memref<9x64xf32, #tpu.memory_space<vmem>>, vector<9x64xf32>
    %c0_51 = arith.constant 0 : index
    %c0_52 = arith.constant 0 : index
    %106 = vector.load %arg10[%c0_51, %c0_52] : memref<2x64xf32, #tpu.memory_space<vmem>>, vector<2x64xf32>
    %c0_53 = arith.constant 0 : index
    %c0_54 = arith.constant 0 : index
    %107 = vector.load %arg11[%c0_53, %c0_54] : memref<2x64xf32, #tpu.memory_space<vmem>>, vector<2x64xf32>
    %c0_55 = arith.constant 0 : index
    %c0_56 = arith.constant 0 : index
    %108 = vector.load %arg9[%c0_55, %c0_56] : memref<64x64xbf16, #tpu.memory_space<vmem>>, vector<64x64xbf16>
    %c0_57 = arith.constant 0 : index
    %c0_58 = arith.constant 0 : index
    %c0_59 = arith.constant 0 : index
    %109 = vector.load %arg7[%c0_57, %c0_58, %c0_59] : memref<9x64x64xbf16, #tpu.memory_space<vmem>>, vector<1x64x64xbf16>
    %110 = vector.shape_cast %109 : vector<1x64x64xbf16> to vector<64x64xbf16>
    %cst_60 = arith.constant dense<0.000000e+00> : vector<64x64xf32>
    %111 = tpu.matmul %110, %104, %cst_60 {dimension_numbers = #tpu.dot_dimension_numbers<[1], [0], [0], [1], [0, 0, 1, 1], [], []>} : vector<64x64xbf16>, vector<64x64xbf16>, vector<64x64xf32> -> vector<64x64xf32>
    %112 = vector.extract_strided_slice %105 {offsets = [0, 0], sizes = [1, 64], strides = [1, 1]} : vector<9x64xf32> to vector<1x64xf32>
    %113 = vector.broadcast %112 : vector<1x64xf32> to vector<64x64xf32>
    %114 = arith.mulf %111, %113 : vector<64x64xf32>
    %c1_61 = arith.constant 1 : index
    %c0_62 = arith.constant 0 : index
    %c0_63 = arith.constant 0 : index
    %115 = vector.load %arg7[%c1_61, %c0_62, %c0_63] : memref<9x64x64xbf16, #tpu.memory_space<vmem>>, vector<1x64x64xbf16>
    %116 = vector.shape_cast %115 : vector<1x64x64xbf16> to vector<64x64xbf16>
    %cst_64 = arith.constant dense<0.000000e+00> : vector<64x64xf32>
    %117 = tpu.matmul %116, %104, %cst_64 {dimension_numbers = #tpu.dot_dimension_numbers<[1], [0], [0], [1], [0, 0, 1, 1], [], []>} : vector<64x64xbf16>, vector<64x64xbf16>, vector<64x64xf32> -> vector<64x64xf32>
    %118 = vector.extract_strided_slice %105 {offsets = [1, 0], sizes = [1, 64], strides = [1, 1]} : vector<9x64xf32> to vector<1x64xf32>
    %119 = vector.broadcast %118 : vector<1x64xf32> to vector<64x64xf32>
    %120 = arith.mulf %117, %119 : vector<64x64xf32>
    %121 = arith.addf %114, %120 : vector<64x64xf32>
    %c2_65 = arith.constant 2 : index
    %c0_66 = arith.constant 0 : index
    %c0_67 = arith.constant 0 : index
    %122 = vector.load %arg7[%c2_65, %c0_66, %c0_67] : memref<9x64x64xbf16, #tpu.memory_space<vmem>>, vector<1x64x64xbf16>
    %123 = vector.shape_cast %122 : vector<1x64x64xbf16> to vector<64x64xbf16>
    %cst_68 = arith.constant dense<0.000000e+00> : vector<64x64xf32>
    %124 = tpu.matmul %123, %104, %cst_68 {dimension_numbers = #tpu.dot_dimension_numbers<[1], [0], [0], [1], [0, 0, 1, 1], [], []>} : vector<64x64xbf16>, vector<64x64xbf16>, vector<64x64xf32> -> vector<64x64xf32>
    %125 = vector.extract_strided_slice %105 {offsets = [2, 0], sizes = [1, 64], strides = [1, 1]} : vector<9x64xf32> to vector<1x64xf32>
    %126 = vector.broadcast %125 : vector<1x64xf32> to vector<64x64xf32>
    %127 = arith.mulf %124, %126 : vector<64x64xf32>
    %128 = arith.addf %121, %127 : vector<64x64xf32>
    %c3_69 = arith.constant 3 : index
    %c0_70 = arith.constant 0 : index
    %c0_71 = arith.constant 0 : index
    %129 = vector.load %arg7[%c3_69, %c0_70, %c0_71] : memref<9x64x64xbf16, #tpu.memory_space<vmem>>, vector<1x64x64xbf16>
    %130 = vector.shape_cast %129 : vector<1x64x64xbf16> to vector<64x64xbf16>
    %cst_72 = arith.constant dense<0.000000e+00> : vector<64x64xf32>
    %131 = tpu.matmul %130, %104, %cst_72 {dimension_numbers = #tpu.dot_dimension_numbers<[1], [0], [0], [1], [0, 0, 1, 1], [], []>} : vector<64x64xbf16>, vector<64x64xbf16>, vector<64x64xf32> -> vector<64x64xf32>
    %132 = vector.extract_strided_slice %105 {offsets = [3, 0], sizes = [1, 64], strides = [1, 1]} : vector<9x64xf32> to vector<1x64xf32>
    %133 = vector.broadcast %132 : vector<1x64xf32> to vector<64x64xf32>
    %134 = arith.mulf %131, %133 : vector<64x64xf32>
    %c4_73 = arith.constant 4 : index
    %c0_74 = arith.constant 0 : index
    %c0_75 = arith.constant 0 : index
    %135 = vector.load %arg7[%c4_73, %c0_74, %c0_75] : memref<9x64x64xbf16, #tpu.memory_space<vmem>>, vector<1x64x64xbf16>
    %136 = vector.shape_cast %135 : vector<1x64x64xbf16> to vector<64x64xbf16>
    %cst_76 = arith.constant dense<0.000000e+00> : vector<64x64xf32>
    %137 = tpu.matmul %136, %104, %cst_76 {dimension_numbers = #tpu.dot_dimension_numbers<[1], [0], [0], [1], [0, 0, 1, 1], [], []>} : vector<64x64xbf16>, vector<64x64xbf16>, vector<64x64xf32> -> vector<64x64xf32>
    %138 = vector.extract_strided_slice %105 {offsets = [4, 0], sizes = [1, 64], strides = [1, 1]} : vector<9x64xf32> to vector<1x64xf32>
    %139 = vector.broadcast %138 : vector<1x64xf32> to vector<64x64xf32>
    %140 = arith.mulf %137, %139 : vector<64x64xf32>
    %141 = arith.addf %134, %140 : vector<64x64xf32>
    %c5_77 = arith.constant 5 : index
    %c0_78 = arith.constant 0 : index
    %c0_79 = arith.constant 0 : index
    %142 = vector.load %arg7[%c5_77, %c0_78, %c0_79] : memref<9x64x64xbf16, #tpu.memory_space<vmem>>, vector<1x64x64xbf16>
    %143 = vector.shape_cast %142 : vector<1x64x64xbf16> to vector<64x64xbf16>
    %cst_80 = arith.constant dense<0.000000e+00> : vector<64x64xf32>
    %144 = tpu.matmul %143, %104, %cst_80 {dimension_numbers = #tpu.dot_dimension_numbers<[1], [0], [0], [1], [0, 0, 1, 1], [], []>} : vector<64x64xbf16>, vector<64x64xbf16>, vector<64x64xf32> -> vector<64x64xf32>
    %145 = vector.extract_strided_slice %105 {offsets = [5, 0], sizes = [1, 64], strides = [1, 1]} : vector<9x64xf32> to vector<1x64xf32>
    %146 = vector.broadcast %145 : vector<1x64xf32> to vector<64x64xf32>
    %147 = arith.mulf %144, %146 : vector<64x64xf32>
    %148 = arith.addf %141, %147 : vector<64x64xf32>
    %c6_81 = arith.constant 6 : index
    %c0_82 = arith.constant 0 : index
    %c0_83 = arith.constant 0 : index
    %149 = vector.load %arg7[%c6_81, %c0_82, %c0_83] : memref<9x64x64xbf16, #tpu.memory_space<vmem>>, vector<1x64x64xbf16>
    %150 = vector.shape_cast %149 : vector<1x64x64xbf16> to vector<64x64xbf16>
    %cst_84 = arith.constant dense<0.000000e+00> : vector<64x64xf32>
    %151 = tpu.matmul %150, %104, %cst_84 {dimension_numbers = #tpu.dot_dimension_numbers<[1], [0], [0], [1], [0, 0, 1, 1], [], []>} : vector<64x64xbf16>, vector<64x64xbf16>, vector<64x64xf32> -> vector<64x64xf32>
    %152 = vector.extract_strided_slice %105 {offsets = [6, 0], sizes = [1, 64], strides = [1, 1]} : vector<9x64xf32> to vector<1x64xf32>
    %153 = vector.broadcast %152 : vector<1x64xf32> to vector<64x64xf32>
    %154 = arith.mulf %151, %153 : vector<64x64xf32>
    %c7_85 = arith.constant 7 : index
    %c0_86 = arith.constant 0 : index
    %c0_87 = arith.constant 0 : index
    %155 = vector.load %arg7[%c7_85, %c0_86, %c0_87] : memref<9x64x64xbf16, #tpu.memory_space<vmem>>, vector<1x64x64xbf16>
    %156 = vector.shape_cast %155 : vector<1x64x64xbf16> to vector<64x64xbf16>
    %cst_88 = arith.constant dense<0.000000e+00> : vector<64x64xf32>
    %157 = tpu.matmul %156, %104, %cst_88 {dimension_numbers = #tpu.dot_dimension_numbers<[1], [0], [0], [1], [0, 0, 1, 1], [], []>} : vector<64x64xbf16>, vector<64x64xbf16>, vector<64x64xf32> -> vector<64x64xf32>
    %158 = vector.extract_strided_slice %105 {offsets = [7, 0], sizes = [1, 64], strides = [1, 1]} : vector<9x64xf32> to vector<1x64xf32>
    %159 = vector.broadcast %158 : vector<1x64xf32> to vector<64x64xf32>
    %160 = arith.mulf %157, %159 : vector<64x64xf32>
    %161 = arith.addf %154, %160 : vector<64x64xf32>
    %c8_89 = arith.constant 8 : index
    %c0_90 = arith.constant 0 : index
    %c0_91 = arith.constant 0 : index
    %162 = vector.load %arg7[%c8_89, %c0_90, %c0_91] : memref<9x64x64xbf16, #tpu.memory_space<vmem>>, vector<1x64x64xbf16>
    %163 = vector.shape_cast %162 : vector<1x64x64xbf16> to vector<64x64xbf16>
    %cst_92 = arith.constant dense<0.000000e+00> : vector<64x64xf32>
    %164 = tpu.matmul %163, %104, %cst_92 {dimension_numbers = #tpu.dot_dimension_numbers<[1], [0], [0], [1], [0, 0, 1, 1], [], []>} : vector<64x64xbf16>, vector<64x64xbf16>, vector<64x64xf32> -> vector<64x64xf32>
    %165 = vector.extract_strided_slice %105 {offsets = [8, 0], sizes = [1, 64], strides = [1, 1]} : vector<9x64xf32> to vector<1x64xf32>
    %166 = vector.broadcast %165 : vector<1x64xf32> to vector<64x64xf32>
    %167 = arith.mulf %164, %166 : vector<64x64xf32>
    %168 = arith.addf %161, %167 : vector<64x64xf32>
    %169 = arith.addf %128, %148 : vector<64x64xf32>
    %170 = arith.addf %169, %168 : vector<64x64xf32>
    %171 = vector.extract_strided_slice %106 {offsets = [0, 0], sizes = [1, 64], strides = [1, 1]} : vector<2x64xf32> to vector<1x64xf32>
    %172 = vector.broadcast %171 : vector<1x64xf32> to vector<64x64xf32>
    %173 = arith.mulf %170, %172 : vector<64x64xf32>
    %174 = vector.extract_strided_slice %106 {offsets = [1, 0], sizes = [1, 64], strides = [1, 1]} : vector<2x64xf32> to vector<1x64xf32>
    %175 = vector.broadcast %174 : vector<1x64xf32> to vector<64x64xf32>
    %176 = arith.addf %173, %175 : vector<64x64xf32>
    %cst_93 = arith.constant 0.000000e+00 : f32
    %cst_94 = arith.constant 6.000000e+00 : f32
    %177 = vector.broadcast %cst_93 : f32 to vector<64x64xf32>
    %178 = arith.maximumf %177, %176 : vector<64x64xf32>
    %179 = vector.broadcast %cst_94 : f32 to vector<64x64xf32>
    %180 = arith.minimumf %179, %178 : vector<64x64xf32>
    %181 = arith.truncf %180 : vector<64x64xf32> to vector<64x64xbf16>
    %cst_95 = arith.constant dense<0.000000e+00> : vector<64x64xf32>
    %182 = tpu.matmul %181, %108, %cst_95 {dimension_numbers = #tpu.dot_dimension_numbers<[1], [0], [0], [1], [0, 0, 1, 1], [], []>} : vector<64x64xbf16>, vector<64x64xbf16>, vector<64x64xf32> -> vector<64x64xf32>
    %183 = vector.extract_strided_slice %107 {offsets = [0, 0], sizes = [1, 64], strides = [1, 1]} : vector<2x64xf32> to vector<1x64xf32>
    %184 = vector.broadcast %183 : vector<1x64xf32> to vector<64x64xf32>
    %185 = arith.mulf %182, %184 : vector<64x64xf32>
    %186 = vector.extract_strided_slice %107 {offsets = [1, 0], sizes = [1, 64], strides = [1, 1]} : vector<2x64xf32> to vector<1x64xf32>
    %187 = vector.broadcast %186 : vector<1x64xf32> to vector<64x64xf32>
    %188 = arith.addf %185, %187 : vector<64x64xf32>
    %cst_96 = arith.constant 0.000000e+00 : f32
    %cst_97 = arith.constant 6.000000e+00 : f32
    %189 = vector.broadcast %cst_96 : f32 to vector<64x64xf32>
    %190 = arith.maximumf %189, %188 : vector<64x64xf32>
    %191 = vector.broadcast %cst_97 : f32 to vector<64x64xf32>
    %192 = arith.minimumf %191, %190 : vector<64x64xf32>
    %193 = arith.truncf %192 : vector<64x64xf32> to vector<64x64xbf16>
    %194 = arith.extf %193 : vector<64x64xbf16> to vector<64x64xf32>
    %c0_98 = arith.constant 0 : index
    %c0_99 = arith.constant 0 : index
    %195 = vector.load %arg43[%c0_98, %c0_99] : memref<1x64xf32, #tpu.memory_space<vmem>>, vector<1x64xf32>
    %196 = vector.broadcast %195 : vector<1x64xf32> to vector<64x64xf32>
    %197 = arith.mulf %194, %196 : vector<64x64xf32>
    %cst_100 = arith.constant dense<0.000000e+00> : vector<64xf32>
    %198 = vector.multi_reduction <add>, %197, %cst_100 [1] : vector<64x64xf32> to vector<64xf32>
    %199 = vector.shape_cast %198 : vector<64xf32> to vector<64x1xf32>
    %c0_101 = arith.constant 0 : index
    %c0_102 = arith.constant 0 : index
    %200 = vector.load %arg40[%c0_101, %c0_102] : memref<1x1xf32, #tpu.memory_space<vmem>>, vector<1x1xf32>
    %201 = vector.broadcast %200 : vector<1x1xf32> to vector<64x1xf32>
    %202 = arith.addf %199, %201 : vector<64x1xf32>
    %203 = arith.negf %202 : vector<64x1xf32>
    %204 = math.exp %203 : vector<64x1xf32>
    %cst_103 = arith.constant 1.000000e+00 : f32
    %205 = vector.broadcast %cst_103 : f32 to vector<64x1xf32>
    %206 = arith.addf %205, %204 : vector<64x1xf32>
    %207 = arith.divf %205, %206 : vector<64x1xf32>
    %208 = vector.broadcast %207 : vector<64x1xf32> to vector<64x64xf32>
    %209 = arith.mulf %194, %208 : vector<64x64xf32>
    %cst_104 = arith.constant dense<0.000000e+00> : vector<64xf32>
    %210 = vector.multi_reduction <add>, %209, %cst_104 [0] : vector<64x64xf32> to vector<64xf32>
    %211 = vector.shape_cast %210 : vector<64xf32> to vector<1x64xf32>
    %cst_105 = arith.constant 6.400000e+01 : f32
    %212 = vector.broadcast %cst_105 : f32 to vector<1x64xf32>
    %213 = arith.divf %211, %212 : vector<1x64xf32>
    %cst_106 = arith.constant dense<0xFF800000> : vector<64xf32>
    %214 = vector.multi_reduction <maximumf>, %209, %cst_106 [0] : vector<64x64xf32> to vector<64xf32>
    %215 = vector.shape_cast %214 : vector<64xf32> to vector<1x64xf32>
    %216 = tpu.iota {dimensions = array<i32: 0>} : vector<2x64xi32>
    %c0_i32 = arith.constant 0 : i32
    %217 = vector.broadcast %c0_i32 : i32 to vector<2x64xi32>
    %218 = arith.cmpi eq, %216, %217 : vector<2x64xi32>
    %219 = vector.shape_cast %213 : vector<1x64xf32> to vector<1x64xf32>
    %220 = vector.broadcast %219 : vector<1x64xf32> to vector<2x64xf32>
    %221 = vector.shape_cast %215 : vector<1x64xf32> to vector<1x64xf32>
    %222 = vector.broadcast %221 : vector<1x64xf32> to vector<2x64xf32>
    %223 = arith.select %218, %220, %222 : vector<2x64xi1>, vector<2x64xf32>
    %224 = arith.truncf %223 : vector<2x64xf32> to vector<2x64xbf16>
    %c0_107 = arith.constant 0 : index
    %c0_108 = arith.constant 0 : index
    %225 = vector.load %arg41[%c0_107, %c0_108] : memref<64x8xbf16, #tpu.memory_space<vmem>>, vector<64x8xbf16>
    %cst_109 = arith.constant dense<0.000000e+00> : vector<2x8xf32>
    %226 = tpu.matmul %224, %225, %cst_109 {dimension_numbers = #tpu.dot_dimension_numbers<[1], [0], [0], [1], [0, 0, 1, 1], [], []>} : vector<2x64xbf16>, vector<64x8xbf16>, vector<2x8xf32> -> vector<2x8xf32>
    %cst_110 = arith.constant 0.000000e+00 : f32
    %227 = vector.broadcast %cst_110 : f32 to vector<2x8xf32>
    %228 = arith.maximumf %226, %227 : vector<2x8xf32>
    %229 = arith.truncf %228 : vector<2x8xf32> to vector<2x8xbf16>
    %c0_111 = arith.constant 0 : index
    %c0_112 = arith.constant 0 : index
    %230 = vector.load %arg42[%c0_111, %c0_112] : memref<8x64xbf16, #tpu.memory_space<vmem>>, vector<8x64xbf16>
    %cst_113 = arith.constant dense<0.000000e+00> : vector<2x64xf32>
    %231 = tpu.matmul %229, %230, %cst_113 {dimension_numbers = #tpu.dot_dimension_numbers<[1], [0], [0], [1], [0, 0, 1, 1], [], []>} : vector<2x8xbf16>, vector<8x64xbf16>, vector<2x64xf32> -> vector<2x64xf32>
    %232 = vector.extract_strided_slice %231 {offsets = [0, 0], sizes = [1, 64], strides = [1, 1]} : vector<2x64xf32> to vector<1x64xf32>
    %233 = vector.extract_strided_slice %231 {offsets = [1, 0], sizes = [1, 64], strides = [1, 1]} : vector<2x64xf32> to vector<1x64xf32>
    %234 = arith.addf %232, %233 : vector<1x64xf32>
    %235 = arith.negf %234 : vector<1x64xf32>
    %236 = math.exp %235 : vector<1x64xf32>
    %cst_114 = arith.constant 1.000000e+00 : f32
    %237 = vector.broadcast %cst_114 : f32 to vector<1x64xf32>
    %238 = arith.addf %237, %236 : vector<1x64xf32>
    %239 = arith.divf %237, %238 : vector<1x64xf32>
    %240 = vector.broadcast %239 : vector<1x64xf32> to vector<64x64xf32>
    %241 = arith.mulf %209, %240 : vector<64x64xf32>
    %242 = arith.truncf %241 : vector<64x64xf32> to vector<64x64xbf16>
    %c0_115 = arith.constant 0 : index
    %c0_116 = arith.constant 0 : index
    %243 = vector.load %arg13[%c0_115, %c0_116] : memref<9x64xf32, #tpu.memory_space<vmem>>, vector<9x64xf32>
    %c0_117 = arith.constant 0 : index
    %c0_118 = arith.constant 0 : index
    %244 = vector.load %arg15[%c0_117, %c0_118] : memref<2x64xf32, #tpu.memory_space<vmem>>, vector<2x64xf32>
    %c0_119 = arith.constant 0 : index
    %c0_120 = arith.constant 0 : index
    %245 = vector.load %arg16[%c0_119, %c0_120] : memref<2x128xf32, #tpu.memory_space<vmem>>, vector<2x128xf32>
    %c0_121 = arith.constant 0 : index
    %c0_122 = arith.constant 0 : index
    %246 = vector.load %arg14[%c0_121, %c0_122] : memref<64x128xbf16, #tpu.memory_space<vmem>>, vector<64x128xbf16>
    %c0_123 = arith.constant 0 : index
    %c0_124 = arith.constant 0 : index
    %c0_125 = arith.constant 0 : index
    %247 = vector.load %arg12[%c0_123, %c0_124, %c0_125] : memref<9x16x64xbf16, #tpu.memory_space<vmem>>, vector<1x16x64xbf16>
    %248 = vector.shape_cast %247 : vector<1x16x64xbf16> to vector<16x64xbf16>
    %cst_126 = arith.constant dense<0.000000e+00> : vector<16x64xf32>
    %249 = tpu.matmul %248, %242, %cst_126 {dimension_numbers = #tpu.dot_dimension_numbers<[1], [0], [0], [1], [0, 0, 1, 1], [], []>} : vector<16x64xbf16>, vector<64x64xbf16>, vector<16x64xf32> -> vector<16x64xf32>
    %250 = vector.extract_strided_slice %243 {offsets = [0, 0], sizes = [1, 64], strides = [1, 1]} : vector<9x64xf32> to vector<1x64xf32>
    %251 = vector.broadcast %250 : vector<1x64xf32> to vector<16x64xf32>
    %252 = arith.mulf %249, %251 : vector<16x64xf32>
    %c1_127 = arith.constant 1 : index
    %c0_128 = arith.constant 0 : index
    %c0_129 = arith.constant 0 : index
    %253 = vector.load %arg12[%c1_127, %c0_128, %c0_129] : memref<9x16x64xbf16, #tpu.memory_space<vmem>>, vector<1x16x64xbf16>
    %254 = vector.shape_cast %253 : vector<1x16x64xbf16> to vector<16x64xbf16>
    %cst_130 = arith.constant dense<0.000000e+00> : vector<16x64xf32>
    %255 = tpu.matmul %254, %242, %cst_130 {dimension_numbers = #tpu.dot_dimension_numbers<[1], [0], [0], [1], [0, 0, 1, 1], [], []>} : vector<16x64xbf16>, vector<64x64xbf16>, vector<16x64xf32> -> vector<16x64xf32>
    %256 = vector.extract_strided_slice %243 {offsets = [1, 0], sizes = [1, 64], strides = [1, 1]} : vector<9x64xf32> to vector<1x64xf32>
    %257 = vector.broadcast %256 : vector<1x64xf32> to vector<16x64xf32>
    %258 = arith.mulf %255, %257 : vector<16x64xf32>
    %259 = arith.addf %252, %258 : vector<16x64xf32>
    %c2_131 = arith.constant 2 : index
    %c0_132 = arith.constant 0 : index
    %c0_133 = arith.constant 0 : index
    %260 = vector.load %arg12[%c2_131, %c0_132, %c0_133] : memref<9x16x64xbf16, #tpu.memory_space<vmem>>, vector<1x16x64xbf16>
    %261 = vector.shape_cast %260 : vector<1x16x64xbf16> to vector<16x64xbf16>
    %cst_134 = arith.constant dense<0.000000e+00> : vector<16x64xf32>
    %262 = tpu.matmul %261, %242, %cst_134 {dimension_numbers = #tpu.dot_dimension_numbers<[1], [0], [0], [1], [0, 0, 1, 1], [], []>} : vector<16x64xbf16>, vector<64x64xbf16>, vector<16x64xf32> -> vector<16x64xf32>
    %263 = vector.extract_strided_slice %243 {offsets = [2, 0], sizes = [1, 64], strides = [1, 1]} : vector<9x64xf32> to vector<1x64xf32>
    %264 = vector.broadcast %263 : vector<1x64xf32> to vector<16x64xf32>
    %265 = arith.mulf %262, %264 : vector<16x64xf32>
    %266 = arith.addf %259, %265 : vector<16x64xf32>
    %c3_135 = arith.constant 3 : index
    %c0_136 = arith.constant 0 : index
    %c0_137 = arith.constant 0 : index
    %267 = vector.load %arg12[%c3_135, %c0_136, %c0_137] : memref<9x16x64xbf16, #tpu.memory_space<vmem>>, vector<1x16x64xbf16>
    %268 = vector.shape_cast %267 : vector<1x16x64xbf16> to vector<16x64xbf16>
    %cst_138 = arith.constant dense<0.000000e+00> : vector<16x64xf32>
    %269 = tpu.matmul %268, %242, %cst_138 {dimension_numbers = #tpu.dot_dimension_numbers<[1], [0], [0], [1], [0, 0, 1, 1], [], []>} : vector<16x64xbf16>, vector<64x64xbf16>, vector<16x64xf32> -> vector<16x64xf32>
    %270 = vector.extract_strided_slice %243 {offsets = [3, 0], sizes = [1, 64], strides = [1, 1]} : vector<9x64xf32> to vector<1x64xf32>
    %271 = vector.broadcast %270 : vector<1x64xf32> to vector<16x64xf32>
    %272 = arith.mulf %269, %271 : vector<16x64xf32>
    %c4_139 = arith.constant 4 : index
    %c0_140 = arith.constant 0 : index
    %c0_141 = arith.constant 0 : index
    %273 = vector.load %arg12[%c4_139, %c0_140, %c0_141] : memref<9x16x64xbf16, #tpu.memory_space<vmem>>, vector<1x16x64xbf16>
    %274 = vector.shape_cast %273 : vector<1x16x64xbf16> to vector<16x64xbf16>
    %cst_142 = arith.constant dense<0.000000e+00> : vector<16x64xf32>
    %275 = tpu.matmul %274, %242, %cst_142 {dimension_numbers = #tpu.dot_dimension_numbers<[1], [0], [0], [1], [0, 0, 1, 1], [], []>} : vector<16x64xbf16>, vector<64x64xbf16>, vector<16x64xf32> -> vector<16x64xf32>
    %276 = vector.extract_strided_slice %243 {offsets = [4, 0], sizes = [1, 64], strides = [1, 1]} : vector<9x64xf32> to vector<1x64xf32>
    %277 = vector.broadcast %276 : vector<1x64xf32> to vector<16x64xf32>
    %278 = arith.mulf %275, %277 : vector<16x64xf32>
    %279 = arith.addf %272, %278 : vector<16x64xf32>
    %c5_143 = arith.constant 5 : index
    %c0_144 = arith.constant 0 : index
    %c0_145 = arith.constant 0 : index
    %280 = vector.load %arg12[%c5_143, %c0_144, %c0_145] : memref<9x16x64xbf16, #tpu.memory_space<vmem>>, vector<1x16x64xbf16>
    %281 = vector.shape_cast %280 : vector<1x16x64xbf16> to vector<16x64xbf16>
    %cst_146 = arith.constant dense<0.000000e+00> : vector<16x64xf32>
    %282 = tpu.matmul %281, %242, %cst_146 {dimension_numbers = #tpu.dot_dimension_numbers<[1], [0], [0], [1], [0, 0, 1, 1], [], []>} : vector<16x64xbf16>, vector<64x64xbf16>, vector<16x64xf32> -> vector<16x64xf32>
    %283 = vector.extract_strided_slice %243 {offsets = [5, 0], sizes = [1, 64], strides = [1, 1]} : vector<9x64xf32> to vector<1x64xf32>
    %284 = vector.broadcast %283 : vector<1x64xf32> to vector<16x64xf32>
    %285 = arith.mulf %282, %284 : vector<16x64xf32>
    %286 = arith.addf %279, %285 : vector<16x64xf32>
    %c6_147 = arith.constant 6 : index
    %c0_148 = arith.constant 0 : index
    %c0_149 = arith.constant 0 : index
    %287 = vector.load %arg12[%c6_147, %c0_148, %c0_149] : memref<9x16x64xbf16, #tpu.memory_space<vmem>>, vector<1x16x64xbf16>
    %288 = vector.shape_cast %287 : vector<1x16x64xbf16> to vector<16x64xbf16>
    %cst_150 = arith.constant dense<0.000000e+00> : vector<16x64xf32>
    %289 = tpu.matmul %288, %242, %cst_150 {dimension_numbers = #tpu.dot_dimension_numbers<[1], [0], [0], [1], [0, 0, 1, 1], [], []>} : vector<16x64xbf16>, vector<64x64xbf16>, vector<16x64xf32> -> vector<16x64xf32>
    %290 = vector.extract_strided_slice %243 {offsets = [6, 0], sizes = [1, 64], strides = [1, 1]} : vector<9x64xf32> to vector<1x64xf32>
    %291 = vector.broadcast %290 : vector<1x64xf32> to vector<16x64xf32>
    %292 = arith.mulf %289, %291 : vector<16x64xf32>
    %c7_151 = arith.constant 7 : index
    %c0_152 = arith.constant 0 : index
    %c0_153 = arith.constant 0 : index
    %293 = vector.load %arg12[%c7_151, %c0_152, %c0_153] : memref<9x16x64xbf16, #tpu.memory_space<vmem>>, vector<1x16x64xbf16>
    %294 = vector.shape_cast %293 : vector<1x16x64xbf16> to vector<16x64xbf16>
    %cst_154 = arith.constant dense<0.000000e+00> : vector<16x64xf32>
    %295 = tpu.matmul %294, %242, %cst_154 {dimension_numbers = #tpu.dot_dimension_numbers<[1], [0], [0], [1], [0, 0, 1, 1], [], []>} : vector<16x64xbf16>, vector<64x64xbf16>, vector<16x64xf32> -> vector<16x64xf32>
    %296 = vector.extract_strided_slice %243 {offsets = [7, 0], sizes = [1, 64], strides = [1, 1]} : vector<9x64xf32> to vector<1x64xf32>
    %297 = vector.broadcast %296 : vector<1x64xf32> to vector<16x64xf32>
    %298 = arith.mulf %295, %297 : vector<16x64xf32>
    %299 = arith.addf %292, %298 : vector<16x64xf32>
    %c8_155 = arith.constant 8 : index
    %c0_156 = arith.constant 0 : index
    %c0_157 = arith.constant 0 : index
    %300 = vector.load %arg12[%c8_155, %c0_156, %c0_157] : memref<9x16x64xbf16, #tpu.memory_space<vmem>>, vector<1x16x64xbf16>
    %301 = vector.shape_cast %300 : vector<1x16x64xbf16> to vector<16x64xbf16>
    %cst_158 = arith.constant dense<0.000000e+00> : vector<16x64xf32>
    %302 = tpu.matmul %301, %242, %cst_158 {dimension_numbers = #tpu.dot_dimension_numbers<[1], [0], [0], [1], [0, 0, 1, 1], [], []>} : vector<16x64xbf16>, vector<64x64xbf16>, vector<16x64xf32> -> vector<16x64xf32>
    %303 = vector.extract_strided_slice %243 {offsets = [8, 0], sizes = [1, 64], strides = [1, 1]} : vector<9x64xf32> to vector<1x64xf32>
    %304 = vector.broadcast %303 : vector<1x64xf32> to vector<16x64xf32>
    %305 = arith.mulf %302, %304 : vector<16x64xf32>
    %306 = arith.addf %299, %305 : vector<16x64xf32>
    %307 = arith.addf %266, %286 : vector<16x64xf32>
    %308 = arith.addf %307, %306 : vector<16x64xf32>
    %309 = vector.extract_strided_slice %244 {offsets = [0, 0], sizes = [1, 64], strides = [1, 1]} : vector<2x64xf32> to vector<1x64xf32>
    %310 = vector.broadcast %309 : vector<1x64xf32> to vector<16x64xf32>
    %311 = arith.mulf %308, %310 : vector<16x64xf32>
    %312 = vector.extract_strided_slice %244 {offsets = [1, 0], sizes = [1, 64], strides = [1, 1]} : vector<2x64xf32> to vector<1x64xf32>
    %313 = vector.broadcast %312 : vector<1x64xf32> to vector<16x64xf32>
    %314 = arith.addf %311, %313 : vector<16x64xf32>
    %cst_159 = arith.constant 0.000000e+00 : f32
    %cst_160 = arith.constant 6.000000e+00 : f32
    %315 = vector.broadcast %cst_159 : f32 to vector<16x64xf32>
    %316 = arith.maximumf %315, %314 : vector<16x64xf32>
    %317 = vector.broadcast %cst_160 : f32 to vector<16x64xf32>
    %318 = arith.minimumf %317, %316 : vector<16x64xf32>
    %319 = arith.truncf %318 : vector<16x64xf32> to vector<16x64xbf16>
    %cst_161 = arith.constant dense<0.000000e+00> : vector<16x128xf32>
    %320 = tpu.matmul %319, %246, %cst_161 {dimension_numbers = #tpu.dot_dimension_numbers<[1], [0], [0], [1], [0, 0, 1, 1], [], []>} : vector<16x64xbf16>, vector<64x128xbf16>, vector<16x128xf32> -> vector<16x128xf32>
    %321 = vector.extract_strided_slice %245 {offsets = [0, 0], sizes = [1, 128], strides = [1, 1]} : vector<2x128xf32> to vector<1x128xf32>
    %322 = vector.broadcast %321 : vector<1x128xf32> to vector<16x128xf32>
    %323 = arith.mulf %320, %322 : vector<16x128xf32>
    %324 = vector.extract_strided_slice %245 {offsets = [1, 0], sizes = [1, 128], strides = [1, 1]} : vector<2x128xf32> to vector<1x128xf32>
    %325 = vector.broadcast %324 : vector<1x128xf32> to vector<16x128xf32>
    %326 = arith.addf %323, %325 : vector<16x128xf32>
    %cst_162 = arith.constant 0.000000e+00 : f32
    %cst_163 = arith.constant 6.000000e+00 : f32
    %327 = vector.broadcast %cst_162 : f32 to vector<16x128xf32>
    %328 = arith.maximumf %327, %326 : vector<16x128xf32>
    %329 = vector.broadcast %cst_163 : f32 to vector<16x128xf32>
    %330 = arith.minimumf %329, %328 : vector<16x128xf32>
    %331 = arith.truncf %330 : vector<16x128xf32> to vector<16x128xbf16>
    %c0_164 = arith.constant 0 : index
    %c0_165 = arith.constant 0 : index
    %332 = vector.load %arg18[%c0_164, %c0_165] : memref<9x128xf32, #tpu.memory_space<vmem>>, vector<9x128xf32>
    %c0_166 = arith.constant 0 : index
    %c0_167 = arith.constant 0 : index
    %333 = vector.load %arg20[%c0_166, %c0_167] : memref<2x128xf32, #tpu.memory_space<vmem>>, vector<2x128xf32>
    %c0_168 = arith.constant 0 : index
    %c0_169 = arith.constant 0 : index
    %334 = vector.load %arg21[%c0_168, %c0_169] : memref<2x128xf32, #tpu.memory_space<vmem>>, vector<2x128xf32>
    %c0_170 = arith.constant 0 : index
    %c0_171 = arith.constant 0 : index
    %335 = vector.load %arg19[%c0_170, %c0_171] : memref<128x128xbf16, #tpu.memory_space<vmem>>, vector<128x128xbf16>
    %c0_172 = arith.constant 0 : index
    %c0_173 = arith.constant 0 : index
    %c0_174 = arith.constant 0 : index
    %336 = vector.load %arg17[%c0_172, %c0_173, %c0_174] : memref<9x16x16xbf16, #tpu.memory_space<vmem>>, vector<1x16x16xbf16>
    %337 = vector.shape_cast %336 : vector<1x16x16xbf16> to vector<16x16xbf16>
    %cst_175 = arith.constant dense<0.000000e+00> : vector<16x128xf32>
    %338 = tpu.matmul %337, %331, %cst_175 {dimension_numbers = #tpu.dot_dimension_numbers<[1], [0], [0], [1], [0, 0, 1, 1], [], []>} : vector<16x16xbf16>, vector<16x128xbf16>, vector<16x128xf32> -> vector<16x128xf32>
    %339 = vector.extract_strided_slice %332 {offsets = [0, 0], sizes = [1, 128], strides = [1, 1]} : vector<9x128xf32> to vector<1x128xf32>
    %340 = vector.broadcast %339 : vector<1x128xf32> to vector<16x128xf32>
    %341 = arith.mulf %338, %340 : vector<16x128xf32>
    %c1_176 = arith.constant 1 : index
    %c0_177 = arith.constant 0 : index
    %c0_178 = arith.constant 0 : index
    %342 = vector.load %arg17[%c1_176, %c0_177, %c0_178] : memref<9x16x16xbf16, #tpu.memory_space<vmem>>, vector<1x16x16xbf16>
    %343 = vector.shape_cast %342 : vector<1x16x16xbf16> to vector<16x16xbf16>
    %cst_179 = arith.constant dense<0.000000e+00> : vector<16x128xf32>
    %344 = tpu.matmul %343, %331, %cst_179 {dimension_numbers = #tpu.dot_dimension_numbers<[1], [0], [0], [1], [0, 0, 1, 1], [], []>} : vector<16x16xbf16>, vector<16x128xbf16>, vector<16x128xf32> -> vector<16x128xf32>
    %345 = vector.extract_strided_slice %332 {offsets = [1, 0], sizes = [1, 128], strides = [1, 1]} : vector<9x128xf32> to vector<1x128xf32>
    %346 = vector.broadcast %345 : vector<1x128xf32> to vector<16x128xf32>
    %347 = arith.mulf %344, %346 : vector<16x128xf32>
    %348 = arith.addf %341, %347 : vector<16x128xf32>
    %c2_180 = arith.constant 2 : index
    %c0_181 = arith.constant 0 : index
    %c0_182 = arith.constant 0 : index
    %349 = vector.load %arg17[%c2_180, %c0_181, %c0_182] : memref<9x16x16xbf16, #tpu.memory_space<vmem>>, vector<1x16x16xbf16>
    %350 = vector.shape_cast %349 : vector<1x16x16xbf16> to vector<16x16xbf16>
    %cst_183 = arith.constant dense<0.000000e+00> : vector<16x128xf32>
    %351 = tpu.matmul %350, %331, %cst_183 {dimension_numbers = #tpu.dot_dimension_numbers<[1], [0], [0], [1], [0, 0, 1, 1], [], []>} : vector<16x16xbf16>, vector<16x128xbf16>, vector<16x128xf32> -> vector<16x128xf32>
    %352 = vector.extract_strided_slice %332 {offsets = [2, 0], sizes = [1, 128], strides = [1, 1]} : vector<9x128xf32> to vector<1x128xf32>
    %353 = vector.broadcast %352 : vector<1x128xf32> to vector<16x128xf32>
    %354 = arith.mulf %351, %353 : vector<16x128xf32>
    %355 = arith.addf %348, %354 : vector<16x128xf32>
    %c3_184 = arith.constant 3 : index
    %c0_185 = arith.constant 0 : index
    %c0_186 = arith.constant 0 : index
    %356 = vector.load %arg17[%c3_184, %c0_185, %c0_186] : memref<9x16x16xbf16, #tpu.memory_space<vmem>>, vector<1x16x16xbf16>
    %357 = vector.shape_cast %356 : vector<1x16x16xbf16> to vector<16x16xbf16>
    %cst_187 = arith.constant dense<0.000000e+00> : vector<16x128xf32>
    %358 = tpu.matmul %357, %331, %cst_187 {dimension_numbers = #tpu.dot_dimension_numbers<[1], [0], [0], [1], [0, 0, 1, 1], [], []>} : vector<16x16xbf16>, vector<16x128xbf16>, vector<16x128xf32> -> vector<16x128xf32>
    %359 = vector.extract_strided_slice %332 {offsets = [3, 0], sizes = [1, 128], strides = [1, 1]} : vector<9x128xf32> to vector<1x128xf32>
    %360 = vector.broadcast %359 : vector<1x128xf32> to vector<16x128xf32>
    %361 = arith.mulf %358, %360 : vector<16x128xf32>
    %c4_188 = arith.constant 4 : index
    %c0_189 = arith.constant 0 : index
    %c0_190 = arith.constant 0 : index
    %362 = vector.load %arg17[%c4_188, %c0_189, %c0_190] : memref<9x16x16xbf16, #tpu.memory_space<vmem>>, vector<1x16x16xbf16>
    %363 = vector.shape_cast %362 : vector<1x16x16xbf16> to vector<16x16xbf16>
    %cst_191 = arith.constant dense<0.000000e+00> : vector<16x128xf32>
    %364 = tpu.matmul %363, %331, %cst_191 {dimension_numbers = #tpu.dot_dimension_numbers<[1], [0], [0], [1], [0, 0, 1, 1], [], []>} : vector<16x16xbf16>, vector<16x128xbf16>, vector<16x128xf32> -> vector<16x128xf32>
    %365 = vector.extract_strided_slice %332 {offsets = [4, 0], sizes = [1, 128], strides = [1, 1]} : vector<9x128xf32> to vector<1x128xf32>
    %366 = vector.broadcast %365 : vector<1x128xf32> to vector<16x128xf32>
    %367 = arith.mulf %364, %366 : vector<16x128xf32>
    %368 = arith.addf %361, %367 : vector<16x128xf32>
    %c5_192 = arith.constant 5 : index
    %c0_193 = arith.constant 0 : index
    %c0_194 = arith.constant 0 : index
    %369 = vector.load %arg17[%c5_192, %c0_193, %c0_194] : memref<9x16x16xbf16, #tpu.memory_space<vmem>>, vector<1x16x16xbf16>
    %370 = vector.shape_cast %369 : vector<1x16x16xbf16> to vector<16x16xbf16>
    %cst_195 = arith.constant dense<0.000000e+00> : vector<16x128xf32>
    %371 = tpu.matmul %370, %331, %cst_195 {dimension_numbers = #tpu.dot_dimension_numbers<[1], [0], [0], [1], [0, 0, 1, 1], [], []>} : vector<16x16xbf16>, vector<16x128xbf16>, vector<16x128xf32> -> vector<16x128xf32>
    %372 = vector.extract_strided_slice %332 {offsets = [5, 0], sizes = [1, 128], strides = [1, 1]} : vector<9x128xf32> to vector<1x128xf32>
    %373 = vector.broadcast %372 : vector<1x128xf32> to vector<16x128xf32>
    %374 = arith.mulf %371, %373 : vector<16x128xf32>
    %375 = arith.addf %368, %374 : vector<16x128xf32>
    %c6_196 = arith.constant 6 : index
    %c0_197 = arith.constant 0 : index
    %c0_198 = arith.constant 0 : index
    %376 = vector.load %arg17[%c6_196, %c0_197, %c0_198] : memref<9x16x16xbf16, #tpu.memory_space<vmem>>, vector<1x16x16xbf16>
    %377 = vector.shape_cast %376 : vector<1x16x16xbf16> to vector<16x16xbf16>
    %cst_199 = arith.constant dense<0.000000e+00> : vector<16x128xf32>
    %378 = tpu.matmul %377, %331, %cst_199 {dimension_numbers = #tpu.dot_dimension_numbers<[1], [0], [0], [1], [0, 0, 1, 1], [], []>} : vector<16x16xbf16>, vector<16x128xbf16>, vector<16x128xf32> -> vector<16x128xf32>
    %379 = vector.extract_strided_slice %332 {offsets = [6, 0], sizes = [1, 128], strides = [1, 1]} : vector<9x128xf32> to vector<1x128xf32>
    %380 = vector.broadcast %379 : vector<1x128xf32> to vector<16x128xf32>
    %381 = arith.mulf %378, %380 : vector<16x128xf32>
    %c7_200 = arith.constant 7 : index
    %c0_201 = arith.constant 0 : index
    %c0_202 = arith.constant 0 : index
    %382 = vector.load %arg17[%c7_200, %c0_201, %c0_202] : memref<9x16x16xbf16, #tpu.memory_space<vmem>>, vector<1x16x16xbf16>
    %383 = vector.shape_cast %382 : vector<1x16x16xbf16> to vector<16x16xbf16>
    %cst_203 = arith.constant dense<0.000000e+00> : vector<16x128xf32>
    %384 = tpu.matmul %383, %331, %cst_203 {dimension_numbers = #tpu.dot_dimension_numbers<[1], [0], [0], [1], [0, 0, 1, 1], [], []>} : vector<16x16xbf16>, vector<16x128xbf16>, vector<16x128xf32> -> vector<16x128xf32>
    %385 = vector.extract_strided_slice %332 {offsets = [7, 0], sizes = [1, 128], strides = [1, 1]} : vector<9x128xf32> to vector<1x128xf32>
    %386 = vector.broadcast %385 : vector<1x128xf32> to vector<16x128xf32>
    %387 = arith.mulf %384, %386 : vector<16x128xf32>
    %388 = arith.addf %381, %387 : vector<16x128xf32>
    %c8_204 = arith.constant 8 : index
    %c0_205 = arith.constant 0 : index
    %c0_206 = arith.constant 0 : index
    %389 = vector.load %arg17[%c8_204, %c0_205, %c0_206] : memref<9x16x16xbf16, #tpu.memory_space<vmem>>, vector<1x16x16xbf16>
    %390 = vector.shape_cast %389 : vector<1x16x16xbf16> to vector<16x16xbf16>
    %cst_207 = arith.constant dense<0.000000e+00> : vector<16x128xf32>
    %391 = tpu.matmul %390, %331, %cst_207 {dimension_numbers = #tpu.dot_dimension_numbers<[1], [0], [0], [1], [0, 0, 1, 1], [], []>} : vector<16x16xbf16>, vector<16x128xbf16>, vector<16x128xf32> -> vector<16x128xf32>
    %392 = vector.extract_strided_slice %332 {offsets = [8, 0], sizes = [1, 128], strides = [1, 1]} : vector<9x128xf32> to vector<1x128xf32>
    %393 = vector.broadcast %392 : vector<1x128xf32> to vector<16x128xf32>
    %394 = arith.mulf %391, %393 : vector<16x128xf32>
    %395 = arith.addf %388, %394 : vector<16x128xf32>
    %396 = arith.addf %355, %375 : vector<16x128xf32>
    %397 = arith.addf %396, %395 : vector<16x128xf32>
    %398 = vector.extract_strided_slice %333 {offsets = [0, 0], sizes = [1, 128], strides = [1, 1]} : vector<2x128xf32> to vector<1x128xf32>
    %399 = vector.broadcast %398 : vector<1x128xf32> to vector<16x128xf32>
    %400 = arith.mulf %397, %399 : vector<16x128xf32>
    %401 = vector.extract_strided_slice %333 {offsets = [1, 0], sizes = [1, 128], strides = [1, 1]} : vector<2x128xf32> to vector<1x128xf32>
    %402 = vector.broadcast %401 : vector<1x128xf32> to vector<16x128xf32>
    %403 = arith.addf %400, %402 : vector<16x128xf32>
    %cst_208 = arith.constant 0.000000e+00 : f32
    %cst_209 = arith.constant 6.000000e+00 : f32
    %404 = vector.broadcast %cst_208 : f32 to vector<16x128xf32>
    %405 = arith.maximumf %404, %403 : vector<16x128xf32>
    %406 = vector.broadcast %cst_209 : f32 to vector<16x128xf32>
    %407 = arith.minimumf %406, %405 : vector<16x128xf32>
    %408 = arith.truncf %407 : vector<16x128xf32> to vector<16x128xbf16>
    %cst_210 = arith.constant dense<0.000000e+00> : vector<16x128xf32>
    %409 = tpu.matmul %408, %335, %cst_210 {dimension_numbers = #tpu.dot_dimension_numbers<[1], [0], [0], [1], [0, 0, 1, 1], [], []>} : vector<16x128xbf16>, vector<128x128xbf16>, vector<16x128xf32> -> vector<16x128xf32>
    %410 = vector.extract_strided_slice %334 {offsets = [0, 0], sizes = [1, 128], strides = [1, 1]} : vector<2x128xf32> to vector<1x128xf32>
    %411 = vector.broadcast %410 : vector<1x128xf32> to vector<16x128xf32>
    %412 = arith.mulf %409, %411 : vector<16x128xf32>
    %413 = vector.extract_strided_slice %334 {offsets = [1, 0], sizes = [1, 128], strides = [1, 1]} : vector<2x128xf32> to vector<1x128xf32>
    %414 = vector.broadcast %413 : vector<1x128xf32> to vector<16x128xf32>
    %415 = arith.addf %412, %414 : vector<16x128xf32>
    %cst_211 = arith.constant 0.000000e+00 : f32
    %cst_212 = arith.constant 6.000000e+00 : f32
    %416 = vector.broadcast %cst_211 : f32 to vector<16x128xf32>
    %417 = arith.maximumf %416, %415 : vector<16x128xf32>
    %418 = vector.broadcast %cst_212 : f32 to vector<16x128xf32>
    %419 = arith.minimumf %418, %417 : vector<16x128xf32>
    %420 = arith.truncf %419 : vector<16x128xf32> to vector<16x128xbf16>
    %421 = arith.extf %420 : vector<16x128xbf16> to vector<16x128xf32>
    %c0_213 = arith.constant 0 : index
    %c0_214 = arith.constant 0 : index
    %422 = vector.load %arg47[%c0_213, %c0_214] : memref<1x128xf32, #tpu.memory_space<vmem>>, vector<1x128xf32>
    %423 = vector.broadcast %422 : vector<1x128xf32> to vector<16x128xf32>
    %424 = arith.mulf %421, %423 : vector<16x128xf32>
    %cst_215 = arith.constant dense<0.000000e+00> : vector<16xf32>
    %425 = vector.multi_reduction <add>, %424, %cst_215 [1] : vector<16x128xf32> to vector<16xf32>
    %426 = vector.shape_cast %425 : vector<16xf32> to vector<16x1xf32>
    %c0_216 = arith.constant 0 : index
    %c0_217 = arith.constant 0 : index
    %427 = vector.load %arg44[%c0_216, %c0_217] : memref<1x1xf32, #tpu.memory_space<vmem>>, vector<1x1xf32>
    %428 = vector.broadcast %427 : vector<1x1xf32> to vector<16x1xf32>
    %429 = arith.addf %426, %428 : vector<16x1xf32>
    %430 = arith.negf %429 : vector<16x1xf32>
    %431 = math.exp %430 : vector<16x1xf32>
    %cst_218 = arith.constant 1.000000e+00 : f32
    %432 = vector.broadcast %cst_218 : f32 to vector<16x1xf32>
    %433 = arith.addf %432, %431 : vector<16x1xf32>
    %434 = arith.divf %432, %433 : vector<16x1xf32>
    %435 = vector.broadcast %434 : vector<16x1xf32> to vector<16x128xf32>
    %436 = arith.mulf %421, %435 : vector<16x128xf32>
    %cst_219 = arith.constant dense<0.000000e+00> : vector<128xf32>
    %437 = vector.multi_reduction <add>, %436, %cst_219 [0] : vector<16x128xf32> to vector<128xf32>
    %438 = vector.shape_cast %437 : vector<128xf32> to vector<1x128xf32>
    %cst_220 = arith.constant 1.600000e+01 : f32
    %439 = vector.broadcast %cst_220 : f32 to vector<1x128xf32>
    %440 = arith.divf %438, %439 : vector<1x128xf32>
    %cst_221 = arith.constant dense<0xFF800000> : vector<128xf32>
    %441 = vector.multi_reduction <maximumf>, %436, %cst_221 [0] : vector<16x128xf32> to vector<128xf32>
    %442 = vector.shape_cast %441 : vector<128xf32> to vector<1x128xf32>
    %443 = tpu.iota {dimensions = array<i32: 0>} : vector<2x128xi32>
    %c0_i32_222 = arith.constant 0 : i32
    %444 = vector.broadcast %c0_i32_222 : i32 to vector<2x128xi32>
    %445 = arith.cmpi eq, %443, %444 : vector<2x128xi32>
    %446 = vector.shape_cast %440 : vector<1x128xf32> to vector<1x128xf32>
    %447 = vector.broadcast %446 : vector<1x128xf32> to vector<2x128xf32>
    %448 = vector.shape_cast %442 : vector<1x128xf32> to vector<1x128xf32>
    %449 = vector.broadcast %448 : vector<1x128xf32> to vector<2x128xf32>
    %450 = arith.select %445, %447, %449 : vector<2x128xi1>, vector<2x128xf32>
    %451 = arith.truncf %450 : vector<2x128xf32> to vector<2x128xbf16>
    %c0_223 = arith.constant 0 : index
    %c0_224 = arith.constant 0 : index
    %452 = vector.load %arg45[%c0_223, %c0_224] : memref<128x16xbf16, #tpu.memory_space<vmem>>, vector<128x16xbf16>
    %cst_225 = arith.constant dense<0.000000e+00> : vector<2x16xf32>
    %453 = tpu.matmul %451, %452, %cst_225 {dimension_numbers = #tpu.dot_dimension_numbers<[1], [0], [0], [1], [0, 0, 1, 1], [], []>} : vector<2x128xbf16>, vector<128x16xbf16>, vector<2x16xf32> -> vector<2x16xf32>
    %cst_226 = arith.constant 0.000000e+00 : f32
    %454 = vector.broadcast %cst_226 : f32 to vector<2x16xf32>
    %455 = arith.maximumf %453, %454 : vector<2x16xf32>
    %456 = arith.truncf %455 : vector<2x16xf32> to vector<2x16xbf16>
    %c0_227 = arith.constant 0 : index
    %c0_228 = arith.constant 0 : index
    %457 = vector.load %arg46[%c0_227, %c0_228] : memref<16x128xbf16, #tpu.memory_space<vmem>>, vector<16x128xbf16>
    %cst_229 = arith.constant dense<0.000000e+00> : vector<2x128xf32>
    %458 = tpu.matmul %456, %457, %cst_229 {dimension_numbers = #tpu.dot_dimension_numbers<[1], [0], [0], [1], [0, 0, 1, 1], [], []>} : vector<2x16xbf16>, vector<16x128xbf16>, vector<2x128xf32> -> vector<2x128xf32>
    %459 = vector.extract_strided_slice %458 {offsets = [0, 0], sizes = [1, 128], strides = [1, 1]} : vector<2x128xf32> to vector<1x128xf32>
    %460 = vector.extract_strided_slice %458 {offsets = [1, 0], sizes = [1, 128], strides = [1, 1]} : vector<2x128xf32> to vector<1x128xf32>
    %461 = arith.addf %459, %460 : vector<1x128xf32>
    %462 = arith.negf %461 : vector<1x128xf32>
    %463 = math.exp %462 : vector<1x128xf32>
    %cst_230 = arith.constant 1.000000e+00 : f32
    %464 = vector.broadcast %cst_230 : f32 to vector<1x128xf32>
    %465 = arith.addf %464, %463 : vector<1x128xf32>
    %466 = arith.divf %464, %465 : vector<1x128xf32>
    %467 = vector.broadcast %466 : vector<1x128xf32> to vector<16x128xf32>
    %468 = arith.mulf %436, %467 : vector<16x128xf32>
    %469 = arith.truncf %468 : vector<16x128xf32> to vector<16x128xbf16>
    %c0_231 = arith.constant 0 : index
    %c0_232 = arith.constant 0 : index
    %470 = vector.load %arg23[%c0_231, %c0_232] : memref<9x128xf32, #tpu.memory_space<vmem>>, vector<9x128xf32>
    %c0_233 = arith.constant 0 : index
    %c0_234 = arith.constant 0 : index
    %471 = vector.load %arg25[%c0_233, %c0_234] : memref<2x128xf32, #tpu.memory_space<vmem>>, vector<2x128xf32>
    %c0_235 = arith.constant 0 : index
    %c0_236 = arith.constant 0 : index
    %472 = vector.load %arg26[%c0_235, %c0_236] : memref<2x256xf32, #tpu.memory_space<vmem>>, vector<2x256xf32>
    %c0_237 = arith.constant 0 : index
    %c0_238 = arith.constant 0 : index
    %473 = vector.load %arg24[%c0_237, %c0_238] : memref<128x256xbf16, #tpu.memory_space<vmem>>, vector<128x256xbf16>
    %c0_239 = arith.constant 0 : index
    %c0_240 = arith.constant 0 : index
    %c0_241 = arith.constant 0 : index
    %474 = vector.load %arg22[%c0_239, %c0_240, %c0_241] : memref<9x4x16xbf16, #tpu.memory_space<vmem>>, vector<1x4x16xbf16>
    %475 = vector.shape_cast %474 : vector<1x4x16xbf16> to vector<4x16xbf16>
    %cst_242 = arith.constant dense<0.000000e+00> : vector<4x128xf32>
    %476 = tpu.matmul %475, %469, %cst_242 {dimension_numbers = #tpu.dot_dimension_numbers<[1], [0], [0], [1], [0, 0, 1, 1], [], []>} : vector<4x16xbf16>, vector<16x128xbf16>, vector<4x128xf32> -> vector<4x128xf32>
    %477 = vector.extract_strided_slice %470 {offsets = [0, 0], sizes = [1, 128], strides = [1, 1]} : vector<9x128xf32> to vector<1x128xf32>
    %478 = vector.broadcast %477 : vector<1x128xf32> to vector<4x128xf32>
    %479 = arith.mulf %476, %478 : vector<4x128xf32>
    %c1_243 = arith.constant 1 : index
    %c0_244 = arith.constant 0 : index
    %c0_245 = arith.constant 0 : index
    %480 = vector.load %arg22[%c1_243, %c0_244, %c0_245] : memref<9x4x16xbf16, #tpu.memory_space<vmem>>, vector<1x4x16xbf16>
    %481 = vector.shape_cast %480 : vector<1x4x16xbf16> to vector<4x16xbf16>
    %cst_246 = arith.constant dense<0.000000e+00> : vector<4x128xf32>
    %482 = tpu.matmul %481, %469, %cst_246 {dimension_numbers = #tpu.dot_dimension_numbers<[1], [0], [0], [1], [0, 0, 1, 1], [], []>} : vector<4x16xbf16>, vector<16x128xbf16>, vector<4x128xf32> -> vector<4x128xf32>
    %483 = vector.extract_strided_slice %470 {offsets = [1, 0], sizes = [1, 128], strides = [1, 1]} : vector<9x128xf32> to vector<1x128xf32>
    %484 = vector.broadcast %483 : vector<1x128xf32> to vector<4x128xf32>
    %485 = arith.mulf %482, %484 : vector<4x128xf32>
    %486 = arith.addf %479, %485 : vector<4x128xf32>
    %c2_247 = arith.constant 2 : index
    %c0_248 = arith.constant 0 : index
    %c0_249 = arith.constant 0 : index
    %487 = vector.load %arg22[%c2_247, %c0_248, %c0_249] : memref<9x4x16xbf16, #tpu.memory_space<vmem>>, vector<1x4x16xbf16>
    %488 = vector.shape_cast %487 : vector<1x4x16xbf16> to vector<4x16xbf16>
    %cst_250 = arith.constant dense<0.000000e+00> : vector<4x128xf32>
    %489 = tpu.matmul %488, %469, %cst_250 {dimension_numbers = #tpu.dot_dimension_numbers<[1], [0], [0], [1], [0, 0, 1, 1], [], []>} : vector<4x16xbf16>, vector<16x128xbf16>, vector<4x128xf32> -> vector<4x128xf32>
    %490 = vector.extract_strided_slice %470 {offsets = [2, 0], sizes = [1, 128], strides = [1, 1]} : vector<9x128xf32> to vector<1x128xf32>
    %491 = vector.broadcast %490 : vector<1x128xf32> to vector<4x128xf32>
    %492 = arith.mulf %489, %491 : vector<4x128xf32>
    %493 = arith.addf %486, %492 : vector<4x128xf32>
    %c3_251 = arith.constant 3 : index
    %c0_252 = arith.constant 0 : index
    %c0_253 = arith.constant 0 : index
    %494 = vector.load %arg22[%c3_251, %c0_252, %c0_253] : memref<9x4x16xbf16, #tpu.memory_space<vmem>>, vector<1x4x16xbf16>
    %495 = vector.shape_cast %494 : vector<1x4x16xbf16> to vector<4x16xbf16>
    %cst_254 = arith.constant dense<0.000000e+00> : vector<4x128xf32>
    %496 = tpu.matmul %495, %469, %cst_254 {dimension_numbers = #tpu.dot_dimension_numbers<[1], [0], [0], [1], [0, 0, 1, 1], [], []>} : vector<4x16xbf16>, vector<16x128xbf16>, vector<4x128xf32> -> vector<4x128xf32>
    %497 = vector.extract_strided_slice %470 {offsets = [3, 0], sizes = [1, 128], strides = [1, 1]} : vector<9x128xf32> to vector<1x128xf32>
    %498 = vector.broadcast %497 : vector<1x128xf32> to vector<4x128xf32>
    %499 = arith.mulf %496, %498 : vector<4x128xf32>
    %c4_255 = arith.constant 4 : index
    %c0_256 = arith.constant 0 : index
    %c0_257 = arith.constant 0 : index
    %500 = vector.load %arg22[%c4_255, %c0_256, %c0_257] : memref<9x4x16xbf16, #tpu.memory_space<vmem>>, vector<1x4x16xbf16>
    %501 = vector.shape_cast %500 : vector<1x4x16xbf16> to vector<4x16xbf16>
    %cst_258 = arith.constant dense<0.000000e+00> : vector<4x128xf32>
    %502 = tpu.matmul %501, %469, %cst_258 {dimension_numbers = #tpu.dot_dimension_numbers<[1], [0], [0], [1], [0, 0, 1, 1], [], []>} : vector<4x16xbf16>, vector<16x128xbf16>, vector<4x128xf32> -> vector<4x128xf32>
    %503 = vector.extract_strided_slice %470 {offsets = [4, 0], sizes = [1, 128], strides = [1, 1]} : vector<9x128xf32> to vector<1x128xf32>
    %504 = vector.broadcast %503 : vector<1x128xf32> to vector<4x128xf32>
    %505 = arith.mulf %502, %504 : vector<4x128xf32>
    %506 = arith.addf %499, %505 : vector<4x128xf32>
    %c5_259 = arith.constant 5 : index
    %c0_260 = arith.constant 0 : index
    %c0_261 = arith.constant 0 : index
    %507 = vector.load %arg22[%c5_259, %c0_260, %c0_261] : memref<9x4x16xbf16, #tpu.memory_space<vmem>>, vector<1x4x16xbf16>
    %508 = vector.shape_cast %507 : vector<1x4x16xbf16> to vector<4x16xbf16>
    %cst_262 = arith.constant dense<0.000000e+00> : vector<4x128xf32>
    %509 = tpu.matmul %508, %469, %cst_262 {dimension_numbers = #tpu.dot_dimension_numbers<[1], [0], [0], [1], [0, 0, 1, 1], [], []>} : vector<4x16xbf16>, vector<16x128xbf16>, vector<4x128xf32> -> vector<4x128xf32>
    %510 = vector.extract_strided_slice %470 {offsets = [5, 0], sizes = [1, 128], strides = [1, 1]} : vector<9x128xf32> to vector<1x128xf32>
    %511 = vector.broadcast %510 : vector<1x128xf32> to vector<4x128xf32>
    %512 = arith.mulf %509, %511 : vector<4x128xf32>
    %513 = arith.addf %506, %512 : vector<4x128xf32>
    %c6_263 = arith.constant 6 : index
    %c0_264 = arith.constant 0 : index
    %c0_265 = arith.constant 0 : index
    %514 = vector.load %arg22[%c6_263, %c0_264, %c0_265] : memref<9x4x16xbf16, #tpu.memory_space<vmem>>, vector<1x4x16xbf16>
    %515 = vector.shape_cast %514 : vector<1x4x16xbf16> to vector<4x16xbf16>
    %cst_266 = arith.constant dense<0.000000e+00> : vector<4x128xf32>
    %516 = tpu.matmul %515, %469, %cst_266 {dimension_numbers = #tpu.dot_dimension_numbers<[1], [0], [0], [1], [0, 0, 1, 1], [], []>} : vector<4x16xbf16>, vector<16x128xbf16>, vector<4x128xf32> -> vector<4x128xf32>
    %517 = vector.extract_strided_slice %470 {offsets = [6, 0], sizes = [1, 128], strides = [1, 1]} : vector<9x128xf32> to vector<1x128xf32>
    %518 = vector.broadcast %517 : vector<1x128xf32> to vector<4x128xf32>
    %519 = arith.mulf %516, %518 : vector<4x128xf32>
    %c7_267 = arith.constant 7 : index
    %c0_268 = arith.constant 0 : index
    %c0_269 = arith.constant 0 : index
    %520 = vector.load %arg22[%c7_267, %c0_268, %c0_269] : memref<9x4x16xbf16, #tpu.memory_space<vmem>>, vector<1x4x16xbf16>
    %521 = vector.shape_cast %520 : vector<1x4x16xbf16> to vector<4x16xbf16>
    %cst_270 = arith.constant dense<0.000000e+00> : vector<4x128xf32>
    %522 = tpu.matmul %521, %469, %cst_270 {dimension_numbers = #tpu.dot_dimension_numbers<[1], [0], [0], [1], [0, 0, 1, 1], [], []>} : vector<4x16xbf16>, vector<16x128xbf16>, vector<4x128xf32> -> vector<4x128xf32>
    %523 = vector.extract_strided_slice %470 {offsets = [7, 0], sizes = [1, 128], strides = [1, 1]} : vector<9x128xf32> to vector<1x128xf32>
    %524 = vector.broadcast %523 : vector<1x128xf32> to vector<4x128xf32>
    %525 = arith.mulf %522, %524 : vector<4x128xf32>
    %526 = arith.addf %519, %525 : vector<4x128xf32>
    %c8_271 = arith.constant 8 : index
    %c0_272 = arith.constant 0 : index
    %c0_273 = arith.constant 0 : index
    %527 = vector.load %arg22[%c8_271, %c0_272, %c0_273] : memref<9x4x16xbf16, #tpu.memory_space<vmem>>, vector<1x4x16xbf16>
    %528 = vector.shape_cast %527 : vector<1x4x16xbf16> to vector<4x16xbf16>
    %cst_274 = arith.constant dense<0.000000e+00> : vector<4x128xf32>
    %529 = tpu.matmul %528, %469, %cst_274 {dimension_numbers = #tpu.dot_dimension_numbers<[1], [0], [0], [1], [0, 0, 1, 1], [], []>} : vector<4x16xbf16>, vector<16x128xbf16>, vector<4x128xf32> -> vector<4x128xf32>
    %530 = vector.extract_strided_slice %470 {offsets = [8, 0], sizes = [1, 128], strides = [1, 1]} : vector<9x128xf32> to vector<1x128xf32>
    %531 = vector.broadcast %530 : vector<1x128xf32> to vector<4x128xf32>
    %532 = arith.mulf %529, %531 : vector<4x128xf32>
    %533 = arith.addf %526, %532 : vector<4x128xf32>
    %534 = arith.addf %493, %513 : vector<4x128xf32>
    %535 = arith.addf %534, %533 : vector<4x128xf32>
    %536 = vector.extract_strided_slice %471 {offsets = [0, 0], sizes = [1, 128], strides = [1, 1]} : vector<2x128xf32> to vector<1x128xf32>
    %537 = vector.broadcast %536 : vector<1x128xf32> to vector<4x128xf32>
    %538 = arith.mulf %535, %537 : vector<4x128xf32>
    %539 = vector.extract_strided_slice %471 {offsets = [1, 0], sizes = [1, 128], strides = [1, 1]} : vector<2x128xf32> to vector<1x128xf32>
    %540 = vector.broadcast %539 : vector<1x128xf32> to vector<4x128xf32>
    %541 = arith.addf %538, %540 : vector<4x128xf32>
    %cst_275 = arith.constant 0.000000e+00 : f32
    %cst_276 = arith.constant 6.000000e+00 : f32
    %542 = vector.broadcast %cst_275 : f32 to vector<4x128xf32>
    %543 = arith.maximumf %542, %541 : vector<4x128xf32>
    %544 = vector.broadcast %cst_276 : f32 to vector<4x128xf32>
    %545 = arith.minimumf %544, %543 : vector<4x128xf32>
    %546 = arith.truncf %545 : vector<4x128xf32> to vector<4x128xbf16>
    %cst_277 = arith.constant dense<0.000000e+00> : vector<4x256xf32>
    %547 = tpu.matmul %546, %473, %cst_277 {dimension_numbers = #tpu.dot_dimension_numbers<[1], [0], [0], [1], [0, 0, 1, 1], [], []>} : vector<4x128xbf16>, vector<128x256xbf16>, vector<4x256xf32> -> vector<4x256xf32>
    %548 = vector.extract_strided_slice %472 {offsets = [0, 0], sizes = [1, 256], strides = [1, 1]} : vector<2x256xf32> to vector<1x256xf32>
    %549 = vector.broadcast %548 : vector<1x256xf32> to vector<4x256xf32>
    %550 = arith.mulf %547, %549 : vector<4x256xf32>
    %551 = vector.extract_strided_slice %472 {offsets = [1, 0], sizes = [1, 256], strides = [1, 1]} : vector<2x256xf32> to vector<1x256xf32>
    %552 = vector.broadcast %551 : vector<1x256xf32> to vector<4x256xf32>
    %553 = arith.addf %550, %552 : vector<4x256xf32>
    %cst_278 = arith.constant 0.000000e+00 : f32
    %cst_279 = arith.constant 6.000000e+00 : f32
    %554 = vector.broadcast %cst_278 : f32 to vector<4x256xf32>
    %555 = arith.maximumf %554, %553 : vector<4x256xf32>
    %556 = vector.broadcast %cst_279 : f32 to vector<4x256xf32>
    %557 = arith.minimumf %556, %555 : vector<4x256xf32>
    %558 = arith.truncf %557 : vector<4x256xf32> to vector<4x256xbf16>
    %c0_280 = arith.constant 0 : index
    %c0_281 = arith.constant 0 : index
    %559 = vector.load %arg28[%c0_280, %c0_281] : memref<9x256xf32, #tpu.memory_space<vmem>>, vector<9x256xf32>
    %c0_282 = arith.constant 0 : index
    %c0_283 = arith.constant 0 : index
    %560 = vector.load %arg30[%c0_282, %c0_283] : memref<2x256xf32, #tpu.memory_space<vmem>>, vector<2x256xf32>
    %c0_284 = arith.constant 0 : index
    %c0_285 = arith.constant 0 : index
    %561 = vector.load %arg31[%c0_284, %c0_285] : memref<2x256xf32, #tpu.memory_space<vmem>>, vector<2x256xf32>
    %c0_286 = arith.constant 0 : index
    %c0_287 = arith.constant 0 : index
    %562 = vector.load %arg29[%c0_286, %c0_287] : memref<256x256xbf16, #tpu.memory_space<vmem>>, vector<256x256xbf16>
    %c0_288 = arith.constant 0 : index
    %c0_289 = arith.constant 0 : index
    %c0_290 = arith.constant 0 : index
    %563 = vector.load %arg27[%c0_288, %c0_289, %c0_290] : memref<9x4x4xbf16, #tpu.memory_space<vmem>>, vector<1x4x4xbf16>
    %564 = vector.shape_cast %563 : vector<1x4x4xbf16> to vector<4x4xbf16>
    %cst_291 = arith.constant dense<0.000000e+00> : vector<4x256xf32>
    %565 = tpu.matmul %564, %558, %cst_291 {dimension_numbers = #tpu.dot_dimension_numbers<[1], [0], [0], [1], [0, 0, 1, 1], [], []>} : vector<4x4xbf16>, vector<4x256xbf16>, vector<4x256xf32> -> vector<4x256xf32>
    %566 = vector.extract_strided_slice %559 {offsets = [0, 0], sizes = [1, 256], strides = [1, 1]} : vector<9x256xf32> to vector<1x256xf32>
    %567 = vector.broadcast %566 : vector<1x256xf32> to vector<4x256xf32>
    %568 = arith.mulf %565, %567 : vector<4x256xf32>
    %c1_292 = arith.constant 1 : index
    %c0_293 = arith.constant 0 : index
    %c0_294 = arith.constant 0 : index
    %569 = vector.load %arg27[%c1_292, %c0_293, %c0_294] : memref<9x4x4xbf16, #tpu.memory_space<vmem>>, vector<1x4x4xbf16>
    %570 = vector.shape_cast %569 : vector<1x4x4xbf16> to vector<4x4xbf16>
    %cst_295 = arith.constant dense<0.000000e+00> : vector<4x256xf32>
    %571 = tpu.matmul %570, %558, %cst_295 {dimension_numbers = #tpu.dot_dimension_numbers<[1], [0], [0], [1], [0, 0, 1, 1], [], []>} : vector<4x4xbf16>, vector<4x256xbf16>, vector<4x256xf32> -> vector<4x256xf32>
    %572 = vector.extract_strided_slice %559 {offsets = [1, 0], sizes = [1, 256], strides = [1, 1]} : vector<9x256xf32> to vector<1x256xf32>
    %573 = vector.broadcast %572 : vector<1x256xf32> to vector<4x256xf32>
    %574 = arith.mulf %571, %573 : vector<4x256xf32>
    %575 = arith.addf %568, %574 : vector<4x256xf32>
    %c2_296 = arith.constant 2 : index
    %c0_297 = arith.constant 0 : index
    %c0_298 = arith.constant 0 : index
    %576 = vector.load %arg27[%c2_296, %c0_297, %c0_298] : memref<9x4x4xbf16, #tpu.memory_space<vmem>>, vector<1x4x4xbf16>
    %577 = vector.shape_cast %576 : vector<1x4x4xbf16> to vector<4x4xbf16>
    %cst_299 = arith.constant dense<0.000000e+00> : vector<4x256xf32>
    %578 = tpu.matmul %577, %558, %cst_299 {dimension_numbers = #tpu.dot_dimension_numbers<[1], [0], [0], [1], [0, 0, 1, 1], [], []>} : vector<4x4xbf16>, vector<4x256xbf16>, vector<4x256xf32> -> vector<4x256xf32>
    %579 = vector.extract_strided_slice %559 {offsets = [2, 0], sizes = [1, 256], strides = [1, 1]} : vector<9x256xf32> to vector<1x256xf32>
    %580 = vector.broadcast %579 : vector<1x256xf32> to vector<4x256xf32>
    %581 = arith.mulf %578, %580 : vector<4x256xf32>
    %582 = arith.addf %575, %581 : vector<4x256xf32>
    %c3_300 = arith.constant 3 : index
    %c0_301 = arith.constant 0 : index
    %c0_302 = arith.constant 0 : index
    %583 = vector.load %arg27[%c3_300, %c0_301, %c0_302] : memref<9x4x4xbf16, #tpu.memory_space<vmem>>, vector<1x4x4xbf16>
    %584 = vector.shape_cast %583 : vector<1x4x4xbf16> to vector<4x4xbf16>
    %cst_303 = arith.constant dense<0.000000e+00> : vector<4x256xf32>
    %585 = tpu.matmul %584, %558, %cst_303 {dimension_numbers = #tpu.dot_dimension_numbers<[1], [0], [0], [1], [0, 0, 1, 1], [], []>} : vector<4x4xbf16>, vector<4x256xbf16>, vector<4x256xf32> -> vector<4x256xf32>
    %586 = vector.extract_strided_slice %559 {offsets = [3, 0], sizes = [1, 256], strides = [1, 1]} : vector<9x256xf32> to vector<1x256xf32>
    %587 = vector.broadcast %586 : vector<1x256xf32> to vector<4x256xf32>
    %588 = arith.mulf %585, %587 : vector<4x256xf32>
    %c4_304 = arith.constant 4 : index
    %c0_305 = arith.constant 0 : index
    %c0_306 = arith.constant 0 : index
    %589 = vector.load %arg27[%c4_304, %c0_305, %c0_306] : memref<9x4x4xbf16, #tpu.memory_space<vmem>>, vector<1x4x4xbf16>
    %590 = vector.shape_cast %589 : vector<1x4x4xbf16> to vector<4x4xbf16>
    %cst_307 = arith.constant dense<0.000000e+00> : vector<4x256xf32>
    %591 = tpu.matmul %590, %558, %cst_307 {dimension_numbers = #tpu.dot_dimension_numbers<[1], [0], [0], [1], [0, 0, 1, 1], [], []>} : vector<4x4xbf16>, vector<4x256xbf16>, vector<4x256xf32> -> vector<4x256xf32>
    %592 = vector.extract_strided_slice %559 {offsets = [4, 0], sizes = [1, 256], strides = [1, 1]} : vector<9x256xf32> to vector<1x256xf32>
    %593 = vector.broadcast %592 : vector<1x256xf32> to vector<4x256xf32>
    %594 = arith.mulf %591, %593 : vector<4x256xf32>
    %595 = arith.addf %588, %594 : vector<4x256xf32>
    %c5_308 = arith.constant 5 : index
    %c0_309 = arith.constant 0 : index
    %c0_310 = arith.constant 0 : index
    %596 = vector.load %arg27[%c5_308, %c0_309, %c0_310] : memref<9x4x4xbf16, #tpu.memory_space<vmem>>, vector<1x4x4xbf16>
    %597 = vector.shape_cast %596 : vector<1x4x4xbf16> to vector<4x4xbf16>
    %cst_311 = arith.constant dense<0.000000e+00> : vector<4x256xf32>
    %598 = tpu.matmul %597, %558, %cst_311 {dimension_numbers = #tpu.dot_dimension_numbers<[1], [0], [0], [1], [0, 0, 1, 1], [], []>} : vector<4x4xbf16>, vector<4x256xbf16>, vector<4x256xf32> -> vector<4x256xf32>
    %599 = vector.extract_strided_slice %559 {offsets = [5, 0], sizes = [1, 256], strides = [1, 1]} : vector<9x256xf32> to vector<1x256xf32>
    %600 = vector.broadcast %599 : vector<1x256xf32> to vector<4x256xf32>
    %601 = arith.mulf %598, %600 : vector<4x256xf32>
    %602 = arith.addf %595, %601 : vector<4x256xf32>
    %c6_312 = arith.constant 6 : index
    %c0_313 = arith.constant 0 : index
    %c0_314 = arith.constant 0 : index
    %603 = vector.load %arg27[%c6_312, %c0_313, %c0_314] : memref<9x4x4xbf16, #tpu.memory_space<vmem>>, vector<1x4x4xbf16>
    %604 = vector.shape_cast %603 : vector<1x4x4xbf16> to vector<4x4xbf16>
    %cst_315 = arith.constant dense<0.000000e+00> : vector<4x256xf32>
    %605 = tpu.matmul %604, %558, %cst_315 {dimension_numbers = #tpu.dot_dimension_numbers<[1], [0], [0], [1], [0, 0, 1, 1], [], []>} : vector<4x4xbf16>, vector<4x256xbf16>, vector<4x256xf32> -> vector<4x256xf32>
    %606 = vector.extract_strided_slice %559 {offsets = [6, 0], sizes = [1, 256], strides = [1, 1]} : vector<9x256xf32> to vector<1x256xf32>
    %607 = vector.broadcast %606 : vector<1x256xf32> to vector<4x256xf32>
    %608 = arith.mulf %605, %607 : vector<4x256xf32>
    %c7_316 = arith.constant 7 : index
    %c0_317 = arith.constant 0 : index
    %c0_318 = arith.constant 0 : index
    %609 = vector.load %arg27[%c7_316, %c0_317, %c0_318] : memref<9x4x4xbf16, #tpu.memory_space<vmem>>, vector<1x4x4xbf16>
    %610 = vector.shape_cast %609 : vector<1x4x4xbf16> to vector<4x4xbf16>
    %cst_319 = arith.constant dense<0.000000e+00> : vector<4x256xf32>
    %611 = tpu.matmul %610, %558, %cst_319 {dimension_numbers = #tpu.dot_dimension_numbers<[1], [0], [0], [1], [0, 0, 1, 1], [], []>} : vector<4x4xbf16>, vector<4x256xbf16>, vector<4x256xf32> -> vector<4x256xf32>
    %612 = vector.extract_strided_slice %559 {offsets = [7, 0], sizes = [1, 256], strides = [1, 1]} : vector<9x256xf32> to vector<1x256xf32>
    %613 = vector.broadcast %612 : vector<1x256xf32> to vector<4x256xf32>
    %614 = arith.mulf %611, %613 : vector<4x256xf32>
    %615 = arith.addf %608, %614 : vector<4x256xf32>
    %c8_320 = arith.constant 8 : index
    %c0_321 = arith.constant 0 : index
    %c0_322 = arith.constant 0 : index
    %616 = vector.load %arg27[%c8_320, %c0_321, %c0_322] : memref<9x4x4xbf16, #tpu.memory_space<vmem>>, vector<1x4x4xbf16>
    %617 = vector.shape_cast %616 : vector<1x4x4xbf16> to vector<4x4xbf16>
    %cst_323 = arith.constant dense<0.000000e+00> : vector<4x256xf32>
    %618 = tpu.matmul %617, %558, %cst_323 {dimension_numbers = #tpu.dot_dimension_numbers<[1], [0], [0], [1], [0, 0, 1, 1], [], []>} : vector<4x4xbf16>, vector<4x256xbf16>, vector<4x256xf32> -> vector<4x256xf32>
    %619 = vector.extract_strided_slice %559 {offsets = [8, 0], sizes = [1, 256], strides = [1, 1]} : vector<9x256xf32> to vector<1x256xf32>
    %620 = vector.broadcast %619 : vector<1x256xf32> to vector<4x256xf32>
    %621 = arith.mulf %618, %620 : vector<4x256xf32>
    %622 = arith.addf %615, %621 : vector<4x256xf32>
    %623 = arith.addf %582, %602 : vector<4x256xf32>
    %624 = arith.addf %623, %622 : vector<4x256xf32>
    %625 = vector.extract_strided_slice %560 {offsets = [0, 0], sizes = [1, 256], strides = [1, 1]} : vector<2x256xf32> to vector<1x256xf32>
    %626 = vector.broadcast %625 : vector<1x256xf32> to vector<4x256xf32>
    %627 = arith.mulf %624, %626 : vector<4x256xf32>
    %628 = vector.extract_strided_slice %560 {offsets = [1, 0], sizes = [1, 256], strides = [1, 1]} : vector<2x256xf32> to vector<1x256xf32>
    %629 = vector.broadcast %628 : vector<1x256xf32> to vector<4x256xf32>
    %630 = arith.addf %627, %629 : vector<4x256xf32>
    %cst_324 = arith.constant 0.000000e+00 : f32
    %cst_325 = arith.constant 6.000000e+00 : f32
    %631 = vector.broadcast %cst_324 : f32 to vector<4x256xf32>
    %632 = arith.maximumf %631, %630 : vector<4x256xf32>
    %633 = vector.broadcast %cst_325 : f32 to vector<4x256xf32>
    %634 = arith.minimumf %633, %632 : vector<4x256xf32>
    %635 = arith.truncf %634 : vector<4x256xf32> to vector<4x256xbf16>
    %cst_326 = arith.constant dense<0.000000e+00> : vector<4x256xf32>
    %636 = tpu.matmul %635, %562, %cst_326 {dimension_numbers = #tpu.dot_dimension_numbers<[1], [0], [0], [1], [0, 0, 1, 1], [], []>} : vector<4x256xbf16>, vector<256x256xbf16>, vector<4x256xf32> -> vector<4x256xf32>
    %637 = vector.extract_strided_slice %561 {offsets = [0, 0], sizes = [1, 256], strides = [1, 1]} : vector<2x256xf32> to vector<1x256xf32>
    %638 = vector.broadcast %637 : vector<1x256xf32> to vector<4x256xf32>
    %639 = arith.mulf %636, %638 : vector<4x256xf32>
    %640 = vector.extract_strided_slice %561 {offsets = [1, 0], sizes = [1, 256], strides = [1, 1]} : vector<2x256xf32> to vector<1x256xf32>
    %641 = vector.broadcast %640 : vector<1x256xf32> to vector<4x256xf32>
    %642 = arith.addf %639, %641 : vector<4x256xf32>
    %cst_327 = arith.constant 0.000000e+00 : f32
    %cst_328 = arith.constant 6.000000e+00 : f32
    %643 = vector.broadcast %cst_327 : f32 to vector<4x256xf32>
    %644 = arith.maximumf %643, %642 : vector<4x256xf32>
    %645 = vector.broadcast %cst_328 : f32 to vector<4x256xf32>
    %646 = arith.minimumf %645, %644 : vector<4x256xf32>
    %647 = arith.truncf %646 : vector<4x256xf32> to vector<4x256xbf16>
    %648 = arith.extf %647 : vector<4x256xbf16> to vector<4x256xf32>
    %c0_329 = arith.constant 0 : index
    %c0_330 = arith.constant 0 : index
    %649 = vector.load %arg51[%c0_329, %c0_330] : memref<1x256xf32, #tpu.memory_space<vmem>>, vector<1x256xf32>
    %650 = vector.broadcast %649 : vector<1x256xf32> to vector<4x256xf32>
    %651 = arith.mulf %648, %650 : vector<4x256xf32>
    %cst_331 = arith.constant dense<0.000000e+00> : vector<4xf32>
    %652 = vector.multi_reduction <add>, %651, %cst_331 [1] : vector<4x256xf32> to vector<4xf32>
    %653 = vector.shape_cast %652 : vector<4xf32> to vector<4x1xf32>
    %c0_332 = arith.constant 0 : index
    %c0_333 = arith.constant 0 : index
    %654 = vector.load %arg48[%c0_332, %c0_333] : memref<1x1xf32, #tpu.memory_space<vmem>>, vector<1x1xf32>
    %655 = vector.broadcast %654 : vector<1x1xf32> to vector<4x1xf32>
    %656 = arith.addf %653, %655 : vector<4x1xf32>
    %657 = arith.negf %656 : vector<4x1xf32>
    %658 = math.exp %657 : vector<4x1xf32>
    %cst_334 = arith.constant 1.000000e+00 : f32
    %659 = vector.broadcast %cst_334 : f32 to vector<4x1xf32>
    %660 = arith.addf %659, %658 : vector<4x1xf32>
    %661 = arith.divf %659, %660 : vector<4x1xf32>
    %662 = vector.broadcast %661 : vector<4x1xf32> to vector<4x256xf32>
    %663 = arith.mulf %648, %662 : vector<4x256xf32>
    %cst_335 = arith.constant dense<0.000000e+00> : vector<256xf32>
    %664 = vector.multi_reduction <add>, %663, %cst_335 [0] : vector<4x256xf32> to vector<256xf32>
    %665 = vector.shape_cast %664 : vector<256xf32> to vector<1x256xf32>
    %cst_336 = arith.constant 4.000000e+00 : f32
    %666 = vector.broadcast %cst_336 : f32 to vector<1x256xf32>
    %667 = arith.divf %665, %666 : vector<1x256xf32>
    %cst_337 = arith.constant dense<0xFF800000> : vector<256xf32>
    %668 = vector.multi_reduction <maximumf>, %663, %cst_337 [0] : vector<4x256xf32> to vector<256xf32>
    %669 = vector.shape_cast %668 : vector<256xf32> to vector<1x256xf32>
    %670 = tpu.iota {dimensions = array<i32: 0>} : vector<2x256xi32>
    %c0_i32_338 = arith.constant 0 : i32
    %671 = vector.broadcast %c0_i32_338 : i32 to vector<2x256xi32>
    %672 = arith.cmpi eq, %670, %671 : vector<2x256xi32>
    %673 = vector.shape_cast %667 : vector<1x256xf32> to vector<1x256xf32>
    %674 = vector.broadcast %673 : vector<1x256xf32> to vector<2x256xf32>
    %675 = vector.shape_cast %669 : vector<1x256xf32> to vector<1x256xf32>
    %676 = vector.broadcast %675 : vector<1x256xf32> to vector<2x256xf32>
    %677 = arith.select %672, %674, %676 : vector<2x256xi1>, vector<2x256xf32>
    %678 = arith.truncf %677 : vector<2x256xf32> to vector<2x256xbf16>
    %c0_339 = arith.constant 0 : index
    %c0_340 = arith.constant 0 : index
    %679 = vector.load %arg49[%c0_339, %c0_340] : memref<256x32xbf16, #tpu.memory_space<vmem>>, vector<256x32xbf16>
    %cst_341 = arith.constant dense<0.000000e+00> : vector<2x32xf32>
    %680 = tpu.matmul %678, %679, %cst_341 {dimension_numbers = #tpu.dot_dimension_numbers<[1], [0], [0], [1], [0, 0, 1, 1], [], []>} : vector<2x256xbf16>, vector<256x32xbf16>, vector<2x32xf32> -> vector<2x32xf32>
    %cst_342 = arith.constant 0.000000e+00 : f32
    %681 = vector.broadcast %cst_342 : f32 to vector<2x32xf32>
    %682 = arith.maximumf %680, %681 : vector<2x32xf32>
    %683 = arith.truncf %682 : vector<2x32xf32> to vector<2x32xbf16>
    %c0_343 = arith.constant 0 : index
    %c0_344 = arith.constant 0 : index
    %684 = vector.load %arg50[%c0_343, %c0_344] : memref<32x256xbf16, #tpu.memory_space<vmem>>, vector<32x256xbf16>
    %cst_345 = arith.constant dense<0.000000e+00> : vector<2x256xf32>
    %685 = tpu.matmul %683, %684, %cst_345 {dimension_numbers = #tpu.dot_dimension_numbers<[1], [0], [0], [1], [0, 0, 1, 1], [], []>} : vector<2x32xbf16>, vector<32x256xbf16>, vector<2x256xf32> -> vector<2x256xf32>
    %686 = vector.extract_strided_slice %685 {offsets = [0, 0], sizes = [1, 256], strides = [1, 1]} : vector<2x256xf32> to vector<1x256xf32>
    %687 = vector.extract_strided_slice %685 {offsets = [1, 0], sizes = [1, 256], strides = [1, 1]} : vector<2x256xf32> to vector<1x256xf32>
    %688 = arith.addf %686, %687 : vector<1x256xf32>
    %689 = arith.negf %688 : vector<1x256xf32>
    %690 = math.exp %689 : vector<1x256xf32>
    %cst_346 = arith.constant 1.000000e+00 : f32
    %691 = vector.broadcast %cst_346 : f32 to vector<1x256xf32>
    %692 = arith.addf %691, %690 : vector<1x256xf32>
    %693 = arith.divf %691, %692 : vector<1x256xf32>
    %694 = vector.broadcast %693 : vector<1x256xf32> to vector<4x256xf32>
    %695 = arith.mulf %663, %694 : vector<4x256xf32>
    %696 = arith.truncf %695 : vector<4x256xf32> to vector<4x256xbf16>
    %697 = arith.extf %696 : vector<4x256xbf16> to vector<4x256xf32>
    %c0_347 = arith.constant 0 : index
    %c0_348 = arith.constant 0 : index
    %698 = vector.load %arg39[%c0_347, %c0_348] : memref<1x256xf32, #tpu.memory_space<vmem>>, vector<1x256xf32>
    %699 = vector.broadcast %698 : vector<1x256xf32> to vector<4x256xf32>
    %700 = arith.mulf %697, %699 : vector<4x256xf32>
    %cst_349 = arith.constant dense<0.000000e+00> : vector<4xf32>
    %701 = vector.multi_reduction <add>, %700, %cst_349 [1] : vector<4x256xf32> to vector<4xf32>
    %702 = vector.shape_cast %701 : vector<4xf32> to vector<4x1xf32>
    %c0_350 = arith.constant 0 : index
    %c0_351 = arith.constant 0 : index
    %703 = vector.load %arg36[%c0_350, %c0_351] : memref<1x1xf32, #tpu.memory_space<vmem>>, vector<1x1xf32>
    %704 = vector.broadcast %703 : vector<1x1xf32> to vector<4x1xf32>
    %705 = arith.addf %702, %704 : vector<4x1xf32>
    %706 = arith.negf %705 : vector<4x1xf32>
    %707 = math.exp %706 : vector<4x1xf32>
    %cst_352 = arith.constant 1.000000e+00 : f32
    %708 = vector.broadcast %cst_352 : f32 to vector<4x1xf32>
    %709 = arith.addf %708, %707 : vector<4x1xf32>
    %710 = arith.divf %708, %709 : vector<4x1xf32>
    %711 = vector.broadcast %710 : vector<4x1xf32> to vector<4x256xf32>
    %712 = arith.mulf %697, %711 : vector<4x256xf32>
    %cst_353 = arith.constant dense<0.000000e+00> : vector<256xf32>
    %713 = vector.multi_reduction <add>, %712, %cst_353 [0] : vector<4x256xf32> to vector<256xf32>
    %714 = vector.shape_cast %713 : vector<256xf32> to vector<1x256xf32>
    %cst_354 = arith.constant 4.000000e+00 : f32
    %715 = vector.broadcast %cst_354 : f32 to vector<1x256xf32>
    %716 = arith.divf %714, %715 : vector<1x256xf32>
    %cst_355 = arith.constant dense<0xFF800000> : vector<256xf32>
    %717 = vector.multi_reduction <maximumf>, %712, %cst_355 [0] : vector<4x256xf32> to vector<256xf32>
    %718 = vector.shape_cast %717 : vector<256xf32> to vector<1x256xf32>
    %719 = tpu.iota {dimensions = array<i32: 0>} : vector<2x256xi32>
    %c0_i32_356 = arith.constant 0 : i32
    %720 = vector.broadcast %c0_i32_356 : i32 to vector<2x256xi32>
    %721 = arith.cmpi eq, %719, %720 : vector<2x256xi32>
    %722 = vector.shape_cast %716 : vector<1x256xf32> to vector<1x256xf32>
    %723 = vector.broadcast %722 : vector<1x256xf32> to vector<2x256xf32>
    %724 = vector.shape_cast %718 : vector<1x256xf32> to vector<1x256xf32>
    %725 = vector.broadcast %724 : vector<1x256xf32> to vector<2x256xf32>
    %726 = arith.select %721, %723, %725 : vector<2x256xi1>, vector<2x256xf32>
    %727 = arith.truncf %726 : vector<2x256xf32> to vector<2x256xbf16>
    %c0_357 = arith.constant 0 : index
    %c0_358 = arith.constant 0 : index
    %728 = vector.load %arg37[%c0_357, %c0_358] : memref<256x32xbf16, #tpu.memory_space<vmem>>, vector<256x32xbf16>
    %cst_359 = arith.constant dense<0.000000e+00> : vector<2x32xf32>
    %729 = tpu.matmul %727, %728, %cst_359 {dimension_numbers = #tpu.dot_dimension_numbers<[1], [0], [0], [1], [0, 0, 1, 1], [], []>} : vector<2x256xbf16>, vector<256x32xbf16>, vector<2x32xf32> -> vector<2x32xf32>
    %cst_360 = arith.constant 0.000000e+00 : f32
    %730 = vector.broadcast %cst_360 : f32 to vector<2x32xf32>
    %731 = arith.maximumf %729, %730 : vector<2x32xf32>
    %732 = arith.truncf %731 : vector<2x32xf32> to vector<2x32xbf16>
    %c0_361 = arith.constant 0 : index
    %c0_362 = arith.constant 0 : index
    %733 = vector.load %arg38[%c0_361, %c0_362] : memref<32x256xbf16, #tpu.memory_space<vmem>>, vector<32x256xbf16>
    %cst_363 = arith.constant dense<0.000000e+00> : vector<2x256xf32>
    %734 = tpu.matmul %732, %733, %cst_363 {dimension_numbers = #tpu.dot_dimension_numbers<[1], [0], [0], [1], [0, 0, 1, 1], [], []>} : vector<2x32xbf16>, vector<32x256xbf16>, vector<2x256xf32> -> vector<2x256xf32>
    %735 = vector.extract_strided_slice %734 {offsets = [0, 0], sizes = [1, 256], strides = [1, 1]} : vector<2x256xf32> to vector<1x256xf32>
    %736 = vector.extract_strided_slice %734 {offsets = [1, 0], sizes = [1, 256], strides = [1, 1]} : vector<2x256xf32> to vector<1x256xf32>
    %737 = arith.addf %735, %736 : vector<1x256xf32>
    %738 = arith.negf %737 : vector<1x256xf32>
    %739 = math.exp %738 : vector<1x256xf32>
    %cst_364 = arith.constant 1.000000e+00 : f32
    %740 = vector.broadcast %cst_364 : f32 to vector<1x256xf32>
    %741 = arith.addf %740, %739 : vector<1x256xf32>
    %742 = arith.divf %740, %741 : vector<1x256xf32>
    %743 = vector.broadcast %742 : vector<1x256xf32> to vector<4x256xf32>
    %744 = arith.mulf %712, %743 : vector<4x256xf32>
    %745 = arith.truncf %744 : vector<4x256xf32> to vector<4x256xbf16>
    %746 = arith.extf %745 : vector<4x256xbf16> to vector<4x256xf32>
    %cst_365 = arith.constant dense<0.000000e+00> : vector<256xf32>
    %747 = vector.multi_reduction <add>, %746, %cst_365 [0] : vector<4x256xf32> to vector<256xf32>
    %748 = vector.shape_cast %747 : vector<256xf32> to vector<1x256xf32>
    %cst_366 = arith.constant 4.000000e+00 : f32
    %749 = vector.broadcast %cst_366 : f32 to vector<1x256xf32>
    %750 = arith.divf %748, %749 : vector<1x256xf32>
    %751 = arith.truncf %750 : vector<1x256xf32> to vector<1x256xbf16>
    %c0_367 = arith.constant 0 : index
    %c0_368 = arith.constant 0 : index
    %752 = vector.load %arg35[%c0_367, %c0_368] : memref<256x10xbf16, #tpu.memory_space<vmem>>, vector<256x10xbf16>
    %cst_369 = arith.constant dense<0.000000e+00> : vector<1x10xf32>
    %753 = tpu.matmul %751, %752, %cst_369 {dimension_numbers = #tpu.dot_dimension_numbers<[1], [0], [0], [1], [0, 0, 1, 1], [], []>} : vector<1x256xbf16>, vector<256x10xbf16>, vector<1x10xf32> -> vector<1x10xf32>
    %c0_370 = arith.constant 0 : index
    %c0_371 = arith.constant 0 : index
    %754 = vector.load %arg34[%c0_370, %c0_371] : memref<1x10xf32, #tpu.memory_space<vmem>>, vector<1x10xf32>
    %755 = arith.addf %753, %754 : vector<1x10xf32>
    %c0_372 = arith.constant 0 : index
    %c0_373 = arith.constant 0 : index
    %c0_374 = arith.constant 0 : index
    %756 = vector.load %arg52[%c0_372, %c0_373, %c0_374] : memref<1x1x10xf32, #tpu.memory_space<vmem>>, vector<1x1x10xf32>
    %757 = vector.shape_cast %756 : vector<1x1x10xf32> to vector<1x10xf32>
    %758 = vector.shape_cast %755 : vector<1x10xf32> to vector<1x1x10xf32>
    tpu.vector_store %arg52[%c0_372, %c0_373, %c0_374], %758 {strides = array<i32>} : memref<1x1x10xf32, #tpu.memory_space<vmem>>, vector<1x1x10xf32>,
    return
  }
  func.func @transform_0(%arg0: i32) -> (i32, i32, i32) {
    %c0_i32 = arith.constant 0 : i32
    %c0_i32_0 = arith.constant 0 : i32
    %c0_i32_1 = arith.constant 0 : i32
    return %arg0, %c0_i32, %c0_i32_0 : i32, i32, i32
  }
  func.func @transform_1(%arg0: i32) -> (i32, i32, i32) {
    %c0_i32 = arith.constant 0 : i32
    %c0_i32_0 = arith.constant 0 : i32
    %c0_i32_1 = arith.constant 0 : i32
    %c0_i32_2 = arith.constant 0 : i32
    return %c0_i32, %c0_i32_0, %c0_i32_1 : i32, i32, i32
  }
  func.func @transform_2(%arg0: i32) -> (i32, i32) {
    %c0_i32 = arith.constant 0 : i32
    %c0_i32_0 = arith.constant 0 : i32
    %c0_i32_1 = arith.constant 0 : i32
    return %c0_i32, %c0_i32_0 : i32, i32
  }
  func.func @transform_3(%arg0: i32) -> (i32, i32) {
    %c0_i32 = arith.constant 0 : i32
    %c0_i32_0 = arith.constant 0 : i32
    %c0_i32_1 = arith.constant 0 : i32
    return %c0_i32, %c0_i32_0 : i32, i32
  }
  func.func @transform_4(%arg0: i32) -> (i32, i32) {
    %c0_i32 = arith.constant 0 : i32
    %c0_i32_0 = arith.constant 0 : i32
    %c0_i32_1 = arith.constant 0 : i32
    return %c0_i32, %c0_i32_0 : i32, i32
  }
  func.func @transform_5(%arg0: i32) -> (i32, i32) {
    %c0_i32 = arith.constant 0 : i32
    %c0_i32_0 = arith.constant 0 : i32
    %c0_i32_1 = arith.constant 0 : i32
    return %c0_i32, %c0_i32_0 : i32, i32
  }
  func.func @transform_6(%arg0: i32) -> (i32, i32, i32) {
    %c0_i32 = arith.constant 0 : i32
    %c0_i32_0 = arith.constant 0 : i32
    %c0_i32_1 = arith.constant 0 : i32
    %c0_i32_2 = arith.constant 0 : i32
    return %c0_i32, %c0_i32_0, %c0_i32_1 : i32, i32, i32
  }
  func.func @transform_7(%arg0: i32) -> (i32, i32) {
    %c0_i32 = arith.constant 0 : i32
    %c0_i32_0 = arith.constant 0 : i32
    %c0_i32_1 = arith.constant 0 : i32
    return %c0_i32, %c0_i32_0 : i32, i32
  }
  func.func @transform_8(%arg0: i32) -> (i32, i32) {
    %c0_i32 = arith.constant 0 : i32
    %c0_i32_0 = arith.constant 0 : i32
    %c0_i32_1 = arith.constant 0 : i32
    return %c0_i32, %c0_i32_0 : i32, i32
  }
  func.func @transform_9(%arg0: i32) -> (i32, i32) {
    %c0_i32 = arith.constant 0 : i32
    %c0_i32_0 = arith.constant 0 : i32
    %c0_i32_1 = arith.constant 0 : i32
    return %c0_i32, %c0_i32_0 : i32, i32
  }
  func.func @transform_10(%arg0: i32) -> (i32, i32) {
    %c0_i32 = arith.constant 0 : i32
    %c0_i32_0 = arith.constant 0 : i32
    %c0_i32_1 = arith.constant 0 : i32
    return %c0_i32, %c0_i32_0 : i32, i32
  }
  func.func @transform_11(%arg0: i32) -> (i32, i32, i32) {
    %c0_i32 = arith.constant 0 : i32
    %c0_i32_0 = arith.constant 0 : i32
    %c0_i32_1 = arith.constant 0 : i32
    %c0_i32_2 = arith.constant 0 : i32
    return %c0_i32, %c0_i32_0, %c0_i32_1 : i32, i32, i32
  }
  func.func @transform_12(%arg0: i32) -> (i32, i32) {
    %c0_i32 = arith.constant 0 : i32
    %c0_i32_0 = arith.constant 0 : i32
    %c0_i32_1 = arith.constant 0 : i32
    return %c0_i32, %c0_i32_0 : i32, i32
  }
  func.func @transform_13(%arg0: i32) -> (i32, i32) {
    %c0_i32 = arith.constant 0 : i32
    %c0_i32_0 = arith.constant 0 : i32
    %c0_i32_1 = arith.constant 0 : i32
    return %c0_i32, %c0_i32_0 : i32, i32
  }
  func.func @transform_14(%arg0: i32) -> (i32, i32) {
    %c0_i32 = arith.constant 0 : i32
    %c0_i32_0 = arith.constant 0 : i32
    %c0_i32_1 = arith.constant 0 : i32
    return %c0_i32, %c0_i32_0 : i32, i32
  }
  func.func @transform_15(%arg0: i32) -> (i32, i32) {
    %c0_i32 = arith.constant 0 : i32
    %c0_i32_0 = arith.constant 0 : i32
    %c0_i32_1 = arith.constant 0 : i32
    return %c0_i32, %c0_i32_0 : i32, i32
  }
  func.func @transform_16(%arg0: i32) -> (i32, i32, i32) {
    %c0_i32 = arith.constant 0 : i32
    %c0_i32_0 = arith.constant 0 : i32
    %c0_i32_1 = arith.constant 0 : i32
    %c0_i32_2 = arith.constant 0 : i32
    return %c0_i32, %c0_i32_0, %c0_i32_1 : i32, i32, i32
  }
  func.func @transform_17(%arg0: i32) -> (i32, i32) {
    %c0_i32 = arith.constant 0 : i32
    %c0_i32_0 = arith.constant 0 : i32
    %c0_i32_1 = arith.constant 0 : i32
    return %c0_i32, %c0_i32_0 : i32, i32
  }
  func.func @transform_18(%arg0: i32) -> (i32, i32) {
    %c0_i32 = arith.constant 0 : i32
    %c0_i32_0 = arith.constant 0 : i32
    %c0_i32_1 = arith.constant 0 : i32
    return %c0_i32, %c0_i32_0 : i32, i32
  }
  func.func @transform_19(%arg0: i32) -> (i32, i32) {
    %c0_i32 = arith.constant 0 : i32
    %c0_i32_0 = arith.constant 0 : i32
    %c0_i32_1 = arith.constant 0 : i32
    return %c0_i32, %c0_i32_0 : i32, i32
  }
  func.func @transform_20(%arg0: i32) -> (i32, i32) {
    %c0_i32 = arith.constant 0 : i32
    %c0_i32_0 = arith.constant 0 : i32
    %c0_i32_1 = arith.constant 0 : i32
    return %c0_i32, %c0_i32_0 : i32, i32
  }
  func.func @transform_21(%arg0: i32) -> (i32, i32, i32) {
    %c0_i32 = arith.constant 0 : i32
    %c0_i32_0 = arith.constant 0 : i32
    %c0_i32_1 = arith.constant 0 : i32
    %c0_i32_2 = arith.constant 0 : i32
    return %c0_i32, %c0_i32_0, %c0_i32_1 : i32, i32, i32
  }
  func.func @transform_22(%arg0: i32) -> (i32, i32) {
    %c0_i32 = arith.constant 0 : i32
    %c0_i32_0 = arith.constant 0 : i32
    %c0_i32_1 = arith.constant 0 : i32
    return %c0_i32, %c0_i32_0 : i32, i32
  }
  func.func @transform_23(%arg0: i32) -> (i32, i32) {
    %c0_i32 = arith.constant 0 : i32
    %c0_i32_0 = arith.constant 0 : i32
    %c0_i32_1 = arith.constant 0 : i32
    return %c0_i32, %c0_i32_0 : i32, i32
  }
  func.func @transform_24(%arg0: i32) -> (i32, i32) {
    %c0_i32 = arith.constant 0 : i32
    %c0_i32_0 = arith.constant 0 : i32
    %c0_i32_1 = arith.constant 0 : i32
    return %c0_i32, %c0_i32_0 : i32, i32
  }
  func.func @transform_25(%arg0: i32) -> (i32, i32) {
    %c0_i32 = arith.constant 0 : i32
    %c0_i32_0 = arith.constant 0 : i32
    %c0_i32_1 = arith.constant 0 : i32
    return %c0_i32, %c0_i32_0 : i32, i32
  }
  func.func @transform_26(%arg0: i32) -> (i32, i32, i32) {
    %c0_i32 = arith.constant 0 : i32
    %c0_i32_0 = arith.constant 0 : i32
    %c0_i32_1 = arith.constant 0 : i32
    %c0_i32_2 = arith.constant 0 : i32
    return %c0_i32, %c0_i32_0, %c0_i32_1 : i32, i32, i32
  }
  func.func @transform_27(%arg0: i32) -> (i32, i32) {
    %c0_i32 = arith.constant 0 : i32
    %c0_i32_0 = arith.constant 0 : i32
    %c0_i32_1 = arith.constant 0 : i32
    return %c0_i32, %c0_i32_0 : i32, i32
  }
  func.func @transform_28(%arg0: i32) -> (i32, i32) {
    %c0_i32 = arith.constant 0 : i32
    %c0_i32_0 = arith.constant 0 : i32
    %c0_i32_1 = arith.constant 0 : i32
    return %c0_i32, %c0_i32_0 : i32, i32
  }
  func.func @transform_29(%arg0: i32) -> (i32, i32) {
    %c0_i32 = arith.constant 0 : i32
    %c0_i32_0 = arith.constant 0 : i32
    %c0_i32_1 = arith.constant 0 : i32
    return %c0_i32, %c0_i32_0 : i32, i32
  }
  func.func @transform_30(%arg0: i32) -> (i32, i32) {
    %c0_i32 = arith.constant 0 : i32
    %c0_i32_0 = arith.constant 0 : i32
    %c0_i32_1 = arith.constant 0 : i32
    return %c0_i32, %c0_i32_0 : i32, i32
  }
  func.func @transform_31(%arg0: i32) -> (i32, i32) {
    %c0_i32 = arith.constant 0 : i32
    %c0_i32_0 = arith.constant 0 : i32
    %c0_i32_1 = arith.constant 0 : i32
    return %c0_i32, %c0_i32_0 : i32, i32
  }
  func.func @transform_32(%arg0: i32) -> (i32, i32) {
    %c0_i32 = arith.constant 0 : i32
    %c0_i32_0 = arith.constant 0 : i32
    %c0_i32_1 = arith.constant 0 : i32
    return %c0_i32, %c0_i32_0 : i32, i32
  }
  func.func @transform_33(%arg0: i32) -> (i32, i32) {
    %c0_i32 = arith.constant 0 : i32
    %c0_i32_0 = arith.constant 0 : i32
    %c0_i32_1 = arith.constant 0 : i32
    return %c0_i32, %c0_i32_0 : i32, i32
  }
  func.func @transform_34(%arg0: i32) -> (i32, i32) {
    %c0_i32 = arith.constant 0 : i32
    %c0_i32_0 = arith.constant 0 : i32
    %c0_i32_1 = arith.constant 0 : i32
    return %c0_i32, %c0_i32_0 : i32, i32
  }
  func.func @transform_35(%arg0: i32) -> (i32, i32) {
    %c0_i32 = arith.constant 0 : i32
    %c0_i32_0 = arith.constant 0 : i32
    %c0_i32_1 = arith.constant 0 : i32
    return %c0_i32, %c0_i32_0 : i32, i32
  }
  func.func @transform_36(%arg0: i32) -> (i32, i32) {
    %c0_i32 = arith.constant 0 : i32
    %c0_i32_0 = arith.constant 0 : i32
    %c0_i32_1 = arith.constant 0 : i32
    return %c0_i32, %c0_i32_0 : i32, i32
  }
  func.func @transform_37(%arg0: i32) -> (i32, i32) {
    %c0_i32 = arith.constant 0 : i32
    %c0_i32_0 = arith.constant 0 : i32
    %c0_i32_1 = arith.constant 0 : i32
    return %c0_i32, %c0_i32_0 : i32, i32
  }
  func.func @transform_38(%arg0: i32) -> (i32, i32) {
    %c0_i32 = arith.constant 0 : i32
    %c0_i32_0 = arith.constant 0 : i32
    %c0_i32_1 = arith.constant 0 : i32
    return %c0_i32, %c0_i32_0 : i32, i32
  }
  func.func @transform_39(%arg0: i32) -> (i32, i32) {
    %c0_i32 = arith.constant 0 : i32
    %c0_i32_0 = arith.constant 0 : i32
    %c0_i32_1 = arith.constant 0 : i32
    return %c0_i32, %c0_i32_0 : i32, i32
  }
  func.func @transform_40(%arg0: i32) -> (i32, i32) {
    %c0_i32 = arith.constant 0 : i32
    %c0_i32_0 = arith.constant 0 : i32
    %c0_i32_1 = arith.constant 0 : i32
    return %c0_i32, %c0_i32_0 : i32, i32
  }
  func.func @transform_41(%arg0: i32) -> (i32, i32) {
    %c0_i32 = arith.constant 0 : i32
    %c0_i32_0 = arith.constant 0 : i32
    %c0_i32_1 = arith.constant 0 : i32
    return %c0_i32, %c0_i32_0 : i32, i32
  }
  func.func @transform_42(%arg0: i32) -> (i32, i32) {
    %c0_i32 = arith.constant 0 : i32
    %c0_i32_0 = arith.constant 0 : i32
    %c0_i32_1 = arith.constant 0 : i32
    return %c0_i32, %c0_i32_0 : i32, i32
  }
  func.func @transform_43(%arg0: i32) -> (i32, i32) {
    %c0_i32 = arith.constant 0 : i32
    %c0_i32_0 = arith.constant 0 : i32
    %c0_i32_1 = arith.constant 0 : i32
    return %c0_i32, %c0_i32_0 : i32, i32
  }
  func.func @transform_44(%arg0: i32) -> (i32, i32) {
    %c0_i32 = arith.constant 0 : i32
    %c0_i32_0 = arith.constant 0 : i32
    %c0_i32_1 = arith.constant 0 : i32
    return %c0_i32, %c0_i32_0 : i32, i32
  }
  func.func @transform_45(%arg0: i32) -> (i32, i32) {
    %c0_i32 = arith.constant 0 : i32
    %c0_i32_0 = arith.constant 0 : i32
    %c0_i32_1 = arith.constant 0 : i32
    return %c0_i32, %c0_i32_0 : i32, i32
  }
  func.func @transform_46(%arg0: i32) -> (i32, i32) {
    %c0_i32 = arith.constant 0 : i32
    %c0_i32_0 = arith.constant 0 : i32
    %c0_i32_1 = arith.constant 0 : i32
    return %c0_i32, %c0_i32_0 : i32, i32
  }
  func.func @transform_47(%arg0: i32) -> (i32, i32) {
    %c0_i32 = arith.constant 0 : i32
    %c0_i32_0 = arith.constant 0 : i32
    %c0_i32_1 = arith.constant 0 : i32
    return %c0_i32, %c0_i32_0 : i32, i32
  }
  func.func @transform_48(%arg0: i32) -> (i32, i32) {
    %c0_i32 = arith.constant 0 : i32
    %c0_i32_0 = arith.constant 0 : i32
    %c0_i32_1 = arith.constant 0 : i32
    return %c0_i32, %c0_i32_0 : i32, i32
  }
  func.func @transform_49(%arg0: i32) -> (i32, i32) {
    %c0_i32 = arith.constant 0 : i32
    %c0_i32_0 = arith.constant 0 : i32
    %c0_i32_1 = arith.constant 0 : i32
    return %c0_i32, %c0_i32_0 : i32, i32
  }
  func.func @transform_50(%arg0: i32) -> (i32, i32) {
    %c0_i32 = arith.constant 0 : i32
    %c0_i32_0 = arith.constant 0 : i32
    %c0_i32_1 = arith.constant 0 : i32
    return %c0_i32, %c0_i32_0 : i32, i32
  }
  func.func @transform_51(%arg0: i32) -> (i32, i32, i32) {
    %c0_i32 = arith.constant 0 : i32
    %c0_i32_0 = arith.constant 0 : i32
    %c0_i32_1 = arith.constant 0 : i32
    return %arg0, %c0_i32, %c0_i32_0 : i32, i32, i32
  }
}

</mosaic_0001>

<llo_original>
// kernel: lightcnn_stam_forward.1
$region0: #{lightcnn_stam_forward.1}
  #allocation0 [shape = 'u32[]', space=smem, size = 0x4, offset = 0x4, fixed_abs, tag = 'smem constant byte address 0x4 - core index']
  #allocation1 [shape = 'u32[144,128]{1,0:T(1,128)}', space=vmem, size = 0x12000, scoped, tag = 'internal scratch']
  #allocation2 [shape = 'f32[1,1]{1,0:T(1,128)S(1)}', space=vmem, size = 0x200, scoped, tag = 'scoped memory for lightcnn_stam_forward.1']
  #allocation3 [shape = 'f32[1,1]{1,0:T(1,128)S(1)}', space=vmem, size = 0x200, scoped, tag = 'scoped memory for lightcnn_stam_forward.1']
  #allocation4 [shape = 'f32[1,1]{1,0:T(1,128)S(1)}', space=vmem, size = 0x200, scoped, tag = 'scoped memory for lightcnn_stam_forward.1']
  #allocation5 [shape = 'f32[1,1]{1,0:T(1,128)S(1)}', space=vmem, size = 0x200, scoped, tag = 'scoped memory for lightcnn_stam_forward.1']
  %s0 = inlined_call_operand.smem [shape: u32[52], index: -1, kind: input, shape index: {}]
  %s1 = sld [smem:[%s0]]
  %s2 = scalar_lea.smem %s0, 1
  %s3 = sld [smem:[%s2]]
  %s4 = scalar_lea.smem %s0, 2
  %s5 = sld [smem:[%s4]]
  %s6 = scalar_lea.smem %s0, 3
  %s7 = sld [smem:[%s6]]
  %s8 = scalar_lea.smem %s0, 4
  %s9 = sld [smem:[%s8]]
  %s10 = scalar_lea.smem %s0, 5
  %s11 = sld [smem:[%s10]]
  %s12 = scalar_lea.smem %s0, 6
  %s13 = sld [smem:[%s12]]
  %s14 = scalar_lea.smem %s0, 7
  %s15 = sld [smem:[%s14]]
  %s16 = scalar_lea.smem %s0, 8
  %s17 = sld [smem:[%s16]]
  %s18 = scalar_lea.smem %s0, 9
  %s19 = sld [smem:[%s18]]
  %s20 = scalar_lea.smem %s0, 10
  %s21 = sld [smem:[%s20]]
  %s22 = scalar_lea.smem %s0, 11
  %s23 = sld [smem:[%s22]]
  %s24 = scalar_lea.smem %s0, 12
  %s25 = sld [smem:[%s24]]
  %s26 = scalar_lea.smem %s0, 13
  %s27 = sld [smem:[%s26]]
  %s28 = scalar_lea.smem %s0, 14
  %s29 = sld [smem:[%s28]]
  %s30 = scalar_lea.smem %s0, 15
  %s31 = sld [smem:[%s30]]
  %s32 = scalar_lea.smem %s0, 16
  %s33 = sld [smem:[%s32]]
  %s34 = scalar_lea.smem %s0, 17
  %s35 = sld [smem:[%s34]]
  %s36 = scalar_lea.smem %s0, 18
  %s37 = sld [smem:[%s36]]
  %s38 = scalar_lea.smem %s0, 19
  %s39 = sld [smem:[%s38]]
  %s40 = scalar_lea.smem %s0, 20
  %s41 = sld [smem:[%s40]]
  %s42 = scalar_lea.smem %s0, 21
  %s43 = sld [smem:[%s42]]
  %s44 = scalar_lea.smem %s0, 22
  %s45 = sld [smem:[%s44]]
  %s46 = scalar_lea.smem %s0, 23
  %s47 = sld [smem:[%s46]]
  %s48 = scalar_lea.smem %s0, 24
  %s49 = sld [smem:[%s48]]
  %s50 = scalar_lea.smem %s0, 25
  %s51 = sld [smem:[%s50]]
  %s52 = scalar_lea.smem %s0, 26
  %s53 = sld [smem:[%s52]]
  %s54 = scalar_lea.smem %s0, 27
  %s55 = sld [smem:[%s54]]
  %s56 = scalar_lea.smem %s0, 28
  %s57 = sld [smem:[%s56]]
  %s58 = scalar_lea.smem %s0, 29
  %s59 = sld [smem:[%s58]]
  %s60 = scalar_lea.smem %s0, 30
  %s61 = sld [smem:[%s60]]
  %s62 = scalar_lea.smem %s0, 31
  %s63 = sld [smem:[%s62]]
  %s64 = scalar_lea.smem %s0, 32
  %s65 = sld [smem:[%s64]]
  %s66 = scalar_lea.smem %s0, 33
  %s67 = sld [smem:[%s66]]
  %s68 = scalar_lea.smem %s0, 34
  %s69 = sld [smem:[%s68]]
  %s70 = scalar_lea.smem %s0, 35
  %s71 = sld [smem:[%s70]]
  %s72 = scalar_lea.smem %s0, 36
  %s73 = sld [smem:[%s72]]
  %s74 = scalar_lea.smem %s0, 37
  %s75 = sld [smem:[%s74]]
  %s76 = scalar_lea.smem %s0, 38
  %s77 = sld [smem:[%s76]]
  %s78 = scalar_lea.smem %s0, 39
  %s79 = sld [smem:[%s78]]
  %s80 = scalar_lea.smem %s0, 40
  %s81 = sld [smem:[%s80]]
  %s82 = scalar_lea.smem %s0, 41
  %s83 = sld [smem:[%s82]]
  %s84 = scalar_lea.smem %s0, 42
  %s85 = sld [smem:[%s84]]
  %s86 = scalar_lea.smem %s0, 43
  %s87 = sld [smem:[%s86]]
  %s88 = scalar_lea.smem %s0, 44
  %s89 = sld [smem:[%s88]]
  %s90 = scalar_lea.smem %s0, 45
  %s91 = sld [smem:[%s90]]
  %s92 = scalar_lea.smem %s0, 46
  %s93 = sld [smem:[%s92]]
  %s94 = scalar_lea.smem %s0, 47
  %s95 = sld [smem:[%s94]]
  %s96 = scalar_lea.smem %s0, 48
  %s97 = sld [smem:[%s96]]
  %s98 = scalar_lea.smem %s0, 49
  %s99 = sld [smem:[%s98]]
  %s100 = scalar_lea.smem %s0, 50
  %s101 = sld [smem:[%s100]]
  %s102 = scalar_lea.smem %s0, 51
  %s103 = sld [smem:[%s102]]
  %s104 = sld [smem:[#allocation0]]
  $region261: #{lightcnn_stam_forward.1} parent=0
    _
  %s106 = ssub.s32 1, %s104
  %s107 = scalar_select 0, %s106, %s104
  %v108 = vstv %s71
  %109 = vst [vmem:[#allocation2] sm:$0x1] %v108
  %v110 = vstv %s79
  %111 = vst [vmem:[#allocation3] sm:$0x1] %v110
  %v112 = vstv %s87
  %113 = vst [vmem:[#allocation4] sm:$0x1] %v112
  %v114 = vstv %s95
  %115 = vst [vmem:[#allocation5] sm:$0x1] %v114
  $region1: #{lightcnn_stam_forward.1} parent=0
    #allocation6 [shape = 'u8[1024]{0}', space=vmem, size = 0x400, scoped, tag = 'input window, operand 31, single buffered']
    #allocation7 [shape = 's32[2]{0}', space=sflag, size = 0x8, scoped, tag = 'scoped memory for lightcnn_stam_forward.1']
    #allocation8 [shape = 's32[2]{0}', space=sflag, size = 0x8, scoped, tag = 'scoped memory for lightcnn_stam_forward.1']
    #allocation9 [shape = 'u8[512]{0}', space=vmem, size = 0x400, scoped, tag = 'input window, operand 33, single buffered']
    #allocation10 [shape = 's32[1]{0}', space=sflag, size = 0x4, scoped, tag = 'scoped memory for lightcnn_stam_forward.1']
    #allocation11 [shape = 'u8[1024]{0}', space=vmem, size = 0x400, scoped, tag = 'input window, operand 38, single buffered']
    #allocation12 [shape = 'u8[512]{0}', space=vmem, size = 0x400, scoped, tag = 'input window, operand 42, single buffered']
    #allocation13 [shape = 's32[1]{0}', space=sflag, size = 0x4, scoped, tag = 'scoped memory for lightcnn_stam_forward.1']
    #allocation14 [shape = 'u8[512]{0}', space=vmem, size = 0x400, scoped, tag = 'input window, operand 46, single buffered']
    #allocation15 [shape = 'u8[1024]{0}', space=vmem, size = 0x400, scoped, tag = 'input window, operand 50, single buffered']
    #allocation16 [shape = 's32[1]{0}', space=sflag, size = 0x4, scoped, tag = 'scoped memory for lightcnn_stam_forward.1']
    #allocation17 [shape = 'u8[1024]{0}', space=vmem, size = 0x400, scoped, tag = 'output window, operand 0']
    %116 = vsyncpa [#allocation7], 0
    %117 = vsyncpa [#allocation10], 0
    %118 = vsyncpa [#allocation13], 0
    %119 = vsyncpa [#allocation16], 0
    %120 = vsyncpa [#allocation8], 0
    %s121 = scalar_lea.sflag [#allocation8], 1
    %122 = vsyncpa %s121, 0
    loop: start=0, step=1, limit=4
    $region2: #{lightcnn_stam_forward.1} parent=1 // loop_pre_header
      _
    $region3: #{lightcnn_stam_forward.1} parent=1 // loop_header
      %s124 = sphi 0, %s128
      %p125 = scmp.ge.s32.totalorder %s124, 4
      %s134 = sphi 0, %s136
      %s137 = sphi 0, %s134
      %s138 = sphi 0, %s137
      %s154 = sphi 0, %s138
      %s158 = sphi 0, %s158
      %s160 = sphi 0, %s158
      %s161 = sphi 0, %s160
      %s175 = sphi 0, %s161
      %s179 = sphi 0, %s179
      %s181 = sphi 0, %s179
      %s182 = sphi 0, %s181
      %s196 = sphi 0, %s182
      %s200 = sphi 0, %s200
      %s202 = sphi 0, %s200
      %s203 = sphi 0, %s202
      %s217 = sphi 0, %s203
      %s221 = sphi 0, %s221
      %s223 = sphi 0, %s221
      %s224 = sphi 0, %s223
      %s238 = sphi 0, %s224
      %s242 = sphi 0, %s242
      %s244 = sphi 0, %s242
      %s245 = sphi 0, %s244
      %s259 = sphi 0, %s245
      %s263 = sphi 0, %s263
      %s265 = sphi 0, %s263
      %s266 = sphi 0, %s265
      %s280 = sphi 0, %s266
      %s284 = sphi 0, %s284
      %s286 = sphi 0, %s284
      %s287 = sphi 0, %s286
      %s301 = sphi 0, %s287
      %s305 = sphi 0, %s305
      %s307 = sphi 0, %s305
      %s308 = sphi 0, %s307
      %s322 = sphi 0, %s308
      %s326 = sphi 0, %s326
      %s328 = sphi 0, %s326
      %s329 = sphi 0, %s328
      %s343 = sphi 0, %s329
      %s347 = sphi 0, %s347
      %s349 = sphi 0, %s347
      %s350 = sphi 0, %s349
      %s364 = sphi 0, %s350
      %s368 = sphi 0, %s368
      %s370 = sphi 0, %s368
      %s371 = sphi 0, %s370
      %s385 = sphi 0, %s371
      %s389 = sphi 0, %s389
      %s391 = sphi 0, %s389
      %s392 = sphi 0, %s391
      %s406 = sphi 0, %s392
      %s410 = sphi 0, %s410
      %s412 = sphi 0, %s410
      %s413 = sphi 0, %s412
      %s427 = sphi 0, %s413
      %s431 = sphi 0, %s431
      %s433 = sphi 0, %s431
      %s434 = sphi 0, %s433
      %s448 = sphi 0, %s434
      %s452 = sphi 0, %s452
      %s454 = sphi 0, %s452
      %s455 = sphi 0, %s454
      %s469 = sphi 0, %s455
      %s473 = sphi 0, %s473
      %s475 = sphi 0, %s473
      %s476 = sphi 0, %s475
      %s490 = sphi 0, %s476
      %s494 = sphi 0, %s494
      %s496 = sphi 0, %s494
      %s497 = sphi 0, %s496
      %s511 = sphi 0, %s497
      %s515 = sphi 0, %s515
      %s517 = sphi 0, %s515
      %s518 = sphi 0, %s517
      %s532 = sphi 0, %s518
      %s536 = sphi 0, %s536
      %s538 = sphi 0, %s536
      %s539 = sphi 0, %s538
      %s553 = sphi 0, %s539
      %s557 = sphi 0, %s557
      %s559 = sphi 0, %s557
      %s560 = sphi 0, %s559
      %s574 = sphi 0, %s560
      %s578 = sphi 0, %s578
      %s580 = sphi 0, %s578
      %s581 = sphi 0, %s580
      %s595 = sphi 0, %s581
      %s599 = sphi 0, %s599
      %s601 = sphi 0, %s599
      %s602 = sphi 0, %s601
      %s616 = sphi 0, %s602
      %s620 = sphi 0, %s620
      %s622 = sphi 0, %s620
      %s623 = sphi 0, %s622
      %s637 = sphi 0, %s623
      %s641 = sphi 0, %s641
      %s643 = sphi 0, %s641
      %s644 = sphi 0, %s643
      %s658 = sphi 0, %s644
      %s662 = sphi 0, %s662
      %s664 = sphi 0, %s662
      %s665 = sphi 0, %s664
      %s679 = sphi 0, %s665
      %s683 = sphi 0, %s683
      %s685 = sphi 0, %s683
      %s686 = sphi 0, %s685
      %s700 = sphi 0, %s686
      %s704 = sphi 0, %s704
      %s706 = sphi 0, %s704
      %s707 = sphi 0, %s706
      %s721 = sphi 0, %s707
      %s725 = sphi 0, %s725
      %s727 = sphi 0, %s725
      %s728 = sphi 0, %s727
      %s742 = sphi 0, %s728
      %s746 = sphi 0, %s746
      %s748 = sphi 0, %s746
      %s749 = sphi 0, %s748
      %s763 = sphi 0, %s749
      %s767 = sphi 0, %s767
      %s769 = sphi 0, %s767
      %s770 = sphi 0, %s769
      %s784 = sphi 0, %s770
      %s788 = sphi 0, %s788
      %s790 = sphi 0, %s788
      %s791 = sphi 0, %s790
      %s805 = sphi 0, %s791
      %s809 = sphi 0, %s809
      %s811 = sphi 0, %s809
      %s812 = sphi 0, %s811
      %s826 = sphi 0, %s812
      %s830 = sphi 0, %s830
      %s832 = sphi 0, %s830
      %s833 = sphi 0, %s832
      %s847 = sphi 0, %s833
      %s851 = sphi 0, %s851
      %s853 = sphi 0, %s851
      %s854 = sphi 0, %s853
      %s868 = sphi 0, %s854
      %s872 = sphi 0, %s872
      %s874 = sphi 0, %s872
      %s875 = sphi 0, %s874
      %s889 = sphi 0, %s875
      %s893 = sphi 0, %s893
      %s895 = sphi 0, %s893
      %s896 = sphi 0, %s895
      %s910 = sphi 0, %s896
      %s914 = sphi 0, %s914
      %s916 = sphi 0, %s914
      %s917 = sphi 0, %s916
      %s931 = sphi 0, %s917
      %s935 = sphi 0, %s935
      %s937 = sphi 0, %s935
      %s938 = sphi 0, %s937
      %s952 = sphi 0, %s938
      %s956 = sphi 0, %s956
      %s958 = sphi 0, %s956
      %s959 = sphi 0, %s958
      %s973 = sphi 0, %s959
      %s977 = sphi 0, %s977
      %s979 = sphi 0, %s977
      %s980 = sphi 0, %s979
      %s994 = sphi 0, %s980
      %s998 = sphi 0, %s998
      %s1000 = sphi 0, %s998
      %s1001 = sphi 0, %s1000
      %s1015 = sphi 0, %s1001
      %s1019 = sphi 0, %s1019
      %s1021 = sphi 0, %s1019
      %s1022 = sphi 0, %s1021
      %s1036 = sphi 0, %s1022
      %s1040 = sphi 0, %s1040
      %s1042 = sphi 0, %s1040
      %s1043 = sphi 0, %s1042
      %s1057 = sphi 0, %s1043
      %s1061 = sphi 0, %s1061
      %s1063 = sphi 0, %s1061
      %s1064 = sphi 0, %s1063
      %s1078 = sphi 0, %s1064
      %s1082 = sphi 0, %s1082
      %s1084 = sphi 0, %s1082
      %s1085 = sphi 0, %s1084
      %s1099 = sphi 0, %s1085
      %s1103 = sphi 0, %s1103
      %s1105 = sphi 0, %s1103
      %s1106 = sphi 0, %s1105
      %s1120 = sphi 0, %s1106
      %s1124 = sphi 0, %s1124
      %s1126 = sphi 0, %s1124
      %s1127 = sphi 0, %s1126
      %s1141 = sphi 0, %s1127
      %s1145 = sphi 0, %s1145
      %s1147 = sphi 0, %s1145
      %s1148 = sphi 0, %s1147
      %s1162 = sphi 0, %s1148
      %s1166 = sphi 0, %s1166
      %s1168 = sphi 0, %s1166
      %s1169 = sphi 0, %s1168
      %s1183 = sphi 0, %s1169
      %s1187 = sphi 0, %s1187
      %s1189 = sphi 0, %s1187
      %s1190 = sphi 0, %s1189
      %s1204 = sphi 0, %s1190
      %s1210 = sphi 0, %s1212
      %s1213 = sphi 0, %s1210
      %s1214 = sphi 0, %s1213
      %s1230 = sphi 0, %s1214
    $region4: #{lightcnn_stam_forward.1} parent=1 // loop_header_branch
      %127 = sbr.rel (%p125) target = $region8
    $region5: #{lightcnn_stam_forward.1} parent=1 // loop_body
      %s129 = ssub.s32 %s124, 1
      %s130 = ssub.s32 %s124, 2
      %s131 = sadd.s32 %s124, 1
      %s132 = ssub.s32 %s124, %s131
      %p133 = scmp.eq.s32.totalorder %s132, 0
      %s135 = sadd.s32 %s134, 1
      %s136 = scalar_select %p133, %s134, %s135
      %p139 = pneg %p133
      %p140 = scmp.eq.s32.totalorder %s124, 1
      %p141 = por %p139, %p140
      %p142 = scmp.ne.s32.totalorder %s134, %s137
      %p143 = scmp.eq.s32.totalorder %s124, 0
      %p144 = por %p142, %p143
      %p145 = scmp.ne.s32.totalorder %s134, %s137
      %p146 = scmp.eq.s32.totalorder %s129, 1
      %p147 = por %p145, %p146
      %p148 = scmp.ne.s32.totalorder %s137, %s138
      %p149 = scmp.eq.s32.totalorder %s129, 0
      %p150 = por %p148, %p149
      %p151 = scmp.ne.s32.totalorder %s137, %s138
      %p152 = scmp.eq.s32.totalorder %s130, 1
      %p153 = por %p151, %p152
      %p155 = scmp.ne.s32.totalorder %s138, %s154
      %p156 = scmp.eq.s32.totalorder %s130, 0
      %p157 = por %p155, %p156
      %s159 = sadd.s32 %s158, 1
      %p162 = scmp.eq.s32.totalorder %s124, 1
      %p163 = scmp.ne.s32.totalorder %s158, %s160
      %p164 = scmp.eq.s32.totalorder %s124, 0
      %p165 = por %p163, %p164
      %p166 = scmp.ne.s32.totalorder %s158, %s160
      %p167 = scmp.eq.s32.totalorder %s129, 1
      %p168 = por %p166, %p167
      %p169 = scmp.ne.s32.totalorder %s160, %s161
      %p170 = scmp.eq.s32.totalorder %s129, 0
      %p171 = por %p169, %p170
      %p172 = scmp.ne.s32.totalorder %s160, %s161
      %p173 = scmp.eq.s32.totalorder %s130, 1
      %p174 = por %p172, %p173
      %p176 = scmp.ne.s32.totalorder %s161, %s175
      %p177 = scmp.eq.s32.totalorder %s130, 0
      %p178 = por %p176, %p177
      %s180 = sadd.s32 %s179, 1
      %p183 = scmp.eq.s32.totalorder %s124, 1
      %p184 = scmp.ne.s32.totalorder %s179, %s181
      %p185 = scmp.eq.s32.totalorder %s124, 0
      %p186 = por %p184, %p185
      %p187 = scmp.ne.s32.totalorder %s179, %s181
      %p188 = scmp.eq.s32.totalorder %s129, 1
      %p189 = por %p187, %p188
      %p190 = scmp.ne.s32.totalorder %s181, %s182
      %p191 = scmp.eq.s32.totalorder %s129, 0
      %p192 = por %p190, %p191
      %p193 = scmp.ne.s32.totalorder %s181, %s182
      %p194 = scmp.eq.s32.totalorder %s130, 1
      %p195 = por %p193, %p194
      %p197 = scmp.ne.s32.totalorder %s182, %s196
      %p198 = scmp.eq.s32.totalorder %s130, 0
      %p199 = por %p197, %p198
      %s201 = sadd.s32 %s200, 1
      %p204 = scmp.eq.s32.totalorder %s124, 1
      %p205 = scmp.ne.s32.totalorder %s200, %s202
      %p206 = scmp.eq.s32.totalorder %s124, 0
      %p207 = por %p205, %p206
      %p208 = scmp.ne.s32.totalorder %s200, %s202
      %p209 = scmp.eq.s32.totalorder %s129, 1
      %p210 = por %p208, %p209
      %p211 = scmp.ne.s32.totalorder %s202, %s203
      %p212 = scmp.eq.s32.totalorder %s129, 0
      %p213 = por %p211, %p212
      %p214 = scmp.ne.s32.totalorder %s202, %s203
      %p215 = scmp.eq.s32.totalorder %s130, 1
      %p216 = por %p214, %p215
      %p218 = scmp.ne.s32.totalorder %s203, %s217
      %p219 = scmp.eq.s32.totalorder %s130, 0
      %p220 = por %p218, %p219
      %s222 = sadd.s32 %s221, 1
      %p225 = scmp.eq.s32.totalorder %s124, 1
      %p226 = scmp.ne.s32.totalorder %s221, %s223
      %p227 = scmp.eq.s32.totalorder %s124, 0
      %p228 = por %p226, %p227
      %p229 = scmp.ne.s32.totalorder %s221, %s223
      %p230 = scmp.eq.s32.totalorder %s129, 1
      %p231 = por %p229, %p230
      %p232 = scmp.ne.s32.totalorder %s223, %s224
      %p233 = scmp.eq.s32.totalorder %s129, 0
      %p234 = por %p232, %p233
      %p235 = scmp.ne.s32.totalorder %s223, %s224
      %p236 = scmp.eq.s32.totalorder %s130, 1
      %p237 = por %p235, %p236
      %p239 = scmp.ne.s32.totalorder %s224, %s238
      %p240 = scmp.eq.s32.totalorder %s130, 0
      %p241 = por %p239, %p240
      %s243 = sadd.s32 %s242, 1
      %p246 = scmp.eq.s32.totalorder %s124, 1
      %p247 = scmp.ne.s32.totalorder %s242, %s244
      %p248 = scmp.eq.s32.totalorder %s124, 0
      %p249 = por %p247, %p248
      %p250 = scmp.ne.s32.totalorder %s242, %s244
      %p251 = scmp.eq.s32.totalorder %s129, 1
      %p252 = por %p250, %p251
      %p253 = scmp.ne.s32.totalorder %s244, %s245
      %p254 = scmp.eq.s32.totalorder %s129, 0
      %p255 = por %p253, %p254
      %p256 = scmp.ne.s32.totalorder %s244, %s245
      %p257 = scmp.eq.s32.totalorder %s130, 1
      %p258 = por %p256, %p257
      %p260 = scmp.ne.s32.totalorder %s245, %s259
      %p261 = scmp.eq.s32.totalorder %s130, 0
      %p262 = por %p260, %p261
      %s264 = sadd.s32 %s263, 1
      %p267 = scmp.eq.s32.totalorder %s124, 1
      %p268 = scmp.ne.s32.totalorder %s263, %s265
      %p269 = scmp.eq.s32.totalorder %s124, 0
      %p270 = por %p268, %p269
      %p271 = scmp.ne.s32.totalorder %s263, %s265
      %p272 = scmp.eq.s32.totalorder %s129, 1
      %p273 = por %p271, %p272
      %p274 = scmp.ne.s32.totalorder %s265, %s266
      %p275 = scmp.eq.s32.totalorder %s129, 0
      %p276 = por %p274, %p275
      %p277 = scmp.ne.s32.totalorder %s265, %s266
      %p278 = scmp.eq.s32.totalorder %s130, 1
      %p279 = por %p277, %p278
      %p281 = scmp.ne.s32.totalorder %s266, %s280
      %p282 = scmp.eq.s32.totalorder %s130, 0
      %p283 = por %p281, %p282
      %s285 = sadd.s32 %s284, 1
      %p288 = scmp.eq.s32.totalorder %s124, 1
      %p289 = scmp.ne.s32.totalorder %s284, %s286
      %p290 = scmp.eq.s32.totalorder %s124, 0
      %p291 = por %p289, %p290
      %p292 = scmp.ne.s32.totalorder %s284, %s286
      %p293 = scmp.eq.s32.totalorder %s129, 1
      %p294 = por %p292, %p293
      %p295 = scmp.ne.s32.totalorder %s286, %s287
      %p296 = scmp.eq.s32.totalorder %s129, 0
      %p297 = por %p295, %p296
      %p298 = scmp.ne.s32.totalorder %s286, %s287
      %p299 = scmp.eq.s32.totalorder %s130, 1
      %p300 = por %p298, %p299
      %p302 = scmp.ne.s32.totalorder %s287, %s301
      %p303 = scmp.eq.s32.totalorder %s130, 0
      %p304 = por %p302, %p303
      %s306 = sadd.s32 %s305, 1
      %p309 = scmp.eq.s32.totalorder %s124, 1
      %p310 = scmp.ne.s32.totalorder %s305, %s307
      %p311 = scmp.eq.s32.totalorder %s124, 0
      %p312 = por %p310, %p311
      %p313 = scmp.ne.s32.totalorder %s305, %s307
      %p314 = scmp.eq.s32.totalorder %s129, 1
      %p315 = por %p313, %p314
      %p316 = scmp.ne.s32.totalorder %s307, %s308
      %p317 = scmp.eq.s32.totalorder %s129, 0
      %p318 = por %p316, %p317
      %p319 = scmp.ne.s32.totalorder %s307, %s308
      %p320 = scmp.eq.s32.totalorder %s130, 1
      %p321 = por %p319, %p320
      %p323 = scmp.ne.s32.totalorder %s308, %s322
      %p324 = scmp.eq.s32.totalorder %s130, 0
      %p325 = por %p323, %p324
      %s327 = sadd.s32 %s326, 1
      %p330 = scmp.eq.s32.totalorder %s124, 1
      %p331 = scmp.ne.s32.totalorder %s326, %s328
      %p332 = scmp.eq.s32.totalorder %s124, 0
      %p333 = por %p331, %p332
      %p334 = scmp.ne.s32.totalorder %s326, %s328
      %p335 = scmp.eq.s32.totalorder %s129, 1
      %p336 = por %p334, %p335
      %p337 = scmp.ne.s32.totalorder %s328, %s329
      %p338 = scmp.eq.s32.totalorder %s129, 0
      %p339 = por %p337, %p338
      %p340 = scmp.ne.s32.totalorder %s328, %s329
      %p341 = scmp.eq.s32.totalorder %s130, 1
      %p342 = por %p340, %p341
      %p344 = scmp.ne.s32.totalorder %s329, %s343
      %p345 = scmp.eq.s32.totalorder %s130, 0
      %p346 = por %p344, %p345
      %s348 = sadd.s32 %s347, 1
      %p351 = scmp.eq.s32.totalorder %s124, 1
      %p352 = scmp.ne.s32.totalorder %s347, %s349
      %p353 = scmp.eq.s32.totalorder %s124, 0
      %p354 = por %p352, %p353
      %p355 = scmp.ne.s32.totalorder %s347, %s349
      %p356 = scmp.eq.s32.totalorder %s129, 1
      %p357 = por %p355, %p356
      %p358 = scmp.ne.s32.totalorder %s349, %s350
      %p359 = scmp.eq.s32.totalorder %s129, 0
      %p360 = por %p358, %p359
      %p361 = scmp.ne.s32.totalorder %s349, %s350
      %p362 = scmp.eq.s32.totalorder %s130, 1
      %p363 = por %p361, %p362
      %p365 = scmp.ne.s32.totalorder %s350, %s364
      %p366 = scmp.eq.s32.totalorder %s130, 0
      %p367 = por %p365, %p366
      %s369 = sadd.s32 %s368, 1
      %p372 = scmp.eq.s32.totalorder %s124, 1
      %p373 = scmp.ne.s32.totalorder %s368, %s370
      %p374 = scmp.eq.s32.totalorder %s124, 0
      %p375 = por %p373, %p374
      %p376 = scmp.ne.s32.totalorder %s368, %s370
      %p377 = scmp.eq.s32.totalorder %s129, 1
      %p378 = por %p376, %p377
      %p379 = scmp.ne.s32.totalorder %s370, %s371
      %p380 = scmp.eq.s32.totalorder %s129, 0
      %p381 = por %p379, %p380
      %p382 = scmp.ne.s32.totalorder %s370, %s371
      %p383 = scmp.eq.s32.totalorder %s130, 1
      %p384 = por %p382, %p383
      %p386 = scmp.ne.s32.totalorder %s371, %s385
      %p387 = scmp.eq.s32.totalorder %s130, 0
      %p388 = por %p386, %p387
      %s390 = sadd.s32 %s389, 1
      %p393 = scmp.eq.s32.totalorder %s124, 1
      %p394 = scmp.ne.s32.totalorder %s389, %s391
      %p395 = scmp.eq.s32.totalorder %s124, 0
      %p396 = por %p394, %p395
      %p397 = scmp.ne.s32.totalorder %s389, %s391
      %p398 = scmp.eq.s32.totalorder %s129, 1
      %p399 = por %p397, %p398
      %p400 = scmp.ne.s32.totalorder %s391, %s392
      %p401 = scmp.eq.s32.totalorder %s129, 0
      %p402 = por %p400, %p401
      %p403 = scmp.ne.s32.totalorder %s391, %s392
      %p404 = scmp.eq.s32.totalorder %s130, 1
      %p405 = por %p403, %p404
      %p407 = scmp.ne.s32.totalorder %s392, %s406
      %p408 = scmp.eq.s32.totalorder %s130, 0
      %p409 = por %p407, %p408
      %s411 = sadd.s32 %s410, 1
      %p414 = scmp.eq.s32.totalorder %s124, 1
      %p415 = scmp.ne.s32.totalorder %s410, %s412
      %p416 = scmp.eq.s32.totalorder %s124, 0
      %p417 = por %p415, %p416
      %p418 = scmp.ne.s32.totalorder %s410, %s412
      %p419 = scmp.eq.s32.totalorder %s129, 1
      %p420 = por %p418, %p419
      %p421 = scmp.ne.s32.totalorder %s412, %s413
      %p422 = scmp.eq.s32.totalorder %s129, 0
      %p423 = por %p421, %p422
      %p424 = scmp.ne.s32.totalorder %s412, %s413
      %p425 = scmp.eq.s32.totalorder %s130, 1
      %p426 = por %p424, %p425
      %p428 = scmp.ne.s32.totalorder %s413, %s427
      %p429 = scmp.eq.s32.totalorder %s130, 0
      %p430 = por %p428, %p429
      %s432 = sadd.s32 %s431, 1
      %p435 = scmp.eq.s32.totalorder %s124, 1
      %p436 = scmp.ne.s32.totalorder %s431, %s433
      %p437 = scmp.eq.s32.totalorder %s124, 0
      %p438 = por %p436, %p437
      %p439 = scmp.ne.s32.totalorder %s431, %s433
      %p440 = scmp.eq.s32.totalorder %s129, 1
      %p441 = por %p439, %p440
      %p442 = scmp.ne.s32.totalorder %s433, %s434
      %p443 = scmp.eq.s32.totalorder %s129, 0
      %p444 = por %p442, %p443
      %p445 = scmp.ne.s32.totalorder %s433, %s434
      %p446 = scmp.eq.s32.totalorder %s130, 1
      %p447 = por %p445, %p446
      %p449 = scmp.ne.s32.totalorder %s434, %s448
      %p450 = scmp.eq.s32.totalorder %s130, 0
      %p451 = por %p449, %p450
      %s453 = sadd.s32 %s452, 1
      %p456 = scmp.eq.s32.totalorder %s124, 1
      %p457 = scmp.ne.s32.totalorder %s452, %s454
      %p458 = scmp.eq.s32.totalorder %s124, 0
      %p459 = por %p457, %p458
      %p460 = scmp.ne.s32.totalorder %s452, %s454
      %p461 = scmp.eq.s32.totalorder %s129, 1
      %p462 = por %p460, %p461
      %p463 = scmp.ne.s32.totalorder %s454, %s455
      %p464 = scmp.eq.s32.totalorder %s129, 0
      %p465 = por %p463, %p464
      %p466 = scmp.ne.s32.totalorder %s454, %s455
      %p467 = scmp.eq.s32.totalorder %s130, 1
      %p468 = por %p466, %p467
      %p470 = scmp.ne.s32.totalorder %s455, %s469
      %p471 = scmp.eq.s32.totalorder %s130, 0
      %p472 = por %p470, %p471
      %s474 = sadd.s32 %s473, 1
      %p477 = scmp.eq.s32.totalorder %s124, 1
      %p478 = scmp.ne.s32.totalorder %s473, %s475
      %p479 = scmp.eq.s32.totalorder %s124, 0
      %p480 = por %p478, %p479
      %p481 = scmp.ne.s32.totalorder %s473, %s475
      %p482 = scmp.eq.s32.totalorder %s129, 1
      %p483 = por %p481, %p482
      %p484 = scmp.ne.s32.totalorder %s475, %s476
      %p485 = scmp.eq.s32.totalorder %s129, 0
      %p486 = por %p484, %p485
      %p487 = scmp.ne.s32.totalorder %s475, %s476
      %p488 = scmp.eq.s32.totalorder %s130, 1
      %p489 = por %p487, %p488
      %p491 = scmp.ne.s32.totalorder %s476, %s490
      %p492 = scmp.eq.s32.totalorder %s130, 0
      %p493 = por %p491, %p492
      %s495 = sadd.s32 %s494, 1
      %p498 = scmp.eq.s32.totalorder %s124, 1
      %p499 = scmp.ne.s32.totalorder %s494, %s496
      %p500 = scmp.eq.s32.totalorder %s124, 0
      %p501 = por %p499, %p500
      %p502 = scmp.ne.s32.totalorder %s494, %s496
      %p503 = scmp.eq.s32.totalorder %s129, 1
      %p504 = por %p502, %p503
      %p505 = scmp.ne.s32.totalorder %s496, %s497
      %p506 = scmp.eq.s32.totalorder %s129, 0
      %p507 = por %p505, %p506
      %p508 = scmp.ne.s32.totalorder %s496, %s497
      %p509 = scmp.eq.s32.totalorder %s130, 1
      %p510 = por %p508, %p509
      %p512 = scmp.ne.s32.totalorder %s497, %s511
      %p513 = scmp.eq.s32.totalorder %s130, 0
      %p514 = por %p512, %p513
      %s516 = sadd.s32 %s515, 1
      %p519 = scmp.eq.s32.totalorder %s124, 1
      %p520 = scmp.ne.s32.totalorder %s515, %s517
      %p521 = scmp.eq.s32.totalorder %s124, 0
      %p522 = por %p520, %p521
      %p523 = scmp.ne.s32.totalorder %s515, %s517
      %p524 = scmp.eq.s32.totalorder %s129, 1
      %p525 = por %p523, %p524
      %p526 = scmp.ne.s32.totalorder %s517, %s518
      %p527 = scmp.eq.s32.totalorder %s129, 0
      %p528 = por %p526, %p527
      %p529 = scmp.ne.s32.totalorder %s517, %s518
      %p530 = scmp.eq.s32.totalorder %s130, 1
      %p531 = por %p529, %p530
      %p533 = scmp.ne.s32.totalorder %s518, %s532
      %p534 = scmp.eq.s32.totalorder %s130, 0
      %p535 = por %p533, %p534
      %s537 = sadd.s32 %s536, 1
      %p540 = scmp.eq.s32.totalorder %s124, 1
      %p541 = scmp.ne.s32.totalorder %s536, %s538
      %p542 = scmp.eq.s32.totalorder %s124, 0
      %p543 = por %p541, %p542
      %p544 = scmp.ne.s32.totalorder %s536, %s538
      %p545 = scmp.eq.s32.totalorder %s129, 1
      %p546 = por %p544, %p545
      %p547 = scmp.ne.s32.totalorder %s538, %s539
      %p548 = scmp.eq.s32.totalorder %s129, 0
      %p549 = por %p547, %p548
      %p550 = scmp.ne.s32.totalorder %s538, %s539
      %p551 = scmp.eq.s32.totalorder %s130, 1
      %p552 = por %p550, %p551
      %p554 = scmp.ne.s32.totalorder %s539, %s553
      %p555 = scmp.eq.s32.totalorder %s130, 0
      %p556 = por %p554, %p555
      %s558 = sadd.s32 %s557, 1
      %p561 = scmp.eq.s32.totalorder %s124, 1
      %p562 = scmp.ne.s32.totalorder %s557, %s559
      %p563 = scmp.eq.s32.totalorder %s124, 0
      %p564 = por %p562, %p563
      %p565 = scmp.ne.s32.totalorder %s557, %s559
      %p566 = scmp.eq.s32.totalorder %s129, 1
      %p567 = por %p565, %p566
      %p568 = scmp.ne.s32.totalorder %s559, %s560
      %p569 = scmp.eq.s32.totalorder %s129, 0
      %p570 = por %p568, %p569
      %p571 = scmp.ne.s32.totalorder %s559, %s560
      %p572 = scmp.eq.s32.totalorder %s130, 1
      %p573 = por %p571, %p572
      %p575 = scmp.ne.s32.totalorder %s560, %s574
      %p576 = scmp.eq.s32.totalorder %s130, 0
      %p577 = por %p575, %p576
      %s579 = sadd.s32 %s578, 1
      %p582 = scmp.eq.s32.totalorder %s124, 1
      %p583 = scmp.ne.s32.totalorder %s578, %s580
      %p584 = scmp.eq.s32.totalorder %s124, 0
      %p585 = por %p583, %p584
      %p586 = scmp.ne.s32.totalorder %s578, %s580
      %p587 = scmp.eq.s32.totalorder %s129, 1
      %p588 = por %p586, %p587
      %p589 = scmp.ne.s32.totalorder %s580, %s581
      %p590 = scmp.eq.s32.totalorder %s129, 0
      %p591 = por %p589, %p590
      %p592 = scmp.ne.s32.totalorder %s580, %s581
      %p593 = scmp.eq.s32.totalorder %s130, 1
      %p594 = por %p592, %p593
      %p596 = scmp.ne.s32.totalorder %s581, %s595
      %p597 = scmp.eq.s32.totalorder %s130, 0
      %p598 = por %p596, %p597
      %s600 = sadd.s32 %s599, 1
      %p603 = scmp.eq.s32.totalorder %s124, 1
      %p604 = scmp.ne.s32.totalorder %s599, %s601
      %p605 = scmp.eq.s32.totalorder %s124, 0
      %p606 = por %p604, %p605
      %p607 = scmp.ne.s32.totalorder %s599, %s601
      %p608 = scmp.eq.s32.totalorder %s129, 1
      %p609 = por %p607, %p608
      %p610 = scmp.ne.s32.totalorder %s601, %s602
      %p611 = scmp.eq.s32.totalorder %s129, 0
      %p612 = por %p610, %p611
      %p613 = scmp.ne.s32.totalorder %s601, %s602
      %p614 = scmp.eq.s32.totalorder %s130, 1
      %p615 = por %p613, %p614
      %p617 = scmp.ne.s32.totalorder %s602, %s616
      %p618 = scmp.eq.s32.totalorder %s130, 0
      %p619 = por %p617, %p618
      %s621 = sadd.s32 %s620, 1
      %p624 = scmp.eq.s32.totalorder %s124, 1
      %p625 = scmp.ne.s32.totalorder %s620, %s622
      %p626 = scmp.eq.s32.totalorder %s124, 0
      %p627 = por %p625, %p626
      %p628 = scmp.ne.s32.totalorder %s620, %s622
      %p629 = scmp.eq.s32.totalorder %s129, 1
      %p630 = por %p628, %p629
      %p631 = scmp.ne.s32.totalorder %s622, %s623
      %p632 = scmp.eq.s32.totalorder %s129, 0
      %p633 = por %p631, %p632
      %p634 = scmp.ne.s32.totalorder %s622, %s623
      %p635 = scmp.eq.s32.totalorder %s130, 1
      %p636 = por %p634, %p635
      %p638 = scmp.ne.s32.totalorder %s623, %s637
      %p639 = scmp.eq.s32.totalorder %s130, 0
      %p640 = por %p638, %p639
      %s642 = sadd.s32 %s641, 1
      %p645 = scmp.eq.s32.totalorder %s124, 1
      %p646 = scmp.ne.s32.totalorder %s641, %s643
      %p647 = scmp.eq.s32.totalorder %s124, 0
      %p648 = por %p646, %p647
      %p649 = scmp.ne.s32.totalorder %s641, %s643
      %p650 = scmp.eq.s32.totalorder %s129, 1
      %p651 = por %p649, %p650
      %p652 = scmp.ne.s32.totalorder %s643, %s644
      %p653 = scmp.eq.s32.totalorder %s129, 0
      %p654 = por %p652, %p653
      %p655 = scmp.ne.s32.totalorder %s643, %s644
      %p656 = scmp.eq.s32.totalorder %s130, 1
      %p657 = por %p655, %p656
      %p659 = scmp.ne.s32.totalorder %s644, %s658
      %p660 = scmp.eq.s32.totalorder %s130, 0
      %p661 = por %p659, %p660
      %s663 = sadd.s32 %s662, 1
      %p666 = scmp.eq.s32.totalorder %s124, 1
      %p667 = scmp.ne.s32.totalorder %s662, %s664
      %p668 = scmp.eq.s32.totalorder %s124, 0
      %p669 = por %p667, %p668
      %p670 = scmp.ne.s32.totalorder %s662, %s664
      %p671 = scmp.eq.s32.totalorder %s129, 1
      %p672 = por %p670, %p671
      %p673 = scmp.ne.s32.totalorder %s664, %s665
      %p674 = scmp.eq.s32.totalorder %s129, 0
      %p675 = por %p673, %p674
      %p676 = scmp.ne.s32.totalorder %s664, %s665
      %p677 = scmp.eq.s32.totalorder %s130, 1
      %p678 = por %p676, %p677
      %p680 = scmp.ne.s32.totalorder %s665, %s679
      %p681 = scmp.eq.s32.totalorder %s130, 0
      %p682 = por %p680, %p681
      %s684 = sadd.s32 %s683, 1
      %p687 = scmp.eq.s32.totalorder %s124, 1
      %p688 = scmp.ne.s32.totalorder %s683, %s685
      %p689 = scmp.eq.s32.totalorder %s124, 0
      %p690 = por %p688, %p689
      %p691 = scmp.ne.s32.totalorder %s683, %s685
      %p692 = scmp.eq.s32.totalorder %s129, 1
      %p693 = por %p691, %p692
      %p694 = scmp.ne.s32.totalorder %s685, %s686
      %p695 = scmp.eq.s32.totalorder %s129, 0
      %p696 = por %p694, %p695
      %p697 = scmp.ne.s32.totalorder %s685, %s686
      %p698 = scmp.eq.s32.totalorder %s130, 1
      %p699 = por %p697, %p698
      %p701 = scmp.ne.s32.totalorder %s686, %s700
      %p702 = scmp.eq.s32.totalorder %s130, 0
      %p703 = por %p701, %p702
      %s705 = sadd.s32 %s704, 1
      %p708 = scmp.eq.s32.totalorder %s124, 1
      %p709 = scmp.ne.s32.totalorder %s704, %s706
      %p710 = scmp.eq.s32.totalorder %s124, 0
      %p711 = por %p709, %p710
      %p712 = scmp.ne.s32.totalorder %s704, %s706
      %p713 = scmp.eq.s32.totalorder %s129, 1
      %p714 = por %p712, %p713
      %p715 = scmp.ne.s32.totalorder %s706, %s707
      %p716 = scmp.eq.s32.totalorder %s129, 0
      %p717 = por %p715, %p716
      %p718 = scmp.ne.s32.totalorder %s706, %s707
      %p719 = scmp.eq.s32.totalorder %s130, 1
      %p720 = por %p718, %p719
      %p722 = scmp.ne.s32.totalorder %s707, %s721
      %p723 = scmp.eq.s32.totalorder %s130, 0
      %p724 = por %p722, %p723
      %s726 = sadd.s32 %s725, 1
      %p729 = scmp.eq.s32.totalorder %s124, 1
      %p730 = scmp.ne.s32.totalorder %s725, %s727
      %p731 = scmp.eq.s32.totalorder %s124, 0
      %p732 = por %p730, %p731
      %p733 = scmp.ne.s32.totalorder %s725, %s727
      %p734 = scmp.eq.s32.totalorder %s129, 1
      %p735 = por %p733, %p734
      %p736 = scmp.ne.s32.totalorder %s727, %s728
      %p737 = scmp.eq.s32.totalorder %s129, 0
      %p738 = por %p736, %p737
      %p739 = scmp.ne.s32.totalorder %s727, %s728
      %p740 = scmp.eq.s32.totalorder %s130, 1
      %p741 = por %p739, %p740
      %p743 = scmp.ne.s32.totalorder %s728, %s742
      %p744 = scmp.eq.s32.totalorder %s130, 0
      %p745 = por %p743, %p744
      %s747 = sadd.s32 %s746, 1
      %p750 = scmp.eq.s32.totalorder %s124, 1
      %p751 = scmp.ne.s32.totalorder %s746, %s748
      %p752 = scmp.eq.s32.totalorder %s124, 0
      %p753 = por %p751, %p752
      %p754 = scmp.ne.s32.totalorder %s746, %s748
      %p755 = scmp.eq.s32.totalorder %s129, 1
      %p756 = por %p754, %p755
      %p757 = scmp.ne.s32.totalorder %s748, %s749
      %p758 = scmp.eq.s32.totalorder %s129, 0
      %p759 = por %p757, %p758
      %p760 = scmp.ne.s32.totalorder %s748, %s749
      %p761 = scmp.eq.s32.totalorder %s130, 1
      %p762 = por %p760, %p761
      %p764 = scmp.ne.s32.totalorder %s749, %s763
      %p765 = scmp.eq.s32.totalorder %s130, 0
      %p766 = por %p764, %p765
      %s768 = sadd.s32 %s767, 1
      %p771 = scmp.eq.s32.totalorder %s124, 1
      %p772 = scmp.ne.s32.totalorder %s767, %s769
      %p773 = scmp.eq.s32.totalorder %s124, 0
      %p774 = por %p772, %p773
      %p775 = scmp.ne.s32.totalorder %s767, %s769
      %p776 = scmp.eq.s32.totalorder %s129, 1
      %p777 = por %p775, %p776
      %p778 = scmp.ne.s32.totalorder %s769, %s770
      %p779 = scmp.eq.s32.totalorder %s129, 0
      %p780 = por %p778, %p779
      %p781 = scmp.ne.s32.totalorder %s769, %s770
      %p782 = scmp.eq.s32.totalorder %s130, 1
      %p783 = por %p781, %p782
      %p785 = scmp.ne.s32.totalorder %s770, %s784
      %p786 = scmp.eq.s32.totalorder %s130, 0
      %p787 = por %p785, %p786
      %s789 = sadd.s32 %s788, 1
      %p792 = scmp.eq.s32.totalorder %s124, 1
      %p793 = scmp.ne.s32.totalorder %s788, %s790
      %p794 = scmp.eq.s32.totalorder %s124, 0
      %p795 = por %p793, %p794
      %p796 = scmp.ne.s32.totalorder %s788, %s790
      %p797 = scmp.eq.s32.totalorder %s129, 1
      %p798 = por %p796, %p797
      %p799 = scmp.ne.s32.totalorder %s790, %s791
      %p800 = scmp.eq.s32.totalorder %s129, 0
      %p801 = por %p799, %p800
      %p802 = scmp.ne.s32.totalorder %s790, %s791
      %p803 = scmp.eq.s32.totalorder %s130, 1
      %p804 = por %p802, %p803
      %p806 = scmp.ne.s32.totalorder %s791, %s805
      %p807 = scmp.eq.s32.totalorder %s130, 0
      %p808 = por %p806, %p807
      %s810 = sadd.s32 %s809, 1
      %p813 = scmp.eq.s32.totalorder %s124, 1
      %p814 = scmp.ne.s32.totalorder %s809, %s811
      %p815 = scmp.eq.s32.totalorder %s124, 0
      %p816 = por %p814, %p815
      %p817 = scmp.ne.s32.totalorder %s809, %s811
      %p818 = scmp.eq.s32.totalorder %s129, 1
      %p819 = por %p817, %p818
      %p820 = scmp.ne.s32.totalorder %s811, %s812
      %p821 = scmp.eq.s32.totalorder %s129, 0
      %p822 = por %p820, %p821
      %p823 = scmp.ne.s32.totalorder %s811, %s812
      %p824 = scmp.eq.s32.totalorder %s130, 1
      %p825 = por %p823, %p824
      %p827 = scmp.ne.s32.totalorder %s812, %s826
      %p828 = scmp.eq.s32.totalorder %s130, 0
      %p829 = por %p827, %p828
      %s831 = sadd.s32 %s830, 1
      %p834 = scmp.eq.s32.totalorder %s124, 1
      %p835 = scmp.ne.s32.totalorder %s830, %s832
      %p836 = scmp.eq.s32.totalorder %s124, 0
      %p837 = por %p835, %p836
      %p838 = scmp.ne.s32.totalorder %s830, %s832
      %p839 = scmp.eq.s32.totalorder %s129, 1
      %p840 = por %p838, %p839
      %p841 = scmp.ne.s32.totalorder %s832, %s833
      %p842 = scmp.eq.s32.totalorder %s129, 0
      %p843 = por %p841, %p842
      %p844 = scmp.ne.s32.totalorder %s832, %s833
      %p845 = scmp.eq.s32.totalorder %s130, 1
      %p846 = por %p844, %p845
      %p848 = scmp.ne.s32.totalorder %s833, %s847
      %p849 = scmp.eq.s32.totalorder %s130, 0
      %p850 = por %p848, %p849
      %s852 = sadd.s32 %s851, 1
      %p855 = scmp.eq.s32.totalorder %s124, 1
      %p856 = scmp.ne.s32.totalorder %s851, %s853
      %p857 = scmp.eq.s32.totalorder %s124, 0
      %p858 = por %p856, %p857
      %p859 = scmp.ne.s32.totalorder %s851, %s853
      %p860 = scmp.eq.s32.totalorder %s129, 1
      %p861 = por %p859, %p860
      %p862 = scmp.ne.s32.totalorder %s853, %s854
      %p863 = scmp.eq.s32.totalorder %s129, 0
      %p864 = por %p862, %p863
      %p865 = scmp.ne.s32.totalorder %s853, %s854
      %p866 = scmp.eq.s32.totalorder %s130, 1
      %p867 = por %p865, %p866
      %p869 = scmp.ne.s32.totalorder %s854, %s868
      %p870 = scmp.eq.s32.totalorder %s130, 0
      %p871 = por %p869, %p870
      %s873 = sadd.s32 %s872, 1
      %p876 = scmp.eq.s32.totalorder %s124, 1
      %p877 = scmp.ne.s32.totalorder %s872, %s874
      %p878 = scmp.eq.s32.totalorder %s124, 0
      %p879 = por %p877, %p878
      %p880 = scmp.ne.s32.totalorder %s872, %s874
      %p881 = scmp.eq.s32.totalorder %s129, 1
      %p882 = por %p880, %p881
      %p883 = scmp.ne.s32.totalorder %s874, %s875
      %p884 = scmp.eq.s32.totalorder %s129, 0
      %p885 = por %p883, %p884
      %p886 = scmp.ne.s32.totalorder %s874, %s875
      %p887 = scmp.eq.s32.totalorder %s130, 1
      %p888 = por %p886, %p887
      %p890 = scmp.ne.s32.totalorder %s875, %s889
      %p891 = scmp.eq.s32.totalorder %s130, 0
      %p892 = por %p890, %p891
      %s894 = sadd.s32 %s893, 1
      %p897 = scmp.eq.s32.totalorder %s124, 1
      %p898 = scmp.ne.s32.totalorder %s893, %s895
      %p899 = scmp.eq.s32.totalorder %s124, 0
      %p900 = por %p898, %p899
      %p901 = scmp.ne.s32.totalorder %s893, %s895
      %p902 = scmp.eq.s32.totalorder %s129, 1
      %p903 = por %p901, %p902
      %p904 = scmp.ne.s32.totalorder %s895, %s896
      %p905 = scmp.eq.s32.totalorder %s129, 0
      %p906 = por %p904, %p905
      %p907 = scmp.ne.s32.totalorder %s895, %s896
      %p908 = scmp.eq.s32.totalorder %s130, 1
      %p909 = por %p907, %p908
      %p911 = scmp.ne.s32.totalorder %s896, %s910
      %p912 = scmp.eq.s32.totalorder %s130, 0
      %p913 = por %p911, %p912
      %s915 = sadd.s32 %s914, 1
      %p918 = scmp.eq.s32.totalorder %s124, 1
      %p919 = scmp.ne.s32.totalorder %s914, %s916
      %p920 = scmp.eq.s32.totalorder %s124, 0
      %p921 = por %p919, %p920
      %p922 = scmp.ne.s32.totalorder %s914, %s916
      %p923 = scmp.eq.s32.totalorder %s129, 1
      %p924 = por %p922, %p923
      %p925 = scmp.ne.s32.totalorder %s916, %s917
      %p926 = scmp.eq.s32.totalorder %s129, 0
      %p927 = por %p925, %p926
      %p928 = scmp.ne.s32.totalorder %s916, %s917
      %p929 = scmp.eq.s32.totalorder %s130, 1
      %p930 = por %p928, %p929
      %p932 = scmp.ne.s32.totalorder %s917, %s931
      %p933 = scmp.eq.s32.totalorder %s130, 0
      %p934 = por %p932, %p933
      %s936 = sadd.s32 %s935, 1
      %p939 = scmp.eq.s32.totalorder %s124, 1
      %p940 = scmp.ne.s32.totalorder %s935, %s937
      %p941 = scmp.eq.s32.totalorder %s124, 0
      %p942 = por %p940, %p941
      %p943 = scmp.ne.s32.totalorder %s935, %s937
      %p944 = scmp.eq.s32.totalorder %s129, 1
      %p945 = por %p943, %p944
      %p946 = scmp.ne.s32.totalorder %s937, %s938
      %p947 = scmp.eq.s32.totalorder %s129, 0
      %p948 = por %p946, %p947
      %p949 = scmp.ne.s32.totalorder %s937, %s938
      %p950 = scmp.eq.s32.totalorder %s130, 1
      %p951 = por %p949, %p950
      %p953 = scmp.ne.s32.totalorder %s938, %s952
      %p954 = scmp.eq.s32.totalorder %s130, 0
      %p955 = por %p953, %p954
      %s957 = sadd.s32 %s956, 1
      %p960 = scmp.eq.s32.totalorder %s124, 1
      %p961 = scmp.ne.s32.totalorder %s956, %s958
      %p962 = scmp.eq.s32.totalorder %s124, 0
      %p963 = por %p961, %p962
      %p964 = scmp.ne.s32.totalorder %s956, %s958
      %p965 = scmp.eq.s32.totalorder %s129, 1
      %p966 = por %p964, %p965
      %p967 = scmp.ne.s32.totalorder %s958, %s959
      %p968 = scmp.eq.s32.totalorder %s129, 0
      %p969 = por %p967, %p968
      %p970 = scmp.ne.s32.totalorder %s958, %s959
      %p971 = scmp.eq.s32.totalorder %s130, 1
      %p972 = por %p970, %p971
      %p974 = scmp.ne.s32.totalorder %s959, %s973
      %p975 = scmp.eq.s32.totalorder %s130, 0
      %p976 = por %p974, %p975
      %s978 = sadd.s32 %s977, 1
      %p981 = scmp.eq.s32.totalorder %s124, 1
      %p982 = scmp.ne.s32.totalorder %s977, %s979
      %p983 = scmp.eq.s32.totalorder %s124, 0
      %p984 = por %p982, %p983
      %p985 = scmp.ne.s32.totalorder %s977, %s979
      %p986 = scmp.eq.s32.totalorder %s129, 1
      %p987 = por %p985, %p986
      %p988 = scmp.ne.s32.totalorder %s979, %s980
      %p989 = scmp.eq.s32.totalorder %s129, 0
      %p990 = por %p988, %p989
      %p991 = scmp.ne.s32.totalorder %s979, %s980
      %p992 = scmp.eq.s32.totalorder %s130, 1
      %p993 = por %p991, %p992
      %p995 = scmp.ne.s32.totalorder %s980, %s994
      %p996 = scmp.eq.s32.totalorder %s130, 0
      %p997 = por %p995, %p996
      %s999 = sadd.s32 %s998, 1
      %p1002 = scmp.eq.s32.totalorder %s124, 1
      %p1003 = scmp.ne.s32.totalorder %s998, %s1000
      %p1004 = scmp.eq.s32.totalorder %s124, 0
      %p1005 = por %p1003, %p1004
      %p1006 = scmp.ne.s32.totalorder %s998, %s1000
      %p1007 = scmp.eq.s32.totalorder %s129, 1
      %p1008 = por %p1006, %p1007
      %p1009 = scmp.ne.s32.totalorder %s1000, %s1001
      %p1010 = scmp.eq.s32.totalorder %s129, 0
      %p1011 = por %p1009, %p1010
      %p1012 = scmp.ne.s32.totalorder %s1000, %s1001
      %p1013 = scmp.eq.s32.totalorder %s130, 1
      %p1014 = por %p1012, %p1013
      %p1016 = scmp.ne.s32.totalorder %s1001, %s1015
      %p1017 = scmp.eq.s32.totalorder %s130, 0
      %p1018 = por %p1016, %p1017
      %s1020 = sadd.s32 %s1019, 1
      %p1023 = scmp.eq.s32.totalorder %s124, 1
      %p1024 = scmp.ne.s32.totalorder %s1019, %s1021
      %p1025 = scmp.eq.s32.totalorder %s124, 0
      %p1026 = por %p1024, %p1025
      %p1027 = scmp.ne.s32.totalorder %s1019, %s1021
      %p1028 = scmp.eq.s32.totalorder %s129, 1
      %p1029 = por %p1027, %p1028
      %p1030 = scmp.ne.s32.totalorder %s1021, %s1022
      %p1031 = scmp.eq.s32.totalorder %s129, 0
      %p1032 = por %p1030, %p1031
      %p1033 = scmp.ne.s32.totalorder %s1021, %s1022
      %p1034 = scmp.eq.s32.totalorder %s130, 1
      %p1035 = por %p1033, %p1034
      %p1037 = scmp.ne.s32.totalorder %s1022, %s1036
      %p1038 = scmp.eq.s32.totalorder %s130, 0
      %p1039 = por %p1037, %p1038
      %s1041 = sadd.s32 %s1040, 1
      %p1044 = scmp.eq.s32.totalorder %s124, 1
      %p1045 = scmp.ne.s32.totalorder %s1040, %s1042
      %p1046 = scmp.eq.s32.totalorder %s124, 0
      %p1047 = por %p1045, %p1046
      %p1048 = scmp.ne.s32.totalorder %s1040, %s1042
      %p1049 = scmp.eq.s32.totalorder %s129, 1
      %p1050 = por %p1048, %p1049
      %p1051 = scmp.ne.s32.totalorder %s1042, %s1043
      %p1052 = scmp.eq.s32.totalorder %s129, 0
      %p1053 = por %p1051, %p1052
      %p1054 = scmp.ne.s32.totalorder %s1042, %s1043
      %p1055 = scmp.eq.s32.totalorder %s130, 1
      %p1056 = por %p1054, %p1055
      %p1058 = scmp.ne.s32.totalorder %s1043, %s1057
      %p1059 = scmp.eq.s32.totalorder %s130, 0
      %p1060 = por %p1058, %p1059
      %s1062 = sadd.s32 %s1061, 1
      %p1065 = scmp.eq.s32.totalorder %s124, 1
      %p1066 = scmp.ne.s32.totalorder %s1061, %s1063
      %p1067 = scmp.eq.s32.totalorder %s124, 0
      %p1068 = por %p1066, %p1067
      %p1069 = scmp.ne.s32.totalorder %s1061, %s1063
      %p1070 = scmp.eq.s32.totalorder %s129, 1
      %p1071 = por %p1069, %p1070
      %p1072 = scmp.ne.s32.totalorder %s1063, %s1064
      %p1073 = scmp.eq.s32.totalorder %s129, 0
      %p1074 = por %p1072, %p1073
      %p1075 = scmp.ne.s32.totalorder %s1063, %s1064
      %p1076 = scmp.eq.s32.totalorder %s130, 1
      %p1077 = por %p1075, %p1076
      %p1079 = scmp.ne.s32.totalorder %s1064, %s1078
      %p1080 = scmp.eq.s32.totalorder %s130, 0
      %p1081 = por %p1079, %p1080
      %s1083 = sadd.s32 %s1082, 1
      %p1086 = scmp.eq.s32.totalorder %s124, 1
      %p1087 = scmp.ne.s32.totalorder %s1082, %s1084
      %p1088 = scmp.eq.s32.totalorder %s124, 0
      %p1089 = por %p1087, %p1088
      %p1090 = scmp.ne.s32.totalorder %s1082, %s1084
      %p1091 = scmp.eq.s32.totalorder %s129, 1
      %p1092 = por %p1090, %p1091
      %p1093 = scmp.ne.s32.totalorder %s1084, %s1085
      %p1094 = scmp.eq.s32.totalorder %s129, 0
      %p1095 = por %p1093, %p1094
      %p1096 = scmp.ne.s32.totalorder %s1084, %s1085
      %p1097 = scmp.eq.s32.totalorder %s130, 1
      %p1098 = por %p1096, %p1097
      %p1100 = scmp.ne.s32.totalorder %s1085, %s1099
      %p1101 = scmp.eq.s32.totalorder %s130, 0
      %p1102 = por %p1100, %p1101
      %s1104 = sadd.s32 %s1103, 1
      %p1107 = scmp.eq.s32.totalorder %s124, 1
      %p1108 = scmp.ne.s32.totalorder %s1103, %s1105
      %p1109 = scmp.eq.s32.totalorder %s124, 0
      %p1110 = por %p1108, %p1109
      %p1111 = scmp.ne.s32.totalorder %s1103, %s1105
      %p1112 = scmp.eq.s32.totalorder %s129, 1
      %p1113 = por %p1111, %p1112
      %p1114 = scmp.ne.s32.totalorder %s1105, %s1106
      %p1115 = scmp.eq.s32.totalorder %s129, 0
      %p1116 = por %p1114, %p1115
      %p1117 = scmp.ne.s32.totalorder %s1105, %s1106
      %p1118 = scmp.eq.s32.totalorder %s130, 1
      %p1119 = por %p1117, %p1118
      %p1121 = scmp.ne.s32.totalorder %s1106, %s1120
      %p1122 = scmp.eq.s32.totalorder %s130, 0
      %p1123 = por %p1121, %p1122
      %s1125 = sadd.s32 %s1124, 1
      %p1128 = scmp.eq.s32.totalorder %s124, 1
      %p1129 = scmp.ne.s32.totalorder %s1124, %s1126
      %p1130 = scmp.eq.s32.totalorder %s124, 0
      %p1131 = por %p1129, %p1130
      %p1132 = scmp.ne.s32.totalorder %s1124, %s1126
      %p1133 = scmp.eq.s32.totalorder %s129, 1
      %p1134 = por %p1132, %p1133
      %p1135 = scmp.ne.s32.totalorder %s1126, %s1127
      %p1136 = scmp.eq.s32.totalorder %s129, 0
      %p1137 = por %p1135, %p1136
      %p1138 = scmp.ne.s32.totalorder %s1126, %s1127
      %p1139 = scmp.eq.s32.totalorder %s130, 1
      %p1140 = por %p1138, %p1139
      %p1142 = scmp.ne.s32.totalorder %s1127, %s1141
      %p1143 = scmp.eq.s32.totalorder %s130, 0
      %p1144 = por %p1142, %p1143
      %s1146 = sadd.s32 %s1145, 1
      %p1149 = scmp.eq.s32.totalorder %s124, 1
      %p1150 = scmp.ne.s32.totalorder %s1145, %s1147
      %p1151 = scmp.eq.s32.totalorder %s124, 0
      %p1152 = por %p1150, %p1151
      %p1153 = scmp.ne.s32.totalorder %s1145, %s1147
      %p1154 = scmp.eq.s32.totalorder %s129, 1
      %p1155 = por %p1153, %p1154
      %p1156 = scmp.ne.s32.totalorder %s1147, %s1148
      %p1157 = scmp.eq.s32.totalorder %s129, 0
      %p1158 = por %p1156, %p1157
      %p1159 = scmp.ne.s32.totalorder %s1147, %s1148
      %p1160 = scmp.eq.s32.totalorder %s130, 1
      %p1161 = por %p1159, %p1160
      %p1163 = scmp.ne.s32.totalorder %s1148, %s1162
      %p1164 = scmp.eq.s32.totalorder %s130, 0
      %p1165 = por %p1163, %p1164
      %s1167 = sadd.s32 %s1166, 1
      %p1170 = scmp.eq.s32.totalorder %s124, 1
      %p1171 = scmp.ne.s32.totalorder %s1166, %s1168
      %p1172 = scmp.eq.s32.totalorder %s124, 0
      %p1173 = por %p1171, %p1172
      %p1174 = scmp.ne.s32.totalorder %s1166, %s1168
      %p1175 = scmp.eq.s32.totalorder %s129, 1
      %p1176 = por %p1174, %p1175
      %p1177 = scmp.ne.s32.totalorder %s1168, %s1169
      %p1178 = scmp.eq.s32.totalorder %s129, 0
      %p1179 = por %p1177, %p1178
      %p1180 = scmp.ne.s32.totalorder %s1168, %s1169
      %p1181 = scmp.eq.s32.totalorder %s130, 1
      %p1182 = por %p1180, %p1181
      %p1184 = scmp.ne.s32.totalorder %s1169, %s1183
      %p1185 = scmp.eq.s32.totalorder %s130, 0
      %p1186 = por %p1184, %p1185
      %s1188 = sadd.s32 %s1187, 1
      %p1191 = scmp.eq.s32.totalorder %s124, 1
      %p1192 = scmp.ne.s32.totalorder %s1187, %s1189
      %p1193 = scmp.eq.s32.totalorder %s124, 0
      %p1194 = por %p1192, %p1193
      %p1195 = scmp.ne.s32.totalorder %s1187, %s1189
      %p1196 = scmp.eq.s32.totalorder %s129, 1
      %p1197 = por %p1195, %p1196
      %p1198 = scmp.ne.s32.totalorder %s1189, %s1190
      %p1199 = scmp.eq.s32.totalorder %s129, 0
      %p1200 = por %p1198, %p1199
      %p1201 = scmp.ne.s32.totalorder %s1189, %s1190
      %p1202 = scmp.eq.s32.totalorder %s130, 1
      %p1203 = por %p1201, %p1202
      %p1205 = scmp.ne.s32.totalorder %s1190, %s1204
      %p1206 = scmp.eq.s32.totalorder %s130, 0
      %p1207 = por %p1205, %p1206
      %s1208 = ssub.s32 %s124, %s131
      %p1209 = scmp.eq.s32.totalorder %s1208, 0
      %s1211 = sadd.s32 %s1210, 1
      %s1212 = scalar_select %p1209, %s1210, %s1211
      %p1215 = pneg %p1209
      %p1216 = scmp.eq.s32.totalorder %s124, 1
      %p1217 = por %p1215, %p1216
      %p1218 = scmp.ne.s32.totalorder %s1210, %s1213
      %p1219 = scmp.eq.s32.totalorder %s124, 0
      %p1220 = por %p1218, %p1219
      %p1221 = scmp.ne.s32.totalorder %s1210, %s1213
      %p1222 = scmp.eq.s32.totalorder %s129, 1
      %p1223 = por %p1221, %p1222
      %p1224 = scmp.ne.s32.totalorder %s1213, %s1214
      %p1225 = scmp.eq.s32.totalorder %s129, 0
      %p1226 = por %p1224, %p1225
      %p1227 = scmp.ne.s32.totalorder %s1213, %s1214
      %p1228 = scmp.eq.s32.totalorder %s130, 1
      %p1229 = por %p1227, %p1228
      %p1231 = scmp.ne.s32.totalorder %s1214, %s1230
      %p1232 = scmp.eq.s32.totalorder %s130, 0
      %p1233 = por %p1231, %p1232
      %p1234 = scmp.le.s32.totalorder 1, %s124
      %p1235 = scmp.lt.s32.totalorder %s124, 3
      %p1236 = pnand %p1234, %p1235
      %p1237 = pneg %p1236
      // Predicated region
      $region9: #{lightcnn_stam_forward.1} parent=5 // pred_check
        _
      $region10: #{lightcnn_stam_forward.1} parent=5 // pred_check_branch
        %1239 = sbr.rel (%p1236) target = $region12
      $region11: #{lightcnn_stam_forward.1} parent=5 // pred_region
        %s1240 = ssub.s32 %s124, 1
        // Predicated region
        $region13: #{lightcnn_stam_forward.1} parent=11 // pred_check
          %p1241 = pneg %p171
        $region14: #{lightcnn_stam_forward.1} parent=11 // pred_check_branch
          %1243 = sbr.rel (%p1241) target = $region16
        $region15: #{lightcnn_stam_forward.1} parent=11 // pred_region
          _
        $region16: #{lightcnn_stam_forward.1} parent=11 // pred_fallthru
          _
        // Predicated region
        $region17: #{lightcnn_stam_forward.1} parent=11 // pred_check
          %p1244 = pneg %p192
        $region18: #{lightcnn_stam_forward.1} parent=11 // pred_check_branch
          %1246 = sbr.rel (%p1244) target = $region20
        $region19: #{lightcnn_stam_forward.1} parent=11 // pred_region
          _
        $region20: #{lightcnn_stam_forward.1} parent=11 // pred_fallthru
          _
        // Predicated region
        $region21: #{lightcnn_stam_forward.1} parent=11 // pred_check
          %p1247 = pneg %p213
        $region22: #{lightcnn_stam_forward.1} parent=11 // pred_check_branch
          %1249 = sbr.rel (%p1247) target = $region24
        $region23: #{lightcnn_stam_forward.1} parent=11 // pred_region
          _
        $region24: #{lightcnn_stam_forward.1} parent=11 // pred_fallthru
          _
        // Predicated region
        $region25: #{lightcnn_stam_forward.1} parent=11 // pred_check
          %p1250 = pneg %p234
        $region26: #{lightcnn_stam_forward.1} parent=11 // pred_check_branch
          %1252 = sbr.rel (%p1250) target = $region28
        $region27: #{lightcnn_stam_forward.1} parent=11 // pred_region
          _
        $region28: #{lightcnn_stam_forward.1} parent=11 // pred_fallthru
          _
        // Predicated region
        $region29: #{lightcnn_stam_forward.1} parent=11 // pred_check
          %p1253 = pneg %p255
        $region30: #{lightcnn_stam_forward.1} parent=11 // pred_check_branch
          %1255 = sbr.rel (%p1253) target = $region32
        $region31: #{lightcnn_stam_forward.1} parent=11 // pred_region
          _
        $region32: #{lightcnn_stam_forward.1} parent=11 // pred_fallthru
          _
        // Predicated region
        $region33: #{lightcnn_stam_forward.1} parent=11 // pred_check
          %p1256 = pneg %p276
        $region34: #{lightcnn_stam_forward.1} parent=11 // pred_check_branch
          %1258 = sbr.rel (%p1256) target = $region36
        $region35: #{lightcnn_stam_forward.1} parent=11 // pred_region
          _
        $region36: #{lightcnn_stam_forward.1} parent=11 // pred_fallthru
          _
        // Predicated region
        $region37: #{lightcnn_stam_forward.1} parent=11 // pred_check
          %p1259 = pneg %p297
        $region38: #{lightcnn_stam_forward.1} parent=11 // pred_check_branch
          %1261 = sbr.rel (%p1259) target = $region40
        $region39: #{lightcnn_stam_forward.1} parent=11 // pred_region
          _
        $region40: #{lightcnn_stam_forward.1} parent=11 // pred_fallthru
          _
        // Predicated region
        $region41: #{lightcnn_stam_forward.1} parent=11 // pred_check
          %p1262 = pneg %p318
        $region42: #{lightcnn_stam_forward.1} parent=11 // pred_check_branch
          %1264 = sbr.rel (%p1262) target = $region44
        $region43: #{lightcnn_stam_forward.1} parent=11 // pred_region
          _
        $region44: #{lightcnn_stam_forward.1} parent=11 // pred_fallthru
          _
        // Predicated region
        $region45: #{lightcnn_stam_forward.1} parent=11 // pred_check
          %p1265 = pneg %p339
        $region46: #{lightcnn_stam_forward.1} parent=11 // pred_check_branch
          %1267 = sbr.rel (%p1265) target = $region48
        $region47: #{lightcnn_stam_forward.1} parent=11 // pred_region
          _
        $region48: #{lightcnn_stam_forward.1} parent=11 // pred_fallthru
          _
        // Predicated region
        $region49: #{lightcnn_stam_forward.1} parent=11 // pred_check
          %p1268 = pneg %p360
        $region50: #{lightcnn_stam_forward.1} parent=11 // pred_check_branch
          %1270 = sbr.rel (%p1268) target = $region52
        $region51: #{lightcnn_stam_forward.1} parent=11 // pred_region
          _
        $region52: #{lightcnn_stam_forward.1} parent=11 // pred_fallthru
          _
        // Predicated region
        $region53: #{lightcnn_stam_forward.1} parent=11 // pred_check
          %p1271 = pneg %p381
        $region54: #{lightcnn_stam_forward.1} parent=11 // pred_check_branch
          %1273 = sbr.rel (%p1271) target = $region56
        $region55: #{lightcnn_stam_forward.1} parent=11 // pred_region
          _
        $region56: #{lightcnn_stam_forward.1} parent=11 // pred_fallthru
          _
        // Predicated region
        $region57: #{lightcnn_stam_forward.1} parent=11 // pred_check
          %p1274 = pneg %p402
        $region58: #{lightcnn_stam_forward.1} parent=11 // pred_check_branch
          %1276 = sbr.rel (%p1274) target = $region60
        $region59: #{lightcnn_stam_forward.1} parent=11 // pred_region
          _
        $region60: #{lightcnn_stam_forward.1} parent=11 // pred_fallthru
          _
        // Predicated region
        $region61: #{lightcnn_stam_forward.1} parent=11 // pred_check
          %p1277 = pneg %p423
        $region62: #{lightcnn_stam_forward.1} parent=11 // pred_check_branch
          %1279 = sbr.rel (%p1277) target = $region64
        $region63: #{lightcnn_stam_forward.1} parent=11 // pred_region
          _
        $region64: #{lightcnn_stam_forward.1} parent=11 // pred_fallthru
          _
        // Predicated region
        $region65: #{lightcnn_stam_forward.1} parent=11 // pred_check
          %p1280 = pneg %p444
        $region66: #{lightcnn_stam_forward.1} parent=11 // pred_check_branch
          %1282 = sbr.rel (%p1280) target = $region68
        $region67: #{lightcnn_stam_forward.1} parent=11 // pred_region
          _
        $region68: #{lightcnn_stam_forward.1} parent=11 // pred_fallthru
          _
        // Predicated region
        $region69: #{lightcnn_stam_forward.1} parent=11 // pred_check
          %p1283 = pneg %p465
        $region70: #{lightcnn_stam_forward.1} parent=11 // pred_check_branch
          %1285 = sbr.rel (%p1283) target = $region72
        $region71: #{lightcnn_stam_forward.1} parent=11 // pred_region
          _
        $region72: #{lightcnn_stam_forward.1} parent=11 // pred_fallthru
          _
        // Predicated region
        $region73: #{lightcnn_stam_forward.1} parent=11 // pred_check
          %p1286 = pneg %p486
        $region74: #{lightcnn_stam_forward.1} parent=11 // pred_check_branch
          %1288 = sbr.rel (%p1286) target = $region76
        $region75: #{lightcnn_stam_forward.1} parent=11 // pred_region
          _
        $region76: #{lightcnn_stam_forward.1} parent=11 // pred_fallthru
          _
        // Predicated region
        $region77: #{lightcnn_stam_forward.1} parent=11 // pred_check
          %p1289 = pneg %p507
        $region78: #{lightcnn_stam_forward.1} parent=11 // pred_check_branch
          %1291 = sbr.rel (%p1289) target = $region80
        $region79: #{lightcnn_stam_forward.1} parent=11 // pred_region
          _
        $region80: #{lightcnn_stam_forward.1} parent=11 // pred_fallthru
          _
        // Predicated region
        $region81: #{lightcnn_stam_forward.1} parent=11 // pred_check
          %p1292 = pneg %p528
        $region82: #{lightcnn_stam_forward.1} parent=11 // pred_check_branch
          %1294 = sbr.rel (%p1292) target = $region84
        $region83: #{lightcnn_stam_forward.1} parent=11 // pred_region
          _
        $region84: #{lightcnn_stam_forward.1} parent=11 // pred_fallthru
          _
        // Predicated region
        $region85: #{lightcnn_stam_forward.1} parent=11 // pred_check
          %p1295 = pneg %p549
        $region86: #{lightcnn_stam_forward.1} parent=11 // pred_check_branch
          %1297 = sbr.rel (%p1295) target = $region88
        $region87: #{lightcnn_stam_forward.1} parent=11 // pred_region
          _
        $region88: #{lightcnn_stam_forward.1} parent=11 // pred_fallthru
          _
        // Predicated region
        $region89: #{lightcnn_stam_forward.1} parent=11 // pred_check
          %p1298 = pneg %p570
        $region90: #{lightcnn_stam_forward.1} parent=11 // pred_check_branch
          %1300 = sbr.rel (%p1298) target = $region92
        $region91: #{lightcnn_stam_forward.1} parent=11 // pred_region
          _
        $region92: #{lightcnn_stam_forward.1} parent=11 // pred_fallthru
          _
        // Predicated region
        $region93: #{lightcnn_stam_forward.1} parent=11 // pred_check
          %p1301 = pneg %p591
        $region94: #{lightcnn_stam_forward.1} parent=11 // pred_check_branch
          %1303 = sbr.rel (%p1301) target = $region96
        $region95: #{lightcnn_stam_forward.1} parent=11 // pred_region
          _
        $region96: #{lightcnn_stam_forward.1} parent=11 // pred_fallthru
          _
        // Predicated region
        $region97: #{lightcnn_stam_forward.1} parent=11 // pred_check
          %p1304 = pneg %p612
        $region98: #{lightcnn_stam_forward.1} parent=11 // pred_check_branch
          %1306 = sbr.rel (%p1304) target = $region100
        $region99: #{lightcnn_stam_forward.1} parent=11 // pred_region
          _
        $region100: #{lightcnn_stam_forward.1} parent=11 // pred_fallthru
          _
        // Predicated region
        $region101: #{lightcnn_stam_forward.1} parent=11 // pred_check
          %p1307 = pneg %p633
        $region102: #{lightcnn_stam_forward.1} parent=11 // pred_check_branch
          %1309 = sbr.rel (%p1307) target = $region104
        $region103: #{lightcnn_stam_forward.1} parent=11 // pred_region
          _
        $region104: #{lightcnn_stam_forward.1} parent=11 // pred_fallthru
          _
        // Predicated region
        $region105: #{lightcnn_stam_forward.1} parent=11 // pred_check
          %p1310 = pneg %p654
        $region106: #{lightcnn_stam_forward.1} parent=11 // pred_check_branch
          %1312 = sbr.rel (%p1310) target = $region108
        $region107: #{lightcnn_stam_forward.1} parent=11 // pred_region
          _
        $region108: #{lightcnn_stam_forward.1} parent=11 // pred_fallthru
          _
        // Predicated region
        $region109: #{lightcnn_stam_forward.1} parent=11 // pred_check
          %p1313 = pneg %p675
        $region110: #{lightcnn_stam_forward.1} parent=11 // pred_check_branch
          %1315 = sbr.rel (%p1313) target = $region112
        $region111: #{lightcnn_stam_forward.1} parent=11 // pred_region
          _
        $region112: #{lightcnn_stam_forward.1} parent=11 // pred_fallthru
          _
        // Predicated region
        $region113: #{lightcnn_stam_forward.1} parent=11 // pred_check
          %p1316 = pneg %p696
        $region114: #{lightcnn_stam_forward.1} parent=11 // pred_check_branch
          %1318 = sbr.rel (%p1316) target = $region116
        $region115: #{lightcnn_stam_forward.1} parent=11 // pred_region
          _
        $region116: #{lightcnn_stam_forward.1} parent=11 // pred_fallthru
          _
        // Predicated region
        $region117: #{lightcnn_stam_forward.1} parent=11 // pred_check
          %p1319 = pneg %p717
        $region118: #{lightcnn_stam_forward.1} parent=11 // pred_check_branch
          %1321 = sbr.rel (%p1319) target = $region120
        $region119: #{lightcnn_stam_forward.1} parent=11 // pred_region
          _
        $region120: #{lightcnn_stam_forward.1} parent=11 // pred_fallthru
          _
        // Predicated region
        $region121: #{lightcnn_stam_forward.1} parent=11 // pred_check
          %p1322 = pneg %p738
        $region122: #{lightcnn_stam_forward.1} parent=11 // pred_check_branch
          %1324 = sbr.rel (%p1322) target = $region124
        $region123: #{lightcnn_stam_forward.1} parent=11 // pred_region
          _
        $region124: #{lightcnn_stam_forward.1} parent=11 // pred_fallthru
          _
        // Predicated region
        $region125: #{lightcnn_stam_forward.1} parent=11 // pred_check
          %p1325 = pneg %p759
        $region126: #{lightcnn_stam_forward.1} parent=11 // pred_check_branch
          %1327 = sbr.rel (%p1325) target = $region128
        $region127: #{lightcnn_stam_forward.1} parent=11 // pred_region
          _
        $region128: #{lightcnn_stam_forward.1} parent=11 // pred_fallthru
          _
        // Predicated region
        $region129: #{lightcnn_stam_forward.1} parent=11 // pred_check
          %p1328 = pneg %p780
        $region130: #{lightcnn_stam_forward.1} parent=11 // pred_check_branch
          %1330 = sbr.rel (%p1328) target = $region132
        $region131: #{lightcnn_stam_forward.1} parent=11 // pred_region
          _
        $region132: #{lightcnn_stam_forward.1} parent=11 // pred_fallthru
          _
        // Predicated region
        $region133: #{lightcnn_stam_forward.1} parent=11 // pred_check
          %p1331 = pneg %p801
        $region134: #{lightcnn_stam_forward.1} parent=11 // pred_check_branch
          %1333 = sbr.rel (%p1331) target = $region136
        $region135: #{lightcnn_stam_forward.1} parent=11 // pred_region
          %s1335 = ssub.s32 32, 32
          %1336 = vsyncadd [#allocation7], %s1335
          %s1338 = sshll.u32 [#allocation6], 4
          %s1339 = int_to_ptr.vmem [resolvable:$true] %s1338
          %1341 = dma.hbm_to_vmem [thread:$0]  %s63, 32, %s1339, [#allocation7]
        $region136: #{lightcnn_stam_forward.1} parent=11 // pred_fallthru
          _
        // Predicated region
        $region137: #{lightcnn_stam_forward.1} parent=11 // pred_check
          %p1342 = pneg %p822
        $region138: #{lightcnn_stam_forward.1} parent=11 // pred_check_branch
          %1344 = sbr.rel (%p1342) target = $region140
        $region139: #{lightcnn_stam_forward.1} parent=11 // pred_region
          _
        $region140: #{lightcnn_stam_forward.1} parent=11 // pred_fallthru
          _
        // Predicated region
        $region141: #{lightcnn_stam_forward.1} parent=11 // pred_check
          %p1345 = pneg %p843
        $region142: #{lightcnn_stam_forward.1} parent=11 // pred_check_branch
          %1347 = sbr.rel (%p1345) target = $region144
        $region143: #{lightcnn_stam_forward.1} parent=11 // pred_region
          %s1349 = ssub.s32 16, 16
          %1350 = vsyncadd [#allocation10], %s1349
          %s1352 = sshll.u32 [#allocation9], 4
          %s1353 = int_to_ptr.vmem [resolvable:$true] %s1352
          %1355 = dma.hbm_to_vmem [thread:$0]  %s67, 16, %s1353, [#allocation10]
        $region144: #{lightcnn_stam_forward.1} parent=11 // pred_fallthru
          _
        // Predicated region
        $region145: #{lightcnn_stam_forward.1} parent=11 // pred_check
          %p1356 = pneg %p864
        $region146: #{lightcnn_stam_forward.1} parent=11 // pred_check_branch
          %1358 = sbr.rel (%p1356) target = $region148
        $region147: #{lightcnn_stam_forward.1} parent=11 // pred_region
          _
        $region148: #{lightcnn_stam_forward.1} parent=11 // pred_fallthru
          _
        // Predicated region
        $region149: #{lightcnn_stam_forward.1} parent=11 // pred_check
          %p1359 = pneg %p885
        $region150: #{lightcnn_stam_forward.1} parent=11 // pred_check_branch
          %1361 = sbr.rel (%p1359) target = $region152
        $region151: #{lightcnn_stam_forward.1} parent=11 // pred_region
          _
        $region152: #{lightcnn_stam_forward.1} parent=11 // pred_fallthru
          _
        // Predicated region
        $region153: #{lightcnn_stam_forward.1} parent=11 // pred_check
          %p1362 = pneg %p906
        $region154: #{lightcnn_stam_forward.1} parent=11 // pred_check_branch
          %1364 = sbr.rel (%p1362) target = $region156
        $region155: #{lightcnn_stam_forward.1} parent=11 // pred_region
          _
        $region156: #{lightcnn_stam_forward.1} parent=11 // pred_fallthru
          _
        // Predicated region
        $region157: #{lightcnn_stam_forward.1} parent=11 // pred_check
          %p1365 = pneg %p927
        $region158: #{lightcnn_stam_forward.1} parent=11 // pred_check_branch
          %1367 = sbr.rel (%p1365) target = $region160
        $region159: #{lightcnn_stam_forward.1} parent=11 // pred_region
          _
        $region160: #{lightcnn_stam_forward.1} parent=11 // pred_fallthru
          _
        // Predicated region
        $region161: #{lightcnn_stam_forward.1} parent=11 // pred_check
          %p1368 = pneg %p948
        $region162: #{lightcnn_stam_forward.1} parent=11 // pred_check_branch
          %1370 = sbr.rel (%p1368) target = $region164
        $region163: #{lightcnn_stam_forward.1} parent=11 // pred_region
          %s1372 = ssub.s32 32, 32
          %1373 = vsyncadd [#allocation10], %s1372
          %s1375 = sshll.u32 [#allocation11], 4
          %s1376 = int_to_ptr.vmem [resolvable:$true] %s1375
          %1378 = dma.hbm_to_vmem [thread:$0]  %s77, 32, %s1376, [#allocation10]
        $region164: #{lightcnn_stam_forward.1} parent=11 // pred_fallthru
          _
        // Predicated region
        $region165: #{lightcnn_stam_forward.1} parent=11 // pred_check
          %p1379 = pneg %p969
        $region166: #{lightcnn_stam_forward.1} parent=11 // pred_check_branch
          %1381 = sbr.rel (%p1379) target = $region168
        $region167: #{lightcnn_stam_forward.1} parent=11 // pred_region
          _
        $region168: #{lightcnn_stam_forward.1} parent=11 // pred_fallthru
          _
        // Predicated region
        $region169: #{lightcnn_stam_forward.1} parent=11 // pred_check
          %p1382 = pneg %p990
        $region170: #{lightcnn_stam_forward.1} parent=11 // pred_check_branch
          %1384 = sbr.rel (%p1382) target = $region172
        $region171: #{lightcnn_stam_forward.1} parent=11 // pred_region
          _
        $region172: #{lightcnn_stam_forward.1} parent=11 // pred_fallthru
          _
        // Predicated region
        $region173: #{lightcnn_stam_forward.1} parent=11 // pred_check
          %p1385 = pneg %p1011
        $region174: #{lightcnn_stam_forward.1} parent=11 // pred_check_branch
          %1387 = sbr.rel (%p1385) target = $region176
        $region175: #{lightcnn_stam_forward.1} parent=11 // pred_region
          _
        $region176: #{lightcnn_stam_forward.1} parent=11 // pred_fallthru
          _
        // Predicated region
        $region177: #{lightcnn_stam_forward.1} parent=11 // pred_check
          %p1388 = pneg %p1032
        $region178: #{lightcnn_stam_forward.1} parent=11 // pred_check_branch
          %1390 = sbr.rel (%p1388) target = $region180
        $region179: #{lightcnn_stam_forward.1} parent=11 // pred_region
          %s1392 = ssub.s32 16, 16
          %1393 = vsyncadd [#allocation13], %s1392
          %s1395 = sshll.u32 [#allocation12], 4
          %s1396 = int_to_ptr.vmem [resolvable:$true] %s1395
          %1398 = dma.hbm_to_vmem [thread:$0]  %s85, 16, %s1396, [#allocation13]
        $region180: #{lightcnn_stam_forward.1} parent=11 // pred_fallthru
          _
        // Predicated region
        $region181: #{lightcnn_stam_forward.1} parent=11 // pred_check
          %p1399 = pneg %p1053
        $region182: #{lightcnn_stam_forward.1} parent=11 // pred_check_branch
          %1401 = sbr.rel (%p1399) target = $region184
        $region183: #{lightcnn_stam_forward.1} parent=11 // pred_region
          _
        $region184: #{lightcnn_stam_forward.1} parent=11 // pred_fallthru
          _
        // Predicated region
        $region185: #{lightcnn_stam_forward.1} parent=11 // pred_check
          %p1402 = pneg %p1074
        $region186: #{lightcnn_stam_forward.1} parent=11 // pred_check_branch
          %1404 = sbr.rel (%p1402) target = $region188
        $region187: #{lightcnn_stam_forward.1} parent=11 // pred_region
          _
        $region188: #{lightcnn_stam_forward.1} parent=11 // pred_fallthru
          _
        // Predicated region
        $region189: #{lightcnn_stam_forward.1} parent=11 // pred_check
          %p1405 = pneg %p1095
        $region190: #{lightcnn_stam_forward.1} parent=11 // pred_check_branch
          %1407 = sbr.rel (%p1405) target = $region192
        $region191: #{lightcnn_stam_forward.1} parent=11 // pred_region
          _
        $region192: #{lightcnn_stam_forward.1} parent=11 // pred_fallthru
          _
        // Predicated region
        $region193: #{lightcnn_stam_forward.1} parent=11 // pred_check
          %p1408 = pneg %p1116
        $region194: #{lightcnn_stam_forward.1} parent=11 // pred_check_branch
          %1410 = sbr.rel (%p1408) target = $region196
        $region195: #{lightcnn_stam_forward.1} parent=11 // pred_region
          %s1412 = ssub.s32 16, 16
          %1413 = vsyncadd [#allocation13], %s1412
          %s1415 = sshll.u32 [#allocation14], 4
          %s1416 = int_to_ptr.vmem [resolvable:$true] %s1415
          %1418 = dma.hbm_to_vmem [thread:$0]  %s93, 16, %s1416, [#allocation13]
        $region196: #{lightcnn_stam_forward.1} parent=11 // pred_fallthru
          _
        // Predicated region
        $region197: #{lightcnn_stam_forward.1} parent=11 // pred_check
          %p1419 = pneg %p1137
        $region198: #{lightcnn_stam_forward.1} parent=11 // pred_check_branch
          %1421 = sbr.rel (%p1419) target = $region200
        $region199: #{lightcnn_stam_forward.1} parent=11 // pred_region
          _
        $region200: #{lightcnn_stam_forward.1} parent=11 // pred_fallthru
          _
        // Predicated region
        $region201: #{lightcnn_stam_forward.1} parent=11 // pred_check
          %p1422 = pneg %p1158
        $region202: #{lightcnn_stam_forward.1} parent=11 // pred_check_branch
          %1424 = sbr.rel (%p1422) target = $region204
        $region203: #{lightcnn_stam_forward.1} parent=11 // pred_region
          _
        $region204: #{lightcnn_stam_forward.1} parent=11 // pred_fallthru
          _
        // Predicated region
        $region205: #{lightcnn_stam_forward.1} parent=11 // pred_check
          %p1425 = pneg %p1179
        $region206: #{lightcnn_stam_forward.1} parent=11 // pred_check_branch
          %1427 = sbr.rel (%p1425) target = $region208
        $region207: #{lightcnn_stam_forward.1} parent=11 // pred_region
          _
        $region208: #{lightcnn_stam_forward.1} parent=11 // pred_fallthru
          _
        // Predicated region
        $region209: #{lightcnn_stam_forward.1} parent=11 // pred_check
          %p1428 = pneg %p1200
        $region210: #{lightcnn_stam_forward.1} parent=11 // pred_check_branch
          %1430 = sbr.rel (%p1428) target = $region212
        $region211: #{lightcnn_stam_forward.1} parent=11 // pred_region
          %s1432 = ssub.s32 32, 32
          %1433 = vsyncadd [#allocation16], %s1432
          %s1435 = sshll.u32 [#allocation15], 4
          %s1436 = int_to_ptr.vmem [resolvable:$true] %s1435
          %1438 = dma.hbm_to_vmem [thread:$0]  %s101, 32, %s1436, [#allocation16]
        $region212: #{lightcnn_stam_forward.1} parent=11 // pred_fallthru
          _
      $region12: #{lightcnn_stam_forward.1} parent=5 // pred_fallthru
        _
      %p1439 = scmp.lt.s32.totalorder %s124, 2
      // Predicated region
      $region213: #{lightcnn_stam_forward.1} parent=5 // pred_check
        %p1440 = pneg %p1439
      $region214: #{lightcnn_stam_forward.1} parent=5 // pred_check_branch
        %1442 = sbr.rel (%p1440) target = $region216
      $region215: #{lightcnn_stam_forward.1} parent=5 // pred_region
        // Predicated region
        $region217: #{lightcnn_stam_forward.1} parent=215 // pred_check
          %p1443 = pneg %p144
        $region218: #{lightcnn_stam_forward.1} parent=215 // pred_check_branch
          %1445 = sbr.rel (%p1443) target = $region220
        $region219: #{lightcnn_stam_forward.1} parent=215 // pred_region
          %p1446 = scmp.lt.s32.totalorder %s124, 1
          %s1447 = scalar_select %p1446, %s124, 1
          %s1448 = smul.addr %s1447, 32
          %s1449 = smul.addr %s1448, 4
          %s1450 = scalar_lea.vmem %s1, %s1449
        $region220: #{lightcnn_stam_forward.1} parent=215 // pred_fallthru
          _
      $region216: #{lightcnn_stam_forward.1} parent=5 // pred_fallthru
        _
      %p1451 = scmp.le.s32.totalorder 1, %s124
      %p1452 = scmp.lt.s32.totalorder %s124, 3
      %p1453 = pnand %p1451, %p1452
      %p1454 = pneg %p1453
      // Predicated region
      $region221: #{lightcnn_stam_forward.1} parent=5 // pred_check
        _
      $region222: #{lightcnn_stam_forward.1} parent=5 // pred_check_branch
        %1456 = sbr.rel (%p1453) target = $region224
      $region223: #{lightcnn_stam_forward.1} parent=5 // pred_region
        %s1457 = ssub.s32 %s124, 1
        // Predicated region
        $region225: #{lightcnn_stam_forward.1} parent=223 // pred_check
          %p1458 = pneg %p801
        $region226: #{lightcnn_stam_forward.1} parent=223 // pred_check_branch
          %1460 = sbr.rel (%p1458) target = $region228
        $region227: #{lightcnn_stam_forward.1} parent=223 // pred_region
          %1461 = dma.done [#allocation7], 32
        $region228: #{lightcnn_stam_forward.1} parent=223 // pred_fallthru
          _
        // Predicated region
        $region229: #{lightcnn_stam_forward.1} parent=223 // pred_check
          %p1462 = pneg %p843
        $region230: #{lightcnn_stam_forward.1} parent=223 // pred_check_branch
          %1464 = sbr.rel (%p1462) target = $region232
        $region231: #{lightcnn_stam_forward.1} parent=223 // pred_region
          %1465 = dma.done [#allocation10], 16
        $region232: #{lightcnn_stam_forward.1} parent=223 // pred_fallthru
          _
        // Predicated region
        $region233: #{lightcnn_stam_forward.1} parent=223 // pred_check
          %p1466 = pneg %p948
        $region234: #{lightcnn_stam_forward.1} parent=223 // pred_check_branch
          %1468 = sbr.rel (%p1466) target = $region236
        $region235: #{lightcnn_stam_forward.1} parent=223 // pred_region
          %1469 = dma.done [#allocation10], 32
        $region236: #{lightcnn_stam_forward.1} parent=223 // pred_fallthru
          _
        // Predicated region
        $region237: #{lightcnn_stam_forward.1} parent=223 // pred_check
          %p1470 = pneg %p1032
        $region238: #{lightcnn_stam_forward.1} parent=223 // pred_check_branch
          %1472 = sbr.rel (%p1470) target = $region240
        $region239: #{lightcnn_stam_forward.1} parent=223 // pred_region
          %1473 = dma.done [#allocation13], 16
        $region240: #{lightcnn_stam_forward.1} parent=223 // pred_fallthru
          _
        // Predicated region
        $region241: #{lightcnn_stam_forward.1} parent=223 // pred_check
          %p1474 = pneg %p1116
        $region242: #{lightcnn_stam_forward.1} parent=223 // pred_check_branch
          %1476 = sbr.rel (%p1474) target = $region244
        $region243: #{lightcnn_stam_forward.1} parent=223 // pred_region
          %1477 = dma.done [#allocation13], 16
        $region244: #{lightcnn_stam_forward.1} parent=223 // pred_fallthru
          _
        // Predicated region
        $region245: #{lightcnn_stam_forward.1} parent=223 // pred_check
          %p1478 = pneg %p1200
        $region246: #{lightcnn_stam_forward.1} parent=223 // pred_check_branch
          %1480 = sbr.rel (%p1478) target = $region248
        $region247: #{lightcnn_stam_forward.1} parent=223 // pred_region
          %1481 = dma.done [#allocation16], 32
        $region248: #{lightcnn_stam_forward.1} parent=223 // pred_fallthru
          _
        %p1482 = scmp.lt.s32.totalorder %s129, 1
        %s1483 = scalar_select %p1482, %s129, 1
        %s1484 = smul.addr %s1483, 32
        %s1485 = smul.addr %s1484, 4
        %s1486 = scalar_lea.vmem %s1, %s1485
        %p1487 = pneg %p150
        %p1488 = pneg %p147
        %p1489 = pneg %p171
        %p1490 = pneg %p168
        %p1491 = pneg %p192
        %p1492 = pneg %p189
        %p1493 = pneg %p213
        %p1494 = pneg %p210
        %p1495 = pneg %p234
        %p1496 = pneg %p231
        %p1497 = pneg %p255
        %p1498 = pneg %p252
        %p1499 = pneg %p276
        %p1500 = pneg %p273
        %p1501 = pneg %p297
        %p1502 = pneg %p294
        %p1503 = pneg %p318
        %p1504 = pneg %p315
        %p1505 = pneg %p339
        %p1506 = pneg %p336
        %p1507 = pneg %p360
        %p1508 = pneg %p357
        %p1509 = pneg %p381
        %p1510 = pneg %p378
        %p1511 = pneg %p402
        %p1512 = pneg %p399
        %p1513 = pneg %p423
        %p1514 = pneg %p420
        %p1515 = pneg %p444
        %p1516 = pneg %p441
        %p1517 = pneg %p465
        %p1518 = pneg %p462
        %p1519 = pneg %p486
        %p1520 = pneg %p483
        %p1521 = pneg %p507
        %p1522 = pneg %p504
        %p1523 = pneg %p528
        %p1524 = pneg %p525
        %p1525 = pneg %p549
        %p1526 = pneg %p546
        %p1527 = pneg %p570
        %p1528 = pneg %p567
        %p1529 = pneg %p591
        %p1530 = pneg %p588
        %p1531 = pneg %p612
        %p1532 = pneg %p609
        %p1533 = pneg %p633
        %p1534 = pneg %p630
        %p1535 = pneg %p654
        %p1536 = pneg %p651
        %p1537 = pneg %p675
        %p1538 = pneg %p672
        %p1539 = pneg %p696
        %p1540 = pneg %p693
        %p1541 = pneg %p717
        %p1542 = pneg %p714
        %p1543 = pneg %p738
        %p1544 = pneg %p735
        %p1545 = pneg %p759
        %p1546 = pneg %p756
        %p1547 = pneg %p780
        %p1548 = pneg %p777
        %p1549 = pneg %p801
        %p1550 = pneg %p798
        %p1551 = pneg %p822
        %p1552 = pneg %p819
        %p1553 = pneg %p843
        %p1554 = pneg %p840
        %p1555 = pneg %p864
        %p1556 = pneg %p861
        %p1557 = pneg %p885
        %p1558 = pneg %p882
        %p1559 = pneg %p906
        %p1560 = pneg %p903
        %p1561 = pneg %p927
        %p1562 = pneg %p924
        %p1563 = pneg %p948
        %p1564 = pneg %p945
        %p1565 = pneg %p969
        %p1566 = pneg %p966
        %p1567 = pneg %p990
        %p1568 = pneg %p987
        %p1569 = pneg %p1011
        %p1570 = pneg %p1008
        %p1571 = pneg %p1032
        %p1572 = pneg %p1029
        %p1573 = pneg %p1053
        %p1574 = pneg %p1050
        %p1575 = pneg %p1074
        %p1576 = pneg %p1071
        %p1577 = pneg %p1095
        %p1578 = pneg %p1092
        %p1579 = pneg %p1116
        %p1580 = pneg %p1113
        %p1581 = pneg %p1137
        %p1582 = pneg %p1134
        %p1583 = pneg %p1158
        %p1584 = pneg %p1155
        %p1585 = pneg %p1179
        %p1586 = pneg %p1176
        %p1587 = pneg %p1200
        %p1588 = pneg %p1197
        %p1589 = pneg %p1226
        %p1590 = pneg %p1223
        %s1591 = sand.u32 %s1213, 1
        %s1592 = scalar_lea.sflag [#allocation8], %s1591
        %s1593 = sand.u32 %s1213, 1
        %s1594 = scalar_lea.vmem [#allocation17], %s1593
        %p1595 = scmp.lt.s32.totalorder %s129, 1
        %s1596 = scalar_select %p1595, %s129, 1
        %s1597 = smul.addr %s1596, 32
        %s1598 = smul.addr %s1597, 4
        %s1599 = scalar_lea.vmem %s1, %s1598
        %v1601 = vld [vmem:[%s1599] sm:$0xf]
        %v1602 = vld [vmem:[%s1599 + $0x4] sm:$0xf]
        %v1603 = vld [vmem:[%s1599 + $0x8] sm:$0xf]
        %v1604 = vld [vmem:[%s1599 + $0xc] sm:$0xf]
        %v1605 = vld [vmem:[%s1599 + $0x10] sm:$0xf]
        %v1606 = vld [vmem:[%s1599 + $0x14] sm:$0xf]
        %v1607 = vld [vmem:[%s1599 + $0x18] sm:$0xf]
        %v1608 = vld [vmem:[%s1599 + $0x1c] sm:$0xf]
        %v1609 = vld [vmem:[%s1599 + $0x20] sm:$0xf]
        %v1610 = vld [vmem:[%s1599 + $0x24] sm:$0xf]
        %v1611 = vld [vmem:[%s1599 + $0x28] sm:$0xf]
        %v1612 = vld [vmem:[%s1599 + $0x2c] sm:$0xf]
        %v1613 = vld [vmem:[%s1599 + $0x30] sm:$0xf]
        %v1614 = vld [vmem:[%s1599 + $0x34] sm:$0xf]
        %v1615 = vld [vmem:[%s1599 + $0x38] sm:$0xf]
        %v1616 = vld [vmem:[%s1599 + $0x3c] sm:$0xf]
        %v1617 = vld [vmem:[%s1599 + $0x40] sm:$0xf]
        %v1618 = vld [vmem:[%s1599 + $0x44] sm:$0xf]
        %v1619 = vld [vmem:[%s1599 + $0x48] sm:$0xf]
        %v1620 = vld [vmem:[%s1599 + $0x4c] sm:$0xf]
        %v1621 = vld [vmem:[%s1599 + $0x50] sm:$0xf]
        %v1622 = vld [vmem:[%s1599 + $0x54] sm:$0xf]
        %v1623 = vld [vmem:[%s1599 + $0x58] sm:$0xf]
        %v1624 = vld [vmem:[%s1599 + $0x5c] sm:$0xf]
        %v1625 = vld [vmem:[%s1599 + $0x60] sm:$0xf]
        %v1626 = vld [vmem:[%s1599 + $0x64] sm:$0xf]
        %v1627 = vld [vmem:[%s1599 + $0x68] sm:$0xf]
        %v1628 = vld [vmem:[%s1599 + $0x6c] sm:$0xf]
        %v1629 = vld [vmem:[%s1599 + $0x70] sm:$0xf]
        %v1630 = vld [vmem:[%s1599 + $0x74] sm:$0xf]
        %v1631 = vld [vmem:[%s1599 + $0x78] sm:$0xf]
        %v1632 = vld [vmem:[%s1599 + $0x7c] sm:$0xf]
        %v1633 = vld [vmem:[#allocation6] sm:$0x3]
        %v1634 = vld [vmem:[%s65] sm:$0xf]
        %v1635 = vld [vmem:[%s65 + $0x4] sm:$0xf]
        %v1636 = vld [vmem:[%s65 + $0x8] sm:$0xf]
        %v1637 = vld [vmem:[%s65 + $0xc] sm:$0x3]
        %v1670 = vunpack.c.l.b16 %v1601
        %v1671 = vunpack.c.l.b16 %v1602
        %v1672 = vunpack.c.l.b16 %v1603
        %v1673 = vunpack.c.l.b16 %v1604
        %v1674 = vunpack.c.l.b16 %v1605
        %v1675 = vunpack.c.l.b16 %v1606
        %v1676 = vunpack.c.l.b16 %v1607
        %v1677 = vunpack.c.l.b16 %v1608
        %v1678 = vunpack.c.l.b16 %v1609
        %v1679 = vunpack.c.l.b16 %v1610
        %v1680 = vunpack.c.l.b16 %v1611
        %v1681 = vunpack.c.l.b16 %v1612
        %v1682 = vunpack.c.l.b16 %v1613
        %v1683 = vunpack.c.l.b16 %v1614
        %v1684 = vunpack.c.l.b16 %v1615
        %v1685 = vunpack.c.l.b16 %v1616
        %v1686 = vunpack.c.l.b16 %v1617
        %v1687 = vunpack.c.l.b16 %v1618
        %v1688 = vunpack.c.l.b16 %v1619
        %v1689 = vunpack.c.l.b16 %v1620
        %v1690 = vunpack.c.l.b16 %v1621
        %v1691 = vunpack.c.l.b16 %v1622
        %v1692 = vunpack.c.l.b16 %v1623
        %v1693 = vunpack.c.l.b16 %v1624
        %v1694 = vunpack.c.l.b16 %v1625
        %v1695 = vunpack.c.l.b16 %v1626
        %v1696 = vunpack.c.l.b16 %v1627
        %v1697 = vunpack.c.l.b16 %v1628
        %v1698 = vunpack.c.l.b16 %v1629
        %v1699 = vunpack.c.l.b16 %v1630
        %v1700 = vunpack.c.l.b16 %v1631
        %v1701 = vunpack.c.l.b16 %v1632
        %v1702 = vpack.c.b16 %v1671, %v1670
        %v1703 = vpack.c.b16 %v1673, %v1672
        %v1704 = vpack.c.b16 %v1675, %v1674
        %v1705 = vpack.c.b16 %v1677, %v1676
        %v1706 = vpack.c.b16 %v1679, %v1678
        %v1707 = vpack.c.b16 %v1681, %v1680
        %v1708 = vpack.c.b16 %v1683, %v1682
        %v1709 = vpack.c.b16 %v1685, %v1684
        %v1710 = vpack.c.b16 %v1687, %v1686
        %v1711 = vpack.c.b16 %v1689, %v1688
        %v1712 = vpack.c.b16 %v1691, %v1690
        %v1713 = vpack.c.b16 %v1693, %v1692
        %v1714 = vpack.c.b16 %v1695, %v1694
        %v1715 = vpack.c.b16 %v1697, %v1696
        %v1716 = vpack.c.b16 %v1699, %v1698
        %v1717 = vpack.c.b16 %v1701, %v1700
        %v1722 = vunpack.c.l.b16 %v1634
        %v1723 = vunpack.c.l.b16 %v1635
        %v1724 = vunpack.c.l.b16 %v1636
        %v1725 = vunpack.c.l.b16 %v1637
        %v1726 = vpack.c.b16 %v1723, %v1722
        %v1727 = vpack.c.b16 %v1725, %v1724
        %vm1729 = vcmask 220160
        %v1731 = vsel %vm1729, %v1702, 0
        %v1734 = vsel %vm1729, %v1703, 0
        %v1737 = vsel %vm1729, %v1704, 0
        %v1740 = vsel %vm1729, %v1705, 0
        %v1743 = vsel %vm1729, %v1706, 0
        %v1746 = vsel %vm1729, %v1707, 0
        %v1749 = vsel %vm1729, %v1708, 0
        %v1752 = vsel %vm1729, %v1709, 0
        %v1755 = vsel %vm1729, %v1710, 0
        %v1758 = vsel %vm1729, %v1711, 0
        %v1761 = vsel %vm1729, %v1712, 0
        %v1764 = vsel %vm1729, %v1713, 0
        %v1767 = vsel %vm1729, %v1714, 0
        %v1770 = vsel %vm1729, %v1715, 0
        %v1773 = vsel %vm1729, %v1716, 0
        %v1776 = vsel %vm1729, %v1717, 0
        %vm1778 = vcmask 1044480
        %vm1779 = vcmask 1045504
        %v1780 = vsel %vm1778, 4294967295, 65535
        %v1781 = vsel %vm1779, %v1780, 0
        %v1783 = vand.u32 %v1727, %v1781
        %1785 = vmatprep.subr.bf16.mxu0 0
        %1786 = vmatpush1.bf16.msra.mxu0 %v1726
        %1787 = vmatprep.subr.bf16.mxu0 0
        %1788 = vmatpush1.bf16.msra.mxu0 %v1783
        %1789 = vmatprep.subr.bf16.mxu0 0
        %1790 = vmatpush1.bf16.msra.mxu0 0
        %1791 = vmatprep.subr.bf16.mxu0 0
        %1792 = vmatpush1.bf16.msra.mxu0 0
        %1793 = vmatprep.subr.bf16.mxu0 0
        %1794 = vmatpush1.bf16.msra.mxu0 0
        %1795 = vmatprep.subr.bf16.mxu0 0
        %1796 = vmatpush1.bf16.msra.mxu0 0
        %1797 = vmatprep.subr.bf16.mxu0 0
        %1798 = vmatpush1.bf16.msra.mxu0 0
        %1799 = vmatprep.subr.bf16.mxu0 0
        %1800 = vmatpush1.bf16.msra.mxu0 0
        %1801 = vmatprep.subr.bf16.mxu0 0
        %1802 = vmatpush1.bf16.msra.mxu0 0
        %1803 = vmatprep.subr.bf16.mxu0 0
        %1804 = vmatpush1.bf16.msra.mxu0 0
        %1805 = vmatprep.subr.bf16.mxu0 0
        %1806 = vmatpush1.bf16.msra.mxu0 0
        %1807 = vmatprep.subr.bf16.mxu0 0
        %1808 = vmatpush1.bf16.msra.mxu0 0
        %1809 = vmatprep.subr.bf16.mxu0 0
        %1810 = vmatpush1.bf16.msra.mxu0 0
        %1811 = vmatprep.subr.bf16.mxu0 0
        %1812 = vmatpush1.bf16.msra.mxu0 0
        %1813 = vmatprep.subr.bf16.mxu0 0
        %1814 = vmatpush1.bf16.msra.mxu0 0
        %1815 = vmatprep.subr.bf16.mxu0 0
        %1816 = vmatpush1.bf16.msra.mxu0 0
        %1817 = vmatprep.mubr.bf16.mxu0 0
        %1818 = vmatmul.mubr.bf16.gmra.mrb[0].mxu0 %v1731
        %v1819 = vpop.f32.mrb[0].mxu0
        %v1820 = vadd.f32 0.0, %v1819
        %v1821 = vpop.f32.mrb[0].mxu0
        %v1822 = vpop.f32.mrb[0].mxu0
        %v1823 = vadd.f32 0.0, %v1822
        %v1824 = vpop.f32.mrb[0].mxu0
        %1825 = vmatprep.mubr.bf16.mxu0 0
        %1826 = vmatmul.mubr.bf16.gmra.mrb[0].mxu0 %v1734
        %v1827 = vpop.f32.mrb[0].mxu0
        %v1828 = vadd.f32 0.0, %v1827
        %v1829 = vpop.f32.mrb[0].mxu0
        %v1830 = vpop.f32.mrb[0].mxu0
        %v1831 = vadd.f32 0.0, %v1830
        %v1832 = vpop.f32.mrb[0].mxu0
        %1833 = vmatprep.mubr.bf16.mxu0 0
        %1834 = vmatmul.mubr.bf16.gmra.mrb[0].mxu0 %v1737
        %v1835 = vpop.f32.mrb[0].mxu0
        %v1836 = vadd.f32 0.0, %v1835
        %v1837 = vpop.f32.mrb[0].mxu0
        %v1838 = vpop.f32.mrb[0].mxu0
        %v1839 = vadd.f32 0.0, %v1838
        %v1840 = vpop.f32.mrb[0].mxu0
        %1841 = vmatprep.mubr.bf16.mxu0 0
        %1842 = vmatmul.mubr.bf16.gmra.mrb[0].mxu0 %v1740
        %v1843 = vpop.f32.mrb[0].mxu0
        %v1844 = vadd.f32 0.0, %v1843
        %v1845 = vpop.f32.mrb[0].mxu0
        %v1846 = vpop.f32.mrb[0].mxu0
        %v1847 = vadd.f32 0.0, %v1846
        %v1848 = vpop.f32.mrb[0].mxu0
        %1849 = vmatprep.mubr.bf16.mxu0 0
        %1850 = vmatmul.mubr.bf16.gmra.mrb[0].mxu0 %v1743
        %v1851 = vpop.f32.mrb[0].mxu0
        %v1852 = vadd.f32 0.0, %v1851
        %v1853 = vpop.f32.mrb[0].mxu0
        %v1854 = vpop.f32.mrb[0].mxu0
        %v1855 = vadd.f32 0.0, %v1854
        %v1856 = vpop.f32.mrb[0].mxu0
        %1857 = vmatprep.mubr.bf16.mxu0 0
        %1858 = vmatmul.mubr.bf16.gmra.mrb[0].mxu0 %v1746
        %v1859 = vpop.f32.mrb[0].mxu0
        %v1860 = vadd.f32 0.0, %v1859
        %v1861 = vpop.f32.mrb[0].mxu0
        %v1862 = vpop.f32.mrb[0].mxu0
        %v1863 = vadd.f32 0.0, %v1862
        %v1864 = vpop.f32.mrb[0].mxu0
        %1865 = vmatprep.mubr.bf16.mxu0 0
        %1866 = vmatmul.mubr.bf16.gmra.mrb[0].mxu0 %v1749
        %v1867 = vpop.f32.mrb[0].mxu0
        %v1868 = vadd.f32 0.0, %v1867
        %v1869 = vpop.f32.mrb[0].mxu0
        %v1870 = vpop.f32.mrb[0].mxu0
        %v1871 = vadd.f32 0.0, %v1870
        %v1872 = vpop.f32.mrb[0].mxu0
        %1873 = vmatprep.mubr.bf16.mxu0 0
        %1874 = vmatmul.mubr.bf16.gmra.mrb[0].mxu0 %v1752
        %v1875 = vpop.f32.mrb[0].mxu0
        %v1876 = vadd.f32 0.0, %v1875
        %v1877 = vpop.f32.mrb[0].mxu0
        %v1878 = vpop.f32.mrb[0].mxu0
        %v1879 = vadd.f32 0.0, %v1878
        %v1880 = vpop.f32.mrb[0].mxu0
        %1881 = vmatprep.mubr.bf16.mxu0 0
        %1882 = vmatmul.mubr.bf16.gmra.mrb[0].mxu0 %v1755
        %v1883 = vpop.f32.mrb[0].mxu0
        %v1884 = vadd.f32 0.0, %v1883
        %v1885 = vpop.f32.mrb[0].mxu0
        %v1886 = vpop.f32.mrb[0].mxu0
        %v1887 = vadd.f32 0.0, %v1886
        %v1888 = vpop.f32.mrb[0].mxu0
        %1889 = vmatprep.mubr.bf16.mxu0 0
        %1890 = vmatmul.mubr.bf16.gmra.mrb[0].mxu0 %v1758
        %v1891 = vpop.f32.mrb[0].mxu0
        %v1892 = vadd.f32 0.0, %v1891
        %v1893 = vpop.f32.mrb[0].mxu0
        %v1894 = vpop.f32.mrb[0].mxu0
        %v1895 = vadd.f32 0.0, %v1894
        %v1896 = vpop.f32.mrb[0].mxu0
        %1897 = vmatprep.mubr.bf16.mxu0 0
        %1898 = vmatmul.mubr.bf16.gmra.mrb[0].mxu0 %v1761
        %v1899 = vpop.f32.mrb[0].mxu0
        %v1900 = vadd.f32 0.0, %v1899
        %v1901 = vpop.f32.mrb[0].mxu0
        %v1902 = vpop.f32.mrb[0].mxu0
        %v1903 = vadd.f32 0.0, %v1902
        %v1904 = vpop.f32.mrb[0].mxu0
        %1905 = vmatprep.mubr.bf16.mxu0 0
        %1906 = vmatmul.mubr.bf16.gmra.mrb[0].mxu0 %v1764
        %v1907 = vpop.f32.mrb[0].mxu0
        %v1908 = vadd.f32 0.0, %v1907
        %v1909 = vpop.f32.mrb[0].mxu0
        %v1910 = vpop.f32.mrb[0].mxu0
        %v1911 = vadd.f32 0.0, %v1910
        %v1912 = vpop.f32.mrb[0].mxu0
        %1913 = vmatprep.mubr.bf16.mxu0 0
        %1914 = vmatmul.mubr.bf16.gmra.mrb[0].mxu0 %v1767
        %v1915 = vpop.f32.mrb[0].mxu0
        %v1916 = vadd.f32 0.0, %v1915
        %v1917 = vpop.f32.mrb[0].mxu0
        %v1918 = vpop.f32.mrb[0].mxu0
        %v1919 = vadd.f32 0.0, %v1918
        %v1920 = vpop.f32.mrb[0].mxu0
        %1921 = vmatprep.mubr.bf16.mxu0 0
        %1922 = vmatmul.mubr.bf16.gmra.mrb[0].mxu0 %v1770
        %v1923 = vpop.f32.mrb[0].mxu0
        %v1924 = vadd.f32 0.0, %v1923
        %v1925 = vpop.f32.mrb[0].mxu0
        %v1926 = vpop.f32.mrb[0].mxu0
        %v1927 = vadd.f32 0.0, %v1926
        %v1928 = vpop.f32.mrb[0].mxu0
        %1929 = vmatprep.mubr.bf16.mxu0 0
        %1930 = vmatmul.mubr.bf16.gmra.mrb[0].mxu0 %v1773
        %v1931 = vpop.f32.mrb[0].mxu0
        %v1932 = vadd.f32 0.0, %v1931
        %v1933 = vpop.f32.mrb[0].mxu0
        %v1934 = vpop.f32.mrb[0].mxu0
        %v1935 = vadd.f32 0.0, %v1934
        %v1936 = vpop.f32.mrb[0].mxu0
        %1937 = vmatprep.mubr.bf16.mxu0 0
        %1938 = vmatmul.mubr.bf16.gmra.mrb[0].mxu0 %v1776
        %v1939 = vpop.f32.mrb[0].mxu0
        %v1940 = vadd.f32 0.0, %v1939
        %v1941 = vpop.f32.mrb[0].mxu0
        %v1942 = vpop.f32.mrb[0].mxu0
        %v1943 = vadd.f32 0.0, %v1942
        %v1944 = vpop.f32.mrb[0].mxu0
        %1945 = vdwg.mxu0
        %v1946 = vlaneseq
        %v1947 = vshrl.u32 %v1946, 7
        %v1948 = vsub.s32 0, %v1947
        %v1949 = vrot.slane %v1633, %v1948
        %v1950 = vmul.f32 %v1820, %v1949
        %v1951 = vmul.f32 %v1823, %v1949
        %v1952 = vmul.f32 %v1828, %v1949
        %v1953 = vmul.f32 %v1831, %v1949
        %v1954 = vmul.f32 %v1836, %v1949
        %v1955 = vmul.f32 %v1839, %v1949
        %v1956 = vmul.f32 %v1844, %v1949
        %v1957 = vmul.f32 %v1847, %v1949
        %v1958 = vmul.f32 %v1852, %v1949
        %v1959 = vmul.f32 %v1855, %v1949
        %v1960 = vmul.f32 %v1860, %v1949
        %v1961 = vmul.f32 %v1863, %v1949
        %v1962 = vmul.f32 %v1868, %v1949
        %v1963 = vmul.f32 %v1871, %v1949
        %v1964 = vmul.f32 %v1876, %v1949
        %v1965 = vmul.f32 %v1879, %v1949
        %v1966 = vmul.f32 %v1884, %v1949
        %v1967 = vmul.f32 %v1887, %v1949
        %v1968 = vmul.f32 %v1892, %v1949
        %v1969 = vmul.f32 %v1895, %v1949
        %v1970 = vmul.f32 %v1900, %v1949
        %v1971 = vmul.f32 %v1903, %v1949
        %v1972 = vmul.f32 %v1908, %v1949
        %v1973 = vmul.f32 %v1911, %v1949
        %v1974 = vmul.f32 %v1916, %v1949
        %v1975 = vmul.f32 %v1919, %v1949
        %v1976 = vmul.f32 %v1924, %v1949
        %v1977 = vmul.f32 %v1927, %v1949
        %v1978 = vmul.f32 %v1932, %v1949
        %v1979 = vmul.f32 %v1935, %v1949
        %v1980 = vmul.f32 %v1940, %v1949
        %v1981 = vmul.f32 %v1943, %v1949
        %v1982 = vlaneseq
        %v1983 = vshrl.u32 %v1982, 7
        %v1984 = vsub.s32 1, %v1983
        %v1985 = vrot.slane %v1633, %v1984
        %v1986 = vadd.f32 %v1950, %v1985
        %v1987 = vadd.f32 %v1951, %v1985
        %v1988 = vadd.f32 %v1952, %v1985
        %v1989 = vadd.f32 %v1953, %v1985
        %v1990 = vadd.f32 %v1954, %v1985
        %v1991 = vadd.f32 %v1955, %v1985
        %v1992 = vadd.f32 %v1956, %v1985
        %v1993 = vadd.f32 %v1957, %v1985
        %v1994 = vadd.f32 %v1958, %v1985
        %v1995 = vadd.f32 %v1959, %v1985
        %v1996 = vadd.f32 %v1960, %v1985
        %v1997 = vadd.f32 %v1961, %v1985
        %v1998 = vadd.f32 %v1962, %v1985
        %v1999 = vadd.f32 %v1963, %v1985
        %v2000 = vadd.f32 %v1964, %v1985
        %v2001 = vadd.f32 %v1965, %v1985
        %v2002 = vadd.f32 %v1966, %v1985
        %v2003 = vadd.f32 %v1967, %v1985
        %v2004 = vadd.f32 %v1968, %v1985
        %v2005 = vadd.f32 %v1969, %v1985
        %v2006 = vadd.f32 %v1970, %v1985
        %v2007 = vadd.f32 %v1971, %v1985
        %v2008 = vadd.f32 %v1972, %v1985
        %v2009 = vadd.f32 %v1973, %v1985
        %v2010 = vadd.f32 %v1974, %v1985
        %v2011 = vadd.f32 %v1975, %v1985
        %v2012 = vadd.f32 %v1976, %v1985
        %v2013 = vadd.f32 %v1977, %v1985
        %v2014 = vadd.f32 %v1978, %v1985
        %v2015 = vadd.f32 %v1979, %v1985
        %v2016 = vadd.f32 %v1980, %v1985
        %v2017 = vadd.f32 %v1981, %v1985
        %v2018 = vmax.f32 %v1986, 0.0
        %v2019 = vmax.f32 %v1987, 0.0
        %v2020 = vmax.f32 %v1988, 0.0
        %v2021 = vmax.f32 %v1989, 0.0
        %v2022 = vmax.f32 %v1990, 0.0
        %v2023 = vmax.f32 %v1991, 0.0
        %v2024 = vmax.f32 %v1992, 0.0
        %v2025 = vmax.f32 %v1993, 0.0
        %v2026 = vmax.f32 %v1994, 0.0
        %v2027 = vmax.f32 %v1995, 0.0
        %v2028 = vmax.f32 %v1996, 0.0
        %v2029 = vmax.f32 %v1997, 0.0
        %v2030 = vmax.f32 %v1998, 0.0
        %v2031 = vmax.f32 %v1999, 0.0
        %v2032 = vmax.f32 %v2000, 0.0
        %v2033 = vmax.f32 %v2001, 0.0
        %v2034 = vmax.f32 %v2002, 0.0
        %v2035 = vmax.f32 %v2003, 0.0
        %v2036 = vmax.f32 %v2004, 0.0
        %v2037 = vmax.f32 %v2005, 0.0
        %v2038 = vmax.f32 %v2006, 0.0
        %v2039 = vmax.f32 %v2007, 0.0
        %v2040 = vmax.f32 %v2008, 0.0
        %v2041 = vmax.f32 %v2009, 0.0
        %v2042 = vmax.f32 %v2010, 0.0
        %v2043 = vmax.f32 %v2011, 0.0
        %v2044 = vmax.f32 %v2012, 0.0
        %v2045 = vmax.f32 %v2013, 0.0
        %v2046 = vmax.f32 %v2014, 0.0
        %v2047 = vmax.f32 %v2015, 0.0
        %v2048 = vmax.f32 %v2016, 0.0
        %v2049 = vmax.f32 %v2017, 0.0
        %v2050 = vmin.f32 %v2018, 6.0
        %v2051 = vmin.f32 %v2019, 6.0
        %v2052 = vmin.f32 %v2020, 6.0
        %v2053 = vmin.f32 %v2021, 6.0
        %v2054 = vmin.f32 %v2022, 6.0
        %v2055 = vmin.f32 %v2023, 6.0
        %v2056 = vmin.f32 %v2024, 6.0
        %v2057 = vmin.f32 %v2025, 6.0
        %v2058 = vmin.f32 %v2026, 6.0
        %v2059 = vmin.f32 %v2027, 6.0
        %v2060 = vmin.f32 %v2028, 6.0
        %v2061 = vmin.f32 %v2029, 6.0
        %v2062 = vmin.f32 %v2030, 6.0
        %v2063 = vmin.f32 %v2031, 6.0
        %v2064 = vmin.f32 %v2032, 6.0
        %v2065 = vmin.f32 %v2033, 6.0
        %v2066 = vmin.f32 %v2034, 6.0
        %v2067 = vmin.f32 %v2035, 6.0
        %v2068 = vmin.f32 %v2036, 6.0
        %v2069 = vmin.f32 %v2037, 6.0
        %v2070 = vmin.f32 %v2038, 6.0
        %v2071 = vmin.f32 %v2039, 6.0
        %v2072 = vmin.f32 %v2040, 6.0
        %v2073 = vmin.f32 %v2041, 6.0
        %v2074 = vmin.f32 %v2042, 6.0
        %v2075 = vmin.f32 %v2043, 6.0
        %v2076 = vmin.f32 %v2044, 6.0
        %v2077 = vmin.f32 %v2045, 6.0
        %v2078 = vmin.f32 %v2046, 6.0
        %v2079 = vmin.f32 %v2047, 6.0
        %v2080 = vmin.f32 %v2048, 6.0
        %v2081 = vmin.f32 %v2049, 6.0
        %v2082 = vpack.c.bf16 %v2051, %v2050
        %v2083 = vpack.c.bf16 %v2053, %v2052
        %v2084 = vpack.c.bf16 %v2055, %v2054
        %v2085 = vpack.c.bf16 %v2057, %v2056
        %v2086 = vpack.c.bf16 %v2059, %v2058
        %v2087 = vpack.c.bf16 %v2061, %v2060
        %v2088 = vpack.c.bf16 %v2063, %v2062
        %v2089 = vpack.c.bf16 %v2065, %v2064
        %v2090 = vpack.c.bf16 %v2067, %v2066
        %v2091 = vpack.c.bf16 %v2069, %v2068
        %v2092 = vpack.c.bf16 %v2071, %v2070
        %v2093 = vpack.c.bf16 %v2073, %v2072
        %v2094 = vpack.c.bf16 %v2075, %v2074
        %v2095 = vpack.c.bf16 %v2077, %v2076
        %v2096 = vpack.c.bf16 %v2079, %v2078
        %v2097 = vpack.c.bf16 %v2081, %v2080
        %v2098 = vld [vmem:[%s5] sm:$0xff]
        %v2099 = vld [vmem:[%s5 + $0x8] sm:$0x1]
        %v2100 = vld [vmem:[%s9] sm:$0x3]
        %v2101 = vld [vmem:[%s11] sm:$0x3]
        %v2102 = vld [vmem:[%s7] sm:$0xf]
        %v2103 = vld [vmem:[%s7 + $0x4] sm:$0xf]
        %v2104 = vld [vmem:[%s7 + $0x8] sm:$0xf]
        %v2105 = vld [vmem:[%s7 + $0xc] sm:$0xf]
        %v2106 = vld [vmem:[%s3] sm:$0xff]
        %v2107 = vld [vmem:[%s3 + $0x8] sm:$0xff]
        %v2108 = vld [vmem:[%s3 + $0x10] sm:$0xff]
        %v2109 = vld [vmem:[%s3 + $0x18] sm:$0xff]
        %v2110 = vld [vmem:[%s3 + $0x20] sm:$0xff]
        %v2111 = vld [vmem:[%s3 + $0x28] sm:$0xff]
        %v2112 = vld [vmem:[%s3 + $0x30] sm:$0xff]
        %v2113 = vld [vmem:[%s3 + $0x38] sm:$0xff]
        %v2122 = vunpack.c.l.b16 %v2106
        %v2123 = vunpack.c.h.b16 %v2106
        %v2124 = vunpack.c.l.b16 %v2107
        %v2125 = vunpack.c.h.b16 %v2107
        %v2126 = vunpack.c.l.b16 %v2108
        %v2127 = vunpack.c.h.b16 %v2108
        %v2128 = vunpack.c.l.b16 %v2109
        %v2129 = vunpack.c.h.b16 %v2109
        %v2130 = vunpack.c.l.b16 %v2110
        %v2131 = vunpack.c.h.b16 %v2110
        %v2132 = vunpack.c.l.b16 %v2111
        %v2133 = vunpack.c.h.b16 %v2111
        %v2134 = vunpack.c.l.b16 %v2112
        %v2135 = vunpack.c.h.b16 %v2112
        %v2136 = vunpack.c.l.b16 %v2113
        %v2137 = vunpack.c.h.b16 %v2113
        %v2138 = vpack.c.b16 %v2124, %v2122
        %v2139 = vpack.c.b16 %v2125, %v2123
        %v2140 = vpack.c.b16 %v2128, %v2126
        %v2141 = vpack.c.b16 %v2129, %v2127
        %v2142 = vpack.c.b16 %v2132, %v2130
        %v2143 = vpack.c.b16 %v2133, %v2131
        %v2144 = vpack.c.b16 %v2136, %v2134
        %v2145 = vpack.c.b16 %v2137, %v2135
        %2154 = vmatprep.subr.bf16.mxu0 0
        %2155 = vmatpush1.bf16.msra.mxu0 %v2082
        %2156 = vmatprep.subr.bf16.mxu0 0
        %2157 = vmatpush1.bf16.msra.mxu0 %v2083
        %2158 = vmatprep.subr.bf16.mxu0 0
        %2159 = vmatpush1.bf16.msra.mxu0 %v2084
        %2160 = vmatprep.subr.bf16.mxu0 0
        %2161 = vmatpush1.bf16.msra.mxu0 %v2085
        %2162 = vmatprep.subr.bf16.mxu0 0
        %2163 = vmatpush1.bf16.msra.mxu0 %v2086
        %2164 = vmatprep.subr.bf16.mxu0 0
        %2165 = vmatpush1.bf16.msra.mxu0 %v2087
        %2166 = vmatprep.subr.bf16.mxu0 0
        %2167 = vmatpush1.bf16.msra.mxu0 %v2088
        %2168 = vmatprep.subr.bf16.mxu0 0
        %2169 = vmatpush1.bf16.msra.mxu0 %v2089
        %2170 = vmatprep.subr.bf16.mxu0 0
        %2171 = vmatpush1.bf16.msra.mxu0 %v2090
        %2172 = vmatprep.subr.bf16.mxu0 0
        %2173 = vmatpush1.bf16.msra.mxu0 %v2091
        %2174 = vmatprep.subr.bf16.mxu0 0
        %2175 = vmatpush1.bf16.msra.mxu0 %v2092
        %2176 = vmatprep.subr.bf16.mxu0 0
        %2177 = vmatpush1.bf16.msra.mxu0 %v2093
        %2178 = vmatprep.subr.bf16.mxu0 0
        %2179 = vmatpush1.bf16.msra.mxu0 %v2094
        %2180 = vmatprep.subr.bf16.mxu0 0
        %2181 = vmatpush1.bf16.msra.mxu0 %v2095
        %2182 = vmatprep.subr.bf16.mxu0 0
        %2183 = vmatpush1.bf16.msra.mxu0 %v2096
        %2184 = vmatprep.subr.bf16.mxu0 0
        %2185 = vmatpush1.bf16.msra.mxu0 %v2097
        %2186 = vmatprep.mubr.bf16.mxu0 %v2139
        %2187 = vmatmul.mubr.bf16.gmra.mrb[0].mxu0 %v2138
        %v2188 = vpop.f32.mrb[0].mxu0
        %v2189 = vadd.f32 0.0, %v2188
        %v2190 = vpop.f32.mrb[0].mxu0
        %v2191 = vpop.f32.mrb[0].mxu0
        %v2192 = vadd.f32 0.0, %v2191
        %v2193 = vpop.f32.mrb[0].mxu0
        %2194 = vmatprep.mubr.bf16.mxu0 %v2141
        %2195 = vmatmul.mubr.bf16.gmra.mrb[0].mxu0 %v2140
        %v2196 = vpop.f32.mrb[0].mxu0
        %v2197 = vadd.f32 0.0, %v2196
        %v2198 = vpop.f32.mrb[0].mxu0
        %v2199 = vpop.f32.mrb[0].mxu0
        %v2200 = vadd.f32 0.0, %v2199
        %v2201 = vpop.f32.mrb[0].mxu0
        %2202 = vmatprep.mubr.bf16.mxu0 %v2143
        %2203 = vmatmul.mubr.bf16.gmra.mrb[0].mxu0 %v2142
        %v2204 = vpop.f32.mrb[0].mxu0
        %v2205 = vadd.f32 0.0, %v2204
        %v2206 = vpop.f32.mrb[0].mxu0
        %v2207 = vpop.f32.mrb[0].mxu0
        %v2208 = vadd.f32 0.0, %v2207
        %v2209 = vpop.f32.mrb[0].mxu0
        %2210 = vmatprep.mubr.bf16.mxu0 %v2145
        %2211 = vmatmul.mubr.bf16.gmra.mrb[0].mxu0 %v2144
        %v2212 = vpop.f32.mrb[0].mxu0
        %v2213 = vadd.f32 0.0, %v2212
        %v2214 = vpop.f32.mrb[0].mxu0
        %v2215 = vpop.f32.mrb[0].mxu0
        %v2216 = vadd.f32 0.0, %v2215
        %v2217 = vpop.f32.mrb[0].mxu0
        %2218 = vdwg.mxu0
        %v2219 = vlaneseq
        %v2220 = vshrl.u32 %v2219, 7
        %v2221 = vsub.s32 0, %v2220
        %v2222 = vrot.slane %v2098, %v2221
        %v2223 = vmul.f32 %v2189, %v2222
        %v2224 = vmul.f32 %v2192, %v2222
        %v2225 = vmul.f32 %v2197, %v2222
        %v2226 = vmul.f32 %v2200, %v2222
        %v2227 = vmul.f32 %v2205, %v2222
        %v2228 = vmul.f32 %v2208, %v2222
        %v2229 = vmul.f32 %v2213, %v2222
        %v2230 = vmul.f32 %v2216, %v2222
        %s2231 = scalar_lea.vmem %s3, 64
        %v2232 = vld [vmem:[%s2231] sm:$0xff]
        %v2233 = vld [vmem:[%s2231 + $0x8] sm:$0xff]
        %v2234 = vld [vmem:[%s2231 + $0x10] sm:$0xff]
        %v2235 = vld [vmem:[%s2231 + $0x18] sm:$0xff]
        %v2236 = vld [vmem:[%s2231 + $0x20] sm:$0xff]
        %v2237 = vld [vmem:[%s2231 + $0x28] sm:$0xff]
        %v2238 = vld [vmem:[%s2231 + $0x30] sm:$0xff]
        %v2239 = vld [vmem:[%s2231 + $0x38] sm:$0xff]
        %v2248 = vunpack.c.l.b16 %v2232
        %v2249 = vunpack.c.h.b16 %v2232
        %v2250 = vunpack.c.l.b16 %v2233
        %v2251 = vunpack.c.h.b16 %v2233
        %v2252 = vunpack.c.l.b16 %v2234
        %v2253 = vunpack.c.h.b16 %v2234
        %v2254 = vunpack.c.l.b16 %v2235
        %v2255 = vunpack.c.h.b16 %v2235
        %v2256 = vunpack.c.l.b16 %v2236
        %v2257 = vunpack.c.h.b16 %v2236
        %v2258 = vunpack.c.l.b16 %v2237
        %v2259 = vunpack.c.h.b16 %v2237
        %v2260 = vunpack.c.l.b16 %v2238
        %v2261 = vunpack.c.h.b16 %v2238
        %v2262 = vunpack.c.l.b16 %v2239
        %v2263 = vunpack.c.h.b16 %v2239
        %v2264 = vpack.c.b16 %v2250, %v2248
        %v2265 = vpack.c.b16 %v2251, %v2249
        %v2266 = vpack.c.b16 %v2254, %v2252
        %v2267 = vpack.c.b16 %v2255, %v2253
        %v2268 = vpack.c.b16 %v2258, %v2256
        %v2269 = vpack.c.b16 %v2259, %v2257
        %v2270 = vpack.c.b16 %v2262, %v2260
        %v2271 = vpack.c.b16 %v2263, %v2261
        %2280 = vmatprep.subr.bf16.mxu0 0
        %2281 = vmatpush1.bf16.msra.mxu0 %v2082
        %2282 = vmatprep.subr.bf16.mxu0 0
        %2283 = vmatpush1.bf16.msra.mxu0 %v2083
        %2284 = vmatprep.subr.bf16.mxu0 0
        %2285 = vmatpush1.bf16.msra.mxu0 %v2084
        %2286 = vmatprep.subr.bf16.mxu0 0
        %2287 = vmatpush1.bf16.msra.mxu0 %v2085
        %2288 = vmatprep.subr.bf16.mxu0 0
        %2289 = vmatpush1.bf16.msra.mxu0 %v2086
        %2290 = vmatprep.subr.bf16.mxu0 0
        %2291 = vmatpush1.bf16.msra.mxu0 %v2087
        %2292 = vmatprep.subr.bf16.mxu0 0
        %2293 = vmatpush1.bf16.msra.mxu0 %v2088
        %2294 = vmatprep.subr.bf16.mxu0 0
        %2295 = vmatpush1.bf16.msra.mxu0 %v2089
        %2296 = vmatprep.subr.bf16.mxu0 0
        %2297 = vmatpush1.bf16.msra.mxu0 %v2090
        %2298 = vmatprep.subr.bf16.mxu0 0
        %2299 = vmatpush1.bf16.msra.mxu0 %v2091
        %2300 = vmatprep.subr.bf16.mxu0 0
        %2301 = vmatpush1.bf16.msra.mxu0 %v2092
        %2302 = vmatprep.subr.bf16.mxu0 0
        %2303 = vmatpush1.bf16.msra.mxu0 %v2093
        %2304 = vmatprep.subr.bf16.mxu0 0
        %2305 = vmatpush1.bf16.msra.mxu0 %v2094
        %2306 = vmatprep.subr.bf16.mxu0 0
        %2307 = vmatpush1.bf16.msra.mxu0 %v2095
        %2308 = vmatprep.subr.bf16.mxu0 0
        %2309 = vmatpush1.bf16.msra.mxu0 %v2096
        %2310 = vmatprep.subr.bf16.mxu0 0
        %2311 = vmatpush1.bf16.msra.mxu0 %v2097
        %2312 = vmatprep.mubr.bf16.mxu0 %v2265
        %2313 = vmatmul.mubr.bf16.gmra.mrb[0].mxu0 %v2264
        %v2314 = vpop.f32.mrb[0].mxu0
        %v2315 = vadd.f32 0.0, %v2314
        %v2316 = vpop.f32.mrb[0].mxu0
        %v2317 = vpop.f32.mrb[0].mxu0
        %v2318 = vadd.f32 0.0, %v2317
        %v2319 = vpop.f32.mrb[0].mxu0
        %2320 = vmatprep.mubr.bf16.mxu0 %v2267
        %2321 = vmatmul.mubr.bf16.gmra.mrb[0].mxu0 %v2266
        %v2322 = vpop.f32.mrb[0].mxu0
        %v2323 = vadd.f32 0.0, %v2322
        %v2324 = vpop.f32.mrb[0].mxu0
        %v2325 = vpop.f32.mrb[0].mxu0
        %v2326 = vadd.f32 0.0, %v2325
        %v2327 = vpop.f32.mrb[0].mxu0
        %2328 = vmatprep.mubr.bf16.mxu0 %v2269
        %2329 = vmatmul.mubr.bf16.gmra.mrb[0].mxu0 %v2268
        %v2330 = vpop.f32.mrb[0].mxu0
        %v2331 = vadd.f32 0.0, %v2330
        %v2332 = vpop.f32.mrb[0].mxu0
        %v2333 = vpop.f32.mrb[0].mxu0
        %v2334 = vadd.f32 0.0, %v2333
        %v2335 = vpop.f32.mrb[0].mxu0
        %2336 = vmatprep.mubr.bf16.mxu0 %v2271
        %2337 = vmatmul.mubr.bf16.gmra.mrb[0].mxu0 %v2270
        %v2338 = vpop.f32.mrb[0].mxu0
        %v2339 = vadd.f32 0.0, %v2338
        %v2340 = vpop.f32.mrb[0].mxu0
        %v2341 = vpop.f32.mrb[0].mxu0
        %v2342 = vadd.f32 0.0, %v2341
        %v2343 = vpop.f32.mrb[0].mxu0
        %2344 = vdwg.mxu0
        %v2345 = vlaneseq
        %v2346 = vshrl.u32 %v2345, 7
        %v2347 = vsub.s32 1, %v2346
        %v2348 = vrot.slane %v2098, %v2347
        %v2349 = vmul.f32 %v2315, %v2348
        %v2350 = vmul.f32 %v2318, %v2348
        %v2351 = vmul.f32 %v2323, %v2348
        %v2352 = vmul.f32 %v2326, %v2348
        %v2353 = vmul.f32 %v2331, %v2348
        %v2354 = vmul.f32 %v2334, %v2348
        %v2355 = vmul.f32 %v2339, %v2348
        %v2356 = vmul.f32 %v2342, %v2348
        %v2357 = vadd.f32 %v2223, %v2349
        %v2358 = vadd.f32 %v2224, %v2350
        %v2359 = vadd.f32 %v2225, %v2351
        %v2360 = vadd.f32 %v2226, %v2352
        %v2361 = vadd.f32 %v2227, %v2353
        %v2362 = vadd.f32 %v2228, %v2354
        %v2363 = vadd.f32 %v2229, %v2355
        %v2364 = vadd.f32 %v2230, %v2356
        %s2365 = scalar_lea.vmem %s3, 128
        %v2366 = vld [vmem:[%s2365] sm:$0xff]
        %v2367 = vld [vmem:[%s2365 + $0x8] sm:$0xff]
        %v2368 = vld [vmem:[%s2365 + $0x10] sm:$0xff]
        %v2369 = vld [vmem:[%s2365 + $0x18] sm:$0xff]
        %v2370 = vld [vmem:[%s2365 + $0x20] sm:$0xff]
        %v2371 = vld [vmem:[%s2365 + $0x28] sm:$0xff]
        %v2372 = vld [vmem:[%s2365 + $0x30] sm:$0xff]
        %v2373 = vld [vmem:[%s2365 + $0x38] sm:$0xff]
        %v2382 = vunpack.c.l.b16 %v2366
        %v2383 = vunpack.c.h.b16 %v2366
        %v2384 = vunpack.c.l.b16 %v2367
        %v2385 = vunpack.c.h.b16 %v2367
        %v2386 = vunpack.c.l.b16 %v2368
        %v2387 = vunpack.c.h.b16 %v2368
        %v2388 = vunpack.c.l.b16 %v2369
        %v2389 = vunpack.c.h.b16 %v2369
        %v2390 = vunpack.c.l.b16 %v2370
        %v2391 = vunpack.c.h.b16 %v2370
        %v2392 = vunpack.c.l.b16 %v2371
        %v2393 = vunpack.c.h.b16 %v2371
        %v2394 = vunpack.c.l.b16 %v2372
        %v2395 = vunpack.c.h.b16 %v2372
        %v2396 = vunpack.c.l.b16 %v2373
        %v2397 = vunpack.c.h.b16 %v2373
        %v2398 = vpack.c.b16 %v2384, %v2382
        %v2399 = vpack.c.b16 %v2385, %v2383
        %v2400 = vpack.c.b16 %v2388, %v2386
        %v2401 = vpack.c.b16 %v2389, %v2387
        %v2402 = vpack.c.b16 %v2392, %v2390
        %v2403 = vpack.c.b16 %v2393, %v2391
        %v2404 = vpack.c.b16 %v2396, %v2394
        %v2405 = vpack.c.b16 %v2397, %v2395
        %2414 = vmatprep.subr.bf16.mxu0 0
        %2415 = vmatpush1.bf16.msra.mxu0 %v2082
        %2416 = vmatprep.subr.bf16.mxu0 0
        %2417 = vmatpush1.bf16.msra.mxu0 %v2083
        %2418 = vmatprep.subr.bf16.mxu0 0
        %2419 = vmatpush1.bf16.msra.mxu0 %v2084
        %2420 = vmatprep.subr.bf16.mxu0 0
        %2421 = vmatpush1.bf16.msra.mxu0 %v2085
        %2422 = vmatprep.subr.bf16.mxu0 0
        %2423 = vmatpush1.bf16.msra.mxu0 %v2086
        %2424 = vmatprep.subr.bf16.mxu0 0
        %2425 = vmatpush1.bf16.msra.mxu0 %v2087
        %2426 = vmatprep.subr.bf16.mxu0 0
        %2427 = vmatpush1.bf16.msra.mxu0 %v2088
        %2428 = vmatprep.subr.bf16.mxu0 0
        %2429 = vmatpush1.bf16.msra.mxu0 %v2089
        %2430 = vmatprep.subr.bf16.mxu0 0
        %2431 = vmatpush1.bf16.msra.mxu0 %v2090
        %2432 = vmatprep.subr.bf16.mxu0 0
        %2433 = vmatpush1.bf16.msra.mxu0 %v2091
        %2434 = vmatprep.subr.bf16.mxu0 0
        %2435 = vmatpush1.bf16.msra.mxu0 %v2092
        %2436 = vmatprep.subr.bf16.mxu0 0
        %2437 = vmatpush1.bf16.msra.mxu0 %v2093
        %2438 = vmatprep.subr.bf16.mxu0 0
        %2439 = vmatpush1.bf16.msra.mxu0 %v2094
        %2440 = vmatprep.subr.bf16.mxu0 0
        %2441 = vmatpush1.bf16.msra.mxu0 %v2095
        %2442 = vmatprep.subr.bf16.mxu0 0
        %2443 = vmatpush1.bf16.msra.mxu0 %v2096
        %2444 = vmatprep.subr.bf16.mxu0 0
        %2445 = vmatpush1.bf16.msra.mxu0 %v2097
        %2446 = vmatprep.mubr.bf16.mxu0 %v2399
        %2447 = vmatmul.mubr.bf16.gmra.mrb[0].mxu0 %v2398
        %v2448 = vpop.f32.mrb[0].mxu0
        %v2449 = vadd.f32 0.0, %v2448
        %v2450 = vpop.f32.mrb[0].mxu0
        %v2451 = vpop.f32.mrb[0].mxu0
        %v2452 = vadd.f32 0.0, %v2451
        %v2453 = vpop.f32.mrb[0].mxu0
        %2454 = vmatprep.mubr.bf16.mxu0 %v2401
        %2455 = vmatmul.mubr.bf16.gmra.mrb[0].mxu0 %v2400
        %v2456 = vpop.f32.mrb[0].mxu0
        %v2457 = vadd.f32 0.0, %v2456
        %v2458 = vpop.f32.mrb[0].mxu0
        %v2459 = vpop.f32.mrb[0].mxu0
        %v2460 = vadd.f32 0.0, %v2459
        %v2461 = vpop.f32.mrb[0].mxu0
        %2462 = vmatprep.mubr.bf16.mxu0 %v2403
        %2463 = vmatmul.mubr.bf16.gmra.mrb[0].mxu0 %v2402
        %v2464 = vpop.f32.mrb[0].mxu0
        %v2465 = vadd.f32 0.0, %v2464
        %v2466 = vpop.f32.mrb[0].mxu0
        %v2467 = vpop.f32.mrb[0].mxu0
        %v2468 = vadd.f32 0.0, %v2467
        %v2469 = vpop.f32.mrb[0].mxu0
        %2470 = vmatprep.mubr.bf16.mxu0 %v2405
        %2471 = vmatmul.mubr.bf16.gmra.mrb[0].mxu0 %v2404
        %v2472 = vpop.f32.mrb[0].mxu0
        %v2473 = vadd.f32 0.0, %v2472
        %v2474 = vpop.f32.mrb[0].mxu0
        %v2475 = vpop.f32.mrb[0].mxu0
        %v2476 = vadd.f32 0.0, %v2475
        %v2477 = vpop.f32.mrb[0].mxu0
        %2478 = vdwg.mxu0
        %v2479 = vlaneseq
        %v2480 = vshrl.u32 %v2479, 7
        %v2481 = vsub.s32 2, %v2480
        %v2482 = vrot.slane %v2098, %v2481
        %v2483 = vmul.f32 %v2449, %v2482
        %v2484 = vmul.f32 %v2452, %v2482
        %v2485 = vmul.f32 %v2457, %v2482
        %v2486 = vmul.f32 %v2460, %v2482
        %v2487 = vmul.f32 %v2465, %v2482
        %v2488 = vmul.f32 %v2468, %v2482
        %v2489 = vmul.f32 %v2473, %v2482
        %v2490 = vmul.f32 %v2476, %v2482
        %v2491 = vadd.f32 %v2357, %v2483
        %v2492 = vadd.f32 %v2358, %v2484
        %v2493 = vadd.f32 %v2359, %v2485
        %v2494 = vadd.f32 %v2360, %v2486
        %v2495 = vadd.f32 %v2361, %v2487
        %v2496 = vadd.f32 %v2362, %v2488
        %v2497 = vadd.f32 %v2363, %v2489
        %v2498 = vadd.f32 %v2364, %v2490
        %s2499 = scalar_lea.vmem %s3, 192
        %v2500 = vld [vmem:[%s2499] sm:$0xff]
        %v2501 = vld [vmem:[%s2499 + $0x8] sm:$0xff]
        %v2502 = vld [vmem:[%s2499 + $0x10] sm:$0xff]
        %v2503 = vld [vmem:[%s2499 + $0x18] sm:$0xff]
        %v2504 = vld [vmem:[%s2499 + $0x20] sm:$0xff]
        %v2505 = vld [vmem:[%s2499 + $0x28] sm:$0xff]
        %v2506 = vld [vmem:[%s2499 + $0x30] sm:$0xff]
        %v2507 = vld [vmem:[%s2499 + $0x38] sm:$0xff]
        %v2516 = vunpack.c.l.b16 %v2500
        %v2517 = vunpack.c.h.b16 %v2500
        %v2518 = vunpack.c.l.b16 %v2501
        %v2519 = vunpack.c.h.b16 %v2501
        %v2520 = vunpack.c.l.b16 %v2502
        %v2521 = vunpack.c.h.b16 %v2502
        %v2522 = vunpack.c.l.b16 %v2503
        %v2523 = vunpack.c.h.b16 %v2503
        %v2524 = vunpack.c.l.b16 %v2504
        %v2525 = vunpack.c.h.b16 %v2504
        %v2526 = vunpack.c.l.b16 %v2505
        %v2527 = vunpack.c.h.b16 %v2505
        %v2528 = vunpack.c.l.b16 %v2506
        %v2529 = vunpack.c.h.b16 %v2506
        %v2530 = vunpack.c.l.b16 %v2507
        %v2531 = vunpack.c.h.b16 %v2507
        %v2532 = vpack.c.b16 %v2518, %v2516
        %v2533 = vpack.c.b16 %v2519, %v2517
        %v2534 = vpack.c.b16 %v2522, %v2520
        %v2535 = vpack.c.b16 %v2523, %v2521
        %v2536 = vpack.c.b16 %v2526, %v2524
        %v2537 = vpack.c.b16 %v2527, %v2525
        %v2538 = vpack.c.b16 %v2530, %v2528
        %v2539 = vpack.c.b16 %v2531, %v2529
        %2548 = vmatprep.subr.bf16.mxu0 0
        %2549 = vmatpush1.bf16.msra.mxu0 %v2082
        %2550 = vmatprep.subr.bf16.mxu0 0
        %2551 = vmatpush1.bf16.msra.mxu0 %v2083
        %2552 = vmatprep.subr.bf16.mxu0 0
        %2553 = vmatpush1.bf16.msra.mxu0 %v2084
        %2554 = vmatprep.subr.bf16.mxu0 0
        %2555 = vmatpush1.bf16.msra.mxu0 %v2085
        %2556 = vmatprep.subr.bf16.mxu0 0
        %2557 = vmatpush1.bf16.msra.mxu0 %v2086
        %2558 = vmatprep.subr.bf16.mxu0 0
        %2559 = vmatpush1.bf16.msra.mxu0 %v2087
        %2560 = vmatprep.subr.bf16.mxu0 0
        %2561 = vmatpush1.bf16.msra.mxu0 %v2088
        %2562 = vmatprep.subr.bf16.mxu0 0
        %2563 = vmatpush1.bf16.msra.mxu0 %v2089
        %2564 = vmatprep.subr.bf16.mxu0 0
        %2565 = vmatpush1.bf16.msra.mxu0 %v2090
        %2566 = vmatprep.subr.bf16.mxu0 0
        %2567 = vmatpush1.bf16.msra.mxu0 %v2091
        %2568 = vmatprep.subr.bf16.mxu0 0
        %2569 = vmatpush1.bf16.msra.mxu0 %v2092
        %2570 = vmatprep.subr.bf16.mxu0 0
        %2571 = vmatpush1.bf16.msra.mxu0 %v2093
        %2572 = vmatprep.subr.bf16.mxu0 0
        %2573 = vmatpush1.bf16.msra.mxu0 %v2094
        %2574 = vmatprep.subr.bf16.mxu0 0
        %2575 = vmatpush1.bf16.msra.mxu0 %v2095
        %2576 = vmatprep.subr.bf16.mxu0 0
        %2577 = vmatpush1.bf16.msra.mxu0 %v2096
        %2578 = vmatprep.subr.bf16.mxu0 0
        %2579 = vmatpush1.bf16.msra.mxu0 %v2097
        %2580 = vmatprep.mubr.bf16.mxu0 %v2533
        %2581 = vmatmul.mubr.bf16.gmra.mrb[0].mxu0 %v2532
        %v2582 = vpop.f32.mrb[0].mxu0
        %v2583 = vadd.f32 0.0, %v2582
        %v2584 = vpop.f32.mrb[0].mxu0
        %v2585 = vpop.f32.mrb[0].mxu0
        %v2586 = vadd.f32 0.0, %v2585
        %v2587 = vpop.f32.mrb[0].mxu0
        %2588 = vmatprep.mubr.bf16.mxu0 %v2535
        %2589 = vmatmul.mubr.bf16.gmra.mrb[0].mxu0 %v2534
        %v2590 = vpop.f32.mrb[0].mxu0
        %v2591 = vadd.f32 0.0, %v2590
        %v2592 = vpop.f32.mrb[0].mxu0
        %v2593 = vpop.f32.mrb[0].mxu0
        %v2594 = vadd.f32 0.0, %v2593
        %v2595 = vpop.f32.mrb[0].mxu0
        %2596 = vmatprep.mubr.bf16.mxu0 %v2537
        %2597 = vmatmul.mubr.bf16.gmra.mrb[0].mxu0 %v2536
        %v2598 = vpop.f32.mrb[0].mxu0
        %v2599 = vadd.f32 0.0, %v2598
        %v2600 = vpop.f32.mrb[0].mxu0
        %v2601 = vpop.f32.mrb[0].mxu0
        %v2602 = vadd.f32 0.0, %v2601
        %v2603 = vpop.f32.mrb[0].mxu0
        %2604 = vmatprep.mubr.bf16.mxu0 %v2539
        %2605 = vmatmul.mubr.bf16.gmra.mrb[0].mxu0 %v2538
        %v2606 = vpop.f32.mrb[0].mxu0
        %v2607 = vadd.f32 0.0, %v2606
        %v2608 = vpop.f32.mrb[0].mxu0
        %v2609 = vpop.f32.mrb[0].mxu0
        %v2610 = vadd.f32 0.0, %v2609
        %v2611 = vpop.f32.mrb[0].mxu0
        %2612 = vdwg.mxu0
        %v2613 = vlaneseq
        %v2614 = vshrl.u32 %v2613, 7
        %v2615 = vsub.s32 3, %v2614
        %v2616 = vrot.slane %v2098, %v2615
        %v2617 = vmul.f32 %v2583, %v2616
        %v2618 = vmul.f32 %v2586, %v2616
        %v2619 = vmul.f32 %v2591, %v2616
        %v2620 = vmul.f32 %v2594, %v2616
        %v2621 = vmul.f32 %v2599, %v2616
        %v2622 = vmul.f32 %v2602, %v2616
        %v2623 = vmul.f32 %v2607, %v2616
        %v2624 = vmul.f32 %v2610, %v2616
        %s2625 = scalar_lea.vmem %s3, 256
        %v2626 = vld [vmem:[%s2625] sm:$0xff]
        %v2627 = vld [vmem:[%s2625 + $0x8] sm:$0xff]
        %v2628 = vld [vmem:[%s2625 + $0x10] sm:$0xff]
        %v2629 = vld [vmem:[%s2625 + $0x18] sm:$0xff]
        %v2630 = vld [vmem:[%s2625 + $0x20] sm:$0xff]
        %v2631 = vld [vmem:[%s2625 + $0x28] sm:$0xff]
        %v2632 = vld [vmem:[%s2625 + $0x30] sm:$0xff]
        %v2633 = vld [vmem:[%s2625 + $0x38] sm:$0xff]
        %v2642 = vunpack.c.l.b16 %v2626
        %v2643 = vunpack.c.h.b16 %v2626
        %v2644 = vunpack.c.l.b16 %v2627
        %v2645 = vunpack.c.h.b16 %v2627
        %v2646 = vunpack.c.l.b16 %v2628
        %v2647 = vunpack.c.h.b16 %v2628
        %v2648 = vunpack.c.l.b16 %v2629
        %v2649 = vunpack.c.h.b16 %v2629
        %v2650 = vunpack.c.l.b16 %v2630
        %v2651 = vunpack.c.h.b16 %v2630
        %v2652 = vunpack.c.l.b16 %v2631
        %v2653 = vunpack.c.h.b16 %v2631
        %v2654 = vunpack.c.l.b16 %v2632
        %v2655 = vunpack.c.h.b16 %v2632
        %v2656 = vunpack.c.l.b16 %v2633
        %v2657 = vunpack.c.h.b16 %v2633
        %v2658 = vpack.c.b16 %v2644, %v2642
        %v2659 = vpack.c.b16 %v2645, %v2643
        %v2660 = vpack.c.b16 %v2648, %v2646
        %v2661 = vpack.c.b16 %v2649, %v2647
        %v2662 = vpack.c.b16 %v2652, %v2650
        %v2663 = vpack.c.b16 %v2653, %v2651
        %v2664 = vpack.c.b16 %v2656, %v2654
        %v2665 = vpack.c.b16 %v2657, %v2655
        %2674 = vmatprep.subr.bf16.mxu0 0
        %2675 = vmatpush1.bf16.msra.mxu0 %v2082
        %2676 = vmatprep.subr.bf16.mxu0 0
        %2677 = vmatpush1.bf16.msra.mxu0 %v2083
        %2678 = vmatprep.subr.bf16.mxu0 0
        %2679 = vmatpush1.bf16.msra.mxu0 %v2084
        %2680 = vmatprep.subr.bf16.mxu0 0
        %2681 = vmatpush1.bf16.msra.mxu0 %v2085
        %2682 = vmatprep.subr.bf16.mxu0 0
        %2683 = vmatpush1.bf16.msra.mxu0 %v2086
        %2684 = vmatprep.subr.bf16.mxu0 0
        %2685 = vmatpush1.bf16.msra.mxu0 %v2087
        %2686 = vmatprep.subr.bf16.mxu0 0
        %2687 = vmatpush1.bf16.msra.mxu0 %v2088
        %2688 = vmatprep.subr.bf16.mxu0 0
        %2689 = vmatpush1.bf16.msra.mxu0 %v2089
        %2690 = vmatprep.subr.bf16.mxu0 0
        %2691 = vmatpush1.bf16.msra.mxu0 %v2090
        %2692 = vmatprep.subr.bf16.mxu0 0
        %2693 = vmatpush1.bf16.msra.mxu0 %v2091
        %2694 = vmatprep.subr.bf16.mxu0 0
        %2695 = vmatpush1.bf16.msra.mxu0 %v2092
        %2696 = vmatprep.subr.bf16.mxu0 0
        %2697 = vmatpush1.bf16.msra.mxu0 %v2093
        %2698 = vmatprep.subr.bf16.mxu0 0
        %2699 = vmatpush1.bf16.msra.mxu0 %v2094
        %2700 = vmatprep.subr.bf16.mxu0 0
        %2701 = vmatpush1.bf16.msra.mxu0 %v2095
        %2702 = vmatprep.subr.bf16.mxu0 0
        %2703 = vmatpush1.bf16.msra.mxu0 %v2096
        %2704 = vmatprep.subr.bf16.mxu0 0
        %2705 = vmatpush1.bf16.msra.mxu0 %v2097
        %2706 = vmatprep.mubr.bf16.mxu0 %v2659
        %2707 = vmatmul.mubr.bf16.gmra.mrb[0].mxu0 %v2658
        %v2708 = vpop.f32.mrb[0].mxu0
        %v2709 = vadd.f32 0.0, %v2708
        %v2710 = vpop.f32.mrb[0].mxu0
        %v2711 = vpop.f32.mrb[0].mxu0
        %v2712 = vadd.f32 0.0, %v2711
        %v2713 = vpop.f32.mrb[0].mxu0
        %2714 = vmatprep.mubr.bf16.mxu0 %v2661
        %2715 = vmatmul.mubr.bf16.gmra.mrb[0].mxu0 %v2660
        %v2716 = vpop.f32.mrb[0].mxu0
        %v2717 = vadd.f32 0.0, %v2716
        %v2718 = vpop.f32.mrb[0].mxu0
        %v2719 = vpop.f32.mrb[0].mxu0
        %v2720 = vadd.f32 0.0, %v2719
        %v2721 = vpop.f32.mrb[0].mxu0
        %2722 = vmatprep.mubr.bf16.mxu0 %v2663
        %2723 = vmatmul.mubr.bf16.gmra.mrb[0].mxu0 %v2662
        %v2724 = vpop.f32.mrb[0].mxu0
        %v2725 = vadd.f32 0.0, %v2724
        %v2726 = vpop.f32.mrb[0].mxu0
        %v2727 = vpop.f32.mrb[0].mxu0
        %v2728 = vadd.f32 0.0, %v2727
        %v2729 = vpop.f32.mrb[0].mxu0
        %2730 = vmatprep.mubr.bf16.mxu0 %v2665
        %2731 = vmatmul.mubr.bf16.gmra.mrb[0].mxu0 %v2664
        %v2732 = vpop.f32.mrb[0].mxu0
        %v2733 = vadd.f32 0.0, %v2732
        %v2734 = vpop.f32.mrb[0].mxu0
        %v2735 = vpop.f32.mrb[0].mxu0
        %v2736 = vadd.f32 0.0, %v2735
        %v2737 = vpop.f32.mrb[0].mxu0
        %2738 = vdwg.mxu0
        %v2739 = vlaneseq
        %v2740 = vshrl.u32 %v2739, 7
        %v2741 = vsub.s32 4, %v2740
        %v2742 = vrot.slane %v2098, %v2741
        %v2743 = vmul.f32 %v2709, %v2742
        %v2744 = vmul.f32 %v2712, %v2742
        %v2745 = vmul.f32 %v2717, %v2742
        %v2746 = vmul.f32 %v2720, %v2742
        %v2747 = vmul.f32 %v2725, %v2742
        %v2748 = vmul.f32 %v2728, %v2742
        %v2749 = vmul.f32 %v2733, %v2742
        %v2750 = vmul.f32 %v2736, %v2742
        %v2751 = vadd.f32 %v2617, %v2743
        %v2752 = vadd.f32 %v2618, %v2744
        %v2753 = vadd.f32 %v2619, %v2745
        %v2754 = vadd.f32 %v2620, %v2746
        %v2755 = vadd.f32 %v2621, %v2747
        %v2756 = vadd.f32 %v2622, %v2748
        %v2757 = vadd.f32 %v2623, %v2749
        %v2758 = vadd.f32 %v2624, %v2750
        %s2759 = scalar_lea.vmem %s3, 320
        %v2760 = vld [vmem:[%s2759] sm:$0xff]
        %v2761 = vld [vmem:[%s2759 + $0x8] sm:$0xff]
        %v2762 = vld [vmem:[%s2759 + $0x10] sm:$0xff]
        %v2763 = vld [vmem:[%s2759 + $0x18] sm:$0xff]
        %v2764 = vld [vmem:[%s2759 + $0x20] sm:$0xff]
        %v2765 = vld [vmem:[%s2759 + $0x28] sm:$0xff]
        %v2766 = vld [vmem:[%s2759 + $0x30] sm:$0xff]
        %v2767 = vld [vmem:[%s2759 + $0x38] sm:$0xff]
        %v2776 = vunpack.c.l.b16 %v2760
        %v2777 = vunpack.c.h.b16 %v2760
        %v2778 = vunpack.c.l.b16 %v2761
        %v2779 = vunpack.c.h.b16 %v2761
        %v2780 = vunpack.c.l.b16 %v2762
        %v2781 = vunpack.c.h.b16 %v2762
        %v2782 = vunpack.c.l.b16 %v2763
        %v2783 = vunpack.c.h.b16 %v2763
        %v2784 = vunpack.c.l.b16 %v2764
        %v2785 = vunpack.c.h.b16 %v2764
        %v2786 = vunpack.c.l.b16 %v2765
        %v2787 = vunpack.c.h.b16 %v2765
        %v2788 = vunpack.c.l.b16 %v2766
        %v2789 = vunpack.c.h.b16 %v2766
        %v2790 = vunpack.c.l.b16 %v2767
        %v2791 = vunpack.c.h.b16 %v2767
        %v2792 = vpack.c.b16 %v2778, %v2776
        %v2793 = vpack.c.b16 %v2779, %v2777
        %v2794 = vpack.c.b16 %v2782, %v2780
        %v2795 = vpack.c.b16 %v2783, %v2781
        %v2796 = vpack.c.b16 %v2786, %v2784
        %v2797 = vpack.c.b16 %v2787, %v2785
        %v2798 = vpack.c.b16 %v2790, %v2788
        %v2799 = vpack.c.b16 %v2791, %v2789
        %2808 = vmatprep.subr.bf16.mxu0 0
        %2809 = vmatpush1.bf16.msra.mxu0 %v2082
        %2810 = vmatprep.subr.bf16.mxu0 0
        %2811 = vmatpush1.bf16.msra.mxu0 %v2083
        %2812 = vmatprep.subr.bf16.mxu0 0
        %2813 = vmatpush1.bf16.msra.mxu0 %v2084
        %2814 = vmatprep.subr.bf16.mxu0 0
        %2815 = vmatpush1.bf16.msra.mxu0 %v2085
        %2816 = vmatprep.subr.bf16.mxu0 0
        %2817 = vmatpush1.bf16.msra.mxu0 %v2086
        %2818 = vmatprep.subr.bf16.mxu0 0
        %2819 = vmatpush1.bf16.msra.mxu0 %v2087
        %2820 = vmatprep.subr.bf16.mxu0 0
        %2821 = vmatpush1.bf16.msra.mxu0 %v2088
        %2822 = vmatprep.subr.bf16.mxu0 0
        %2823 = vmatpush1.bf16.msra.mxu0 %v2089
        %2824 = vmatprep.subr.bf16.mxu0 0
        %2825 = vmatpush1.bf16.msra.mxu0 %v2090
        %2826 = vmatprep.subr.bf16.mxu0 0
        %2827 = vmatpush1.bf16.msra.mxu0 %v2091
        %2828 = vmatprep.subr.bf16.mxu0 0
        %2829 = vmatpush1.bf16.msra.mxu0 %v2092
        %2830 = vmatprep.subr.bf16.mxu0 0
        %2831 = vmatpush1.bf16.msra.mxu0 %v2093
        %2832 = vmatprep.subr.bf16.mxu0 0
        %2833 = vmatpush1.bf16.msra.mxu0 %v2094
        %2834 = vmatprep.subr.bf16.mxu0 0
        %2835 = vmatpush1.bf16.msra.mxu0 %v2095
        %2836 = vmatprep.subr.bf16.mxu0 0
        %2837 = vmatpush1.bf16.msra.mxu0 %v2096
        %2838 = vmatprep.subr.bf16.mxu0 0
        %2839 = vmatpush1.bf16.msra.mxu0 %v2097
        %2840 = vmatprep.mubr.bf16.mxu0 %v2793
        %2841 = vmatmul.mubr.bf16.gmra.mrb[0].mxu0 %v2792
        %v2842 = vpop.f32.mrb[0].mxu0
        %v2843 = vadd.f32 0.0, %v2842
        %v2844 = vpop.f32.mrb[0].mxu0
        %v2845 = vpop.f32.mrb[0].mxu0
        %v2846 = vadd.f32 0.0, %v2845
        %v2847 = vpop.f32.mrb[0].mxu0
        %2848 = vmatprep.mubr.bf16.mxu0 %v2795
        %2849 = vmatmul.mubr.bf16.gmra.mrb[0].mxu0 %v2794
        %v2850 = vpop.f32.mrb[0].mxu0
        %v2851 = vadd.f32 0.0, %v2850
        %v2852 = vpop.f32.mrb[0].mxu0
        %v2853 = vpop.f32.mrb[0].mxu0
        %v2854 = vadd.f32 0.0, %v2853
        %v2855 = vpop.f32.mrb[0].mxu0
        %2856 = vmatprep.mubr.bf16.mxu0 %v2797
        %2857 = vmatmul.mubr.bf16.gmra.mrb[0].mxu0 %v2796
        %v2858 = vpop.f32.mrb[0].mxu0
        %v2859 = vadd.f32 0.0, %v2858
        %v2860 = vpop.f32.mrb[0].mxu0
        %v2861 = vpop.f32.mrb[0].mxu0
        %v2862 = vadd.f32 0.0, %v2861
        %v2863 = vpop.f32.mrb[0].mxu0
        %2864 = vmatprep.mubr.bf16.mxu0 %v2799
        %2865 = vmatmul.mubr.bf16.gmra.mrb[0].mxu0 %v2798
        %v2866 = vpop.f32.mrb[0].mxu0
        %v2867 = vadd.f32 0.0, %v2866
        %v2868 = vpop.f32.mrb[0].mxu0
        %v2869 = vpop.f32.mrb[0].mxu0
        %v2870 = vadd.f32 0.0, %v2869
        %v2871 = vpop.f32.mrb[0].mxu0
        %2872 = vdwg.mxu0
        %v2873 = vlaneseq
        %v2874 = vshrl.u32 %v2873, 7
        %v2875 = vsub.s32 5, %v2874
        %v2876 = vrot.slane %v2098, %v2875
        %v2877 = vmul.f32 %v2843, %v2876
        %v2878 = vmul.f32 %v2846, %v2876
        %v2879 = vmul.f32 %v2851, %v2876
        %v2880 = vmul.f32 %v2854, %v2876
        %v2881 = vmul.f32 %v2859, %v2876
        %v2882 = vmul.f32 %v2862, %v2876
        %v2883 = vmul.f32 %v2867, %v2876
        %v2884 = vmul.f32 %v2870, %v2876
        %v2885 = vadd.f32 %v2751, %v2877
        %v2886 = vadd.f32 %v2752, %v2878
        %v2887 = vadd.f32 %v2753, %v2879
        %v2888 = vadd.f32 %v2754, %v2880
        %v2889 = vadd.f32 %v2755, %v2881
        %v2890 = vadd.f32 %v2756, %v2882
        %v2891 = vadd.f32 %v2757, %v2883
        %v2892 = vadd.f32 %v2758, %v2884
        %s2893 = scalar_lea.vmem %s3, 384
        %v2894 = vld [vmem:[%s2893] sm:$0xff]
        %v2895 = vld [vmem:[%s2893 + $0x8] sm:$0xff]
        %v2896 = vld [vmem:[%s2893 + $0x10] sm:$0xff]
        %v2897 = vld [vmem:[%s2893 + $0x18] sm:$0xff]
        %v2898 = vld [vmem:[%s2893 + $0x20] sm:$0xff]
        %v2899 = vld [vmem:[%s2893 + $0x28] sm:$0xff]
        %v2900 = vld [vmem:[%s2893 + $0x30] sm:$0xff]
        %v2901 = vld [vmem:[%s2893 + $0x38] sm:$0xff]
        %v2910 = vunpack.c.l.b16 %v2894
        %v2911 = vunpack.c.h.b16 %v2894
        %v2912 = vunpack.c.l.b16 %v2895
        %v2913 = vunpack.c.h.b16 %v2895
        %v2914 = vunpack.c.l.b16 %v2896
        %v2915 = vunpack.c.h.b16 %v2896
        %v2916 = vunpack.c.l.b16 %v2897
        %v2917 = vunpack.c.h.b16 %v2897
        %v2918 = vunpack.c.l.b16 %v2898
        %v2919 = vunpack.c.h.b16 %v2898
        %v2920 = vunpack.c.l.b16 %v2899
        %v2921 = vunpack.c.h.b16 %v2899
        %v2922 = vunpack.c.l.b16 %v2900
        %v2923 = vunpack.c.h.b16 %v2900
        %v2924 = vunpack.c.l.b16 %v2901
        %v2925 = vunpack.c.h.b16 %v2901
        %v2926 = vpack.c.b16 %v2912, %v2910
        %v2927 = vpack.c.b16 %v2913, %v2911
        %v2928 = vpack.c.b16 %v2916, %v2914
        %v2929 = vpack.c.b16 %v2917, %v2915
        %v2930 = vpack.c.b16 %v2920, %v2918
        %v2931 = vpack.c.b16 %v2921, %v2919
        %v2932 = vpack.c.b16 %v2924, %v2922
        %v2933 = vpack.c.b16 %v2925, %v2923
        %2942 = vmatprep.subr.bf16.mxu0 0
        %2943 = vmatpush1.bf16.msra.mxu0 %v2082
        %2944 = vmatprep.subr.bf16.mxu0 0
        %2945 = vmatpush1.bf16.msra.mxu0 %v2083
        %2946 = vmatprep.subr.bf16.mxu0 0
        %2947 = vmatpush1.bf16.msra.mxu0 %v2084
        %2948 = vmatprep.subr.bf16.mxu0 0
        %2949 = vmatpush1.bf16.msra.mxu0 %v2085
        %2950 = vmatprep.subr.bf16.mxu0 0
        %2951 = vmatpush1.bf16.msra.mxu0 %v2086
        %2952 = vmatprep.subr.bf16.mxu0 0
        %2953 = vmatpush1.bf16.msra.mxu0 %v2087
        %2954 = vmatprep.subr.bf16.mxu0 0
        %2955 = vmatpush1.bf16.msra.mxu0 %v2088
        %2956 = vmatprep.subr.bf16.mxu0 0
        %2957 = vmatpush1.bf16.msra.mxu0 %v2089
        %2958 = vmatprep.subr.bf16.mxu0 0
        %2959 = vmatpush1.bf16.msra.mxu0 %v2090
        %2960 = vmatprep.subr.bf16.mxu0 0
        %2961 = vmatpush1.bf16.msra.mxu0 %v2091
        %2962 = vmatprep.subr.bf16.mxu0 0
        %2963 = vmatpush1.bf16.msra.mxu0 %v2092
        %2964 = vmatprep.subr.bf16.mxu0 0
        %2965 = vmatpush1.bf16.msra.mxu0 %v2093
        %2966 = vmatprep.subr.bf16.mxu0 0
        %2967 = vmatpush1.bf16.msra.mxu0 %v2094
        %2968 = vmatprep.subr.bf16.mxu0 0
        %2969 = vmatpush1.bf16.msra.mxu0 %v2095
        %2970 = vmatprep.subr.bf16.mxu0 0
        %2971 = vmatpush1.bf16.msra.mxu0 %v2096
        %2972 = vmatprep.subr.bf16.mxu0 0
        %2973 = vmatpush1.bf16.msra.mxu0 %v2097
        %2974 = vmatprep.mubr.bf16.mxu0 %v2927
        %2975 = vmatmul.mubr.bf16.gmra.mrb[0].mxu0 %v2926
        %v2976 = vpop.f32.mrb[0].mxu0
        %v2977 = vadd.f32 0.0, %v2976
        %v2978 = vpop.f32.mrb[0].mxu0
        %v2979 = vpop.f32.mrb[0].mxu0
        %v2980 = vadd.f32 0.0, %v2979
        %v2981 = vpop.f32.mrb[0].mxu0
        %2982 = vmatprep.mubr.bf16.mxu0 %v2929
        %2983 = vmatmul.mubr.bf16.gmra.mrb[0].mxu0 %v2928
        %v2984 = vpop.f32.mrb[0].mxu0
        %v2985 = vadd.f32 0.0, %v2984
        %v2986 = vpop.f32.mrb[0].mxu0
        %v2987 = vpop.f32.mrb[0].mxu0
        %v2988 = vadd.f32 0.0, %v2987
        %v2989 = vpop.f32.mrb[0].mxu0
        %2990 = vmatprep.mubr.bf16.mxu0 %v2931
        %2991 = vmatmul.mubr.bf16.gmra.mrb[0].mxu0 %v2930
        %v2992 = vpop.f32.mrb[0].mxu0
        %v2993 = vadd.f32 0.0, %v2992
        %v2994 = vpop.f32.mrb[0].mxu0
        %v2995 = vpop.f32.mrb[0].mxu0
        %v2996 = vadd.f32 0.0, %v2995
        %v2997 = vpop.f32.mrb[0].mxu0
        %2998 = vmatprep.mubr.bf16.mxu0 %v2933
        %2999 = vmatmul.mubr.bf16.gmra.mrb[0].mxu0 %v2932
        %v3000 = vpop.f32.mrb[0].mxu0
        %v3001 = vadd.f32 0.0, %v3000
        %v3002 = vpop.f32.mrb[0].mxu0
        %v3003 = vpop.f32.mrb[0].mxu0
        %v3004 = vadd.f32 0.0, %v3003
        %v3005 = vpop.f32.mrb[0].mxu0
        %3006 = vdwg.mxu0
        %v3007 = vlaneseq
        %v3008 = vshrl.u32 %v3007, 7
        %v3009 = vsub.s32 6, %v3008
        %v3010 = vrot.slane %v2098, %v3009
        %v3011 = vmul.f32 %v2977, %v3010
        %v3012 = vmul.f32 %v2980, %v3010
        %v3013 = vmul.f32 %v2985, %v3010
        %v3014 = vmul.f32 %v2988, %v3010
        %v3015 = vmul.f32 %v2993, %v3010
        %v3016 = vmul.f32 %v2996, %v3010
        %v3017 = vmul.f32 %v3001, %v3010
        %v3018 = vmul.f32 %v3004, %v3010
        %s3019 = scalar_lea.vmem %s3, 448
        %v3020 = vld [vmem:[%s3019] sm:$0xff]
        %v3021 = vld [vmem:[%s3019 + $0x8] sm:$0xff]
        %v3022 = vld [vmem:[%s3019 + $0x10] sm:$0xff]
        %v3023 = vld [vmem:[%s3019 + $0x18] sm:$0xff]
        %v3024 = vld [vmem:[%s3019 + $0x20] sm:$0xff]
        %v3025 = vld [vmem:[%s3019 + $0x28] sm:$0xff]
        %v3026 = vld [vmem:[%s3019 + $0x30] sm:$0xff]
        %v3027 = vld [vmem:[%s3019 + $0x38] sm:$0xff]
        %v3036 = vunpack.c.l.b16 %v3020
        %v3037 = vunpack.c.h.b16 %v3020
        %v3038 = vunpack.c.l.b16 %v3021
        %v3039 = vunpack.c.h.b16 %v3021
        %v3040 = vunpack.c.l.b16 %v3022
        %v3041 = vunpack.c.h.b16 %v3022
        %v3042 = vunpack.c.l.b16 %v3023
        %v3043 = vunpack.c.h.b16 %v3023
        %v3044 = vunpack.c.l.b16 %v3024
        %v3045 = vunpack.c.h.b16 %v3024
        %v3046 = vunpack.c.l.b16 %v3025
        %v3047 = vunpack.c.h.b16 %v3025
        %v3048 = vunpack.c.l.b16 %v3026
        %v3049 = vunpack.c.h.b16 %v3026
        %v3050 = vunpack.c.l.b16 %v3027
        %v3051 = vunpack.c.h.b16 %v3027
        %v3052 = vpack.c.b16 %v3038, %v3036
        %v3053 = vpack.c.b16 %v3039, %v3037
        %v3054 = vpack.c.b16 %v3042, %v3040
        %v3055 = vpack.c.b16 %v3043, %v3041
        %v3056 = vpack.c.b16 %v3046, %v3044
        %v3057 = vpack.c.b16 %v3047, %v3045
        %v3058 = vpack.c.b16 %v3050, %v3048
        %v3059 = vpack.c.b16 %v3051, %v3049
        %3068 = vmatprep.subr.bf16.mxu0 0
        %3069 = vmatpush1.bf16.msra.mxu0 %v2082
        %3070 = vmatprep.subr.bf16.mxu0 0
        %3071 = vmatpush1.bf16.msra.mxu0 %v2083
        %3072 = vmatprep.subr.bf16.mxu0 0
        %3073 = vmatpush1.bf16.msra.mxu0 %v2084
        %3074 = vmatprep.subr.bf16.mxu0 0
        %3075 = vmatpush1.bf16.msra.mxu0 %v2085
        %3076 = vmatprep.subr.bf16.mxu0 0
        %3077 = vmatpush1.bf16.msra.mxu0 %v2086
        %3078 = vmatprep.subr.bf16.mxu0 0
        %3079 = vmatpush1.bf16.msra.mxu0 %v2087
        %3080 = vmatprep.subr.bf16.mxu0 0
        %3081 = vmatpush1.bf16.msra.mxu0 %v2088
        %3082 = vmatprep.subr.bf16.mxu0 0
        %3083 = vmatpush1.bf16.msra.mxu0 %v2089
        %3084 = vmatprep.subr.bf16.mxu0 0
        %3085 = vmatpush1.bf16.msra.mxu0 %v2090
        %3086 = vmatprep.subr.bf16.mxu0 0
        %3087 = vmatpush1.bf16.msra.mxu0 %v2091
        %3088 = vmatprep.subr.bf16.mxu0 0
        %3089 = vmatpush1.bf16.msra.mxu0 %v2092
        %3090 = vmatprep.subr.bf16.mxu0 0
        %3091 = vmatpush1.bf16.msra.mxu0 %v2093
        %3092 = vmatprep.subr.bf16.mxu0 0
        %3093 = vmatpush1.bf16.msra.mxu0 %v2094
        %3094 = vmatprep.subr.bf16.mxu0 0
        %3095 = vmatpush1.bf16.msra.mxu0 %v2095
        %3096 = vmatprep.subr.bf16.mxu0 0
        %3097 = vmatpush1.bf16.msra.mxu0 %v2096
        %3098 = vmatprep.subr.bf16.mxu0 0
        %3099 = vmatpush1.bf16.msra.mxu0 %v2097
        %3100 = vmatprep.mubr.bf16.mxu0 %v3053
        %3101 = vmatmul.mubr.bf16.gmra.mrb[0].mxu0 %v3052
        %v3102 = vpop.f32.mrb[0].mxu0
        %v3103 = vadd.f32 0.0, %v3102
        %v3104 = vpop.f32.mrb[0].mxu0
        %v3105 = vpop.f32.mrb[0].mxu0
        %v3106 = vadd.f32 0.0, %v3105
        %v3107 = vpop.f32.mrb[0].mxu0
        %3108 = vmatprep.mubr.bf16.mxu0 %v3055
        %3109 = vmatmul.mubr.bf16.gmra.mrb[0].mxu0 %v3054
        %v3110 = vpop.f32.mrb[0].mxu0
        %v3111 = vadd.f32 0.0, %v3110
        %v3112 = vpop.f32.mrb[0].mxu0
        %v3113 = vpop.f32.mrb[0].mxu0
        %v3114 = vadd.f32 0.0, %v3113
        %v3115 = vpop.f32.mrb[0].mxu0
        %3116 = vmatprep.mubr.bf16.mxu0 %v3057
        %3117 = vmatmul.mubr.bf16.gmra.mrb[0].mxu0 %v3056
        %v3118 = vpop.f32.mrb[0].mxu0
        %v3119 = vadd.f32 0.0, %v3118
        %v3120 = vpop.f32.mrb[0].mxu0
        %v3121 = vpop.f32.mrb[0].mxu0
        %v3122 = vadd.f32 0.0, %v3121
        %v3123 = vpop.f32.mrb[0].mxu0
        %3124 = vmatprep.mubr.bf16.mxu0 %v3059
        %3125 = vmatmul.mubr.bf16.gmra.mrb[0].mxu0 %v3058
        %v3126 = vpop.f32.mrb[0].mxu0
        %v3127 = vadd.f32 0.0, %v3126
        %v3128 = vpop.f32.mrb[0].mxu0
        %v3129 = vpop.f32.mrb[0].mxu0
        %v3130 = vadd.f32 0.0, %v3129
        %v3131 = vpop.f32.mrb[0].mxu0
        %3132 = vdwg.mxu0
        %v3133 = vlaneseq
        %v3134 = vshrl.u32 %v3133, 7
        %v3135 = vsub.s32 7, %v3134
        %v3136 = vrot.slane %v2098, %v3135
        %v3137 = vmul.f32 %v3103, %v3136
        %v3138 = vmul.f32 %v3106, %v3136
        %v3139 = vmul.f32 %v3111, %v3136
        %v3140 = vmul.f32 %v3114, %v3136
        %v3141 = vmul.f32 %v3119, %v3136
        %v3142 = vmul.f32 %v3122, %v3136
        %v3143 = vmul.f32 %v3127, %v3136
        %v3144 = vmul.f32 %v3130, %v3136
        %v3145 = vadd.f32 %v3011, %v3137
        %v3146 = vadd.f32 %v3012, %v3138
        %v3147 = vadd.f32 %v3013, %v3139
        %v3148 = vadd.f32 %v3014, %v3140
        %v3149 = vadd.f32 %v3015, %v3141
        %v3150 = vadd.f32 %v3016, %v3142
        %v3151 = vadd.f32 %v3017, %v3143
        %v3152 = vadd.f32 %v3018, %v3144
        %s3153 = scalar_lea.vmem %s3, 512
        %v3154 = vld [vmem:[%s3153] sm:$0xff]
        %v3155 = vld [vmem:[%s3153 + $0x8] sm:$0xff]
        %v3156 = vld [vmem:[%s3153 + $0x10] sm:$0xff]
        %v3157 = vld [vmem:[%s3153 + $0x18] sm:$0xff]
        %v3158 = vld [vmem:[%s3153 + $0x20] sm:$0xff]
        %v3159 = vld [vmem:[%s3153 + $0x28] sm:$0xff]
        %v3160 = vld [vmem:[%s3153 + $0x30] sm:$0xff]
        %v3161 = vld [vmem:[%s3153 + $0x38] sm:$0xff]
        %v3170 = vunpack.c.l.b16 %v3154
        %v3171 = vunpack.c.h.b16 %v3154
        %v3172 = vunpack.c.l.b16 %v3155
        %v3173 = vunpack.c.h.b16 %v3155
        %v3174 = vunpack.c.l.b16 %v3156
        %v3175 = vunpack.c.h.b16 %v3156
        %v3176 = vunpack.c.l.b16 %v3157
        %v3177 = vunpack.c.h.b16 %v3157
        %v3178 = vunpack.c.l.b16 %v3158
        %v3179 = vunpack.c.h.b16 %v3158
        %v3180 = vunpack.c.l.b16 %v3159
        %v3181 = vunpack.c.h.b16 %v3159
        %v3182 = vunpack.c.l.b16 %v3160
        %v3183 = vunpack.c.h.b16 %v3160
        %v3184 = vunpack.c.l.b16 %v3161
        %v3185 = vunpack.c.h.b16 %v3161
        %v3186 = vpack.c.b16 %v3172, %v3170
        %v3187 = vpack.c.b16 %v3173, %v3171
        %v3188 = vpack.c.b16 %v3176, %v3174
        %v3189 = vpack.c.b16 %v3177, %v3175
        %v3190 = vpack.c.b16 %v3180, %v3178
        %v3191 = vpack.c.b16 %v3181, %v3179
        %v3192 = vpack.c.b16 %v3184, %v3182
        %v3193 = vpack.c.b16 %v3185, %v3183
        %3202 = vmatprep.subr.bf16.mxu0 0
        %3203 = vmatpush1.bf16.msra.mxu0 %v2082
        %3204 = vmatprep.subr.bf16.mxu0 0
        %3205 = vmatpush1.bf16.msra.mxu0 %v2083
        %3206 = vmatprep.subr.bf16.mxu0 0
        %3207 = vmatpush1.bf16.msra.mxu0 %v2084
        %3208 = vmatprep.subr.bf16.mxu0 0
        %3209 = vmatpush1.bf16.msra.mxu0 %v2085
        %3210 = vmatprep.subr.bf16.mxu0 0
        %3211 = vmatpush1.bf16.msra.mxu0 %v2086
        %3212 = vmatprep.subr.bf16.mxu0 0
        %3213 = vmatpush1.bf16.msra.mxu0 %v2087
        %3214 = vmatprep.subr.bf16.mxu0 0
        %3215 = vmatpush1.bf16.msra.mxu0 %v2088
        %3216 = vmatprep.subr.bf16.mxu0 0
        %3217 = vmatpush1.bf16.msra.mxu0 %v2089
        %3218 = vmatprep.subr.bf16.mxu0 0
        %3219 = vmatpush1.bf16.msra.mxu0 %v2090
        %3220 = vmatprep.subr.bf16.mxu0 0
        %3221 = vmatpush1.bf16.msra.mxu0 %v2091
        %3222 = vmatprep.subr.bf16.mxu0 0
        %3223 = vmatpush1.bf16.msra.mxu0 %v2092
        %3224 = vmatprep.subr.bf16.mxu0 0
        %3225 = vmatpush1.bf16.msra.mxu0 %v2093
        %3226 = vmatprep.subr.bf16.mxu0 0
        %3227 = vmatpush1.bf16.msra.mxu0 %v2094
        %3228 = vmatprep.subr.bf16.mxu0 0
        %3229 = vmatpush1.bf16.msra.mxu0 %v2095
        %3230 = vmatprep.subr.bf16.mxu0 0
        %3231 = vmatpush1.bf16.msra.mxu0 %v2096
        %3232 = vmatprep.subr.bf16.mxu0 0
        %3233 = vmatpush1.bf16.msra.mxu0 %v2097
        %3234 = vmatprep.mubr.bf16.mxu0 %v3187
        %3235 = vmatmul.mubr.bf16.gmra.mrb[0].mxu0 %v3186
        %v3236 = vpop.f32.mrb[0].mxu0
        %v3237 = vadd.f32 0.0, %v3236
        %v3238 = vpop.f32.mrb[0].mxu0
        %v3239 = vpop.f32.mrb[0].mxu0
        %v3240 = vadd.f32 0.0, %v3239
        %v3241 = vpop.f32.mrb[0].mxu0
        %3242 = vmatprep.mubr.bf16.mxu0 %v3189
        %3243 = vmatmul.mubr.bf16.gmra.mrb[0].mxu0 %v3188
        %v3244 = vpop.f32.mrb[0].mxu0
        %v3245 = vadd.f32 0.0, %v3244
        %v3246 = vpop.f32.mrb[0].mxu0
        %v3247 = vpop.f32.mrb[0].mxu0
        %v3248 = vadd.f32 0.0, %v3247
        %v3249 = vpop.f32.mrb[0].mxu0
        %3250 = vmatprep.mubr.bf16.mxu0 %v3191
        %3251 = vmatmul.mubr.bf16.gmra.mrb[0].mxu0 %v3190
        %v3252 = vpop.f32.mrb[0].mxu0
        %v3253 = vadd.f32 0.0, %v3252
        %v3254 = vpop.f32.mrb[0].mxu0
        %v3255 = vpop.f32.mrb[0].mxu0
        %v3256 = vadd.f32 0.0, %v3255
        %v3257 = vpop.f32.mrb[0].mxu0
        %3258 = vmatprep.mubr.bf16.mxu0 %v3193
        %3259 = vmatmul.mubr.bf16.gmra.mrb[0].mxu0 %v3192
        %v3260 = vpop.f32.mrb[0].mxu0
        %v3261 = vadd.f32 0.0, %v3260
        %v3262 = vpop.f32.mrb[0].mxu0
        %v3263 = vpop.f32.mrb[0].mxu0
        %v3264 = vadd.f32 0.0, %v3263
        %v3265 = vpop.f32.mrb[0].mxu0
        %3266 = vdwg.mxu0
        %v3267 = vlaneseq
        %v3268 = vshrl.u32 %v3267, 7
        %v3269 = vsub.s32 0, %v3268
        %v3270 = vrot.slane %v2099, %v3269
        %v3271 = vmul.f32 %v3237, %v3270
        %v3272 = vmul.f32 %v3240, %v3270
        %v3273 = vmul.f32 %v3245, %v3270
        %v3274 = vmul.f32 %v3248, %v3270
        %v3275 = vmul.f32 %v3253, %v3270
        %v3276 = vmul.f32 %v3256, %v3270
        %v3277 = vmul.f32 %v3261, %v3270
        %v3278 = vmul.f32 %v3264, %v3270
        %v3279 = vadd.f32 %v3145, %v3271
        %v3280 = vadd.f32 %v3146, %v3272
        %v3281 = vadd.f32 %v3147, %v3273
        %v3282 = vadd.f32 %v3148, %v3274
        %v3283 = vadd.f32 %v3149, %v3275
        %v3284 = vadd.f32 %v3150, %v3276
        %v3285 = vadd.f32 %v3151, %v3277
        %v3286 = vadd.f32 %v3152, %v3278
        %v3287 = vadd.f32 %v2491, %v2885
        %v3288 = vadd.f32 %v2492, %v2886
        %v3289 = vadd.f32 %v2493, %v2887
        %v3290 = vadd.f32 %v2494, %v2888
        %v3291 = vadd.f32 %v2495, %v2889
        %v3292 = vadd.f32 %v2496, %v2890
        %v3293 = vadd.f32 %v2497, %v2891
        %v3294 = vadd.f32 %v2498, %v2892
        %v3295 = vadd.f32 %v3287, %v3279
        %v3296 = vadd.f32 %v3288, %v3280
        %v3297 = vadd.f32 %v3289, %v3281
        %v3298 = vadd.f32 %v3290, %v3282
        %v3299 = vadd.f32 %v3291, %v3283
        %v3300 = vadd.f32 %v3292, %v3284
        %v3301 = vadd.f32 %v3293, %v3285
        %v3302 = vadd.f32 %v3294, %v3286
        %v3303 = vlaneseq
        %v3304 = vshrl.u32 %v3303, 7
        %v3305 = vsub.s32 0, %v3304
        %v3306 = vrot.slane %v2100, %v3305
        %v3307 = vmul.f32 %v3295, %v3306
        %v3308 = vmul.f32 %v3296, %v3306
        %v3309 = vmul.f32 %v3297, %v3306
        %v3310 = vmul.f32 %v3298, %v3306
        %v3311 = vmul.f32 %v3299, %v3306
        %v3312 = vmul.f32 %v3300, %v3306
        %v3313 = vmul.f32 %v3301, %v3306
        %v3314 = vmul.f32 %v3302, %v3306
        %v3315 = vlaneseq
        %v3316 = vshrl.u32 %v3315, 7
        %v3317 = vsub.s32 1, %v3316
        %v3318 = vrot.slane %v2100, %v3317
        %v3319 = vadd.f32 %v3307, %v3318
        %v3320 = vadd.f32 %v3308, %v3318
        %v3321 = vadd.f32 %v3309, %v3318
        %v3322 = vadd.f32 %v3310, %v3318
        %v3323 = vadd.f32 %v3311, %v3318
        %v3324 = vadd.f32 %v3312, %v3318
        %v3325 = vadd.f32 %v3313, %v3318
        %v3326 = vadd.f32 %v3314, %v3318
        %v3327 = vmax.f32 %v3319, 0.0
        %v3328 = vmax.f32 %v3320, 0.0
        %v3329 = vmax.f32 %v3321, 0.0
        %v3330 = vmax.f32 %v3322, 0.0
        %v3331 = vmax.f32 %v3323, 0.0
        %v3332 = vmax.f32 %v3324, 0.0
        %v3333 = vmax.f32 %v3325, 0.0
        %v3334 = vmax.f32 %v3326, 0.0
        %v3335 = vmin.f32 %v3327, 6.0
        %v3336 = vmin.f32 %v3328, 6.0
        %v3337 = vmin.f32 %v3329, 6.0
        %v3338 = vmin.f32 %v3330, 6.0
        %v3339 = vmin.f32 %v3331, 6.0
        %v3340 = vmin.f32 %v3332, 6.0
        %v3341 = vmin.f32 %v3333, 6.0
        %v3342 = vmin.f32 %v3334, 6.0
        %v3343 = vpack.c.bf16 %v3336, %v3335
        %v3344 = vpack.c.bf16 %v3338, %v3337
        %v3345 = vpack.c.bf16 %v3340, %v3339
        %v3346 = vpack.c.bf16 %v3342, %v3341
        %v3351 = vunpack.c.l.b16 %v2102
        %v3352 = vunpack.c.l.b16 %v2103
        %v3353 = vunpack.c.l.b16 %v2104
        %v3354 = vunpack.c.l.b16 %v2105
        %v3355 = vpack.c.b16 %v3352, %v3351
        %v3356 = vpack.c.b16 %v3354, %v3353
        %vm3359 = vcmask 261120
        %v3361 = vsel %vm3359, %v3343, 0
        %v3364 = vsel %vm3359, %v3344, 0
        %v3367 = vsel %vm3359, %v3345, 0
        %v3370 = vsel %vm3359, %v3346, 0
        %3372 = vmatprep.subr.bf16.mxu0 0
        %3373 = vmatpush1.bf16.msra.mxu0 %v3355
        %3374 = vmatprep.subr.bf16.mxu0 0
        %3375 = vmatpush1.bf16.msra.mxu0 %v3356
        %3376 = vmatprep.subr.bf16.mxu0 0
        %3377 = vmatpush1.bf16.msra.mxu0 0
        %3378 = vmatprep.subr.bf16.mxu0 0
        %3379 = vmatpush1.bf16.msra.mxu0 0
        %3380 = vmatprep.subr.bf16.mxu0 0
        %3381 = vmatpush1.bf16.msra.mxu0 0
        %3382 = vmatprep.subr.bf16.mxu0 0
        %3383 = vmatpush1.bf16.msra.mxu0 0
        %3384 = vmatprep.subr.bf16.mxu0 0
        %3385 = vmatpush1.bf16.msra.mxu0 0
        %3386 = vmatprep.subr.bf16.mxu0 0
        %3387 = vmatpush1.bf16.msra.mxu0 0
        %3388 = vmatprep.subr.bf16.mxu0 0
        %3389 = vmatpush1.bf16.msra.mxu0 0
        %3390 = vmatprep.subr.bf16.mxu0 0
        %3391 = vmatpush1.bf16.msra.mxu0 0
        %3392 = vmatprep.subr.bf16.mxu0 0
        %3393 = vmatpush1.bf16.msra.mxu0 0
        %3394 = vmatprep.subr.bf16.mxu0 0
        %3395 = vmatpush1.bf16.msra.mxu0 0
        %3396 = vmatprep.subr.bf16.mxu0 0
        %3397 = vmatpush1.bf16.msra.mxu0 0
        %3398 = vmatprep.subr.bf16.mxu0 0
        %3399 = vmatpush1.bf16.msra.mxu0 0
        %3400 = vmatprep.subr.bf16.mxu0 0
        %3401 = vmatpush1.bf16.msra.mxu0 0
        %3402 = vmatprep.subr.bf16.mxu0 0
        %3403 = vmatpush1.bf16.msra.mxu0 0
        %3404 = vmatprep.mubr.bf16.mxu0 0
        %3405 = vmatmul.mubr.bf16.gmra.mrb[0].mxu0 %v3361
        %v3406 = vpop.f32.mrb[0].mxu0
        %v3407 = vadd.f32 0.0, %v3406
        %v3408 = vpop.f32.mrb[0].mxu0
        %v3409 = vpop.f32.mrb[0].mxu0
        %v3410 = vadd.f32 0.0, %v3409
        %v3411 = vpop.f32.mrb[0].mxu0
        %3412 = vmatprep.mubr.bf16.mxu0 0
        %3413 = vmatmul.mubr.bf16.gmra.mrb[0].mxu0 %v3364
        %v3414 = vpop.f32.mrb[0].mxu0
        %v3415 = vadd.f32 0.0, %v3414
        %v3416 = vpop.f32.mrb[0].mxu0
        %v3417 = vpop.f32.mrb[0].mxu0
        %v3418 = vadd.f32 0.0, %v3417
        %v3419 = vpop.f32.mrb[0].mxu0
        %3420 = vmatprep.mubr.bf16.mxu0 0
        %3421 = vmatmul.mubr.bf16.gmra.mrb[0].mxu0 %v3367
        %v3422 = vpop.f32.mrb[0].mxu0
        %v3423 = vadd.f32 0.0, %v3422
        %v3424 = vpop.f32.mrb[0].mxu0
        %v3425 = vpop.f32.mrb[0].mxu0
        %v3426 = vadd.f32 0.0, %v3425
        %v3427 = vpop.f32.mrb[0].mxu0
        %3428 = vmatprep.mubr.bf16.mxu0 0
        %3429 = vmatmul.mubr.bf16.gmra.mrb[0].mxu0 %v3370
        %v3430 = vpop.f32.mrb[0].mxu0
        %v3431 = vadd.f32 0.0, %v3430
        %v3432 = vpop.f32.mrb[0].mxu0
        %v3433 = vpop.f32.mrb[0].mxu0
        %v3434 = vadd.f32 0.0, %v3433
        %v3435 = vpop.f32.mrb[0].mxu0
        %3436 = vdwg.mxu0
        %v3437 = vlaneseq
        %v3438 = vshrl.u32 %v3437, 7
        %v3439 = vsub.s32 0, %v3438
        %v3440 = vrot.slane %v2101, %v3439
        %v3441 = vmul.f32 %v3407, %v3440
        %v3442 = vmul.f32 %v3410, %v3440
        %v3443 = vmul.f32 %v3415, %v3440
        %v3444 = vmul.f32 %v3418, %v3440
        %v3445 = vmul.f32 %v3423, %v3440
        %v3446 = vmul.f32 %v3426, %v3440
        %v3447 = vmul.f32 %v3431, %v3440
        %v3448 = vmul.f32 %v3434, %v3440
        %v3449 = vlaneseq
        %v3450 = vshrl.u32 %v3449, 7
        %v3451 = vsub.s32 1, %v3450
        %v3452 = vrot.slane %v2101, %v3451
        %v3453 = vadd.f32 %v3441, %v3452
        %v3454 = vadd.f32 %v3442, %v3452
        %v3455 = vadd.f32 %v3443, %v3452
        %v3456 = vadd.f32 %v3444, %v3452
        %v3457 = vadd.f32 %v3445, %v3452
        %v3458 = vadd.f32 %v3446, %v3452
        %v3459 = vadd.f32 %v3447, %v3452
        %v3460 = vadd.f32 %v3448, %v3452
        %v3461 = vmax.f32 %v3453, 0.0
        %v3462 = vmax.f32 %v3454, 0.0
        %v3463 = vmax.f32 %v3455, 0.0
        %v3464 = vmax.f32 %v3456, 0.0
        %v3465 = vmax.f32 %v3457, 0.0
        %v3466 = vmax.f32 %v3458, 0.0
        %v3467 = vmax.f32 %v3459, 0.0
        %v3468 = vmax.f32 %v3460, 0.0
        %v3469 = vmin.f32 %v3461, 6.0
        %v3470 = vmin.f32 %v3462, 6.0
        %v3471 = vmin.f32 %v3463, 6.0
        %v3472 = vmin.f32 %v3464, 6.0
        %v3473 = vmin.f32 %v3465, 6.0
        %v3474 = vmin.f32 %v3466, 6.0
        %v3475 = vmin.f32 %v3467, 6.0
        %v3476 = vmin.f32 %v3468, 6.0
        %v3477 = vpack.c.bf16 %v3470, %v3469
        %v3478 = vpack.c.bf16 %v3472, %v3471
        %v3479 = vpack.c.bf16 %v3474, %v3473
        %v3480 = vpack.c.bf16 %v3476, %v3475
        %v3481 = vld [vmem:[%s15] sm:$0xff]
        %v3482 = vld [vmem:[%s15 + $0x8] sm:$0x1]
        %v3483 = vld [vmem:[%s19] sm:$0x3]
        %v3484 = vld [vmem:[%s21] sm:$0x3]
        %v3485 = vld [vmem:[%s17] sm:$0xf]
        %v3486 = vld [vmem:[%s17 + $0x4] sm:$0xf]
        %v3487 = vld [vmem:[%s17 + $0x8] sm:$0xf]
        %v3488 = vld [vmem:[%s17 + $0xc] sm:$0xf]
        %v3489 = vld [vmem:[%s17 + $0x10] sm:$0xf]
        %v3490 = vld [vmem:[%s17 + $0x14] sm:$0xf]
        %v3491 = vld [vmem:[%s17 + $0x18] sm:$0xf]
        %v3492 = vld [vmem:[%s17 + $0x1c] sm:$0xf]
        %v3493 = vld [vmem:[%s13] sm:$0xf]
        %v3494 = vld [vmem:[%s13 + $0x4] sm:$0xf]
        %v3495 = vld [vmem:[%s13 + $0x8] sm:$0xf]
        %v3496 = vld [vmem:[%s13 + $0xc] sm:$0xf]
        %v3497 = vld [vmem:[%s13 + $0x10] sm:$0xf]
        %v3498 = vld [vmem:[%s13 + $0x14] sm:$0xf]
        %v3499 = vld [vmem:[%s13 + $0x18] sm:$0xf]
        %v3500 = vld [vmem:[%s13 + $0x1c] sm:$0xf]
        %v3509 = vunpack.c.l.b16 %v3493
        %v3510 = vunpack.c.l.b16 %v3494
        %v3511 = vunpack.c.l.b16 %v3495
        %v3512 = vunpack.c.l.b16 %v3496
        %v3513 = vunpack.c.l.b16 %v3497
        %v3514 = vunpack.c.l.b16 %v3498
        %v3515 = vunpack.c.l.b16 %v3499
        %v3516 = vunpack.c.l.b16 %v3500
        %v3517 = vpack.c.b16 %v3510, %v3509
        %v3518 = vpack.c.b16 %v3512, %v3511
        %v3519 = vpack.c.b16 %v3514, %v3513
        %v3520 = vpack.c.b16 %v3516, %v3515
        %vm3521 = vcmask 523264
        %v3523 = vsel %vm3521, %v3517, 0
        %v3526 = vsel %vm3521, %v3518, 0
        %v3529 = vsel %vm3521, %v3519, 0
        %v3532 = vsel %vm3521, %v3520, 0
        %3534 = vmatprep.subr.bf16.mxu0 0
        %3535 = vmatpush1.bf16.msra.mxu0 %v3477
        %3536 = vmatprep.subr.bf16.mxu0 0
        %3537 = vmatpush1.bf16.msra.mxu0 %v3478
        %3538 = vmatprep.subr.bf16.mxu0 0
        %3539 = vmatpush1.bf16.msra.mxu0 %v3479
        %3540 = vmatprep.subr.bf16.mxu0 0
        %3541 = vmatpush1.bf16.msra.mxu0 %v3480
        %3542 = vmatprep.subr.bf16.mxu0 0
        %3543 = vmatpush1.bf16.msra.mxu0 0
        %3544 = vmatprep.subr.bf16.mxu0 0
        %3545 = vmatpush1.bf16.msra.mxu0 0
        %3546 = vmatprep.subr.bf16.mxu0 0
        %3547 = vmatpush1.bf16.msra.mxu0 0
        %3548 = vmatprep.subr.bf16.mxu0 0
        %3549 = vmatpush1.bf16.msra.mxu0 0
        %3550 = vmatprep.subr.bf16.mxu0 0
        %3551 = vmatpush1.bf16.msra.mxu0 0
        %3552 = vmatprep.subr.bf16.mxu0 0
        %3553 = vmatpush1.bf16.msra.mxu0 0
        %3554 = vmatprep.subr.bf16.mxu0 0
        %3555 = vmatpush1.bf16.msra.mxu0 0
        %3556 = vmatprep.subr.bf16.mxu0 0
        %3557 = vmatpush1.bf16.msra.mxu0 0
        %3558 = vmatprep.subr.bf16.mxu0 0
        %3559 = vmatpush1.bf16.msra.mxu0 0
        %3560 = vmatprep.subr.bf16.mxu0 0
        %3561 = vmatpush1.bf16.msra.mxu0 0
        %3562 = vmatprep.subr.bf16.mxu0 0
        %3563 = vmatpush1.bf16.msra.mxu0 0
        %3564 = vmatprep.subr.bf16.mxu0 0
        %3565 = vmatpush1.bf16.msra.mxu0 0
        %3566 = vmatprep.mubr.bf16.mxu0 0
        %3567 = vmatmul.mubr.bf16.gmra.mrb[0].mxu0 %v3523
        %v3568 = vpop.f32.mrb[0].mxu0
        %v3569 = vadd.f32 0.0, %v3568
        %v3570 = vpop.f32.mrb[0].mxu0
        %v3571 = vpop.f32.mrb[0].mxu0
        %v3572 = vadd.f32 0.0, %v3571
        %v3573 = vpop.f32.mrb[0].mxu0
        %3574 = vmatprep.mubr.bf16.mxu0 0
        %3575 = vmatmul.mubr.bf16.gmra.mrb[0].mxu0 %v3526
        %v3576 = vpop.f32.mrb[0].mxu0
        %v3577 = vadd.f32 0.0, %v3576
        %v3578 = vpop.f32.mrb[0].mxu0
        %v3579 = vpop.f32.mrb[0].mxu0
        %v3580 = vadd.f32 0.0, %v3579
        %v3581 = vpop.f32.mrb[0].mxu0
        %3582 = vmatprep.mubr.bf16.mxu0 0
        %3583 = vmatmul.mubr.bf16.gmra.mrb[0].mxu0 %v3529
        %v3584 = vpop.f32.mrb[0].mxu0
        %v3585 = vadd.f32 0.0, %v3584
        %v3586 = vpop.f32.mrb[0].mxu0
        %v3587 = vpop.f32.mrb[0].mxu0
        %v3588 = vadd.f32 0.0, %v3587
        %v3589 = vpop.f32.mrb[0].mxu0
        %3590 = vmatprep.mubr.bf16.mxu0 0
        %3591 = vmatmul.mubr.bf16.gmra.mrb[0].mxu0 %v3532
        %v3592 = vpop.f32.mrb[0].mxu0
        %v3593 = vadd.f32 0.0, %v3592
        %v3594 = vpop.f32.mrb[0].mxu0
        %v3595 = vpop.f32.mrb[0].mxu0
        %v3596 = vadd.f32 0.0, %v3595
        %v3597 = vpop.f32.mrb[0].mxu0
        %3598 = vdwg.mxu0
        %v3599 = vlaneseq
        %v3600 = vshrl.u32 %v3599, 7
        %v3601 = vsub.s32 0, %v3600
        %v3602 = vrot.slane %v3481, %v3601
        %v3603 = vmul.f32 %v3569, %v3602
        %v3604 = vmul.f32 %v3572, %v3602
        %v3605 = vmul.f32 %v3577, %v3602
        %v3606 = vmul.f32 %v3580, %v3602
        %v3607 = vmul.f32 %v3585, %v3602
        %v3608 = vmul.f32 %v3588, %v3602
        %v3609 = vmul.f32 %v3593, %v3602
        %v3610 = vmul.f32 %v3596, %v3602
        %s3611 = scalar_lea.vmem %s13, 32
        %v3612 = vld [vmem:[%s3611] sm:$0xf]
        %v3613 = vld [vmem:[%s3611 + $0x4] sm:$0xf]
        %v3614 = vld [vmem:[%s3611 + $0x8] sm:$0xf]
        %v3615 = vld [vmem:[%s3611 + $0xc] sm:$0xf]
        %v3616 = vld [vmem:[%s3611 + $0x10] sm:$0xf]
        %v3617 = vld [vmem:[%s3611 + $0x14] sm:$0xf]
        %v3618 = vld [vmem:[%s3611 + $0x18] sm:$0xf]
        %v3619 = vld [vmem:[%s3611 + $0x1c] sm:$0xf]
        %v3628 = vunpack.c.l.b16 %v3612
        %v3629 = vunpack.c.l.b16 %v3613
        %v3630 = vunpack.c.l.b16 %v3614
        %v3631 = vunpack.c.l.b16 %v3615
        %v3632 = vunpack.c.l.b16 %v3616
        %v3633 = vunpack.c.l.b16 %v3617
        %v3634 = vunpack.c.l.b16 %v3618
        %v3635 = vunpack.c.l.b16 %v3619
        %v3636 = vpack.c.b16 %v3629, %v3628
        %v3637 = vpack.c.b16 %v3631, %v3630
        %v3638 = vpack.c.b16 %v3633, %v3632
        %v3639 = vpack.c.b16 %v3635, %v3634
        %v3641 = vsel %vm3521, %v3636, 0
        %v3644 = vsel %vm3521, %v3637, 0
        %v3647 = vsel %vm3521, %v3638, 0
        %v3650 = vsel %vm3521, %v3639, 0
        %3652 = vmatprep.subr.bf16.mxu0 0
        %3653 = vmatpush1.bf16.msra.mxu0 %v3477
        %3654 = vmatprep.subr.bf16.mxu0 0
        %3655 = vmatpush1.bf16.msra.mxu0 %v3478
        %3656 = vmatprep.subr.bf16.mxu0 0
        %3657 = vmatpush1.bf16.msra.mxu0 %v3479
        %3658 = vmatprep.subr.bf16.mxu0 0
        %3659 = vmatpush1.bf16.msra.mxu0 %v3480
        %3660 = vmatprep.subr.bf16.mxu0 0
        %3661 = vmatpush1.bf16.msra.mxu0 0
        %3662 = vmatprep.subr.bf16.mxu0 0
        %3663 = vmatpush1.bf16.msra.mxu0 0
        %3664 = vmatprep.subr.bf16.mxu0 0
        %3665 = vmatpush1.bf16.msra.mxu0 0
        %3666 = vmatprep.subr.bf16.mxu0 0
        %3667 = vmatpush1.bf16.msra.mxu0 0
        %3668 = vmatprep.subr.bf16.mxu0 0
        %3669 = vmatpush1.bf16.msra.mxu0 0
        %3670 = vmatprep.subr.bf16.mxu0 0
        %3671 = vmatpush1.bf16.msra.mxu0 0
        %3672 = vmatprep.subr.bf16.mxu0 0
        %3673 = vmatpush1.bf16.msra.mxu0 0
        %3674 = vmatprep.subr.bf16.mxu0 0
        %3675 = vmatpush1.bf16.msra.mxu0 0
        %3676 = vmatprep.subr.bf16.mxu0 0
        %3677 = vmatpush1.bf16.msra.mxu0 0
        %3678 = vmatprep.subr.bf16.mxu0 0
        %3679 = vmatpush1.bf16.msra.mxu0 0
        %3680 = vmatprep.subr.bf16.mxu0 0
        %3681 = vmatpush1.bf16.msra.mxu0 0
        %3682 = vmatprep.subr.bf16.mxu0 0
        %3683 = vmatpush1.bf16.msra.mxu0 0
        %3684 = vmatprep.mubr.bf16.mxu0 0
        %3685 = vmatmul.mubr.bf16.gmra.mrb[0].mxu0 %v3641
        %v3686 = vpop.f32.mrb[0].mxu0
        %v3687 = vadd.f32 0.0, %v3686
        %v3688 = vpop.f32.mrb[0].mxu0
        %v3689 = vpop.f32.mrb[0].mxu0
        %v3690 = vadd.f32 0.0, %v3689
        %v3691 = vpop.f32.mrb[0].mxu0
        %3692 = vmatprep.mubr.bf16.mxu0 0
        %3693 = vmatmul.mubr.bf16.gmra.mrb[0].mxu0 %v3644
        %v3694 = vpop.f32.mrb[0].mxu0
        %v3695 = vadd.f32 0.0, %v3694
        %v3696 = vpop.f32.mrb[0].mxu0
        %v3697 = vpop.f32.mrb[0].mxu0
        %v3698 = vadd.f32 0.0, %v3697
        %v3699 = vpop.f32.mrb[0].mxu0
        %3700 = vmatprep.mubr.bf16.mxu0 0
        %3701 = vmatmul.mubr.bf16.gmra.mrb[0].mxu0 %v3647
        %v3702 = vpop.f32.mrb[0].mxu0
        %v3703 = vadd.f32 0.0, %v3702
        %v3704 = vpop.f32.mrb[0].mxu0
        %v3705 = vpop.f32.mrb[0].mxu0
        %v3706 = vadd.f32 0.0, %v3705
        %v3707 = vpop.f32.mrb[0].mxu0
        %3708 = vmatprep.mubr.bf16.mxu0 0
        %3709 = vmatmul.mubr.bf16.gmra.mrb[0].mxu0 %v3650
        %v3710 = vpop.f32.mrb[0].mxu0
        %v3711 = vadd.f32 0.0, %v3710
        %v3712 = vpop.f32.mrb[0].mxu0
        %v3713 = vpop.f32.mrb[0].mxu0
        %v3714 = vadd.f32 0.0, %v3713
        %v3715 = vpop.f32.mrb[0].mxu0
        %3716 = vdwg.mxu0
        %v3717 = vlaneseq
        %v3718 = vshrl.u32 %v3717, 7
        %v3719 = vsub.s32 1, %v3718
        %v3720 = vrot.slane %v3481, %v3719
        %v3721 = vmul.f32 %v3687, %v3720
        %v3722 = vmul.f32 %v3690, %v3720
        %v3723 = vmul.f32 %v3695, %v3720
        %v3724 = vmul.f32 %v3698, %v3720
        %v3725 = vmul.f32 %v3703, %v3720
        %v3726 = vmul.f32 %v3706, %v3720
        %v3727 = vmul.f32 %v3711, %v3720
        %v3728 = vmul.f32 %v3714, %v3720
        %v3729 = vadd.f32 %v3603, %v3721
        %v3730 = vadd.f32 %v3604, %v3722
        %v3731 = vadd.f32 %v3605, %v3723
        %v3732 = vadd.f32 %v3606, %v3724
        %v3733 = vadd.f32 %v3607, %v3725
        %v3734 = vadd.f32 %v3608, %v3726
        %v3735 = vadd.f32 %v3609, %v3727
        %v3736 = vadd.f32 %v3610, %v3728
        %s3737 = scalar_lea.vmem %s13, 64
        %v3738 = vld [vmem:[%s3737] sm:$0xf]
        %v3739 = vld [vmem:[%s3737 + $0x4] sm:$0xf]
        %v3740 = vld [vmem:[%s3737 + $0x8] sm:$0xf]
        %v3741 = vld [vmem:[%s3737 + $0xc] sm:$0xf]
        %v3742 = vld [vmem:[%s3737 + $0x10] sm:$0xf]
        %v3743 = vld [vmem:[%s3737 + $0x14] sm:$0xf]
        %v3744 = vld [vmem:[%s3737 + $0x18] sm:$0xf]
        %v3745 = vld [vmem:[%s3737 + $0x1c] sm:$0xf]
        %v3754 = vunpack.c.l.b16 %v3738
        %v3755 = vunpack.c.l.b16 %v3739
        %v3756 = vunpack.c.l.b16 %v3740
        %v3757 = vunpack.c.l.b16 %v3741
        %v3758 = vunpack.c.l.b16 %v3742
        %v3759 = vunpack.c.l.b16 %v3743
        %v3760 = vunpack.c.l.b16 %v3744
        %v3761 = vunpack.c.l.b16 %v3745
        %v3762 = vpack.c.b16 %v3755, %v3754
        %v3763 = vpack.c.b16 %v3757, %v3756
        %v3764 = vpack.c.b16 %v3759, %v3758
        %v3765 = vpack.c.b16 %v3761, %v3760
        %v3767 = vsel %vm3521, %v3762, 0
        %v3770 = vsel %vm3521, %v3763, 0
        %v3773 = vsel %vm3521, %v3764, 0
        %v3776 = vsel %vm3521, %v3765, 0
        %3778 = vmatprep.subr.bf16.mxu0 0
        %3779 = vmatpush1.bf16.msra.mxu0 %v3477
        %3780 = vmatprep.subr.bf16.mxu0 0
        %3781 = vmatpush1.bf16.msra.mxu0 %v3478
        %3782 = vmatprep.subr.bf16.mxu0 0
        %3783 = vmatpush1.bf16.msra.mxu0 %v3479
        %3784 = vmatprep.subr.bf16.mxu0 0
        %3785 = vmatpush1.bf16.msra.mxu0 %v3480
        %3786 = vmatprep.subr.bf16.mxu0 0
        %3787 = vmatpush1.bf16.msra.mxu0 0
        %3788 = vmatprep.subr.bf16.mxu0 0
        %3789 = vmatpush1.bf16.msra.mxu0 0
        %3790 = vmatprep.subr.bf16.mxu0 0
        %3791 = vmatpush1.bf16.msra.mxu0 0
        %3792 = vmatprep.subr.bf16.mxu0 0
        %3793 = vmatpush1.bf16.msra.mxu0 0
        %3794 = vmatprep.subr.bf16.mxu0 0
        %3795 = vmatpush1.bf16.msra.mxu0 0
        %3796 = vmatprep.subr.bf16.mxu0 0
        %3797 = vmatpush1.bf16.msra.mxu0 0
        %3798 = vmatprep.subr.bf16.mxu0 0
        %3799 = vmatpush1.bf16.msra.mxu0 0
        %3800 = vmatprep.subr.bf16.mxu0 0
        %3801 = vmatpush1.bf16.msra.mxu0 0
        %3802 = vmatprep.subr.bf16.mxu0 0
        %3803 = vmatpush1.bf16.msra.mxu0 0
        %3804 = vmatprep.subr.bf16.mxu0 0
        %3805 = vmatpush1.bf16.msra.mxu0 0
        %3806 = vmatprep.subr.bf16.mxu0 0
        %3807 = vmatpush1.bf16.msra.mxu0 0
        %3808 = vmatprep.subr.bf16.mxu0 0
        %3809 = vmatpush1.bf16.msra.mxu0 0
        %3810 = vmatprep.mubr.bf16.mxu0 0
        %3811 = vmatmul.mubr.bf16.gmra.mrb[0].mxu0 %v3767
        %v3812 = vpop.f32.mrb[0].mxu0
        %v3813 = vadd.f32 0.0, %v3812
        %v3814 = vpop.f32.mrb[0].mxu0
        %v3815 = vpop.f32.mrb[0].mxu0
        %v3816 = vadd.f32 0.0, %v3815
        %v3817 = vpop.f32.mrb[0].mxu0
        %3818 = vmatprep.mubr.bf16.mxu0 0
        %3819 = vmatmul.mubr.bf16.gmra.mrb[0].mxu0 %v3770
        %v3820 = vpop.f32.mrb[0].mxu0
        %v3821 = vadd.f32 0.0, %v3820
        %v3822 = vpop.f32.mrb[0].mxu0
        %v3823 = vpop.f32.mrb[0].mxu0
        %v3824 = vadd.f32 0.0, %v3823
        %v3825 = vpop.f32.mrb[0].mxu0
        %3826 = vmatprep.mubr.bf16.mxu0 0
        %3827 = vmatmul.mubr.bf16.gmra.mrb[0].mxu0 %v3773
        %v3828 = vpop.f32.mrb[0].mxu0
        %v3829 = vadd.f32 0.0, %v3828
        %v3830 = vpop.f32.mrb[0].mxu0
        %v3831 = vpop.f32.mrb[0].mxu0
        %v3832 = vadd.f32 0.0, %v3831
        %v3833 = vpop.f32.mrb[0].mxu0
        %3834 = vmatprep.mubr.bf16.mxu0 0
        %3835 = vmatmul.mubr.bf16.gmra.mrb[0].mxu0 %v3776
        %v3836 = vpop.f32.mrb[0].mxu0
        %v3837 = vadd.f32 0.0, %v3836
        %v3838 = vpop.f32.mrb[0].mxu0
        %v3839 = vpop.f32.mrb[0].mxu0
        %v3840 = vadd.f32 0.0, %v3839
        %v3841 = vpop.f32.mrb[0].mxu0
        %3842 = vdwg.mxu0
        %v3843 = vlaneseq
        %v3844 = vshrl.u32 %v3843, 7
        %v3845 = vsub.s32 2, %v3844
        %v3846 = vrot.slane %v3481, %v3845
        %v3847 = vmul.f32 %v3813, %v3846
        %v3848 = vmul.f32 %v3816, %v3846
        %v3849 = vmul.f32 %v3821, %v3846
        %v3850 = vmul.f32 %v3824, %v3846
        %v3851 = vmul.f32 %v3829, %v3846
        %v3852 = vmul.f32 %v3832, %v3846
        %v3853 = vmul.f32 %v3837, %v3846
        %v3854 = vmul.f32 %v3840, %v3846
        %v3855 = vadd.f32 %v3729, %v3847
        %v3856 = vadd.f32 %v3730, %v3848
        %v3857 = vadd.f32 %v3731, %v3849
        %v3858 = vadd.f32 %v3732, %v3850
        %v3859 = vadd.f32 %v3733, %v3851
        %v3860 = vadd.f32 %v3734, %v3852
        %v3861 = vadd.f32 %v3735, %v3853
        %v3862 = vadd.f32 %v3736, %v3854
        %s3863 = scalar_lea.vmem %s13, 96
        %v3864 = vld [vmem:[%s3863] sm:$0xf]
        %v3865 = vld [vmem:[%s3863 + $0x4] sm:$0xf]
        %v3866 = vld [vmem:[%s3863 + $0x8] sm:$0xf]
        %v3867 = vld [vmem:[%s3863 + $0xc] sm:$0xf]
        %v3868 = vld [vmem:[%s3863 + $0x10] sm:$0xf]
        %v3869 = vld [vmem:[%s3863 + $0x14] sm:$0xf]
        %v3870 = vld [vmem:[%s3863 + $0x18] sm:$0xf]
        %v3871 = vld [vmem:[%s3863 + $0x1c] sm:$0xf]
        %v3880 = vunpack.c.l.b16 %v3864
        %v3881 = vunpack.c.l.b16 %v3865
        %v3882 = vunpack.c.l.b16 %v3866
        %v3883 = vunpack.c.l.b16 %v3867
        %v3884 = vunpack.c.l.b16 %v3868
        %v3885 = vunpack.c.l.b16 %v3869
        %v3886 = vunpack.c.l.b16 %v3870
        %v3887 = vunpack.c.l.b16 %v3871
        %v3888 = vpack.c.b16 %v3881, %v3880
        %v3889 = vpack.c.b16 %v3883, %v3882
        %v3890 = vpack.c.b16 %v3885, %v3884
        %v3891 = vpack.c.b16 %v3887, %v3886
        %v3893 = vsel %vm3521, %v3888, 0
        %v3896 = vsel %vm3521, %v3889, 0
        %v3899 = vsel %vm3521, %v3890, 0
        %v3902 = vsel %vm3521, %v3891, 0
        %3904 = vmatprep.subr.bf16.mxu0 0
        %3905 = vmatpush1.bf16.msra.mxu0 %v3477
        %3906 = vmatprep.subr.bf16.mxu0 0
        %3907 = vmatpush1.bf16.msra.mxu0 %v3478
        %3908 = vmatprep.subr.bf16.mxu0 0
        %3909 = vmatpush1.bf16.msra.mxu0 %v3479
        %3910 = vmatprep.subr.bf16.mxu0 0
        %3911 = vmatpush1.bf16.msra.mxu0 %v3480
        %3912 = vmatprep.subr.bf16.mxu0 0
        %3913 = vmatpush1.bf16.msra.mxu0 0
        %3914 = vmatprep.subr.bf16.mxu0 0
        %3915 = vmatpush1.bf16.msra.mxu0 0
        %3916 = vmatprep.subr.bf16.mxu0 0
        %3917 = vmatpush1.bf16.msra.mxu0 0
        %3918 = vmatprep.subr.bf16.mxu0 0
        %3919 = vmatpush1.bf16.msra.mxu0 0
        %3920 = vmatprep.subr.bf16.mxu0 0
        %3921 = vmatpush1.bf16.msra.mxu0 0
        %3922 = vmatprep.subr.bf16.mxu0 0
        %3923 = vmatpush1.bf16.msra.mxu0 0
        %3924 = vmatprep.subr.bf16.mxu0 0
        %3925 = vmatpush1.bf16.msra.mxu0 0
        %3926 = vmatprep.subr.bf16.mxu0 0
        %3927 = vmatpush1.bf16.msra.mxu0 0
        %3928 = vmatprep.subr.bf16.mxu0 0
        %3929 = vmatpush1.bf16.msra.mxu0 0
        %3930 = vmatprep.subr.bf16.mxu0 0
        %3931 = vmatpush1.bf16.msra.mxu0 0
        %3932 = vmatprep.subr.bf16.mxu0 0
        %3933 = vmatpush1.bf16.msra.mxu0 0
        %3934 = vmatprep.subr.bf16.mxu0 0
        %3935 = vmatpush1.bf16.msra.mxu0 0
        %3936 = vmatprep.mubr.bf16.mxu0 0
        %3937 = vmatmul.mubr.bf16.gmra.mrb[0].mxu0 %v3893
        %v3938 = vpop.f32.mrb[0].mxu0
        %v3939 = vadd.f32 0.0, %v3938
        %v3940 = vpop.f32.mrb[0].mxu0
        %v3941 = vpop.f32.mrb[0].mxu0
        %v3942 = vadd.f32 0.0, %v3941
        %v3943 = vpop.f32.mrb[0].mxu0
        %3944 = vmatprep.mubr.bf16.mxu0 0
        %3945 = vmatmul.mubr.bf16.gmra.mrb[0].mxu0 %v3896
        %v3946 = vpop.f32.mrb[0].mxu0
        %v3947 = vadd.f32 0.0, %v3946
        %v3948 = vpop.f32.mrb[0].mxu0
        %v3949 = vpop.f32.mrb[0].mxu0
        %v3950 = vadd.f32 0.0, %v3949
        %v3951 = vpop.f32.mrb[0].mxu0
        %3952 = vmatprep.mubr.bf16.mxu0 0
        %3953 = vmatmul.mubr.bf16.gmra.mrb[0].mxu0 %v3899
        %v3954 = vpop.f32.mrb[0].mxu0
        %v3955 = vadd.f32 0.0, %v3954
        %v3956 = vpop.f32.mrb[0].mxu0
        %v3957 = vpop.f32.mrb[0].mxu0
        %v3958 = vadd.f32 0.0, %v3957
        %v3959 = vpop.f32.mrb[0].mxu0
        %3960 = vmatprep.mubr.bf16.mxu0 0
        %3961 = vmatmul.mubr.bf16.gmra.mrb[0].mxu0 %v3902
        %v3962 = vpop.f32.mrb[0].mxu0
        %v3963 = vadd.f32 0.0, %v3962
        %v3964 = vpop.f32.mrb[0].mxu0
        %v3965 = vpop.f32.mrb[0].mxu0
        %v3966 = vadd.f32 0.0, %v3965
        %v3967 = vpop.f32.mrb[0].mxu0
        %3968 = vdwg.mxu0
        %v3969 = vlaneseq
        %v3970 = vshrl.u32 %v3969, 7
        %v3971 = vsub.s32 3, %v3970
        %v3972 = vrot.slane %v3481, %v3971
        %v3973 = vmul.f32 %v3939, %v3972
        %v3974 = vmul.f32 %v3942, %v3972
        %v3975 = vmul.f32 %v3947, %v3972
        %v3976 = vmul.f32 %v3950, %v3972
        %v3977 = vmul.f32 %v3955, %v3972
        %v3978 = vmul.f32 %v3958, %v3972
        %v3979 = vmul.f32 %v3963, %v3972
        %v3980 = vmul.f32 %v3966, %v3972
        %s3981 = scalar_lea.vmem %s13, 128
        %v3982 = vld [vmem:[%s3981] sm:$0xf]
        %v3983 = vld [vmem:[%s3981 + $0x4] sm:$0xf]
        %v3984 = vld [vmem:[%s3981 + $0x8] sm:$0xf]
        %v3985 = vld [vmem:[%s3981 + $0xc] sm:$0xf]
        %v3986 = vld [vmem:[%s3981 + $0x10] sm:$0xf]
        %v3987 = vld [vmem:[%s3981 + $0x14] sm:$0xf]
        %v3988 = vld [vmem:[%s3981 + $0x18] sm:$0xf]
        %v3989 = vld [vmem:[%s3981 + $0x1c] sm:$0xf]
        %v3998 = vunpack.c.l.b16 %v3982
        %v3999 = vunpack.c.l.b16 %v3983
        %v4000 = vunpack.c.l.b16 %v3984
        %v4001 = vunpack.c.l.b16 %v3985
        %v4002 = vunpack.c.l.b16 %v3986
        %v4003 = vunpack.c.l.b16 %v3987
        %v4004 = vunpack.c.l.b16 %v3988
        %v4005 = vunpack.c.l.b16 %v3989
        %v4006 = vpack.c.b16 %v3999, %v3998
        %v4007 = vpack.c.b16 %v4001, %v4000
        %v4008 = vpack.c.b16 %v4003, %v4002
        %v4009 = vpack.c.b16 %v4005, %v4004
        %v4011 = vsel %vm3521, %v4006, 0
        %v4014 = vsel %vm3521, %v4007, 0
        %v4017 = vsel %vm3521, %v4008, 0
        %v4020 = vsel %vm3521, %v4009, 0
        %4022 = vmatprep.subr.bf16.mxu0 0
        %4023 = vmatpush1.bf16.msra.mxu0 %v3477
        %4024 = vmatprep.subr.bf16.mxu0 0
        %4025 = vmatpush1.bf16.msra.mxu0 %v3478
        %4026 = vmatprep.subr.bf16.mxu0 0
        %4027 = vmatpush1.bf16.msra.mxu0 %v3479
        %4028 = vmatprep.subr.bf16.mxu0 0
        %4029 = vmatpush1.bf16.msra.mxu0 %v3480
        %4030 = vmatprep.subr.bf16.mxu0 0
        %4031 = vmatpush1.bf16.msra.mxu0 0
        %4032 = vmatprep.subr.bf16.mxu0 0
        %4033 = vmatpush1.bf16.msra.mxu0 0
        %4034 = vmatprep.subr.bf16.mxu0 0
        %4035 = vmatpush1.bf16.msra.mxu0 0
        %4036 = vmatprep.subr.bf16.mxu0 0
        %4037 = vmatpush1.bf16.msra.mxu0 0
        %4038 = vmatprep.subr.bf16.mxu0 0
        %4039 = vmatpush1.bf16.msra.mxu0 0
        %4040 = vmatprep.subr.bf16.mxu0 0
        %4041 = vmatpush1.bf16.msra.mxu0 0
        %4042 = vmatprep.subr.bf16.mxu0 0
        %4043 = vmatpush1.bf16.msra.mxu0 0
        %4044 = vmatprep.subr.bf16.mxu0 0
        %4045 = vmatpush1.bf16.msra.mxu0 0
        %4046 = vmatprep.subr.bf16.mxu0 0
        %4047 = vmatpush1.bf16.msra.mxu0 0
        %4048 = vmatprep.subr.bf16.mxu0 0
        %4049 = vmatpush1.bf16.msra.mxu0 0
        %4050 = vmatprep.subr.bf16.mxu0 0
        %4051 = vmatpush1.bf16.msra.mxu0 0
        %4052 = vmatprep.subr.bf16.mxu0 0
        %4053 = vmatpush1.bf16.msra.mxu0 0
        %4054 = vmatprep.mubr.bf16.mxu0 0
        %4055 = vmatmul.mubr.bf16.gmra.mrb[0].mxu0 %v4011
        %v4056 = vpop.f32.mrb[0].mxu0
        %v4057 = vadd.f32 0.0, %v4056
        %v4058 = vpop.f32.mrb[0].mxu0
        %v4059 = vpop.f32.mrb[0].mxu0
        %v4060 = vadd.f32 0.0, %v4059
        %v4061 = vpop.f32.mrb[0].mxu0
        %4062 = vmatprep.mubr.bf16.mxu0 0
        %4063 = vmatmul.mubr.bf16.gmra.mrb[0].mxu0 %v4014
        %v4064 = vpop.f32.mrb[0].mxu0
        %v4065 = vadd.f32 0.0, %v4064
        %v4066 = vpop.f32.mrb[0].mxu0
        %v4067 = vpop.f32.mrb[0].mxu0
        %v4068 = vadd.f32 0.0, %v4067
        %v4069 = vpop.f32.mrb[0].mxu0
        %4070 = vmatprep.mubr.bf16.mxu0 0
        %4071 = vmatmul.mubr.bf16.gmra.mrb[0].mxu0 %v4017
        %v4072 = vpop.f32.mrb[0].mxu0
        %v4073 = vadd.f32 0.0, %v4072
        %v4074 = vpop.f32.mrb[0].mxu0
        %v4075 = vpop.f32.mrb[0].mxu0
        %v4076 = vadd.f32 0.0, %v4075
        %v4077 = vpop.f32.mrb[0].mxu0
        %4078 = vmatprep.mubr.bf16.mxu0 0
        %4079 = vmatmul.mubr.bf16.gmra.mrb[0].mxu0 %v4020
        %v4080 = vpop.f32.mrb[0].mxu0
        %v4081 = vadd.f32 0.0, %v4080
        %v4082 = vpop.f32.mrb[0].mxu0
        %v4083 = vpop.f32.mrb[0].mxu0
        %v4084 = vadd.f32 0.0, %v4083
        %v4085 = vpop.f32.mrb[0].mxu0
        %4086 = vdwg.mxu0
        %v4087 = vlaneseq
        %v4088 = vshrl.u32 %v4087, 7
        %v4089 = vsub.s32 4, %v4088
        %v4090 = vrot.slane %v3481, %v4089
        %v4091 = vmul.f32 %v4057, %v4090
        %v4092 = vmul.f32 %v4060, %v4090
        %v4093 = vmul.f32 %v4065, %v4090
        %v4094 = vmul.f32 %v4068, %v4090
        %v4095 = vmul.f32 %v4073, %v4090
        %v4096 = vmul.f32 %v4076, %v4090
        %v4097 = vmul.f32 %v4081, %v4090
        %v4098 = vmul.f32 %v4084, %v4090
        %v4099 = vadd.f32 %v3973, %v4091
        %v4100 = vadd.f32 %v3974, %v4092
        %v4101 = vadd.f32 %v3975, %v4093
        %v4102 = vadd.f32 %v3976, %v4094
        %v4103 = vadd.f32 %v3977, %v4095
        %v4104 = vadd.f32 %v3978, %v4096
        %v4105 = vadd.f32 %v3979, %v4097
        %v4106 = vadd.f32 %v3980, %v4098
        %s4107 = scalar_lea.vmem %s13, 160
        %v4108 = vld [vmem:[%s4107] sm:$0xf]
        %v4109 = vld [vmem:[%s4107 + $0x4] sm:$0xf]
        %v4110 = vld [vmem:[%s4107 + $0x8] sm:$0xf]
        %v4111 = vld [vmem:[%s4107 + $0xc] sm:$0xf]
        %v4112 = vld [vmem:[%s4107 + $0x10] sm:$0xf]
        %v4113 = vld [vmem:[%s4107 + $0x14] sm:$0xf]
        %v4114 = vld [vmem:[%s4107 + $0x18] sm:$0xf]
        %v4115 = vld [vmem:[%s4107 + $0x1c] sm:$0xf]
        %v4124 = vunpack.c.l.b16 %v4108
        %v4125 = vunpack.c.l.b16 %v4109
        %v4126 = vunpack.c.l.b16 %v4110
        %v4127 = vunpack.c.l.b16 %v4111
        %v4128 = vunpack.c.l.b16 %v4112
        %v4129 = vunpack.c.l.b16 %v4113
        %v4130 = vunpack.c.l.b16 %v4114
        %v4131 = vunpack.c.l.b16 %v4115
        %v4132 = vpack.c.b16 %v4125, %v4124
        %v4133 = vpack.c.b16 %v4127, %v4126
        %v4134 = vpack.c.b16 %v4129, %v4128
        %v4135 = vpack.c.b16 %v4131, %v4130
        %v4137 = vsel %vm3521, %v4132, 0
        %v4140 = vsel %vm3521, %v4133, 0
        %v4143 = vsel %vm3521, %v4134, 0
        %v4146 = vsel %vm3521, %v4135, 0
        %4148 = vmatprep.subr.bf16.mxu0 0
        %4149 = vmatpush1.bf16.msra.mxu0 %v3477
        %4150 = vmatprep.subr.bf16.mxu0 0
        %4151 = vmatpush1.bf16.msra.mxu0 %v3478
        %4152 = vmatprep.subr.bf16.mxu0 0
        %4153 = vmatpush1.bf16.msra.mxu0 %v3479
        %4154 = vmatprep.subr.bf16.mxu0 0
        %4155 = vmatpush1.bf16.msra.mxu0 %v3480
        %4156 = vmatprep.subr.bf16.mxu0 0
        %4157 = vmatpush1.bf16.msra.mxu0 0
        %4158 = vmatprep.subr.bf16.mxu0 0
        %4159 = vmatpush1.bf16.msra.mxu0 0
        %4160 = vmatprep.subr.bf16.mxu0 0
        %4161 = vmatpush1.bf16.msra.mxu0 0
        %4162 = vmatprep.subr.bf16.mxu0 0
        %4163 = vmatpush1.bf16.msra.mxu0 0
        %4164 = vmatprep.subr.bf16.mxu0 0
        %4165 = vmatpush1.bf16.msra.mxu0 0
        %4166 = vmatprep.subr.bf16.mxu0 0
        %4167 = vmatpush1.bf16.msra.mxu0 0
        %4168 = vmatprep.subr.bf16.mxu0 0
        %4169 = vmatpush1.bf16.msra.mxu0 0
        %4170 = vmatprep.subr.bf16.mxu0 0
        %4171 = vmatpush1.bf16.msra.mxu0 0
        %4172 = vmatprep.subr.bf16.mxu0 0
        %4173 = vmatpush1.bf16.msra.mxu0 0
        %4174 = vmatprep.subr.bf16.mxu0 0
        %4175 = vmatpush1.bf16.msra.mxu0 0
        %4176 = vmatprep.subr.bf16.mxu0 0
        %4177 = vmatpush1.bf16.msra.mxu0 0
        %4178 = vmatprep.subr.bf16.mxu0 0
        %4179 = vmatpush1.bf16.msra.mxu0 0
        %4180 = vmatprep.mubr.bf16.mxu0 0
        %4181 = vmatmul.mubr.bf16.gmra.mrb[0].mxu0 %v4137
        %v4182 = vpop.f32.mrb[0].mxu0
        %v4183 = vadd.f32 0.0, %v4182
        %v4184 = vpop.f32.mrb[0].mxu0
        %v4185 = vpop.f32.mrb[0].mxu0
        %v4186 = vadd.f32 0.0, %v4185
        %v4187 = vpop.f32.mrb[0].mxu0
        %4188 = vmatprep.mubr.bf16.mxu0 0
        %4189 = vmatmul.mubr.bf16.gmra.mrb[0].mxu0 %v4140
        %v4190 = vpop.f32.mrb[0].mxu0
        %v4191 = vadd.f32 0.0, %v4190
        %v4192 = vpop.f32.mrb[0].mxu0
        %v4193 = vpop.f32.mrb[0].mxu0
        %v4194 = vadd.f32 0.0, %v4193
        %v4195 = vpop.f32.mrb[0].mxu0
        %4196 = vmatprep.mubr.bf16.mxu0 0
        %4197 = vmatmul.mubr.bf16.gmra.mrb[0].mxu0 %v4143
        %v4198 = vpop.f32.mrb[0].mxu0
        %v4199 = vadd.f32 0.0, %v4198
        %v4200 = vpop.f32.mrb[0].mxu0
        %v4201 = vpop.f32.mrb[0].mxu0
        %v4202 = vadd.f32 0.0, %v4201
        %v4203 = vpop.f32.mrb[0].mxu0
        %4204 = vmatprep.mubr.bf16.mxu0 0
        %4205 = vmatmul.mubr.bf16.gmra.mrb[0].mxu0 %v4146
        %v4206 = vpop.f32.mrb[0].mxu0
        %v4207 = vadd.f32 0.0, %v4206
        %v4208 = vpop.f32.mrb[0].mxu0
        %v4209 = vpop.f32.mrb[0].mxu0
        %v4210 = vadd.f32 0.0, %v4209
        %v4211 = vpop.f32.mrb[0].mxu0
        %4212 = vdwg.mxu0
        %v4213 = vlaneseq
        %v4214 = vshrl.u32 %v4213, 7
        %v4215 = vsub.s32 5, %v4214
        %v4216 = vrot.slane %v3481, %v4215
        %v4217 = vmul.f32 %v4183, %v4216
        %v4218 = vmul.f32 %v4186, %v4216
        %v4219 = vmul.f32 %v4191, %v4216
        %v4220 = vmul.f32 %v4194, %v4216
        %v4221 = vmul.f32 %v4199, %v4216
        %v4222 = vmul.f32 %v4202, %v4216
        %v4223 = vmul.f32 %v4207, %v4216
        %v4224 = vmul.f32 %v4210, %v4216
        %v4225 = vadd.f32 %v4099, %v4217
        %v4226 = vadd.f32 %v4100, %v4218
        %v4227 = vadd.f32 %v4101, %v4219
        %v4228 = vadd.f32 %v4102, %v4220
        %v4229 = vadd.f32 %v4103, %v4221
        %v4230 = vadd.f32 %v4104, %v4222
        %v4231 = vadd.f32 %v4105, %v4223
        %v4232 = vadd.f32 %v4106, %v4224
        %s4233 = scalar_lea.vmem %s13, 192
        %v4234 = vld [vmem:[%s4233] sm:$0xf]
        %v4235 = vld [vmem:[%s4233 + $0x4] sm:$0xf]
        %v4236 = vld [vmem:[%s4233 + $0x8] sm:$0xf]
        %v4237 = vld [vmem:[%s4233 + $0xc] sm:$0xf]
        %v4238 = vld [vmem:[%s4233 + $0x10] sm:$0xf]
        %v4239 = vld [vmem:[%s4233 + $0x14] sm:$0xf]
        %v4240 = vld [vmem:[%s4233 + $0x18] sm:$0xf]
        %v4241 = vld [vmem:[%s4233 + $0x1c] sm:$0xf]
        %v4250 = vunpack.c.l.b16 %v4234
        %v4251 = vunpack.c.l.b16 %v4235
        %v4252 = vunpack.c.l.b16 %v4236
        %v4253 = vunpack.c.l.b16 %v4237
        %v4254 = vunpack.c.l.b16 %v4238
        %v4255 = vunpack.c.l.b16 %v4239
        %v4256 = vunpack.c.l.b16 %v4240
        %v4257 = vunpack.c.l.b16 %v4241
        %v4258 = vpack.c.b16 %v4251, %v4250
        %v4259 = vpack.c.b16 %v4253, %v4252
        %v4260 = vpack.c.b16 %v4255, %v4254
        %v4261 = vpack.c.b16 %v4257, %v4256
        %v4263 = vsel %vm3521, %v4258, 0
        %v4266 = vsel %vm3521, %v4259, 0
        %v4269 = vsel %vm3521, %v4260, 0
        %v4272 = vsel %vm3521, %v4261, 0
        %4274 = vmatprep.subr.bf16.mxu0 0
        %4275 = vmatpush1.bf16.msra.mxu0 %v3477
        %4276 = vmatprep.subr.bf16.mxu0 0
        %4277 = vmatpush1.bf16.msra.mxu0 %v3478
        %4278 = vmatprep.subr.bf16.mxu0 0
        %4279 = vmatpush1.bf16.msra.mxu0 %v3479
        %4280 = vmatprep.subr.bf16.mxu0 0
        %4281 = vmatpush1.bf16.msra.mxu0 %v3480
        %4282 = vmatprep.subr.bf16.mxu0 0
        %4283 = vmatpush1.bf16.msra.mxu0 0
        %4284 = vmatprep.subr.bf16.mxu0 0
        %4285 = vmatpush1.bf16.msra.mxu0 0
        %4286 = vmatprep.subr.bf16.mxu0 0
        %4287 = vmatpush1.bf16.msra.mxu0 0
        %4288 = vmatprep.subr.bf16.mxu0 0
        %4289 = vmatpush1.bf16.msra.mxu0 0
        %4290 = vmatprep.subr.bf16.mxu0 0
        %4291 = vmatpush1.bf16.msra.mxu0 0
        %4292 = vmatprep.subr.bf16.mxu0 0
        %4293 = vmatpush1.bf16.msra.mxu0 0
        %4294 = vmatprep.subr.bf16.mxu0 0
        %4295 = vmatpush1.bf16.msra.mxu0 0
        %4296 = vmatprep.subr.bf16.mxu0 0
        %4297 = vmatpush1.bf16.msra.mxu0 0
        %4298 = vmatprep.subr.bf16.mxu0 0
        %4299 = vmatpush1.bf16.msra.mxu0 0
        %4300 = vmatprep.subr.bf16.mxu0 0
        %4301 = vmatpush1.bf16.msra.mxu0 0
        %4302 = vmatprep.subr.bf16.mxu0 0
        %4303 = vmatpush1.bf16.msra.mxu0 0
        %4304 = vmatprep.subr.bf16.mxu0 0
        %4305 = vmatpush1.bf16.msra.mxu0 0
        %4306 = vmatprep.mubr.bf16.mxu0 0
        %4307 = vmatmul.mubr.bf16.gmra.mrb[0].mxu0 %v4263
        %v4308 = vpop.f32.mrb[0].mxu0
        %v4309 = vadd.f32 0.0, %v4308
        %v4310 = vpop.f32.mrb[0].mxu0
        %v4311 = vpop.f32.mrb[0].mxu0
        %v4312 = vadd.f32 0.0, %v4311
        %v4313 = vpop.f32.mrb[0].mxu0
        %4314 = vmatprep.mubr.bf16.mxu0 0
        %4315 = vmatmul.mubr.bf16.gmra.mrb[0].mxu0 %v4266
        %v4316 = vpop.f32.mrb[0].mxu0
        %v4317 = vadd.f32 0.0, %v4316
        %v4318 = vpop.f32.mrb[0].mxu0
        %v4319 = vpop.f32.mrb[0].mxu0
        %v4320 = vadd.f32 0.0, %v4319
        %v4321 = vpop.f32.mrb[0].mxu0
        %4322 = vmatprep.mubr.bf16.mxu0 0
        %4323 = vmatmul.mubr.bf16.gmra.mrb[0].mxu0 %v4269
        %v4324 = vpop.f32.mrb[0].mxu0
        %v4325 = vadd.f32 0.0, %v4324
        %v4326 = vpop.f32.mrb[0].mxu0
        %v4327 = vpop.f32.mrb[0].mxu0
        %v4328 = vadd.f32 0.0, %v4327
        %v4329 = vpop.f32.mrb[0].mxu0
        %4330 = vmatprep.mubr.bf16.mxu0 0
        %4331 = vmatmul.mubr.bf16.gmra.mrb[0].mxu0 %v4272
        %v4332 = vpop.f32.mrb[0].mxu0
        %v4333 = vadd.f32 0.0, %v4332
        %v4334 = vpop.f32.mrb[0].mxu0
        %v4335 = vpop.f32.mrb[0].mxu0
        %v4336 = vadd.f32 0.0, %v4335
        %v4337 = vpop.f32.mrb[0].mxu0
        %4338 = vdwg.mxu0
        %v4339 = vlaneseq
        %v4340 = vshrl.u32 %v4339, 7
        %v4341 = vsub.s32 6, %v4340
        %v4342 = vrot.slane %v3481, %v4341
        %v4343 = vmul.f32 %v4309, %v4342
        %v4344 = vmul.f32 %v4312, %v4342
        %v4345 = vmul.f32 %v4317, %v4342
        %v4346 = vmul.f32 %v4320, %v4342
        %v4347 = vmul.f32 %v4325, %v4342
        %v4348 = vmul.f32 %v4328, %v4342
        %v4349 = vmul.f32 %v4333, %v4342
        %v4350 = vmul.f32 %v4336, %v4342
        %s4351 = scalar_lea.vmem %s13, 224
        %v4352 = vld [vmem:[%s4351] sm:$0xf]
        %v4353 = vld [vmem:[%s4351 + $0x4] sm:$0xf]
        %v4354 = vld [vmem:[%s4351 + $0x8] sm:$0xf]
        %v4355 = vld [vmem:[%s4351 + $0xc] sm:$0xf]
        %v4356 = vld [vmem:[%s4351 + $0x10] sm:$0xf]
        %v4357 = vld [vmem:[%s4351 + $0x14] sm:$0xf]
        %v4358 = vld [vmem:[%s4351 + $0x18] sm:$0xf]
        %v4359 = vld [vmem:[%s4351 + $0x1c] sm:$0xf]
        %v4368 = vunpack.c.l.b16 %v4352
        %v4369 = vunpack.c.l.b16 %v4353
        %v4370 = vunpack.c.l.b16 %v4354
        %v4371 = vunpack.c.l.b16 %v4355
        %v4372 = vunpack.c.l.b16 %v4356
        %v4373 = vunpack.c.l.b16 %v4357
        %v4374 = vunpack.c.l.b16 %v4358
        %v4375 = vunpack.c.l.b16 %v4359
        %v4376 = vpack.c.b16 %v4369, %v4368
        %v4377 = vpack.c.b16 %v4371, %v4370
        %v4378 = vpack.c.b16 %v4373, %v4372
        %v4379 = vpack.c.b16 %v4375, %v4374
        %v4381 = vsel %vm3521, %v4376, 0
        %v4384 = vsel %vm3521, %v4377, 0
        %v4387 = vsel %vm3521, %v4378, 0
        %v4390 = vsel %vm3521, %v4379, 0
        %4392 = vmatprep.subr.bf16.mxu0 0
        %4393 = vmatpush1.bf16.msra.mxu0 %v3477
        %4394 = vmatprep.subr.bf16.mxu0 0
        %4395 = vmatpush1.bf16.msra.mxu0 %v3478
        %4396 = vmatprep.subr.bf16.mxu0 0
        %4397 = vmatpush1.bf16.msra.mxu0 %v3479
        %4398 = vmatprep.subr.bf16.mxu0 0
        %4399 = vmatpush1.bf16.msra.mxu0 %v3480
        %4400 = vmatprep.subr.bf16.mxu0 0
        %4401 = vmatpush1.bf16.msra.mxu0 0
        %4402 = vmatprep.subr.bf16.mxu0 0
        %4403 = vmatpush1.bf16.msra.mxu0 0
        %4404 = vmatprep.subr.bf16.mxu0 0
        %4405 = vmatpush1.bf16.msra.mxu0 0
        %4406 = vmatprep.subr.bf16.mxu0 0
        %4407 = vmatpush1.bf16.msra.mxu0 0
        %4408 = vmatprep.subr.bf16.mxu0 0
        %4409 = vmatpush1.bf16.msra.mxu0 0
        %4410 = vmatprep.subr.bf16.mxu0 0
        %4411 = vmatpush1.bf16.msra.mxu0 0
        %4412 = vmatprep.subr.bf16.mxu0 0
        %4413 = vmatpush1.bf16.msra.mxu0 0
        %4414 = vmatprep.subr.bf16.mxu0 0
        %4415 = vmatpush1.bf16.msra.mxu0 0
        %4416 = vmatprep.subr.bf16.mxu0 0
        %4417 = vmatpush1.bf16.msra.mxu0 0
        %4418 = vmatprep.subr.bf16.mxu0 0
        %4419 = vmatpush1.bf16.msra.mxu0 0
        %4420 = vmatprep.subr.bf16.mxu0 0
        %4421 = vmatpush1.bf16.msra.mxu0 0
        %4422 = vmatprep.subr.bf16.mxu0 0
        %4423 = vmatpush1.bf16.msra.mxu0 0
        %4424 = vmatprep.mubr.bf16.mxu0 0
        %4425 = vmatmul.mubr.bf16.gmra.mrb[0].mxu0 %v4381
        %v4426 = vpop.f32.mrb[0].mxu0
        %v4427 = vadd.f32 0.0, %v4426
        %v4428 = vpop.f32.mrb[0].mxu0
        %v4429 = vpop.f32.mrb[0].mxu0
        %v4430 = vadd.f32 0.0, %v4429
        %v4431 = vpop.f32.mrb[0].mxu0
        %4432 = vmatprep.mubr.bf16.mxu0 0
        %4433 = vmatmul.mubr.bf16.gmra.mrb[0].mxu0 %v4384
        %v4434 = vpop.f32.mrb[0].mxu0
        %v4435 = vadd.f32 0.0, %v4434
        %v4436 = vpop.f32.mrb[0].mxu0
        %v4437 = vpop.f32.mrb[0].mxu0
        %v4438 = vadd.f32 0.0, %v4437
        %v4439 = vpop.f32.mrb[0].mxu0
        %4440 = vmatprep.mubr.bf16.mxu0 0
        %4441 = vmatmul.mubr.bf16.gmra.mrb[0].mxu0 %v4387
        %v4442 = vpop.f32.mrb[0].mxu0
        %v4443 = vadd.f32 0.0, %v4442
        %v4444 = vpop.f32.mrb[0].mxu0
        %v4445 = vpop.f32.mrb[0].mxu0
        %v4446 = vadd.f32 0.0, %v4445
        %v4447 = vpop.f32.mrb[0].mxu0
        %4448 = vmatprep.mubr.bf16.mxu0 0
        %4449 = vmatmul.mubr.bf16.gmra.mrb[0].mxu0 %v4390
        %v4450 = vpop.f32.mrb[0].mxu0
        %v4451 = vadd.f32 0.0, %v4450
        %v4452 = vpop.f32.mrb[0].mxu0
        %v4453 = vpop.f32.mrb[0].mxu0
        %v4454 = vadd.f32 0.0, %v4453
        %v4455 = vpop.f32.mrb[0].mxu0
        %4456 = vdwg.mxu0
        %v4457 = vlaneseq
        %v4458 = vshrl.u32 %v4457, 7
        %v4459 = vsub.s32 7, %v4458
        %v4460 = vrot.slane %v3481, %v4459
        %v4461 = vmul.f32 %v4427, %v4460
        %v4462 = vmul.f32 %v4430, %v4460
        %v4463 = vmul.f32 %v4435, %v4460
        %v4464 = vmul.f32 %v4438, %v4460
        %v4465 = vmul.f32 %v4443, %v4460
        %v4466 = vmul.f32 %v4446, %v4460
        %v4467 = vmul.f32 %v4451, %v4460
        %v4468 = vmul.f32 %v4454, %v4460
        %v4469 = vadd.f32 %v4343, %v4461
        %v4470 = vadd.f32 %v4344, %v4462
        %v4471 = vadd.f32 %v4345, %v4463
        %v4472 = vadd.f32 %v4346, %v4464
        %v4473 = vadd.f32 %v4347, %v4465
        %v4474 = vadd.f32 %v4348, %v4466
        %v4475 = vadd.f32 %v4349, %v4467
        %v4476 = vadd.f32 %v4350, %v4468
        %s4477 = scalar_lea.vmem %s13, 256
        %v4478 = vld [vmem:[%s4477] sm:$0xf]
        %v4479 = vld [vmem:[%s4477 + $0x4] sm:$0xf]
        %v4480 = vld [vmem:[%s4477 + $0x8] sm:$0xf]
        %v4481 = vld [vmem:[%s4477 + $0xc] sm:$0xf]
        %v4482 = vld [vmem:[%s4477 + $0x10] sm:$0xf]
        %v4483 = vld [vmem:[%s4477 + $0x14] sm:$0xf]
        %v4484 = vld [vmem:[%s4477 + $0x18] sm:$0xf]
        %v4485 = vld [vmem:[%s4477 + $0x1c] sm:$0xf]
        %v4494 = vunpack.c.l.b16 %v4478
        %v4495 = vunpack.c.l.b16 %v4479
        %v4496 = vunpack.c.l.b16 %v4480
        %v4497 = vunpack.c.l.b16 %v4481
        %v4498 = vunpack.c.l.b16 %v4482
        %v4499 = vunpack.c.l.b16 %v4483
        %v4500 = vunpack.c.l.b16 %v4484
        %v4501 = vunpack.c.l.b16 %v4485
        %v4502 = vpack.c.b16 %v4495, %v4494
        %v4503 = vpack.c.b16 %v4497, %v4496
        %v4504 = vpack.c.b16 %v4499, %v4498
        %v4505 = vpack.c.b16 %v4501, %v4500
        %v4507 = vsel %vm3521, %v4502, 0
        %v4510 = vsel %vm3521, %v4503, 0
        %v4513 = vsel %vm3521, %v4504, 0
        %v4516 = vsel %vm3521, %v4505, 0
        %4518 = vmatprep.subr.bf16.mxu0 0
        %4519 = vmatpush1.bf16.msra.mxu0 %v3477
        %4520 = vmatprep.subr.bf16.mxu0 0
        %4521 = vmatpush1.bf16.msra.mxu0 %v3478
        %4522 = vmatprep.subr.bf16.mxu0 0
        %4523 = vmatpush1.bf16.msra.mxu0 %v3479
        %4524 = vmatprep.subr.bf16.mxu0 0
        %4525 = vmatpush1.bf16.msra.mxu0 %v3480
        %4526 = vmatprep.subr.bf16.mxu0 0
        %4527 = vmatpush1.bf16.msra.mxu0 0
        %4528 = vmatprep.subr.bf16.mxu0 0
        %4529 = vmatpush1.bf16.msra.mxu0 0
        %4530 = vmatprep.subr.bf16.mxu0 0
        %4531 = vmatpush1.bf16.msra.mxu0 0
        %4532 = vmatprep.subr.bf16.mxu0 0
        %4533 = vmatpush1.bf16.msra.mxu0 0
        %4534 = vmatprep.subr.bf16.mxu0 0
        %4535 = vmatpush1.bf16.msra.mxu0 0
        %4536 = vmatprep.subr.bf16.mxu0 0
        %4537 = vmatpush1.bf16.msra.mxu0 0
        %4538 = vmatprep.subr.bf16.mxu0 0
        %4539 = vmatpush1.bf16.msra.mxu0 0
        %4540 = vmatprep.subr.bf16.mxu0 0
        %4541 = vmatpush1.bf16.msra.mxu0 0
        %4542 = vmatprep.subr.bf16.mxu0 0
        %4543 = vmatpush1.bf16.msra.mxu0 0
        %4544 = vmatprep.subr.bf16.mxu0 0
        %4545 = vmatpush1.bf16.msra.mxu0 0
        %4546 = vmatprep.subr.bf16.mxu0 0
        %4547 = vmatpush1.bf16.msra.mxu0 0
        %4548 = vmatprep.subr.bf16.mxu0 0
        %4549 = vmatpush1.bf16.msra.mxu0 0
        %4550 = vmatprep.mubr.bf16.mxu0 0
        %4551 = vmatmul.mubr.bf16.gmra.mrb[0].mxu0 %v4507
        %v4552 = vpop.f32.mrb[0].mxu0
        %v4553 = vadd.f32 0.0, %v4552
        %v4554 = vpop.f32.mrb[0].mxu0
        %v4555 = vpop.f32.mrb[0].mxu0
        %v4556 = vadd.f32 0.0, %v4555
        %v4557 = vpop.f32.mrb[0].mxu0
        %4558 = vmatprep.mubr.bf16.mxu0 0
        %4559 = vmatmul.mubr.bf16.gmra.mrb[0].mxu0 %v4510
        %v4560 = vpop.f32.mrb[0].mxu0
        %v4561 = vadd.f32 0.0, %v4560
        %v4562 = vpop.f32.mrb[0].mxu0
        %v4563 = vpop.f32.mrb[0].mxu0
        %v4564 = vadd.f32 0.0, %v4563
        %v4565 = vpop.f32.mrb[0].mxu0
        %4566 = vmatprep.mubr.bf16.mxu0 0
        %4567 = vmatmul.mubr.bf16.gmra.mrb[0].mxu0 %v4513
        %v4568 = vpop.f32.mrb[0].mxu0
        %v4569 = vadd.f32 0.0, %v4568
        %v4570 = vpop.f32.mrb[0].mxu0
        %v4571 = vpop.f32.mrb[0].mxu0
        %v4572 = vadd.f32 0.0, %v4571
        %v4573 = vpop.f32.mrb[0].mxu0
        %4574 = vmatprep.mubr.bf16.mxu0 0
        %4575 = vmatmul.mubr.bf16.gmra.mrb[0].mxu0 %v4516
        %v4576 = vpop.f32.mrb[0].mxu0
        %v4577 = vadd.f32 0.0, %v4576
        %v4578 = vpop.f32.mrb[0].mxu0
        %v4579 = vpop.f32.mrb[0].mxu0
        %v4580 = vadd.f32 0.0, %v4579
        %v4581 = vpop.f32.mrb[0].mxu0
        %4582 = vdwg.mxu0
        %v4583 = vlaneseq
        %v4584 = vshrl.u32 %v4583, 7
        %v4585 = vsub.s32 0, %v4584
        %v4586 = vrot.slane %v3482, %v4585
        %v4587 = vmul.f32 %v4553, %v4586
        %v4588 = vmul.f32 %v4556, %v4586
        %v4589 = vmul.f32 %v4561, %v4586
        %v4590 = vmul.f32 %v4564, %v4586
        %v4591 = vmul.f32 %v4569, %v4586
        %v4592 = vmul.f32 %v4572, %v4586
        %v4593 = vmul.f32 %v4577, %v4586
        %v4594 = vmul.f32 %v4580, %v4586
        %v4595 = vadd.f32 %v4469, %v4587
        %v4596 = vadd.f32 %v4470, %v4588
        %v4597 = vadd.f32 %v4471, %v4589
        %v4598 = vadd.f32 %v4472, %v4590
        %v4599 = vadd.f32 %v4473, %v4591
        %v4600 = vadd.f32 %v4474, %v4592
        %v4601 = vadd.f32 %v4475, %v4593
        %v4602 = vadd.f32 %v4476, %v4594
        %v4603 = vadd.f32 %v3855, %v4225
        %v4604 = vadd.f32 %v3856, %v4226
        %v4605 = vadd.f32 %v3857, %v4227
        %v4606 = vadd.f32 %v3858, %v4228
        %v4607 = vadd.f32 %v3859, %v4229
        %v4608 = vadd.f32 %v3860, %v4230
        %v4609 = vadd.f32 %v3861, %v4231
        %v4610 = vadd.f32 %v3862, %v4232
        %v4611 = vadd.f32 %v4603, %v4595
        %v4612 = vadd.f32 %v4604, %v4596
        %v4613 = vadd.f32 %v4605, %v4597
        %v4614 = vadd.f32 %v4606, %v4598
        %v4615 = vadd.f32 %v4607, %v4599
        %v4616 = vadd.f32 %v4608, %v4600
        %v4617 = vadd.f32 %v4609, %v4601
        %v4618 = vadd.f32 %v4610, %v4602
        %v4619 = vlaneseq
        %v4620 = vshrl.u32 %v4619, 7
        %v4621 = vsub.s32 0, %v4620
        %v4622 = vrot.slane %v3483, %v4621
        %v4623 = vmul.f32 %v4611, %v4622
        %v4624 = vmul.f32 %v4612, %v4622
        %v4625 = vmul.f32 %v4613, %v4622
        %v4626 = vmul.f32 %v4614, %v4622
        %v4627 = vmul.f32 %v4615, %v4622
        %v4628 = vmul.f32 %v4616, %v4622
        %v4629 = vmul.f32 %v4617, %v4622
        %v4630 = vmul.f32 %v4618, %v4622
        %v4631 = vlaneseq
        %v4632 = vshrl.u32 %v4631, 7
        %v4633 = vsub.s32 1, %v4632
        %v4634 = vrot.slane %v3483, %v4633
        %v4635 = vadd.f32 %v4623, %v4634
        %v4636 = vadd.f32 %v4624, %v4634
        %v4637 = vadd.f32 %v4625, %v4634
        %v4638 = vadd.f32 %v4626, %v4634
        %v4639 = vadd.f32 %v4627, %v4634
        %v4640 = vadd.f32 %v4628, %v4634
        %v4641 = vadd.f32 %v4629, %v4634
        %v4642 = vadd.f32 %v4630, %v4634
        %v4643 = vmax.f32 %v4635, 0.0
        %v4644 = vmax.f32 %v4636, 0.0
        %v4645 = vmax.f32 %v4637, 0.0
        %v4646 = vmax.f32 %v4638, 0.0
        %v4647 = vmax.f32 %v4639, 0.0
        %v4648 = vmax.f32 %v4640, 0.0
        %v4649 = vmax.f32 %v4641, 0.0
        %v4650 = vmax.f32 %v4642, 0.0
        %v4651 = vmin.f32 %v4643, 6.0
        %v4652 = vmin.f32 %v4644, 6.0
        %v4653 = vmin.f32 %v4645, 6.0
        %v4654 = vmin.f32 %v4646, 6.0
        %v4655 = vmin.f32 %v4647, 6.0
        %v4656 = vmin.f32 %v4648, 6.0
        %v4657 = vmin.f32 %v4649, 6.0
        %v4658 = vmin.f32 %v4650, 6.0
        %v4659 = vpack.c.bf16 %v4652, %v4651
        %v4660 = vpack.c.bf16 %v4654, %v4653
        %v4661 = vpack.c.bf16 %v4656, %v4655
        %v4662 = vpack.c.bf16 %v4658, %v4657
        %v4671 = vunpack.c.l.b16 %v3485
        %v4672 = vunpack.c.l.b16 %v3486
        %v4673 = vunpack.c.l.b16 %v3487
        %v4674 = vunpack.c.l.b16 %v3488
        %v4675 = vunpack.c.l.b16 %v3489
        %v4676 = vunpack.c.l.b16 %v3490
        %v4677 = vunpack.c.l.b16 %v3491
        %v4678 = vunpack.c.l.b16 %v3492
        %v4679 = vpack.c.b16 %v4672, %v4671
        %v4680 = vpack.c.b16 %v4674, %v4673
        %v4681 = vpack.c.b16 %v4676, %v4675
        %v4682 = vpack.c.b16 %v4678, %v4677
        %v4688 = vsel %vm3521, %v4659, 0
        %v4691 = vsel %vm3521, %v4660, 0
        %v4694 = vsel %vm3521, %v4661, 0
        %v4697 = vsel %vm3521, %v4662, 0
        %4699 = vmatprep.subr.bf16.mxu0 0
        %4700 = vmatpush1.bf16.msra.mxu0 %v4679
        %4701 = vmatprep.subr.bf16.mxu0 0
        %4702 = vmatpush1.bf16.msra.mxu0 %v4680
        %4703 = vmatprep.subr.bf16.mxu0 0
        %4704 = vmatpush1.bf16.msra.mxu0 %v4681
        %4705 = vmatprep.subr.bf16.mxu0 0
        %4706 = vmatpush1.bf16.msra.mxu0 %v4682
        %4707 = vmatprep.subr.bf16.mxu0 0
        %4708 = vmatpush1.bf16.msra.mxu0 0
        %4709 = vmatprep.subr.bf16.mxu0 0
        %4710 = vmatpush1.bf16.msra.mxu0 0
        %4711 = vmatprep.subr.bf16.mxu0 0
        %4712 = vmatpush1.bf16.msra.mxu0 0
        %4713 = vmatprep.subr.bf16.mxu0 0
        %4714 = vmatpush1.bf16.msra.mxu0 0
        %4715 = vmatprep.subr.bf16.mxu0 0
        %4716 = vmatpush1.bf16.msra.mxu0 0
        %4717 = vmatprep.subr.bf16.mxu0 0
        %4718 = vmatpush1.bf16.msra.mxu0 0
        %4719 = vmatprep.subr.bf16.mxu0 0
        %4720 = vmatpush1.bf16.msra.mxu0 0
        %4721 = vmatprep.subr.bf16.mxu0 0
        %4722 = vmatpush1.bf16.msra.mxu0 0
        %4723 = vmatprep.subr.bf16.mxu0 0
        %4724 = vmatpush1.bf16.msra.mxu0 0
        %4725 = vmatprep.subr.bf16.mxu0 0
        %4726 = vmatpush1.bf16.msra.mxu0 0
        %4727 = vmatprep.subr.bf16.mxu0 0
        %4728 = vmatpush1.bf16.msra.mxu0 0
        %4729 = vmatprep.subr.bf16.mxu0 0
        %4730 = vmatpush1.bf16.msra.mxu0 0
        %4731 = vmatprep.mubr.bf16.mxu0 0
        %4732 = vmatmul.mubr.bf16.gmra.mrb[0].mxu0 %v4688
        %v4733 = vpop.f32.mrb[0].mxu0
        %v4734 = vadd.f32 0.0, %v4733
        %v4735 = vpop.f32.mrb[0].mxu0
        %v4736 = vpop.f32.mrb[0].mxu0
        %v4737 = vadd.f32 0.0, %v4736
        %v4738 = vpop.f32.mrb[0].mxu0
        %4739 = vmatprep.mubr.bf16.mxu0 0
        %4740 = vmatmul.mubr.bf16.gmra.mrb[0].mxu0 %v4691
        %v4741 = vpop.f32.mrb[0].mxu0
        %v4742 = vadd.f32 0.0, %v4741
        %v4743 = vpop.f32.mrb[0].mxu0
        %v4744 = vpop.f32.mrb[0].mxu0
        %v4745 = vadd.f32 0.0, %v4744
        %v4746 = vpop.f32.mrb[0].mxu0
        %4747 = vmatprep.mubr.bf16.mxu0 0
        %4748 = vmatmul.mubr.bf16.gmra.mrb[0].mxu0 %v4694
        %v4749 = vpop.f32.mrb[0].mxu0
        %v4750 = vadd.f32 0.0, %v4749
        %v4751 = vpop.f32.mrb[0].mxu0
        %v4752 = vpop.f32.mrb[0].mxu0
        %v4753 = vadd.f32 0.0, %v4752
        %v4754 = vpop.f32.mrb[0].mxu0
        %4755 = vmatprep.mubr.bf16.mxu0 0
        %4756 = vmatmul.mubr.bf16.gmra.mrb[0].mxu0 %v4697
        %v4757 = vpop.f32.mrb[0].mxu0
        %v4758 = vadd.f32 0.0, %v4757
        %v4759 = vpop.f32.mrb[0].mxu0
        %v4760 = vpop.f32.mrb[0].mxu0
        %v4761 = vadd.f32 0.0, %v4760
        %v4762 = vpop.f32.mrb[0].mxu0
        %4763 = vdwg.mxu0
        %v4764 = vlaneseq
        %v4765 = vshrl.u32 %v4764, 7
        %v4766 = vsub.s32 0, %v4765
        %v4767 = vrot.slane %v3484, %v4766
        %v4768 = vmul.f32 %v4734, %v4767
        %v4769 = vmul.f32 %v4737, %v4767
        %v4770 = vmul.f32 %v4742, %v4767
        %v4771 = vmul.f32 %v4745, %v4767
        %v4772 = vmul.f32 %v4750, %v4767
        %v4773 = vmul.f32 %v4753, %v4767
        %v4774 = vmul.f32 %v4758, %v4767
        %v4775 = vmul.f32 %v4761, %v4767
        %v4776 = vlaneseq
        %v4777 = vshrl.u32 %v4776, 7
        %v4778 = vsub.s32 1, %v4777
        %v4779 = vrot.slane %v3484, %v4778
        %v4780 = vadd.f32 %v4768, %v4779
        %v4781 = vadd.f32 %v4769, %v4779
        %v4782 = vadd.f32 %v4770, %v4779
        %v4783 = vadd.f32 %v4771, %v4779
        %v4784 = vadd.f32 %v4772, %v4779
        %v4785 = vadd.f32 %v4773, %v4779
        %v4786 = vadd.f32 %v4774, %v4779
        %v4787 = vadd.f32 %v4775, %v4779
        %v4788 = vmax.f32 %v4780, 0.0
        %v4789 = vmax.f32 %v4781, 0.0
        %v4790 = vmax.f32 %v4782, 0.0
        %v4791 = vmax.f32 %v4783, 0.0
        %v4792 = vmax.f32 %v4784, 0.0
        %v4793 = vmax.f32 %v4785, 0.0
        %v4794 = vmax.f32 %v4786, 0.0
        %v4795 = vmax.f32 %v4787, 0.0
        %v4796 = vmin.f32 %v4788, 6.0
        %v4797 = vmin.f32 %v4789, 6.0
        %v4798 = vmin.f32 %v4790, 6.0
        %v4799 = vmin.f32 %v4791, 6.0
        %v4800 = vmin.f32 %v4792, 6.0
        %v4801 = vmin.f32 %v4793, 6.0
        %v4802 = vmin.f32 %v4794, 6.0
        %v4803 = vmin.f32 %v4795, 6.0
        %v4804 = vpack.c.bf16 %v4797, %v4796
        %v4805 = vpack.c.bf16 %v4799, %v4798
        %v4806 = vpack.c.bf16 %v4801, %v4800
        %v4807 = vpack.c.bf16 %v4803, %v4802
        %v4808 = vunpack.c.l.bf16 %v4804
        %v4809 = vunpack.c.h.bf16 %v4804
        %v4810 = vunpack.c.l.bf16 %v4805
        %v4811 = vunpack.c.h.bf16 %v4805
        %v4812 = vunpack.c.l.bf16 %v4806
        %v4813 = vunpack.c.h.bf16 %v4806
        %v4814 = vunpack.c.l.bf16 %v4807
        %v4815 = vunpack.c.h.bf16 %v4807
        %v4816 = vld [vmem:[#allocation12] sm:$0x1]
        %v4818 = vlaneseq
        %v4819 = vshrl.u32 %v4818, 7
        %v4820 = vsub.s32 0, %v4819
        %v4821 = vrot.slane %v4816, %v4820
        %v4823 = vmul.f32 %v4808, %v4821
        %v4824 = vmul.f32 %v4809, %v4821
        %v4825 = vmul.f32 %v4810, %v4821
        %v4826 = vmul.f32 %v4811, %v4821
        %v4827 = vmul.f32 %v4812, %v4821
        %v4828 = vmul.f32 %v4813, %v4821
        %v4829 = vmul.f32 %v4814, %v4821
        %v4830 = vmul.f32 %v4815, %v4821
        %v4831 = vsel %vm3521, %v4823, 0.0
        %4832 = vadd.xlane.f32.xlu0 %v4831
        %v4833 = vpop.xlane.xlu0 %4832
        %v4834 = vsel %vm3521, %v4824, 0.0
        %4835 = vadd.xlane.f32.xlu0 %v4834
        %v4836 = vpop.xlane.xlu0 %4835
        %v4837 = vsel %vm3521, %v4825, 0.0
        %4838 = vadd.xlane.f32.xlu0 %v4837
        %v4839 = vpop.xlane.xlu0 %4838
        %v4840 = vsel %vm3521, %v4826, 0.0
        %4841 = vadd.xlane.f32.xlu0 %v4840
        %v4842 = vpop.xlane.xlu0 %4841
        %v4843 = vsel %vm3521, %v4827, 0.0
        %4844 = vadd.xlane.f32.xlu0 %v4843
        %v4845 = vpop.xlane.xlu0 %4844
        %v4846 = vsel %vm3521, %v4828, 0.0
        %4847 = vadd.xlane.f32.xlu0 %v4846
        %v4848 = vpop.xlane.xlu0 %4847
        %v4849 = vsel %vm3521, %v4829, 0.0
        %4850 = vadd.xlane.f32.xlu0 %v4849
        %v4851 = vpop.xlane.xlu0 %4850
        %v4852 = vsel %vm3521, %v4830, 0.0
        %4853 = vadd.xlane.f32.xlu0 %v4852
        %v4854 = vpop.xlane.xlu0 %4853
        %v4855 = vld [vmem:[#allocation3] sm:$0x1]
        %v4857 = vlaneseq
        %v4858 = vshrl.u32 %v4857, 7
        %v4859 = vsub.s32 0, %v4858
        %v4860 = vrot.slane %v4855, %v4859
        %v4862 = vadd.f32 %v4833, %v4860
        %v4863 = vadd.f32 %v4836, %v4860
        %v4864 = vadd.f32 %v4839, %v4860
        %v4865 = vadd.f32 %v4842, %v4860
        %v4866 = vadd.f32 %v4845, %v4860
        %v4867 = vadd.f32 %v4848, %v4860
        %v4868 = vadd.f32 %v4851, %v4860
        %v4869 = vadd.f32 %v4854, %v4860
        %v4870 = vxor.u32 %v4862, 2147483648
        %v4871 = vxor.u32 %v4863, 2147483648
        %v4872 = vxor.u32 %v4864, 2147483648
        %v4873 = vxor.u32 %v4865, 2147483648
        %v4874 = vxor.u32 %v4866, 2147483648
        %v4875 = vxor.u32 %v4867, 2147483648
        %v4876 = vxor.u32 %v4868, 2147483648
        %v4877 = vxor.u32 %v4869, 2147483648
        %v4878 = vmul.f32 %v4870, 1.442695
        %v4879 = vpow.pop %v4878
        %v4880 = vmul.f32 %v4871, 1.442695
        %v4881 = vpow.pop %v4880
        %v4882 = vmul.f32 %v4872, 1.442695
        %v4883 = vpow.pop %v4882
        %v4884 = vmul.f32 %v4873, 1.442695
        %v4885 = vpow.pop %v4884
        %v4886 = vmul.f32 %v4874, 1.442695
        %v4887 = vpow.pop %v4886
        %v4888 = vmul.f32 %v4875, 1.442695
        %v4889 = vpow.pop %v4888
        %v4890 = vmul.f32 %v4876, 1.442695
        %v4891 = vpow.pop %v4890
        %v4892 = vmul.f32 %v4877, 1.442695
        %v4893 = vpow.pop %v4892
        %v4894 = vadd.f32 %v4879, 1.0
        %v4895 = vadd.f32 %v4881, 1.0
        %v4896 = vadd.f32 %v4883, 1.0
        %v4897 = vadd.f32 %v4885, 1.0
        %v4898 = vadd.f32 %v4887, 1.0
        %v4899 = vadd.f32 %v4889, 1.0
        %v4900 = vadd.f32 %v4891, 1.0
        %v4901 = vadd.f32 %v4893, 1.0
        %v4902 = vrcp.pop %v4894
        %v4903 = vmul.f32 1.0, %v4902
        %v4904 = vrcp.pop %v4895
        %v4905 = vmul.f32 1.0, %v4904
        %v4906 = vrcp.pop %v4896
        %v4907 = vmul.f32 1.0, %v4906
        %v4908 = vrcp.pop %v4897
        %v4909 = vmul.f32 1.0, %v4908
        %v4910 = vrcp.pop %v4898
        %v4911 = vmul.f32 1.0, %v4910
        %v4912 = vrcp.pop %v4899
        %v4913 = vmul.f32 1.0, %v4912
        %v4914 = vrcp.pop %v4900
        %v4915 = vmul.f32 1.0, %v4914
        %v4916 = vrcp.pop %v4901
        %v4917 = vmul.f32 1.0, %v4916
        %4919 = vset.pattern.permute.xlu0 0
        %4920 = vperm.xlu0 %4919, %v4903
        %v4921 = vpop.permute.xlu0 %4920
        %4924 = vset.pattern.permute.xlu0 0
        %4925 = vperm.xlu0 %4924, %v4905
        %v4926 = vpop.permute.xlu0 %4925
        %4929 = vset.pattern.permute.xlu0 0
        %4930 = vperm.xlu0 %4929, %v4907
        %v4931 = vpop.permute.xlu0 %4930
        %4934 = vset.pattern.permute.xlu0 0
        %4935 = vperm.xlu0 %4934, %v4909
        %v4936 = vpop.permute.xlu0 %4935
        %4939 = vset.pattern.permute.xlu0 0
        %4940 = vperm.xlu0 %4939, %v4911
        %v4941 = vpop.permute.xlu0 %4940
        %4944 = vset.pattern.permute.xlu0 0
        %4945 = vperm.xlu0 %4944, %v4913
        %v4946 = vpop.permute.xlu0 %4945
        %4949 = vset.pattern.permute.xlu0 0
        %4950 = vperm.xlu0 %4949, %v4915
        %v4951 = vpop.permute.xlu0 %4950
        %4954 = vset.pattern.permute.xlu0 0
        %4955 = vperm.xlu0 %4954, %v4917
        %v4956 = vpop.permute.xlu0 %4955
        %v4958 = vmul.f32 %v4808, %v4921
        %v4959 = vmul.f32 %v4809, %v4926
        %v4960 = vmul.f32 %v4810, %v4931
        %v4961 = vmul.f32 %v4811, %v4936
        %v4962 = vmul.f32 %v4812, %v4941
        %v4963 = vmul.f32 %v4813, %v4946
        %v4964 = vmul.f32 %v4814, %v4951
        %v4965 = vmul.f32 %v4815, %v4956
        %v4966 = vsel %vm3521, %v4958, 0.0
        %v4967 = vsel %vm3521, %v4959, 0.0
        %v4968 = vadd.f32 %v4966, %v4967
        %v4969 = vsel %vm3521, %v4960, 0.0
        %v4970 = vadd.f32 %v4968, %v4969
        %v4971 = vsel %vm3521, %v4961, 0.0
        %v4972 = vadd.f32 %v4970, %v4971
        %v4973 = vsel %vm3521, %v4962, 0.0
        %v4974 = vadd.f32 %v4972, %v4973
        %v4975 = vsel %vm3521, %v4963, 0.0
        %v4976 = vadd.f32 %v4974, %v4975
        %v4977 = vsel %vm3521, %v4964, 0.0
        %v4978 = vadd.f32 %v4976, %v4977
        %v4979 = vsel %vm3521, %v4965, 0.0
        %v4980 = vadd.f32 %v4978, %v4979
        %v4981 = vrot.slane %v4980, 4
        %v4982 = vadd.f32 %v4980, %v4981
        %v4983 = vrot.slane %v4982, 2
        %v4984 = vadd.f32 %v4982, %v4983
        %v4985 = vrot.slane %v4984, 1
        %v4986 = vadd.f32 %v4984, %v4985
        %v4987 = vrcp.pop 64.0
        %v4988 = vmul.f32 %v4986, %v4987
        %v4989 = vsel %vm3521, %v4958, -inf
        %v4990 = vsel %vm3521, %v4959, -inf
        %v4991 = vsel %vm3521, %v4960, -inf
        %v4992 = vsel %vm3521, %v4961, -inf
        %v4993 = vsel %vm3521, %v4962, -inf
        %v4994 = vmax.f32 %v4989, %v4993
        %v4995 = vsel %vm3521, %v4963, -inf
        %v4996 = vmax.f32 %v4990, %v4995
        %v4997 = vsel %vm3521, %v4964, -inf
        %v4998 = vmax.f32 %v4991, %v4997
        %v4999 = vsel %vm3521, %v4965, -inf
        %v5000 = vmax.f32 %v4992, %v4999
        %v5001 = vmax.f32 %v4994, %v4996
        %v5002 = vmax.f32 %v4998, %v5000
        %v5003 = vmax.f32 %v5001, %v5002
        %v5004 = vrot.slane %v5003, 4
        %v5005 = vmax.f32 %v5003, %v5004
        %v5006 = vrot.slane %v5005, 2
        %v5007 = vmax.f32 %v5005, %v5006
        %v5008 = vrot.slane %v5007, 1
        %v5009 = vmax.f32 %v5007, %v5008
        %v5010 = vlaneseq
        %v5011 = vshrl.u32 %v5010, 7
        %vm5012 = vcmp.eq.s32.totalorder %v5011, 0
        %v5013 = vsel %vm5012, %v4988, %v5009
        %v5014 = vpack.c.bf16 %v5013, %v5013
        %v5015 = vld [vmem:[%s81] sm:$0xf]
        %v5016 = vld [vmem:[%s81 + $0x4] sm:$0xf]
        %v5017 = vld [vmem:[%s81 + $0x8] sm:$0xf]
        %v5018 = vld [vmem:[%s81 + $0xc] sm:$0xf]
        %v5019 = vld [vmem:[%s81 + $0x10] sm:$0xf]
        %v5020 = vld [vmem:[%s81 + $0x14] sm:$0xf]
        %v5021 = vld [vmem:[%s81 + $0x18] sm:$0xf]
        %v5022 = vld [vmem:[%s81 + $0x1c] sm:$0xf]
        %v5031 = vunpack.c.l.b16 %v5015
        %v5032 = vunpack.c.l.b16 %v5016
        %v5033 = vunpack.c.l.b16 %v5017
        %v5034 = vunpack.c.l.b16 %v5018
        %v5035 = vunpack.c.l.b16 %v5019
        %v5036 = vunpack.c.l.b16 %v5020
        %v5037 = vunpack.c.l.b16 %v5021
        %v5038 = vunpack.c.l.b16 %v5022
        %v5039 = vpack.c.b16 %v5032, %v5031
        %v5040 = vpack.c.b16 %v5034, %v5033
        %v5041 = vpack.c.b16 %v5036, %v5035
        %v5042 = vpack.c.b16 %v5038, %v5037
        %v5048 = vsel %vm3521, %v5014, 0
        %5050 = vmatprep.subr.bf16.mxu0 0
        %5051 = vmatpush1.bf16.msra.mxu0 %v5039
        %5052 = vmatprep.subr.bf16.mxu0 0
        %5053 = vmatpush1.bf16.msra.mxu0 %v5040
        %5054 = vmatprep.subr.bf16.mxu0 0
        %5055 = vmatpush1.bf16.msra.mxu0 %v5041
        %5056 = vmatprep.subr.bf16.mxu0 0
        %5057 = vmatpush1.bf16.msra.mxu0 %v5042
        %5058 = vmatprep.subr.bf16.mxu0 0
        %5059 = vmatpush1.bf16.msra.mxu0 0
        %5060 = vmatprep.subr.bf16.mxu0 0
        %5061 = vmatpush1.bf16.msra.mxu0 0
        %5062 = vmatprep.subr.bf16.mxu0 0
        %5063 = vmatpush1.bf16.msra.mxu0 0
        %5064 = vmatprep.subr.bf16.mxu0 0
        %5065 = vmatpush1.bf16.msra.mxu0 0
        %5066 = vmatprep.subr.bf16.mxu0 0
        %5067 = vmatpush1.bf16.msra.mxu0 0
        %5068 = vmatprep.subr.bf16.mxu0 0
        %5069 = vmatpush1.bf16.msra.mxu0 0
        %5070 = vmatprep.subr.bf16.mxu0 0
        %5071 = vmatpush1.bf16.msra.mxu0 0
        %5072 = vmatprep.subr.bf16.mxu0 0
        %5073 = vmatpush1.bf16.msra.mxu0 0
        %5074 = vmatprep.subr.bf16.mxu0 0
        %5075 = vmatpush1.bf16.msra.mxu0 0
        %5076 = vmatprep.subr.bf16.mxu0 0
        %5077 = vmatpush1.bf16.msra.mxu0 0
        %5078 = vmatprep.subr.bf16.mxu0 0
        %5079 = vmatpush1.bf16.msra.mxu0 0
        %5080 = vmatprep.subr.bf16.mxu0 0
        %5081 = vmatpush1.bf16.msra.mxu0 0
        %5082 = vmatprep.mubr.bf16.mxu0 0
        %5083 = vmatmul.mubr.bf16.gmra.mrb[0].mxu0 %v5048
        %v5084 = vpop.f32.mrb[0].mxu0
        %v5085 = vadd.f32 0.0, %v5084
        %v5086 = vpop.f32.mrb[0].mxu0
        %v5087 = vpop.f32.mrb[0].mxu0
        %v5088 = vpop.f32.mrb[0].mxu0
        %5089 = vdwg.mxu0
        %v5090 = vmax.f32 %v5085, 0.0
        %v5091 = vpack.c.bf16 %v5090, %v5090
        %v5092 = vld [vmem:[%s83] sm:$0xf]
        %vm5093 = vcmask 64512
        %v5095 = vsel %vm5093, %v5091, 0
        %vm5097 = vcmask 1043456
        %v5099 = vsel %vm5097, %v5092, 0
        %5101 = vmatprep.subr.bf16.mxu0 0
        %5102 = vmatpush1.bf16.msra.mxu0 %v5099
        %5103 = vmatprep.subr.bf16.mxu0 0
        %5104 = vmatpush1.bf16.msra.mxu0 0
        %5105 = vmatprep.subr.bf16.mxu0 0
        %5106 = vmatpush1.bf16.msra.mxu0 0
        %5107 = vmatprep.subr.bf16.mxu0 0
        %5108 = vmatpush1.bf16.msra.mxu0 0
        %5109 = vmatprep.subr.bf16.mxu0 0
        %5110 = vmatpush1.bf16.msra.mxu0 0
        %5111 = vmatprep.subr.bf16.mxu0 0
        %5112 = vmatpush1.bf16.msra.mxu0 0
        %5113 = vmatprep.subr.bf16.mxu0 0
        %5114 = vmatpush1.bf16.msra.mxu0 0
        %5115 = vmatprep.subr.bf16.mxu0 0
        %5116 = vmatpush1.bf16.msra.mxu0 0
        %5117 = vmatprep.subr.bf16.mxu0 0
        %5118 = vmatpush1.bf16.msra.mxu0 0
        %5119 = vmatprep.subr.bf16.mxu0 0
        %5120 = vmatpush1.bf16.msra.mxu0 0
        %5121 = vmatprep.subr.bf16.mxu0 0
        %5122 = vmatpush1.bf16.msra.mxu0 0
        %5123 = vmatprep.subr.bf16.mxu0 0
        %5124 = vmatpush1.bf16.msra.mxu0 0
        %5125 = vmatprep.subr.bf16.mxu0 0
        %5126 = vmatpush1.bf16.msra.mxu0 0
        %5127 = vmatprep.subr.bf16.mxu0 0
        %5128 = vmatpush1.bf16.msra.mxu0 0
        %5129 = vmatprep.subr.bf16.mxu0 0
        %5130 = vmatpush1.bf16.msra.mxu0 0
        %5131 = vmatprep.subr.bf16.mxu0 0
        %5132 = vmatpush1.bf16.msra.mxu0 0
        %5133 = vmatprep.mubr.bf16.mxu0 0
        %5134 = vmatmul.mubr.bf16.gmra.mrb[0].mxu0 %v5095
        %v5135 = vpop.f32.mrb[0].mxu0
        %v5136 = vadd.f32 0.0, %v5135
        %v5137 = vpop.f32.mrb[0].mxu0
        %v5138 = vpop.f32.mrb[0].mxu0
        %v5139 = vpop.f32.mrb[0].mxu0
        %5140 = vdwg.mxu0
        %v5142 = vrot.slane %v5136, 1
        %v5144 = vadd.f32 %v5136, %v5142
        %v5145 = vxor.u32 %v5144, 2147483648
        %v5146 = vmul.f32 %v5145, 1.442695
        %v5147 = vpow.pop %v5146
        %v5148 = vadd.f32 %v5147, 1.0
        %v5149 = vrcp.pop %v5148
        %v5150 = vmul.f32 1.0, %v5149
        %v5151 = vlaneseq
        %v5152 = vshrl.u32 %v5151, 7
        %v5153 = vsub.s32 0, %v5152
        %v5154 = vrot.slane %v5150, %v5153
        %v5155 = vmul.f32 %v4958, %v5154
        %v5156 = vmul.f32 %v4959, %v5154
        %v5157 = vmul.f32 %v4960, %v5154
        %v5158 = vmul.f32 %v4961, %v5154
        %v5159 = vmul.f32 %v4962, %v5154
        %v5160 = vmul.f32 %v4963, %v5154
        %v5161 = vmul.f32 %v4964, %v5154
        %v5162 = vmul.f32 %v4965, %v5154
        %v5163 = vpack.c.bf16 %v5156, %v5155
        %v5164 = vpack.c.bf16 %v5158, %v5157
        %v5165 = vpack.c.bf16 %v5160, %v5159
        %v5166 = vpack.c.bf16 %v5162, %v5161
        %v5167 = vld [vmem:[%s25] sm:$0xff]
        %v5168 = vld [vmem:[%s25 + $0x8] sm:$0x1]
        %v5169 = vld [vmem:[%s29] sm:$0x3]
        %v5170 = vld [vmem:[%s31] sm:$0x3]
        %v5171 = vld [vmem:[%s27] sm:$0xf]
        %v5172 = vld [vmem:[%s27 + $0x4] sm:$0xf]
        %v5173 = vld [vmem:[%s27 + $0x8] sm:$0xf]
        %v5174 = vld [vmem:[%s27 + $0xc] sm:$0xf]
        %v5175 = vld [vmem:[%s27 + $0x10] sm:$0xf]
        %v5176 = vld [vmem:[%s27 + $0x14] sm:$0xf]
        %v5177 = vld [vmem:[%s27 + $0x18] sm:$0xf]
        %v5178 = vld [vmem:[%s27 + $0x1c] sm:$0xf]
        %v5179 = vld [vmem:[%s23] sm:$0xf]
        %v5180 = vld [vmem:[%s23 + $0x4] sm:$0xf]
        %v5183 = vunpack.c.l.b16 %v5179
        %v5184 = vunpack.c.l.b16 %v5180
        %v5185 = vpack.c.b16 %v5184, %v5183
        %v5187 = vsel %vm3521, %v5185, 0
        %5189 = vmatprep.subr.bf16.mxu0 0
        %5190 = vmatpush1.bf16.msra.mxu0 %v5163
        %5191 = vmatprep.subr.bf16.mxu0 0
        %5192 = vmatpush1.bf16.msra.mxu0 %v5164
        %5193 = vmatprep.subr.bf16.mxu0 0
        %5194 = vmatpush1.bf16.msra.mxu0 %v5165
        %5195 = vmatprep.subr.bf16.mxu0 0
        %5196 = vmatpush1.bf16.msra.mxu0 %v5166
        %5197 = vmatprep.subr.bf16.mxu0 0
        %5198 = vmatpush1.bf16.msra.mxu0 0
        %5199 = vmatprep.subr.bf16.mxu0 0
        %5200 = vmatpush1.bf16.msra.mxu0 0
        %5201 = vmatprep.subr.bf16.mxu0 0
        %5202 = vmatpush1.bf16.msra.mxu0 0
        %5203 = vmatprep.subr.bf16.mxu0 0
        %5204 = vmatpush1.bf16.msra.mxu0 0
        %5205 = vmatprep.subr.bf16.mxu0 0
        %5206 = vmatpush1.bf16.msra.mxu0 0
        %5207 = vmatprep.subr.bf16.mxu0 0
        %5208 = vmatpush1.bf16.msra.mxu0 0
        %5209 = vmatprep.subr.bf16.mxu0 0
        %5210 = vmatpush1.bf16.msra.mxu0 0
        %5211 = vmatprep.subr.bf16.mxu0 0
        %5212 = vmatpush1.bf16.msra.mxu0 0
        %5213 = vmatprep.subr.bf16.mxu0 0
        %5214 = vmatpush1.bf16.msra.mxu0 0
        %5215 = vmatprep.subr.bf16.mxu0 0
        %5216 = vmatpush1.bf16.msra.mxu0 0
        %5217 = vmatprep.subr.bf16.mxu0 0
        %5218 = vmatpush1.bf16.msra.mxu0 0
        %5219 = vmatprep.subr.bf16.mxu0 0
        %5220 = vmatpush1.bf16.msra.mxu0 0
        %5221 = vmatprep.mubr.bf16.mxu0 0
        %5222 = vmatmul.mubr.bf16.gmra.mrb[0].mxu0 %v5187
        %v5223 = vpop.f32.mrb[0].mxu0
        %v5224 = vadd.f32 0.0, %v5223
        %v5225 = vpop.f32.mrb[0].mxu0
        %v5226 = vpop.f32.mrb[0].mxu0
        %v5227 = vadd.f32 0.0, %v5226
        %v5228 = vpop.f32.mrb[0].mxu0
        %5229 = vdwg.mxu0
        %v5230 = vlaneseq
        %v5231 = vshrl.u32 %v5230, 7
        %v5232 = vsub.s32 0, %v5231
        %v5233 = vrot.slane %v5167, %v5232
        %v5234 = vmul.f32 %v5224, %v5233
        %v5235 = vmul.f32 %v5227, %v5233
        %s5236 = scalar_lea.vmem %s23, 8
        %v5237 = vld [vmem:[%s5236] sm:$0xf]
        %v5238 = vld [vmem:[%s5236 + $0x4] sm:$0xf]
        %v5241 = vunpack.c.l.b16 %v5237
        %v5242 = vunpack.c.l.b16 %v5238
        %v5243 = vpack.c.b16 %v5242, %v5241
        %v5245 = vsel %vm3521, %v5243, 0
        %5247 = vmatprep.subr.bf16.mxu0 0
        %5248 = vmatpush1.bf16.msra.mxu0 %v5163
        %5249 = vmatprep.subr.bf16.mxu0 0
        %5250 = vmatpush1.bf16.msra.mxu0 %v5164
        %5251 = vmatprep.subr.bf16.mxu0 0
        %5252 = vmatpush1.bf16.msra.mxu0 %v5165
        %5253 = vmatprep.subr.bf16.mxu0 0
        %5254 = vmatpush1.bf16.msra.mxu0 %v5166
        %5255 = vmatprep.subr.bf16.mxu0 0
        %5256 = vmatpush1.bf16.msra.mxu0 0
        %5257 = vmatprep.subr.bf16.mxu0 0
        %5258 = vmatpush1.bf16.msra.mxu0 0
        %5259 = vmatprep.subr.bf16.mxu0 0
        %5260 = vmatpush1.bf16.msra.mxu0 0
        %5261 = vmatprep.subr.bf16.mxu0 0
        %5262 = vmatpush1.bf16.msra.mxu0 0
        %5263 = vmatprep.subr.bf16.mxu0 0
        %5264 = vmatpush1.bf16.msra.mxu0 0
        %5265 = vmatprep.subr.bf16.mxu0 0
        %5266 = vmatpush1.bf16.msra.mxu0 0
        %5267 = vmatprep.subr.bf16.mxu0 0
        %5268 = vmatpush1.bf16.msra.mxu0 0
        %5269 = vmatprep.subr.bf16.mxu0 0
        %5270 = vmatpush1.bf16.msra.mxu0 0
        %5271 = vmatprep.subr.bf16.mxu0 0
        %5272 = vmatpush1.bf16.msra.mxu0 0
        %5273 = vmatprep.subr.bf16.mxu0 0
        %5274 = vmatpush1.bf16.msra.mxu0 0
        %5275 = vmatprep.subr.bf16.mxu0 0
        %5276 = vmatpush1.bf16.msra.mxu0 0
        %5277 = vmatprep.subr.bf16.mxu0 0
        %5278 = vmatpush1.bf16.msra.mxu0 0
        %5279 = vmatprep.mubr.bf16.mxu0 0
        %5280 = vmatmul.mubr.bf16.gmra.mrb[0].mxu0 %v5245
        %v5281 = vpop.f32.mrb[0].mxu0
        %v5282 = vadd.f32 0.0, %v5281
        %v5283 = vpop.f32.mrb[0].mxu0
        %v5284 = vpop.f32.mrb[0].mxu0
        %v5285 = vadd.f32 0.0, %v5284
        %v5286 = vpop.f32.mrb[0].mxu0
        %5287 = vdwg.mxu0
        %v5288 = vlaneseq
        %v5289 = vshrl.u32 %v5288, 7
        %v5290 = vsub.s32 1, %v5289
        %v5291 = vrot.slane %v5167, %v5290
        %v5292 = vmul.f32 %v5282, %v5291
        %v5293 = vmul.f32 %v5285, %v5291
        %v5294 = vadd.f32 %v5234, %v5292
        %v5295 = vadd.f32 %v5235, %v5293
        %s5296 = scalar_lea.vmem %s23, 16
        %v5297 = vld [vmem:[%s5296] sm:$0xf]
        %v5298 = vld [vmem:[%s5296 + $0x4] sm:$0xf]
        %v5301 = vunpack.c.l.b16 %v5297
        %v5302 = vunpack.c.l.b16 %v5298
        %v5303 = vpack.c.b16 %v5302, %v5301
        %v5305 = vsel %vm3521, %v5303, 0
        %5307 = vmatprep.subr.bf16.mxu0 0
        %5308 = vmatpush1.bf16.msra.mxu0 %v5163
        %5309 = vmatprep.subr.bf16.mxu0 0
        %5310 = vmatpush1.bf16.msra.mxu0 %v5164
        %5311 = vmatprep.subr.bf16.mxu0 0
        %5312 = vmatpush1.bf16.msra.mxu0 %v5165
        %5313 = vmatprep.subr.bf16.mxu0 0
        %5314 = vmatpush1.bf16.msra.mxu0 %v5166
        %5315 = vmatprep.subr.bf16.mxu0 0
        %5316 = vmatpush1.bf16.msra.mxu0 0
        %5317 = vmatprep.subr.bf16.mxu0 0
        %5318 = vmatpush1.bf16.msra.mxu0 0
        %5319 = vmatprep.subr.bf16.mxu0 0
        %5320 = vmatpush1.bf16.msra.mxu0 0
        %5321 = vmatprep.subr.bf16.mxu0 0
        %5322 = vmatpush1.bf16.msra.mxu0 0
        %5323 = vmatprep.subr.bf16.mxu0 0
        %5324 = vmatpush1.bf16.msra.mxu0 0
        %5325 = vmatprep.subr.bf16.mxu0 0
        %5326 = vmatpush1.bf16.msra.mxu0 0
        %5327 = vmatprep.subr.bf16.mxu0 0
        %5328 = vmatpush1.bf16.msra.mxu0 0
        %5329 = vmatprep.subr.bf16.mxu0 0
        %5330 = vmatpush1.bf16.msra.mxu0 0
        %5331 = vmatprep.subr.bf16.mxu0 0
        %5332 = vmatpush1.bf16.msra.mxu0 0
        %5333 = vmatprep.subr.bf16.mxu0 0
        %5334 = vmatpush1.bf16.msra.mxu0 0
        %5335 = vmatprep.subr.bf16.mxu0 0
        %5336 = vmatpush1.bf16.msra.mxu0 0
        %5337 = vmatprep.subr.bf16.mxu0 0
        %5338 = vmatpush1.bf16.msra.mxu0 0
        %5339 = vmatprep.mubr.bf16.mxu0 0
        %5340 = vmatmul.mubr.bf16.gmra.mrb[0].mxu0 %v5305
        %v5341 = vpop.f32.mrb[0].mxu0
        %v5342 = vadd.f32 0.0, %v5341
        %v5343 = vpop.f32.mrb[0].mxu0
        %v5344 = vpop.f32.mrb[0].mxu0
        %v5345 = vadd.f32 0.0, %v5344
        %v5346 = vpop.f32.mrb[0].mxu0
        %5347 = vdwg.mxu0
        %v5348 = vlaneseq
        %v5349 = vshrl.u32 %v5348, 7
        %v5350 = vsub.s32 2, %v5349
        %v5351 = vrot.slane %v5167, %v5350
        %v5352 = vmul.f32 %v5342, %v5351
        %v5353 = vmul.f32 %v5345, %v5351
        %v5354 = vadd.f32 %v5294, %v5352
        %v5355 = vadd.f32 %v5295, %v5353
        %s5356 = scalar_lea.vmem %s23, 24
        %v5357 = vld [vmem:[%s5356] sm:$0xf]
        %v5358 = vld [vmem:[%s5356 + $0x4] sm:$0xf]
        %v5361 = vunpack.c.l.b16 %v5357
        %v5362 = vunpack.c.l.b16 %v5358
        %v5363 = vpack.c.b16 %v5362, %v5361
        %v5365 = vsel %vm3521, %v5363, 0
        %5367 = vmatprep.subr.bf16.mxu0 0
        %5368 = vmatpush1.bf16.msra.mxu0 %v5163
        %5369 = vmatprep.subr.bf16.mxu0 0
        %5370 = vmatpush1.bf16.msra.mxu0 %v5164
        %5371 = vmatprep.subr.bf16.mxu0 0
        %5372 = vmatpush1.bf16.msra.mxu0 %v5165
        %5373 = vmatprep.subr.bf16.mxu0 0
        %5374 = vmatpush1.bf16.msra.mxu0 %v5166
        %5375 = vmatprep.subr.bf16.mxu0 0
        %5376 = vmatpush1.bf16.msra.mxu0 0
        %5377 = vmatprep.subr.bf16.mxu0 0
        %5378 = vmatpush1.bf16.msra.mxu0 0
        %5379 = vmatprep.subr.bf16.mxu0 0
        %5380 = vmatpush1.bf16.msra.mxu0 0
        %5381 = vmatprep.subr.bf16.mxu0 0
        %5382 = vmatpush1.bf16.msra.mxu0 0
        %5383 = vmatprep.subr.bf16.mxu0 0
        %5384 = vmatpush1.bf16.msra.mxu0 0
        %5385 = vmatprep.subr.bf16.mxu0 0
        %5386 = vmatpush1.bf16.msra.mxu0 0
        %5387 = vmatprep.subr.bf16.mxu0 0
        %5388 = vmatpush1.bf16.msra.mxu0 0
        %5389 = vmatprep.subr.bf16.mxu0 0
        %5390 = vmatpush1.bf16.msra.mxu0 0
        %5391 = vmatprep.subr.bf16.mxu0 0
        %5392 = vmatpush1.bf16.msra.mxu0 0
        %5393 = vmatprep.subr.bf16.mxu0 0
        %5394 = vmatpush1.bf16.msra.mxu0 0
        %5395 = vmatprep.subr.bf16.mxu0 0
        %5396 = vmatpush1.bf16.msra.mxu0 0
        %5397 = vmatprep.subr.bf16.mxu0 0
        %5398 = vmatpush1.bf16.msra.mxu0 0
        %5399 = vmatprep.mubr.bf16.mxu0 0
        %5400 = vmatmul.mubr.bf16.gmra.mrb[0].mxu0 %v5365
        %v5401 = vpop.f32.mrb[0].mxu0
        %v5402 = vadd.f32 0.0, %v5401
        %v5403 = vpop.f32.mrb[0].mxu0
        %v5404 = vpop.f32.mrb[0].mxu0
        %v5405 = vadd.f32 0.0, %v5404
        %v5406 = vpop.f32.mrb[0].mxu0
        %5407 = vdwg.mxu0
        %v5408 = vlaneseq
        %v5409 = vshrl.u32 %v5408, 7
        %v5410 = vsub.s32 3, %v5409
        %v5411 = vrot.slane %v5167, %v5410
        %v5412 = vmul.f32 %v5402, %v5411
        %v5413 = vmul.f32 %v5405, %v5411
        %s5414 = scalar_lea.vmem %s23, 32
        %v5415 = vld [vmem:[%s5414] sm:$0xf]
        %v5416 = vld [vmem:[%s5414 + $0x4] sm:$0xf]
        %v5419 = vunpack.c.l.b16 %v5415
        %v5420 = vunpack.c.l.b16 %v5416
        %v5421 = vpack.c.b16 %v5420, %v5419
        %v5423 = vsel %vm3521, %v5421, 0
        %5425 = vmatprep.subr.bf16.mxu0 0
        %5426 = vmatpush1.bf16.msra.mxu0 %v5163
        %5427 = vmatprep.subr.bf16.mxu0 0
        %5428 = vmatpush1.bf16.msra.mxu0 %v5164
        %5429 = vmatprep.subr.bf16.mxu0 0
        %5430 = vmatpush1.bf16.msra.mxu0 %v5165
        %5431 = vmatprep.subr.bf16.mxu0 0
        %5432 = vmatpush1.bf16.msra.mxu0 %v5166
        %5433 = vmatprep.subr.bf16.mxu0 0
        %5434 = vmatpush1.bf16.msra.mxu0 0
        %5435 = vmatprep.subr.bf16.mxu0 0
        %5436 = vmatpush1.bf16.msra.mxu0 0
        %5437 = vmatprep.subr.bf16.mxu0 0
        %5438 = vmatpush1.bf16.msra.mxu0 0
        %5439 = vmatprep.subr.bf16.mxu0 0
        %5440 = vmatpush1.bf16.msra.mxu0 0
        %5441 = vmatprep.subr.bf16.mxu0 0
        %5442 = vmatpush1.bf16.msra.mxu0 0
        %5443 = vmatprep.subr.bf16.mxu0 0
        %5444 = vmatpush1.bf16.msra.mxu0 0
        %5445 = vmatprep.subr.bf16.mxu0 0
        %5446 = vmatpush1.bf16.msra.mxu0 0
        %5447 = vmatprep.subr.bf16.mxu0 0
        %5448 = vmatpush1.bf16.msra.mxu0 0
        %5449 = vmatprep.subr.bf16.mxu0 0
        %5450 = vmatpush1.bf16.msra.mxu0 0
        %5451 = vmatprep.subr.bf16.mxu0 0
        %5452 = vmatpush1.bf16.msra.mxu0 0
        %5453 = vmatprep.subr.bf16.mxu0 0
        %5454 = vmatpush1.bf16.msra.mxu0 0
        %5455 = vmatprep.subr.bf16.mxu0 0
        %5456 = vmatpush1.bf16.msra.mxu0 0
        %5457 = vmatprep.mubr.bf16.mxu0 0
        %5458 = vmatmul.mubr.bf16.gmra.mrb[0].mxu0 %v5423
        %v5459 = vpop.f32.mrb[0].mxu0
        %v5460 = vadd.f32 0.0, %v5459
        %v5461 = vpop.f32.mrb[0].mxu0
        %v5462 = vpop.f32.mrb[0].mxu0
        %v5463 = vadd.f32 0.0, %v5462
        %v5464 = vpop.f32.mrb[0].mxu0
        %5465 = vdwg.mxu0
        %v5466 = vlaneseq
        %v5467 = vshrl.u32 %v5466, 7
        %v5468 = vsub.s32 4, %v5467
        %v5469 = vrot.slane %v5167, %v5468
        %v5470 = vmul.f32 %v5460, %v5469
        %v5471 = vmul.f32 %v5463, %v5469
        %v5472 = vadd.f32 %v5412, %v5470
        %v5473 = vadd.f32 %v5413, %v5471
        %s5474 = scalar_lea.vmem %s23, 40
        %v5475 = vld [vmem:[%s5474] sm:$0xf]
        %v5476 = vld [vmem:[%s5474 + $0x4] sm:$0xf]
        %v5479 = vunpack.c.l.b16 %v5475
        %v5480 = vunpack.c.l.b16 %v5476
        %v5481 = vpack.c.b16 %v5480, %v5479
        %v5483 = vsel %vm3521, %v5481, 0
        %5485 = vmatprep.subr.bf16.mxu0 0
        %5486 = vmatpush1.bf16.msra.mxu0 %v5163
        %5487 = vmatprep.subr.bf16.mxu0 0
        %5488 = vmatpush1.bf16.msra.mxu0 %v5164
        %5489 = vmatprep.subr.bf16.mxu0 0
        %5490 = vmatpush1.bf16.msra.mxu0 %v5165
        %5491 = vmatprep.subr.bf16.mxu0 0
        %5492 = vmatpush1.bf16.msra.mxu0 %v5166
        %5493 = vmatprep.subr.bf16.mxu0 0
        %5494 = vmatpush1.bf16.msra.mxu0 0
        %5495 = vmatprep.subr.bf16.mxu0 0
        %5496 = vmatpush1.bf16.msra.mxu0 0
        %5497 = vmatprep.subr.bf16.mxu0 0
        %5498 = vmatpush1.bf16.msra.mxu0 0
        %5499 = vmatprep.subr.bf16.mxu0 0
        %5500 = vmatpush1.bf16.msra.mxu0 0
        %5501 = vmatprep.subr.bf16.mxu0 0
        %5502 = vmatpush1.bf16.msra.mxu0 0
        %5503 = vmatprep.subr.bf16.mxu0 0
        %5504 = vmatpush1.bf16.msra.mxu0 0
        %5505 = vmatprep.subr.bf16.mxu0 0
        %5506 = vmatpush1.bf16.msra.mxu0 0
        %5507 = vmatprep.subr.bf16.mxu0 0
        %5508 = vmatpush1.bf16.msra.mxu0 0
        %5509 = vmatprep.subr.bf16.mxu0 0
        %5510 = vmatpush1.bf16.msra.mxu0 0
        %5511 = vmatprep.subr.bf16.mxu0 0
        %5512 = vmatpush1.bf16.msra.mxu0 0
        %5513 = vmatprep.subr.bf16.mxu0 0
        %5514 = vmatpush1.bf16.msra.mxu0 0
        %5515 = vmatprep.subr.bf16.mxu0 0
        %5516 = vmatpush1.bf16.msra.mxu0 0
        %5517 = vmatprep.mubr.bf16.mxu0 0
        %5518 = vmatmul.mubr.bf16.gmra.mrb[0].mxu0 %v5483
        %v5519 = vpop.f32.mrb[0].mxu0
        %v5520 = vadd.f32 0.0, %v5519
        %v5521 = vpop.f32.mrb[0].mxu0
        %v5522 = vpop.f32.mrb[0].mxu0
        %v5523 = vadd.f32 0.0, %v5522
        %v5524 = vpop.f32.mrb[0].mxu0
        %5525 = vdwg.mxu0
        %v5526 = vlaneseq
        %v5527 = vshrl.u32 %v5526, 7
        %v5528 = vsub.s32 5, %v5527
        %v5529 = vrot.slane %v5167, %v5528
        %v5530 = vmul.f32 %v5520, %v5529
        %v5531 = vmul.f32 %v5523, %v5529
        %v5532 = vadd.f32 %v5472, %v5530
        %v5533 = vadd.f32 %v5473, %v5531
        %s5534 = scalar_lea.vmem %s23, 48
        %v5535 = vld [vmem:[%s5534] sm:$0xf]
        %v5536 = vld [vmem:[%s5534 + $0x4] sm:$0xf]
        %v5539 = vunpack.c.l.b16 %v5535
        %v5540 = vunpack.c.l.b16 %v5536
        %v5541 = vpack.c.b16 %v5540, %v5539
        %v5543 = vsel %vm3521, %v5541, 0
        %5545 = vmatprep.subr.bf16.mxu0 0
        %5546 = vmatpush1.bf16.msra.mxu0 %v5163
        %5547 = vmatprep.subr.bf16.mxu0 0
        %5548 = vmatpush1.bf16.msra.mxu0 %v5164
        %5549 = vmatprep.subr.bf16.mxu0 0
        %5550 = vmatpush1.bf16.msra.mxu0 %v5165
        %5551 = vmatprep.subr.bf16.mxu0 0
        %5552 = vmatpush1.bf16.msra.mxu0 %v5166
        %5553 = vmatprep.subr.bf16.mxu0 0
        %5554 = vmatpush1.bf16.msra.mxu0 0
        %5555 = vmatprep.subr.bf16.mxu0 0
        %5556 = vmatpush1.bf16.msra.mxu0 0
        %5557 = vmatprep.subr.bf16.mxu0 0
        %5558 = vmatpush1.bf16.msra.mxu0 0
        %5559 = vmatprep.subr.bf16.mxu0 0
        %5560 = vmatpush1.bf16.msra.mxu0 0
        %5561 = vmatprep.subr.bf16.mxu0 0
        %5562 = vmatpush1.bf16.msra.mxu0 0
        %5563 = vmatprep.subr.bf16.mxu0 0
        %5564 = vmatpush1.bf16.msra.mxu0 0
        %5565 = vmatprep.subr.bf16.mxu0 0
        %5566 = vmatpush1.bf16.msra.mxu0 0
        %5567 = vmatprep.subr.bf16.mxu0 0
        %5568 = vmatpush1.bf16.msra.mxu0 0
        %5569 = vmatprep.subr.bf16.mxu0 0
        %5570 = vmatpush1.bf16.msra.mxu0 0
        %5571 = vmatprep.subr.bf16.mxu0 0
        %5572 = vmatpush1.bf16.msra.mxu0 0
        %5573 = vmatprep.subr.bf16.mxu0 0
        %5574 = vmatpush1.bf16.msra.mxu0 0
        %5575 = vmatprep.subr.bf16.mxu0 0
        %5576 = vmatpush1.bf16.msra.mxu0 0
        %5577 = vmatprep.mubr.bf16.mxu0 0
        %5578 = vmatmul.mubr.bf16.gmra.mrb[0].mxu0 %v5543
        %v5579 = vpop.f32.mrb[0].mxu0
        %v5580 = vadd.f32 0.0, %v5579
        %v5581 = vpop.f32.mrb[0].mxu0
        %v5582 = vpop.f32.mrb[0].mxu0
        %v5583 = vadd.f32 0.0, %v5582
        %v5584 = vpop.f32.mrb[0].mxu0
        %5585 = vdwg.mxu0
        %v5586 = vlaneseq
        %v5587 = vshrl.u32 %v5586, 7
        %v5588 = vsub.s32 6, %v5587
        %v5589 = vrot.slane %v5167, %v5588
        %v5590 = vmul.f32 %v5580, %v5589
        %v5591 = vmul.f32 %v5583, %v5589
        %s5592 = scalar_lea.vmem %s23, 56
        %v5593 = vld [vmem:[%s5592] sm:$0xf]
        %v5594 = vld [vmem:[%s5592 + $0x4] sm:$0xf]
        %v5597 = vunpack.c.l.b16 %v5593
        %v5598 = vunpack.c.l.b16 %v5594
        %v5599 = vpack.c.b16 %v5598, %v5597
        %v5601 = vsel %vm3521, %v5599, 0
        %5603 = vmatprep.subr.bf16.mxu0 0
        %5604 = vmatpush1.bf16.msra.mxu0 %v5163
        %5605 = vmatprep.subr.bf16.mxu0 0
        %5606 = vmatpush1.bf16.msra.mxu0 %v5164
        %5607 = vmatprep.subr.bf16.mxu0 0
        %5608 = vmatpush1.bf16.msra.mxu0 %v5165
        %5609 = vmatprep.subr.bf16.mxu0 0
        %5610 = vmatpush1.bf16.msra.mxu0 %v5166
        %5611 = vmatprep.subr.bf16.mxu0 0
        %5612 = vmatpush1.bf16.msra.mxu0 0
        %5613 = vmatprep.subr.bf16.mxu0 0
        %5614 = vmatpush1.bf16.msra.mxu0 0
        %5615 = vmatprep.subr.bf16.mxu0 0
        %5616 = vmatpush1.bf16.msra.mxu0 0
        %5617 = vmatprep.subr.bf16.mxu0 0
        %5618 = vmatpush1.bf16.msra.mxu0 0
        %5619 = vmatprep.subr.bf16.mxu0 0
        %5620 = vmatpush1.bf16.msra.mxu0 0
        %5621 = vmatprep.subr.bf16.mxu0 0
        %5622 = vmatpush1.bf16.msra.mxu0 0
        %5623 = vmatprep.subr.bf16.mxu0 0
        %5624 = vmatpush1.bf16.msra.mxu0 0
        %5625 = vmatprep.subr.bf16.mxu0 0
        %5626 = vmatpush1.bf16.msra.mxu0 0
        %5627 = vmatprep.subr.bf16.mxu0 0
        %5628 = vmatpush1.bf16.msra.mxu0 0
        %5629 = vmatprep.subr.bf16.mxu0 0
        %5630 = vmatpush1.bf16.msra.mxu0 0
        %5631 = vmatprep.subr.bf16.mxu0 0
        %5632 = vmatpush1.bf16.msra.mxu0 0
        %5633 = vmatprep.subr.bf16.mxu0 0
        %5634 = vmatpush1.bf16.msra.mxu0 0
        %5635 = vmatprep.mubr.bf16.mxu0 0
        %5636 = vmatmul.mubr.bf16.gmra.mrb[0].mxu0 %v5601
        %v5637 = vpop.f32.mrb[0].mxu0
        %v5638 = vadd.f32 0.0, %v5637
        %v5639 = vpop.f32.mrb[0].mxu0
        %v5640 = vpop.f32.mrb[0].mxu0
        %v5641 = vadd.f32 0.0, %v5640
        %v5642 = vpop.f32.mrb[0].mxu0
        %5643 = vdwg.mxu0
        %v5644 = vlaneseq
        %v5645 = vshrl.u32 %v5644, 7
        %v5646 = vsub.s32 7, %v5645
        %v5647 = vrot.slane %v5167, %v5646
        %v5648 = vmul.f32 %v5638, %v5647
        %v5649 = vmul.f32 %v5641, %v5647
        %v5650 = vadd.f32 %v5590, %v5648
        %v5651 = vadd.f32 %v5591, %v5649
        %s5652 = scalar_lea.vmem %s23, 64
        %v5653 = vld [vmem:[%s5652] sm:$0xf]
        %v5654 = vld [vmem:[%s5652 + $0x4] sm:$0xf]
        %v5657 = vunpack.c.l.b16 %v5653
        %v5658 = vunpack.c.l.b16 %v5654
        %v5659 = vpack.c.b16 %v5658, %v5657
        %v5661 = vsel %vm3521, %v5659, 0
        %5663 = vmatprep.subr.bf16.mxu0 0
        %5664 = vmatpush1.bf16.msra.mxu0 %v5163
        %5665 = vmatprep.subr.bf16.mxu0 0
        %5666 = vmatpush1.bf16.msra.mxu0 %v5164
        %5667 = vmatprep.subr.bf16.mxu0 0
        %5668 = vmatpush1.bf16.msra.mxu0 %v5165
        %5669 = vmatprep.subr.bf16.mxu0 0
        %5670 = vmatpush1.bf16.msra.mxu0 %v5166
        %5671 = vmatprep.subr.bf16.mxu0 0
        %5672 = vmatpush1.bf16.msra.mxu0 0
        %5673 = vmatprep.subr.bf16.mxu0 0
        %5674 = vmatpush1.bf16.msra.mxu0 0
        %5675 = vmatprep.subr.bf16.mxu0 0
        %5676 = vmatpush1.bf16.msra.mxu0 0
        %5677 = vmatprep.subr.bf16.mxu0 0
        %5678 = vmatpush1.bf16.msra.mxu0 0
        %5679 = vmatprep.subr.bf16.mxu0 0
        %5680 = vmatpush1.bf16.msra.mxu0 0
        %5681 = vmatprep.subr.bf16.mxu0 0
        %5682 = vmatpush1.bf16.msra.mxu0 0
        %5683 = vmatprep.subr.bf16.mxu0 0
        %5684 = vmatpush1.bf16.msra.mxu0 0
        %5685 = vmatprep.subr.bf16.mxu0 0
        %5686 = vmatpush1.bf16.msra.mxu0 0
        %5687 = vmatprep.subr.bf16.mxu0 0
        %5688 = vmatpush1.bf16.msra.mxu0 0
        %5689 = vmatprep.subr.bf16.mxu0 0
        %5690 = vmatpush1.bf16.msra.mxu0 0
        %5691 = vmatprep.subr.bf16.mxu0 0
        %5692 = vmatpush1.bf16.msra.mxu0 0
        %5693 = vmatprep.subr.bf16.mxu0 0
        %5694 = vmatpush1.bf16.msra.mxu0 0
        %5695 = vmatprep.mubr.bf16.mxu0 0
        %5696 = vmatmul.mubr.bf16.gmra.mrb[0].mxu0 %v5661
        %v5697 = vpop.f32.mrb[0].mxu0
        %v5698 = vadd.f32 0.0, %v5697
        %v5699 = vpop.f32.mrb[0].mxu0
        %v5700 = vpop.f32.mrb[0].mxu0
        %v5701 = vadd.f32 0.0, %v5700
        %v5702 = vpop.f32.mrb[0].mxu0
        %5703 = vdwg.mxu0
        %v5704 = vlaneseq
        %v5705 = vshrl.u32 %v5704, 7
        %v5706 = vsub.s32 0, %v5705
        %v5707 = vrot.slane %v5168, %v5706
        %v5708 = vmul.f32 %v5698, %v5707
        %v5709 = vmul.f32 %v5701, %v5707
        %v5710 = vadd.f32 %v5650, %v5708
        %v5711 = vadd.f32 %v5651, %v5709
        %v5712 = vadd.f32 %v5354, %v5532
        %v5713 = vadd.f32 %v5355, %v5533
        %v5714 = vadd.f32 %v5712, %v5710
        %v5715 = vadd.f32 %v5713, %v5711
        %v5716 = vlaneseq
        %v5717 = vshrl.u32 %v5716, 7
        %v5718 = vsub.s32 0, %v5717
        %v5719 = vrot.slane %v5169, %v5718
        %v5720 = vmul.f32 %v5714, %v5719
        %v5721 = vmul.f32 %v5715, %v5719
        %v5722 = vlaneseq
        %v5723 = vshrl.u32 %v5722, 7
        %v5724 = vsub.s32 1, %v5723
        %v5725 = vrot.slane %v5169, %v5724
        %v5726 = vadd.f32 %v5720, %v5725
        %v5727 = vadd.f32 %v5721, %v5725
        %v5728 = vmax.f32 %v5726, 0.0
        %v5729 = vmax.f32 %v5727, 0.0
        %v5730 = vmin.f32 %v5728, 6.0
        %v5731 = vmin.f32 %v5729, 6.0
        %v5732 = vpack.c.bf16 %v5731, %v5730
        %v5741 = vunpack.c.l.b16 %v5171
        %v5742 = vunpack.c.l.b16 %v5172
        %v5743 = vunpack.c.l.b16 %v5173
        %v5744 = vunpack.c.l.b16 %v5174
        %v5745 = vunpack.c.l.b16 %v5175
        %v5746 = vunpack.c.l.b16 %v5176
        %v5747 = vunpack.c.l.b16 %v5177
        %v5748 = vunpack.c.l.b16 %v5178
        %v5749 = vpack.c.b16 %v5742, %v5741
        %v5750 = vpack.c.b16 %v5744, %v5743
        %v5751 = vpack.c.b16 %v5746, %v5745
        %v5752 = vpack.c.b16 %v5748, %v5747
        %v5758 = vsel %vm3521, %v5732, 0
        %5760 = vmatprep.subr.bf16.mxu0 0
        %5761 = vmatpush1.bf16.msra.mxu0 %v5749
        %5762 = vmatprep.subr.bf16.mxu0 0
        %5763 = vmatpush1.bf16.msra.mxu0 %v5750
        %5764 = vmatprep.subr.bf16.mxu0 0
        %5765 = vmatpush1.bf16.msra.mxu0 %v5751
        %5766 = vmatprep.subr.bf16.mxu0 0
        %5767 = vmatpush1.bf16.msra.mxu0 %v5752
        %5768 = vmatprep.subr.bf16.mxu0 0
        %5769 = vmatpush1.bf16.msra.mxu0 0
        %5770 = vmatprep.subr.bf16.mxu0 0
        %5771 = vmatpush1.bf16.msra.mxu0 0
        %5772 = vmatprep.subr.bf16.mxu0 0
        %5773 = vmatpush1.bf16.msra.mxu0 0
        %5774 = vmatprep.subr.bf16.mxu0 0
        %5775 = vmatpush1.bf16.msra.mxu0 0
        %5776 = vmatprep.subr.bf16.mxu0 0
        %5777 = vmatpush1.bf16.msra.mxu0 0
        %5778 = vmatprep.subr.bf16.mxu0 0
        %5779 = vmatpush1.bf16.msra.mxu0 0
        %5780 = vmatprep.subr.bf16.mxu0 0
        %5781 = vmatpush1.bf16.msra.mxu0 0
        %5782 = vmatprep.subr.bf16.mxu0 0
        %5783 = vmatpush1.bf16.msra.mxu0 0
        %5784 = vmatprep.subr.bf16.mxu0 0
        %5785 = vmatpush1.bf16.msra.mxu0 0
        %5786 = vmatprep.subr.bf16.mxu0 0
        %5787 = vmatpush1.bf16.msra.mxu0 0
        %5788 = vmatprep.subr.bf16.mxu0 0
        %5789 = vmatpush1.bf16.msra.mxu0 0
        %5790 = vmatprep.subr.bf16.mxu0 0
        %5791 = vmatpush1.bf16.msra.mxu0 0
        %5792 = vmatprep.mubr.bf16.mxu0 0
        %5793 = vmatmul.mubr.bf16.gmra.mrb[0].mxu0 %v5758
        %v5794 = vpop.f32.mrb[0].mxu0
        %v5795 = vadd.f32 0.0, %v5794
        %v5796 = vpop.f32.mrb[0].mxu0
        %v5797 = vpop.f32.mrb[0].mxu0
        %v5798 = vadd.f32 0.0, %v5797
        %v5799 = vpop.f32.mrb[0].mxu0
        %5800 = vdwg.mxu0
        %v5801 = vlaneseq
        %v5802 = vshrl.u32 %v5801, 7
        %v5803 = vsub.s32 0, %v5802
        %v5804 = vrot.slane %v5170, %v5803
        %v5805 = vmul.f32 %v5795, %v5804
        %v5806 = vmul.f32 %v5798, %v5804
        %v5807 = vlaneseq
        %v5808 = vshrl.u32 %v5807, 7
        %v5809 = vsub.s32 1, %v5808
        %v5810 = vrot.slane %v5170, %v5809
        %v5811 = vadd.f32 %v5805, %v5810
        %v5812 = vadd.f32 %v5806, %v5810
        %v5813 = vmax.f32 %v5811, 0.0
        %v5814 = vmax.f32 %v5812, 0.0
        %v5815 = vmin.f32 %v5813, 6.0
        %v5816 = vmin.f32 %v5814, 6.0
        %v5817 = vpack.c.bf16 %v5816, %v5815
        %v5818 = vld [vmem:[%s35] sm:$0xff]
        %v5819 = vld [vmem:[%s35 + $0x8] sm:$0x1]
        %v5820 = vld [vmem:[%s39] sm:$0x3]
        %v5821 = vld [vmem:[%s41] sm:$0x3]
        %v5822 = vld [vmem:[%s37] sm:$0xf]
        %v5823 = vld [vmem:[%s37 + $0x4] sm:$0xf]
        %v5824 = vld [vmem:[%s37 + $0x8] sm:$0xf]
        %v5825 = vld [vmem:[%s37 + $0xc] sm:$0xf]
        %v5826 = vld [vmem:[%s37 + $0x10] sm:$0xf]
        %v5827 = vld [vmem:[%s37 + $0x14] sm:$0xf]
        %v5828 = vld [vmem:[%s37 + $0x18] sm:$0xf]
        %v5829 = vld [vmem:[%s37 + $0x1c] sm:$0xf]
        %v5830 = vld [vmem:[%s37 + $0x20] sm:$0xf]
        %v5831 = vld [vmem:[%s37 + $0x24] sm:$0xf]
        %v5832 = vld [vmem:[%s37 + $0x28] sm:$0xf]
        %v5833 = vld [vmem:[%s37 + $0x2c] sm:$0xf]
        %v5834 = vld [vmem:[%s37 + $0x30] sm:$0xf]
        %v5835 = vld [vmem:[%s37 + $0x34] sm:$0xf]
        %v5836 = vld [vmem:[%s37 + $0x38] sm:$0xf]
        %v5837 = vld [vmem:[%s37 + $0x3c] sm:$0xf]
        %v5838 = vld [vmem:[%s33] sm:$0xf]
        %v5839 = vld [vmem:[%s33 + $0x4] sm:$0xf]
        %v5842 = vunpack.c.l.b16 %v5838
        %v5843 = vunpack.c.l.b16 %v5839
        %v5844 = vpack.c.b16 %v5843, %v5842
        %vm5845 = vcmask 130048
        %v5847 = vsel %vm5845, %v5844, 0
        %5849 = vmatprep.subr.bf16.mxu0 0
        %5850 = vmatpush1.bf16.msra.mxu0 %v5817
        %5851 = vmatprep.subr.bf16.mxu0 0
        %5852 = vmatpush1.bf16.msra.mxu0 0
        %5853 = vmatprep.subr.bf16.mxu0 0
        %5854 = vmatpush1.bf16.msra.mxu0 0
        %5855 = vmatprep.subr.bf16.mxu0 0
        %5856 = vmatpush1.bf16.msra.mxu0 0
        %5857 = vmatprep.subr.bf16.mxu0 0
        %5858 = vmatpush1.bf16.msra.mxu0 0
        %5859 = vmatprep.subr.bf16.mxu0 0
        %5860 = vmatpush1.bf16.msra.mxu0 0
        %5861 = vmatprep.subr.bf16.mxu0 0
        %5862 = vmatpush1.bf16.msra.mxu0 0
        %5863 = vmatprep.subr.bf16.mxu0 0
        %5864 = vmatpush1.bf16.msra.mxu0 0
        %5865 = vmatprep.subr.bf16.mxu0 0
        %5866 = vmatpush1.bf16.msra.mxu0 0
        %5867 = vmatprep.subr.bf16.mxu0 0
        %5868 = vmatpush1.bf16.msra.mxu0 0
        %5869 = vmatprep.subr.bf16.mxu0 0
        %5870 = vmatpush1.bf16.msra.mxu0 0
        %5871 = vmatprep.subr.bf16.mxu0 0
        %5872 = vmatpush1.bf16.msra.mxu0 0
        %5873 = vmatprep.subr.bf16.mxu0 0
        %5874 = vmatpush1.bf16.msra.mxu0 0
        %5875 = vmatprep.subr.bf16.mxu0 0
        %5876 = vmatpush1.bf16.msra.mxu0 0
        %5877 = vmatprep.subr.bf16.mxu0 0
        %5878 = vmatpush1.bf16.msra.mxu0 0
        %5879 = vmatprep.subr.bf16.mxu0 0
        %5880 = vmatpush1.bf16.msra.mxu0 0
        %5881 = vmatprep.mubr.bf16.mxu0 0
        %5882 = vmatmul.mubr.bf16.gmra.mrb[0].mxu0 %v5847
        %v5883 = vpop.f32.mrb[0].mxu0
        %v5884 = vadd.f32 0.0, %v5883
        %v5885 = vpop.f32.mrb[0].mxu0
        %v5886 = vpop.f32.mrb[0].mxu0
        %v5887 = vadd.f32 0.0, %v5886
        %v5888 = vpop.f32.mrb[0].mxu0
        %5889 = vdwg.mxu0
        %v5890 = vlaneseq
        %v5891 = vshrl.u32 %v5890, 7
        %v5892 = vsub.s32 0, %v5891
        %v5893 = vrot.slane %v5818, %v5892
        %v5894 = vmul.f32 %v5884, %v5893
        %v5895 = vmul.f32 %v5887, %v5893
        %s5896 = scalar_lea.vmem %s33, 8
        %v5897 = vld [vmem:[%s5896] sm:$0xf]
        %v5898 = vld [vmem:[%s5896 + $0x4] sm:$0xf]
        %v5901 = vunpack.c.l.b16 %v5897
        %v5902 = vunpack.c.l.b16 %v5898
        %v5903 = vpack.c.b16 %v5902, %v5901
        %v5905 = vsel %vm5845, %v5903, 0
        %5907 = vmatprep.subr.bf16.mxu0 0
        %5908 = vmatpush1.bf16.msra.mxu0 %v5817
        %5909 = vmatprep.subr.bf16.mxu0 0
        %5910 = vmatpush1.bf16.msra.mxu0 0
        %5911 = vmatprep.subr.bf16.mxu0 0
        %5912 = vmatpush1.bf16.msra.mxu0 0
        %5913 = vmatprep.subr.bf16.mxu0 0
        %5914 = vmatpush1.bf16.msra.mxu0 0
        %5915 = vmatprep.subr.bf16.mxu0 0
        %5916 = vmatpush1.bf16.msra.mxu0 0
        %5917 = vmatprep.subr.bf16.mxu0 0
        %5918 = vmatpush1.bf16.msra.mxu0 0
        %5919 = vmatprep.subr.bf16.mxu0 0
        %5920 = vmatpush1.bf16.msra.mxu0 0
        %5921 = vmatprep.subr.bf16.mxu0 0
        %5922 = vmatpush1.bf16.msra.mxu0 0
        %5923 = vmatprep.subr.bf16.mxu0 0
        %5924 = vmatpush1.bf16.msra.mxu0 0
        %5925 = vmatprep.subr.bf16.mxu0 0
        %5926 = vmatpush1.bf16.msra.mxu0 0
        %5927 = vmatprep.subr.bf16.mxu0 0
        %5928 = vmatpush1.bf16.msra.mxu0 0
        %5929 = vmatprep.subr.bf16.mxu0 0
        %5930 = vmatpush1.bf16.msra.mxu0 0
        %5931 = vmatprep.subr.bf16.mxu0 0
        %5932 = vmatpush1.bf16.msra.mxu0 0
        %5933 = vmatprep.subr.bf16.mxu0 0
        %5934 = vmatpush1.bf16.msra.mxu0 0
        %5935 = vmatprep.subr.bf16.mxu0 0
        %5936 = vmatpush1.bf16.msra.mxu0 0
        %5937 = vmatprep.subr.bf16.mxu0 0
        %5938 = vmatpush1.bf16.msra.mxu0 0
        %5939 = vmatprep.mubr.bf16.mxu0 0
        %5940 = vmatmul.mubr.bf16.gmra.mrb[0].mxu0 %v5905
        %v5941 = vpop.f32.mrb[0].mxu0
        %v5942 = vadd.f32 0.0, %v5941
        %v5943 = vpop.f32.mrb[0].mxu0
        %v5944 = vpop.f32.mrb[0].mxu0
        %v5945 = vadd.f32 0.0, %v5944
        %v5946 = vpop.f32.mrb[0].mxu0
        %5947 = vdwg.mxu0
        %v5948 = vlaneseq
        %v5949 = vshrl.u32 %v5948, 7
        %v5950 = vsub.s32 1, %v5949
        %v5951 = vrot.slane %v5818, %v5950
        %v5952 = vmul.f32 %v5942, %v5951
        %v5953 = vmul.f32 %v5945, %v5951
        %v5954 = vadd.f32 %v5894, %v5952
        %v5955 = vadd.f32 %v5895, %v5953
        %s5956 = scalar_lea.vmem %s33, 16
        %v5957 = vld [vmem:[%s5956] sm:$0xf]
        %v5958 = vld [vmem:[%s5956 + $0x4] sm:$0xf]
        %v5961 = vunpack.c.l.b16 %v5957
        %v5962 = vunpack.c.l.b16 %v5958
        %v5963 = vpack.c.b16 %v5962, %v5961
        %v5965 = vsel %vm5845, %v5963, 0
        %5967 = vmatprep.subr.bf16.mxu0 0
        %5968 = vmatpush1.bf16.msra.mxu0 %v5817
        %5969 = vmatprep.subr.bf16.mxu0 0
        %5970 = vmatpush1.bf16.msra.mxu0 0
        %5971 = vmatprep.subr.bf16.mxu0 0
        %5972 = vmatpush1.bf16.msra.mxu0 0
        %5973 = vmatprep.subr.bf16.mxu0 0
        %5974 = vmatpush1.bf16.msra.mxu0 0
        %5975 = vmatprep.subr.bf16.mxu0 0
        %5976 = vmatpush1.bf16.msra.mxu0 0
        %5977 = vmatprep.subr.bf16.mxu0 0
        %5978 = vmatpush1.bf16.msra.mxu0 0
        %5979 = vmatprep.subr.bf16.mxu0 0
        %5980 = vmatpush1.bf16.msra.mxu0 0
        %5981 = vmatprep.subr.bf16.mxu0 0
        %5982 = vmatpush1.bf16.msra.mxu0 0
        %5983 = vmatprep.subr.bf16.mxu0 0
        %5984 = vmatpush1.bf16.msra.mxu0 0
        %5985 = vmatprep.subr.bf16.mxu0 0
        %5986 = vmatpush1.bf16.msra.mxu0 0
        %5987 = vmatprep.subr.bf16.mxu0 0
        %5988 = vmatpush1.bf16.msra.mxu0 0
        %5989 = vmatprep.subr.bf16.mxu0 0
        %5990 = vmatpush1.bf16.msra.mxu0 0
        %5991 = vmatprep.subr.bf16.mxu0 0
        %5992 = vmatpush1.bf16.msra.mxu0 0
        %5993 = vmatprep.subr.bf16.mxu0 0
        %5994 = vmatpush1.bf16.msra.mxu0 0
        %5995 = vmatprep.subr.bf16.mxu0 0
        %5996 = vmatpush1.bf16.msra.mxu0 0
        %5997 = vmatprep.subr.bf16.mxu0 0
        %5998 = vmatpush1.bf16.msra.mxu0 0
        %5999 = vmatprep.mubr.bf16.mxu0 0
        %6000 = vmatmul.mubr.bf16.gmra.mrb[0].mxu0 %v5965
        %v6001 = vpop.f32.mrb[0].mxu0
        %v6002 = vadd.f32 0.0, %v6001
        %v6003 = vpop.f32.mrb[0].mxu0
        %v6004 = vpop.f32.mrb[0].mxu0
        %v6005 = vadd.f32 0.0, %v6004
        %v6006 = vpop.f32.mrb[0].mxu0
        %6007 = vdwg.mxu0
        %v6008 = vlaneseq
        %v6009 = vshrl.u32 %v6008, 7
        %v6010 = vsub.s32 2, %v6009
        %v6011 = vrot.slane %v5818, %v6010
        %v6012 = vmul.f32 %v6002, %v6011
        %v6013 = vmul.f32 %v6005, %v6011
        %v6014 = vadd.f32 %v5954, %v6012
        %v6015 = vadd.f32 %v5955, %v6013
        %s6016 = scalar_lea.vmem %s33, 24
        %v6017 = vld [vmem:[%s6016] sm:$0xf]
        %v6018 = vld [vmem:[%s6016 + $0x4] sm:$0xf]
        %v6021 = vunpack.c.l.b16 %v6017
        %v6022 = vunpack.c.l.b16 %v6018
        %v6023 = vpack.c.b16 %v6022, %v6021
        %v6025 = vsel %vm5845, %v6023, 0
        %6027 = vmatprep.subr.bf16.mxu0 0
        %6028 = vmatpush1.bf16.msra.mxu0 %v5817
        %6029 = vmatprep.subr.bf16.mxu0 0
        %6030 = vmatpush1.bf16.msra.mxu0 0
        %6031 = vmatprep.subr.bf16.mxu0 0
        %6032 = vmatpush1.bf16.msra.mxu0 0
        %6033 = vmatprep.subr.bf16.mxu0 0
        %6034 = vmatpush1.bf16.msra.mxu0 0
        %6035 = vmatprep.subr.bf16.mxu0 0
        %6036 = vmatpush1.bf16.msra.mxu0 0
        %6037 = vmatprep.subr.bf16.mxu0 0
        %6038 = vmatpush1.bf16.msra.mxu0 0
        %6039 = vmatprep.subr.bf16.mxu0 0
        %6040 = vmatpush1.bf16.msra.mxu0 0
        %6041 = vmatprep.subr.bf16.mxu0 0
        %6042 = vmatpush1.bf16.msra.mxu0 0
        %6043 = vmatprep.subr.bf16.mxu0 0
        %6044 = vmatpush1.bf16.msra.mxu0 0
        %6045 = vmatprep.subr.bf16.mxu0 0
        %6046 = vmatpush1.bf16.msra.mxu0 0
        %6047 = vmatprep.subr.bf16.mxu0 0
        %6048 = vmatpush1.bf16.msra.mxu0 0
        %6049 = vmatprep.subr.bf16.mxu0 0
        %6050 = vmatpush1.bf16.msra.mxu0 0
        %6051 = vmatprep.subr.bf16.mxu0 0
        %6052 = vmatpush1.bf16.msra.mxu0 0
        %6053 = vmatprep.subr.bf16.mxu0 0
        %6054 = vmatpush1.bf16.msra.mxu0 0
        %6055 = vmatprep.subr.bf16.mxu0 0
        %6056 = vmatpush1.bf16.msra.mxu0 0
        %6057 = vmatprep.subr.bf16.mxu0 0
        %6058 = vmatpush1.bf16.msra.mxu0 0
        %6059 = vmatprep.mubr.bf16.mxu0 0
        %6060 = vmatmul.mubr.bf16.gmra.mrb[0].mxu0 %v6025
        %v6061 = vpop.f32.mrb[0].mxu0
        %v6062 = vadd.f32 0.0, %v6061
        %v6063 = vpop.f32.mrb[0].mxu0
        %v6064 = vpop.f32.mrb[0].mxu0
        %v6065 = vadd.f32 0.0, %v6064
        %v6066 = vpop.f32.mrb[0].mxu0
        %6067 = vdwg.mxu0
        %v6068 = vlaneseq
        %v6069 = vshrl.u32 %v6068, 7
        %v6070 = vsub.s32 3, %v6069
        %v6071 = vrot.slane %v5818, %v6070
        %v6072 = vmul.f32 %v6062, %v6071
        %v6073 = vmul.f32 %v6065, %v6071
        %s6074 = scalar_lea.vmem %s33, 32
        %v6075 = vld [vmem:[%s6074] sm:$0xf]
        %v6076 = vld [vmem:[%s6074 + $0x4] sm:$0xf]
        %v6079 = vunpack.c.l.b16 %v6075
        %v6080 = vunpack.c.l.b16 %v6076
        %v6081 = vpack.c.b16 %v6080, %v6079
        %v6083 = vsel %vm5845, %v6081, 0
        %6085 = vmatprep.subr.bf16.mxu0 0
        %6086 = vmatpush1.bf16.msra.mxu0 %v5817
        %6087 = vmatprep.subr.bf16.mxu0 0
        %6088 = vmatpush1.bf16.msra.mxu0 0
        %6089 = vmatprep.subr.bf16.mxu0 0
        %6090 = vmatpush1.bf16.msra.mxu0 0
        %6091 = vmatprep.subr.bf16.mxu0 0
        %6092 = vmatpush1.bf16.msra.mxu0 0
        %6093 = vmatprep.subr.bf16.mxu0 0
        %6094 = vmatpush1.bf16.msra.mxu0 0
        %6095 = vmatprep.subr.bf16.mxu0 0
        %6096 = vmatpush1.bf16.msra.mxu0 0
        %6097 = vmatprep.subr.bf16.mxu0 0
        %6098 = vmatpush1.bf16.msra.mxu0 0
        %6099 = vmatprep.subr.bf16.mxu0 0
        %6100 = vmatpush1.bf16.msra.mxu0 0
        %6101 = vmatprep.subr.bf16.mxu0 0
        %6102 = vmatpush1.bf16.msra.mxu0 0
        %6103 = vmatprep.subr.bf16.mxu0 0
        %6104 = vmatpush1.bf16.msra.mxu0 0
        %6105 = vmatprep.subr.bf16.mxu0 0
        %6106 = vmatpush1.bf16.msra.mxu0 0
        %6107 = vmatprep.subr.bf16.mxu0 0
        %6108 = vmatpush1.bf16.msra.mxu0 0
        %6109 = vmatprep.subr.bf16.mxu0 0
        %6110 = vmatpush1.bf16.msra.mxu0 0
        %6111 = vmatprep.subr.bf16.mxu0 0
        %6112 = vmatpush1.bf16.msra.mxu0 0
        %6113 = vmatprep.subr.bf16.mxu0 0
        %6114 = vmatpush1.bf16.msra.mxu0 0
        %6115 = vmatprep.subr.bf16.mxu0 0
        %6116 = vmatpush1.bf16.msra.mxu0 0
        %6117 = vmatprep.mubr.bf16.mxu0 0
        %6118 = vmatmul.mubr.bf16.gmra.mrb[0].mxu0 %v6083
        %v6119 = vpop.f32.mrb[0].mxu0
        %v6120 = vadd.f32 0.0, %v6119
        %v6121 = vpop.f32.mrb[0].mxu0
        %v6122 = vpop.f32.mrb[0].mxu0
        %v6123 = vadd.f32 0.0, %v6122
        %v6124 = vpop.f32.mrb[0].mxu0
        %6125 = vdwg.mxu0
        %v6126 = vlaneseq
        %v6127 = vshrl.u32 %v6126, 7
        %v6128 = vsub.s32 4, %v6127
        %v6129 = vrot.slane %v5818, %v6128
        %v6130 = vmul.f32 %v6120, %v6129
        %v6131 = vmul.f32 %v6123, %v6129
        %v6132 = vadd.f32 %v6072, %v6130
        %v6133 = vadd.f32 %v6073, %v6131
        %s6134 = scalar_lea.vmem %s33, 40
        %v6135 = vld [vmem:[%s6134] sm:$0xf]
        %v6136 = vld [vmem:[%s6134 + $0x4] sm:$0xf]
        %v6139 = vunpack.c.l.b16 %v6135
        %v6140 = vunpack.c.l.b16 %v6136
        %v6141 = vpack.c.b16 %v6140, %v6139
        %v6143 = vsel %vm5845, %v6141, 0
        %6145 = vmatprep.subr.bf16.mxu0 0
        %6146 = vmatpush1.bf16.msra.mxu0 %v5817
        %6147 = vmatprep.subr.bf16.mxu0 0
        %6148 = vmatpush1.bf16.msra.mxu0 0
        %6149 = vmatprep.subr.bf16.mxu0 0
        %6150 = vmatpush1.bf16.msra.mxu0 0
        %6151 = vmatprep.subr.bf16.mxu0 0
        %6152 = vmatpush1.bf16.msra.mxu0 0
        %6153 = vmatprep.subr.bf16.mxu0 0
        %6154 = vmatpush1.bf16.msra.mxu0 0
        %6155 = vmatprep.subr.bf16.mxu0 0
        %6156 = vmatpush1.bf16.msra.mxu0 0
        %6157 = vmatprep.subr.bf16.mxu0 0
        %6158 = vmatpush1.bf16.msra.mxu0 0
        %6159 = vmatprep.subr.bf16.mxu0 0
        %6160 = vmatpush1.bf16.msra.mxu0 0
        %6161 = vmatprep.subr.bf16.mxu0 0
        %6162 = vmatpush1.bf16.msra.mxu0 0
        %6163 = vmatprep.subr.bf16.mxu0 0
        %6164 = vmatpush1.bf16.msra.mxu0 0
        %6165 = vmatprep.subr.bf16.mxu0 0
        %6166 = vmatpush1.bf16.msra.mxu0 0
        %6167 = vmatprep.subr.bf16.mxu0 0
        %6168 = vmatpush1.bf16.msra.mxu0 0
        %6169 = vmatprep.subr.bf16.mxu0 0
        %6170 = vmatpush1.bf16.msra.mxu0 0
        %6171 = vmatprep.subr.bf16.mxu0 0
        %6172 = vmatpush1.bf16.msra.mxu0 0
        %6173 = vmatprep.subr.bf16.mxu0 0
        %6174 = vmatpush1.bf16.msra.mxu0 0
        %6175 = vmatprep.subr.bf16.mxu0 0
        %6176 = vmatpush1.bf16.msra.mxu0 0
        %6177 = vmatprep.mubr.bf16.mxu0 0
        %6178 = vmatmul.mubr.bf16.gmra.mrb[0].mxu0 %v6143
        %v6179 = vpop.f32.mrb[0].mxu0
        %v6180 = vadd.f32 0.0, %v6179
        %v6181 = vpop.f32.mrb[0].mxu0
        %v6182 = vpop.f32.mrb[0].mxu0
        %v6183 = vadd.f32 0.0, %v6182
        %v6184 = vpop.f32.mrb[0].mxu0
        %6185 = vdwg.mxu0
        %v6186 = vlaneseq
        %v6187 = vshrl.u32 %v6186, 7
        %v6188 = vsub.s32 5, %v6187
        %v6189 = vrot.slane %v5818, %v6188
        %v6190 = vmul.f32 %v6180, %v6189
        %v6191 = vmul.f32 %v6183, %v6189
        %v6192 = vadd.f32 %v6132, %v6190
        %v6193 = vadd.f32 %v6133, %v6191
        %s6194 = scalar_lea.vmem %s33, 48
        %v6195 = vld [vmem:[%s6194] sm:$0xf]
        %v6196 = vld [vmem:[%s6194 + $0x4] sm:$0xf]
        %v6199 = vunpack.c.l.b16 %v6195
        %v6200 = vunpack.c.l.b16 %v6196
        %v6201 = vpack.c.b16 %v6200, %v6199
        %v6203 = vsel %vm5845, %v6201, 0
        %6205 = vmatprep.subr.bf16.mxu0 0
        %6206 = vmatpush1.bf16.msra.mxu0 %v5817
        %6207 = vmatprep.subr.bf16.mxu0 0
        %6208 = vmatpush1.bf16.msra.mxu0 0
        %6209 = vmatprep.subr.bf16.mxu0 0
        %6210 = vmatpush1.bf16.msra.mxu0 0
        %6211 = vmatprep.subr.bf16.mxu0 0
        %6212 = vmatpush1.bf16.msra.mxu0 0
        %6213 = vmatprep.subr.bf16.mxu0 0
        %6214 = vmatpush1.bf16.msra.mxu0 0
        %6215 = vmatprep.subr.bf16.mxu0 0
        %6216 = vmatpush1.bf16.msra.mxu0 0
        %6217 = vmatprep.subr.bf16.mxu0 0
        %6218 = vmatpush1.bf16.msra.mxu0 0
        %6219 = vmatprep.subr.bf16.mxu0 0
        %6220 = vmatpush1.bf16.msra.mxu0 0
        %6221 = vmatprep.subr.bf16.mxu0 0
        %6222 = vmatpush1.bf16.msra.mxu0 0
        %6223 = vmatprep.subr.bf16.mxu0 0
        %6224 = vmatpush1.bf16.msra.mxu0 0
        %6225 = vmatprep.subr.bf16.mxu0 0
        %6226 = vmatpush1.bf16.msra.mxu0 0
        %6227 = vmatprep.subr.bf16.mxu0 0
        %6228 = vmatpush1.bf16.msra.mxu0 0
        %6229 = vmatprep.subr.bf16.mxu0 0
        %6230 = vmatpush1.bf16.msra.mxu0 0
        %6231 = vmatprep.subr.bf16.mxu0 0
        %6232 = vmatpush1.bf16.msra.mxu0 0
        %6233 = vmatprep.subr.bf16.mxu0 0
        %6234 = vmatpush1.bf16.msra.mxu0 0
        %6235 = vmatprep.subr.bf16.mxu0 0
        %6236 = vmatpush1.bf16.msra.mxu0 0
        %6237 = vmatprep.mubr.bf16.mxu0 0
        %6238 = vmatmul.mubr.bf16.gmra.mrb[0].mxu0 %v6203
        %v6239 = vpop.f32.mrb[0].mxu0
        %v6240 = vadd.f32 0.0, %v6239
        %v6241 = vpop.f32.mrb[0].mxu0
        %v6242 = vpop.f32.mrb[0].mxu0
        %v6243 = vadd.f32 0.0, %v6242
        %v6244 = vpop.f32.mrb[0].mxu0
        %6245 = vdwg.mxu0
        %v6246 = vlaneseq
        %v6247 = vshrl.u32 %v6246, 7
        %v6248 = vsub.s32 6, %v6247
        %v6249 = vrot.slane %v5818, %v6248
        %v6250 = vmul.f32 %v6240, %v6249
        %v6251 = vmul.f32 %v6243, %v6249
        %s6252 = scalar_lea.vmem %s33, 56
        %v6253 = vld [vmem:[%s6252] sm:$0xf]
        %v6254 = vld [vmem:[%s6252 + $0x4] sm:$0xf]
        %v6257 = vunpack.c.l.b16 %v6253
        %v6258 = vunpack.c.l.b16 %v6254
        %v6259 = vpack.c.b16 %v6258, %v6257
        %v6261 = vsel %vm5845, %v6259, 0
        %6263 = vmatprep.subr.bf16.mxu0 0
        %6264 = vmatpush1.bf16.msra.mxu0 %v5817
        %6265 = vmatprep.subr.bf16.mxu0 0
        %6266 = vmatpush1.bf16.msra.mxu0 0
        %6267 = vmatprep.subr.bf16.mxu0 0
        %6268 = vmatpush1.bf16.msra.mxu0 0
        %6269 = vmatprep.subr.bf16.mxu0 0
        %6270 = vmatpush1.bf16.msra.mxu0 0
        %6271 = vmatprep.subr.bf16.mxu0 0
        %6272 = vmatpush1.bf16.msra.mxu0 0
        %6273 = vmatprep.subr.bf16.mxu0 0
        %6274 = vmatpush1.bf16.msra.mxu0 0
        %6275 = vmatprep.subr.bf16.mxu0 0
        %6276 = vmatpush1.bf16.msra.mxu0 0
        %6277 = vmatprep.subr.bf16.mxu0 0
        %6278 = vmatpush1.bf16.msra.mxu0 0
        %6279 = vmatprep.subr.bf16.mxu0 0
        %6280 = vmatpush1.bf16.msra.mxu0 0
        %6281 = vmatprep.subr.bf16.mxu0 0
        %6282 = vmatpush1.bf16.msra.mxu0 0
        %6283 = vmatprep.subr.bf16.mxu0 0
        %6284 = vmatpush1.bf16.msra.mxu0 0
        %6285 = vmatprep.subr.bf16.mxu0 0
        %6286 = vmatpush1.bf16.msra.mxu0 0
        %6287 = vmatprep.subr.bf16.mxu0 0
        %6288 = vmatpush1.bf16.msra.mxu0 0
        %6289 = vmatprep.subr.bf16.mxu0 0
        %6290 = vmatpush1.bf16.msra.mxu0 0
        %6291 = vmatprep.subr.bf16.mxu0 0
        %6292 = vmatpush1.bf16.msra.mxu0 0
        %6293 = vmatprep.subr.bf16.mxu0 0
        %6294 = vmatpush1.bf16.msra.mxu0 0
        %6295 = vmatprep.mubr.bf16.mxu0 0
        %6296 = vmatmul.mubr.bf16.gmra.mrb[0].mxu0 %v6261
        %v6297 = vpop.f32.mrb[0].mxu0
        %v6298 = vadd.f32 0.0, %v6297
        %v6299 = vpop.f32.mrb[0].mxu0
        %v6300 = vpop.f32.mrb[0].mxu0
        %v6301 = vadd.f32 0.0, %v6300
        %v6302 = vpop.f32.mrb[0].mxu0
        %6303 = vdwg.mxu0
        %v6304 = vlaneseq
        %v6305 = vshrl.u32 %v6304, 7
        %v6306 = vsub.s32 7, %v6305
        %v6307 = vrot.slane %v5818, %v6306
        %v6308 = vmul.f32 %v6298, %v6307
        %v6309 = vmul.f32 %v6301, %v6307
        %v6310 = vadd.f32 %v6250, %v6308
        %v6311 = vadd.f32 %v6251, %v6309
        %s6312 = scalar_lea.vmem %s33, 64
        %v6313 = vld [vmem:[%s6312] sm:$0xf]
        %v6314 = vld [vmem:[%s6312 + $0x4] sm:$0xf]
        %v6317 = vunpack.c.l.b16 %v6313
        %v6318 = vunpack.c.l.b16 %v6314
        %v6319 = vpack.c.b16 %v6318, %v6317
        %v6321 = vsel %vm5845, %v6319, 0
        %6323 = vmatprep.subr.bf16.mxu0 0
        %6324 = vmatpush1.bf16.msra.mxu0 %v5817
        %6325 = vmatprep.subr.bf16.mxu0 0
        %6326 = vmatpush1.bf16.msra.mxu0 0
        %6327 = vmatprep.subr.bf16.mxu0 0
        %6328 = vmatpush1.bf16.msra.mxu0 0
        %6329 = vmatprep.subr.bf16.mxu0 0
        %6330 = vmatpush1.bf16.msra.mxu0 0
        %6331 = vmatprep.subr.bf16.mxu0 0
        %6332 = vmatpush1.bf16.msra.mxu0 0
        %6333 = vmatprep.subr.bf16.mxu0 0
        %6334 = vmatpush1.bf16.msra.mxu0 0
        %6335 = vmatprep.subr.bf16.mxu0 0
        %6336 = vmatpush1.bf16.msra.mxu0 0
        %6337 = vmatprep.subr.bf16.mxu0 0
        %6338 = vmatpush1.bf16.msra.mxu0 0
        %6339 = vmatprep.subr.bf16.mxu0 0
        %6340 = vmatpush1.bf16.msra.mxu0 0
        %6341 = vmatprep.subr.bf16.mxu0 0
        %6342 = vmatpush1.bf16.msra.mxu0 0
        %6343 = vmatprep.subr.bf16.mxu0 0
        %6344 = vmatpush1.bf16.msra.mxu0 0
        %6345 = vmatprep.subr.bf16.mxu0 0
        %6346 = vmatpush1.bf16.msra.mxu0 0
        %6347 = vmatprep.subr.bf16.mxu0 0
        %6348 = vmatpush1.bf16.msra.mxu0 0
        %6349 = vmatprep.subr.bf16.mxu0 0
        %6350 = vmatpush1.bf16.msra.mxu0 0
        %6351 = vmatprep.subr.bf16.mxu0 0
        %6352 = vmatpush1.bf16.msra.mxu0 0
        %6353 = vmatprep.subr.bf16.mxu0 0
        %6354 = vmatpush1.bf16.msra.mxu0 0
        %6355 = vmatprep.mubr.bf16.mxu0 0
        %6356 = vmatmul.mubr.bf16.gmra.mrb[0].mxu0 %v6321
        %v6357 = vpop.f32.mrb[0].mxu0
        %v6358 = vadd.f32 0.0, %v6357
        %v6359 = vpop.f32.mrb[0].mxu0
        %v6360 = vpop.f32.mrb[0].mxu0
        %v6361 = vadd.f32 0.0, %v6360
        %v6362 = vpop.f32.mrb[0].mxu0
        %6363 = vdwg.mxu0
        %v6364 = vlaneseq
        %v6365 = vshrl.u32 %v6364, 7
        %v6366 = vsub.s32 0, %v6365
        %v6367 = vrot.slane %v5819, %v6366
        %v6368 = vmul.f32 %v6358, %v6367
        %v6369 = vmul.f32 %v6361, %v6367
        %v6370 = vadd.f32 %v6310, %v6368
        %v6371 = vadd.f32 %v6311, %v6369
        %v6372 = vadd.f32 %v6014, %v6192
        %v6373 = vadd.f32 %v6015, %v6193
        %v6374 = vadd.f32 %v6372, %v6370
        %v6375 = vadd.f32 %v6373, %v6371
        %v6376 = vlaneseq
        %v6377 = vshrl.u32 %v6376, 7
        %v6378 = vsub.s32 0, %v6377
        %v6379 = vrot.slane %v5820, %v6378
        %v6380 = vmul.f32 %v6374, %v6379
        %v6381 = vmul.f32 %v6375, %v6379
        %v6382 = vlaneseq
        %v6383 = vshrl.u32 %v6382, 7
        %v6384 = vsub.s32 1, %v6383
        %v6385 = vrot.slane %v5820, %v6384
        %v6386 = vadd.f32 %v6380, %v6385
        %v6387 = vadd.f32 %v6381, %v6385
        %v6388 = vmax.f32 %v6386, 0.0
        %v6389 = vmax.f32 %v6387, 0.0
        %v6390 = vmin.f32 %v6388, 6.0
        %v6391 = vmin.f32 %v6389, 6.0
        %v6392 = vpack.c.bf16 %v6391, %v6390
        %v6409 = vunpack.c.l.b16 %v5822
        %v6410 = vunpack.c.l.b16 %v5823
        %v6411 = vunpack.c.l.b16 %v5824
        %v6412 = vunpack.c.l.b16 %v5825
        %v6413 = vunpack.c.l.b16 %v5826
        %v6414 = vunpack.c.l.b16 %v5827
        %v6415 = vunpack.c.l.b16 %v5828
        %v6416 = vunpack.c.l.b16 %v5829
        %v6417 = vunpack.c.l.b16 %v5830
        %v6418 = vunpack.c.l.b16 %v5831
        %v6419 = vunpack.c.l.b16 %v5832
        %v6420 = vunpack.c.l.b16 %v5833
        %v6421 = vunpack.c.l.b16 %v5834
        %v6422 = vunpack.c.l.b16 %v5835
        %v6423 = vunpack.c.l.b16 %v5836
        %v6424 = vunpack.c.l.b16 %v5837
        %v6425 = vpack.c.b16 %v6410, %v6409
        %v6426 = vpack.c.b16 %v6412, %v6411
        %v6427 = vpack.c.b16 %v6414, %v6413
        %v6428 = vpack.c.b16 %v6416, %v6415
        %v6429 = vpack.c.b16 %v6418, %v6417
        %v6430 = vpack.c.b16 %v6420, %v6419
        %v6431 = vpack.c.b16 %v6422, %v6421
        %v6432 = vpack.c.b16 %v6424, %v6423
        %6441 = vmatprep.subr.bf16.mxu0 0
        %6442 = vmatpush1.bf16.msra.mxu0 %v6425
        %6443 = vmatprep.subr.bf16.mxu0 0
        %6444 = vmatpush1.bf16.msra.mxu0 %v6426
        %6445 = vmatprep.subr.bf16.mxu0 0
        %6446 = vmatpush1.bf16.msra.mxu0 %v6427
        %6447 = vmatprep.subr.bf16.mxu0 0
        %6448 = vmatpush1.bf16.msra.mxu0 %v6428
        %6449 = vmatprep.subr.bf16.mxu0 0
        %6450 = vmatpush1.bf16.msra.mxu0 %v6429
        %6451 = vmatprep.subr.bf16.mxu0 0
        %6452 = vmatpush1.bf16.msra.mxu0 %v6430
        %6453 = vmatprep.subr.bf16.mxu0 0
        %6454 = vmatpush1.bf16.msra.mxu0 %v6431
        %6455 = vmatprep.subr.bf16.mxu0 0
        %6456 = vmatpush1.bf16.msra.mxu0 %v6432
        %6457 = vmatprep.subr.bf16.mxu0 0
        %6458 = vmatpush1.bf16.msra.mxu0 0
        %6459 = vmatprep.subr.bf16.mxu0 0
        %6460 = vmatpush1.bf16.msra.mxu0 0
        %6461 = vmatprep.subr.bf16.mxu0 0
        %6462 = vmatpush1.bf16.msra.mxu0 0
        %6463 = vmatprep.subr.bf16.mxu0 0
        %6464 = vmatpush1.bf16.msra.mxu0 0
        %6465 = vmatprep.subr.bf16.mxu0 0
        %6466 = vmatpush1.bf16.msra.mxu0 0
        %6467 = vmatprep.subr.bf16.mxu0 0
        %6468 = vmatpush1.bf16.msra.mxu0 0
        %6469 = vmatprep.subr.bf16.mxu0 0
        %6470 = vmatpush1.bf16.msra.mxu0 0
        %6471 = vmatprep.subr.bf16.mxu0 0
        %6472 = vmatpush1.bf16.msra.mxu0 0
        %6473 = vmatprep.mubr.bf16.mxu0 0
        %6474 = vmatmul.mubr.bf16.gmra.mrb[0].mxu0 %v6392
        %v6475 = vpop.f32.mrb[0].mxu0
        %v6476 = vadd.f32 0.0, %v6475
        %v6477 = vpop.f32.mrb[0].mxu0
        %v6478 = vpop.f32.mrb[0].mxu0
        %v6479 = vadd.f32 0.0, %v6478
        %v6480 = vpop.f32.mrb[0].mxu0
        %6481 = vdwg.mxu0
        %v6482 = vlaneseq
        %v6483 = vshrl.u32 %v6482, 7
        %v6484 = vsub.s32 0, %v6483
        %v6485 = vrot.slane %v5821, %v6484
        %v6486 = vmul.f32 %v6476, %v6485
        %v6487 = vmul.f32 %v6479, %v6485
        %v6488 = vlaneseq
        %v6489 = vshrl.u32 %v6488, 7
        %v6490 = vsub.s32 1, %v6489
        %v6491 = vrot.slane %v5821, %v6490
        %v6492 = vadd.f32 %v6486, %v6491
        %v6493 = vadd.f32 %v6487, %v6491
        %v6494 = vmax.f32 %v6492, 0.0
        %v6495 = vmax.f32 %v6493, 0.0
        %v6496 = vmin.f32 %v6494, 6.0
        %v6497 = vmin.f32 %v6495, 6.0
        %v6498 = vpack.c.bf16 %v6497, %v6496
        %v6499 = vunpack.c.l.bf16 %v6498
        %v6500 = vunpack.c.h.bf16 %v6498
        %v6501 = vld [vmem:[#allocation14] sm:$0x1]
        %v6503 = vlaneseq
        %v6504 = vshrl.u32 %v6503, 7
        %v6505 = vsub.s32 0, %v6504
        %v6506 = vrot.slane %v6501, %v6505
        %v6508 = vmul.f32 %v6499, %v6506
        %v6509 = vmul.f32 %v6500, %v6506
        %6510 = vadd.xlane.f32.xlu0 %v6508
        %v6511 = vpop.xlane.xlu0 %6510
        %6512 = vadd.xlane.f32.xlu0 %v6509
        %v6513 = vpop.xlane.xlu0 %6512
        %v6514 = vld [vmem:[#allocation4] sm:$0x1]
        %v6516 = vlaneseq
        %v6517 = vshrl.u32 %v6516, 7
        %v6518 = vsub.s32 0, %v6517
        %v6519 = vrot.slane %v6514, %v6518
        %v6521 = vadd.f32 %v6511, %v6519
        %v6522 = vadd.f32 %v6513, %v6519
        %v6523 = vxor.u32 %v6521, 2147483648
        %v6524 = vxor.u32 %v6522, 2147483648
        %v6525 = vmul.f32 %v6523, 1.442695
        %v6526 = vpow.pop %v6525
        %v6527 = vmul.f32 %v6524, 1.442695
        %v6528 = vpow.pop %v6527
        %v6529 = vadd.f32 %v6526, 1.0
        %v6530 = vadd.f32 %v6528, 1.0
        %v6531 = vrcp.pop %v6529
        %v6532 = vmul.f32 1.0, %v6531
        %v6533 = vrcp.pop %v6530
        %v6534 = vmul.f32 1.0, %v6533
        %6536 = vset.pattern.permute.xlu0 0
        %6537 = vperm.xlu0 %6536, %v6532
        %v6538 = vpop.permute.xlu0 %6537
        %6541 = vset.pattern.permute.xlu0 0
        %6542 = vperm.xlu0 %6541, %v6534
        %v6543 = vpop.permute.xlu0 %6542
        %v6545 = vmul.f32 %v6499, %v6538
        %v6546 = vmul.f32 %v6500, %v6543
        %v6547 = vadd.f32 %v6545, %v6546
        %v6548 = vrot.slane %v6547, 4
        %v6549 = vadd.f32 %v6547, %v6548
        %v6550 = vrot.slane %v6549, 2
        %v6551 = vadd.f32 %v6549, %v6550
        %v6552 = vrot.slane %v6551, 1
        %v6553 = vadd.f32 %v6551, %v6552
        %v6554 = vrcp.pop 16.0
        %v6555 = vmul.f32 %v6553, %v6554
        %v6556 = vmax.f32 %v6545, %v6546
        %v6557 = vrot.slane %v6556, 4
        %v6558 = vmax.f32 %v6556, %v6557
        %v6559 = vrot.slane %v6558, 2
        %v6560 = vmax.f32 %v6558, %v6559
        %v6561 = vrot.slane %v6560, 1
        %v6562 = vmax.f32 %v6560, %v6561
        %v6563 = vsel %vm5012, %v6555, %v6562
        %v6564 = vpack.c.bf16 %v6563, %v6563
        %v6565 = vld [vmem:[%s89] sm:$0xf]
        %v6566 = vld [vmem:[%s89 + $0x4] sm:$0xf]
        %v6567 = vld [vmem:[%s89 + $0x8] sm:$0xf]
        %v6568 = vld [vmem:[%s89 + $0xc] sm:$0xf]
        %v6569 = vld [vmem:[%s89 + $0x10] sm:$0xf]
        %v6570 = vld [vmem:[%s89 + $0x14] sm:$0xf]
        %v6571 = vld [vmem:[%s89 + $0x18] sm:$0xf]
        %v6572 = vld [vmem:[%s89 + $0x1c] sm:$0xf]
        %v6573 = vld [vmem:[%s89 + $0x20] sm:$0xf]
        %v6574 = vld [vmem:[%s89 + $0x24] sm:$0xf]
        %v6575 = vld [vmem:[%s89 + $0x28] sm:$0xf]
        %v6576 = vld [vmem:[%s89 + $0x2c] sm:$0xf]
        %v6577 = vld [vmem:[%s89 + $0x30] sm:$0xf]
        %v6578 = vld [vmem:[%s89 + $0x34] sm:$0xf]
        %v6579 = vld [vmem:[%s89 + $0x38] sm:$0xf]
        %v6580 = vld [vmem:[%s89 + $0x3c] sm:$0xf]
        %v6597 = vunpack.c.l.b16 %v6565
        %v6598 = vunpack.c.l.b16 %v6566
        %v6599 = vunpack.c.l.b16 %v6567
        %v6600 = vunpack.c.l.b16 %v6568
        %v6601 = vunpack.c.l.b16 %v6569
        %v6602 = vunpack.c.l.b16 %v6570
        %v6603 = vunpack.c.l.b16 %v6571
        %v6604 = vunpack.c.l.b16 %v6572
        %v6605 = vunpack.c.l.b16 %v6573
        %v6606 = vunpack.c.l.b16 %v6574
        %v6607 = vunpack.c.l.b16 %v6575
        %v6608 = vunpack.c.l.b16 %v6576
        %v6609 = vunpack.c.l.b16 %v6577
        %v6610 = vunpack.c.l.b16 %v6578
        %v6611 = vunpack.c.l.b16 %v6579
        %v6612 = vunpack.c.l.b16 %v6580
        %v6613 = vpack.c.b16 %v6598, %v6597
        %v6614 = vpack.c.b16 %v6600, %v6599
        %v6615 = vpack.c.b16 %v6602, %v6601
        %v6616 = vpack.c.b16 %v6604, %v6603
        %v6617 = vpack.c.b16 %v6606, %v6605
        %v6618 = vpack.c.b16 %v6608, %v6607
        %v6619 = vpack.c.b16 %v6610, %v6609
        %v6620 = vpack.c.b16 %v6612, %v6611
        %6629 = vmatprep.subr.bf16.mxu0 0
        %6630 = vmatpush1.bf16.msra.mxu0 %v6613
        %6631 = vmatprep.subr.bf16.mxu0 0
        %6632 = vmatpush1.bf16.msra.mxu0 %v6614
        %6633 = vmatprep.subr.bf16.mxu0 0
        %6634 = vmatpush1.bf16.msra.mxu0 %v6615
        %6635 = vmatprep.subr.bf16.mxu0 0
        %6636 = vmatpush1.bf16.msra.mxu0 %v6616
        %6637 = vmatprep.subr.bf16.mxu0 0
        %6638 = vmatpush1.bf16.msra.mxu0 %v6617
        %6639 = vmatprep.subr.bf16.mxu0 0
        %6640 = vmatpush1.bf16.msra.mxu0 %v6618
        %6641 = vmatprep.subr.bf16.mxu0 0
        %6642 = vmatpush1.bf16.msra.mxu0 %v6619
        %6643 = vmatprep.subr.bf16.mxu0 0
        %6644 = vmatpush1.bf16.msra.mxu0 %v6620
        %6645 = vmatprep.subr.bf16.mxu0 0
        %6646 = vmatpush1.bf16.msra.mxu0 0
        %6647 = vmatprep.subr.bf16.mxu0 0
        %6648 = vmatpush1.bf16.msra.mxu0 0
        %6649 = vmatprep.subr.bf16.mxu0 0
        %6650 = vmatpush1.bf16.msra.mxu0 0
        %6651 = vmatprep.subr.bf16.mxu0 0
        %6652 = vmatpush1.bf16.msra.mxu0 0
        %6653 = vmatprep.subr.bf16.mxu0 0
        %6654 = vmatpush1.bf16.msra.mxu0 0
        %6655 = vmatprep.subr.bf16.mxu0 0
        %6656 = vmatpush1.bf16.msra.mxu0 0
        %6657 = vmatprep.subr.bf16.mxu0 0
        %6658 = vmatpush1.bf16.msra.mxu0 0
        %6659 = vmatprep.subr.bf16.mxu0 0
        %6660 = vmatpush1.bf16.msra.mxu0 0
        %6661 = vmatprep.mubr.bf16.mxu0 0
        %6662 = vmatmul.mubr.bf16.gmra.mrb[0].mxu0 %v6564
        %v6663 = vpop.f32.mrb[0].mxu0
        %v6664 = vadd.f32 0.0, %v6663
        %v6665 = vpop.f32.mrb[0].mxu0
        %v6666 = vpop.f32.mrb[0].mxu0
        %v6667 = vpop.f32.mrb[0].mxu0
        %6668 = vdwg.mxu0
        %v6669 = vmax.f32 %v6664, 0.0
        %v6670 = vpack.c.bf16 %v6669, %v6669
        %v6671 = vld [vmem:[%s91] sm:$0xf]
        %v6672 = vld [vmem:[%s91 + $0x4] sm:$0xf]
        %v6675 = vunpack.c.l.b16 %v6671
        %v6676 = vunpack.c.l.b16 %v6672
        %v6677 = vpack.c.b16 %v6676, %v6675
        %v6680 = vsel %vm5845, %v6670, 0
        %6682 = vmatprep.subr.bf16.mxu0 0
        %6683 = vmatpush1.bf16.msra.mxu0 %v6677
        %6684 = vmatprep.subr.bf16.mxu0 0
        %6685 = vmatpush1.bf16.msra.mxu0 0
        %6686 = vmatprep.subr.bf16.mxu0 0
        %6687 = vmatpush1.bf16.msra.mxu0 0
        %6688 = vmatprep.subr.bf16.mxu0 0
        %6689 = vmatpush1.bf16.msra.mxu0 0
        %6690 = vmatprep.subr.bf16.mxu0 0
        %6691 = vmatpush1.bf16.msra.mxu0 0
        %6692 = vmatprep.subr.bf16.mxu0 0
        %6693 = vmatpush1.bf16.msra.mxu0 0
        %6694 = vmatprep.subr.bf16.mxu0 0
        %6695 = vmatpush1.bf16.msra.mxu0 0
        %6696 = vmatprep.subr.bf16.mxu0 0
        %6697 = vmatpush1.bf16.msra.mxu0 0
        %6698 = vmatprep.subr.bf16.mxu0 0
        %6699 = vmatpush1.bf16.msra.mxu0 0
        %6700 = vmatprep.subr.bf16.mxu0 0
        %6701 = vmatpush1.bf16.msra.mxu0 0
        %6702 = vmatprep.subr.bf16.mxu0 0
        %6703 = vmatpush1.bf16.msra.mxu0 0
        %6704 = vmatprep.subr.bf16.mxu0 0
        %6705 = vmatpush1.bf16.msra.mxu0 0
        %6706 = vmatprep.subr.bf16.mxu0 0
        %6707 = vmatpush1.bf16.msra.mxu0 0
        %6708 = vmatprep.subr.bf16.mxu0 0
        %6709 = vmatpush1.bf16.msra.mxu0 0
        %6710 = vmatprep.subr.bf16.mxu0 0
        %6711 = vmatpush1.bf16.msra.mxu0 0
        %6712 = vmatprep.subr.bf16.mxu0 0
        %6713 = vmatpush1.bf16.msra.mxu0 0
        %6714 = vmatprep.mubr.bf16.mxu0 0
        %6715 = vmatmul.mubr.bf16.gmra.mrb[0].mxu0 %v6680
        %v6716 = vpop.f32.mrb[0].mxu0
        %v6717 = vadd.f32 0.0, %v6716
        %v6718 = vpop.f32.mrb[0].mxu0
        %v6719 = vpop.f32.mrb[0].mxu0
        %v6720 = vpop.f32.mrb[0].mxu0
        %6721 = vdwg.mxu0
        %v6723 = vrot.slane %v6717, 1
        %v6725 = vadd.f32 %v6717, %v6723
        %v6726 = vxor.u32 %v6725, 2147483648
        %v6727 = vmul.f32 %v6726, 1.442695
        %v6728 = vpow.pop %v6727
        %v6729 = vadd.f32 %v6728, 1.0
        %v6730 = vrcp.pop %v6729
        %v6731 = vmul.f32 1.0, %v6730
        %v6732 = vlaneseq
        %v6733 = vshrl.u32 %v6732, 7
        %v6734 = vsub.s32 0, %v6733
        %v6735 = vrot.slane %v6731, %v6734
        %v6736 = vmul.f32 %v6545, %v6735
        %v6737 = vmul.f32 %v6546, %v6735
        %v6738 = vpack.c.bf16 %v6737, %v6736
        %v6739 = vld [vmem:[%s45] sm:$0xff]
        %v6740 = vld [vmem:[%s45 + $0x8] sm:$0x1]
        %v6741 = vld [vmem:[%s49] sm:$0x3]
        %v6742 = vld [vmem:[%s51] sm:$0xf]
        %v6743 = vld [vmem:[%s47] sm:$0xff]
        %v6744 = vld [vmem:[%s47 + $0x8] sm:$0xff]
        %v6745 = vld [vmem:[%s47 + $0x10] sm:$0xff]
        %v6746 = vld [vmem:[%s47 + $0x18] sm:$0xff]
        %v6747 = vld [vmem:[%s47 + $0x20] sm:$0xff]
        %v6748 = vld [vmem:[%s47 + $0x28] sm:$0xff]
        %v6749 = vld [vmem:[%s47 + $0x30] sm:$0xff]
        %v6750 = vld [vmem:[%s47 + $0x38] sm:$0xff]
        %v6751 = vld [vmem:[%s47 + $0x40] sm:$0xff]
        %v6752 = vld [vmem:[%s47 + $0x48] sm:$0xff]
        %v6753 = vld [vmem:[%s47 + $0x50] sm:$0xff]
        %v6754 = vld [vmem:[%s47 + $0x58] sm:$0xff]
        %v6755 = vld [vmem:[%s47 + $0x60] sm:$0xff]
        %v6756 = vld [vmem:[%s47 + $0x68] sm:$0xff]
        %v6757 = vld [vmem:[%s47 + $0x70] sm:$0xff]
        %v6758 = vld [vmem:[%s47 + $0x78] sm:$0xff]
        %v6759 = vld [vmem:[%s43] sm:$0x3]
        %v6761 = vsel %vm5845, %v6759, 0
        %6763 = vmatprep.subr.bf16.mxu0 0
        %6764 = vmatpush1.bf16.msra.mxu0 %v6738
        %6765 = vmatprep.subr.bf16.mxu0 0
        %6766 = vmatpush1.bf16.msra.mxu0 0
        %6767 = vmatprep.subr.bf16.mxu0 0
        %6768 = vmatpush1.bf16.msra.mxu0 0
        %6769 = vmatprep.subr.bf16.mxu0 0
        %6770 = vmatpush1.bf16.msra.mxu0 0
        %6771 = vmatprep.subr.bf16.mxu0 0
        %6772 = vmatpush1.bf16.msra.mxu0 0
        %6773 = vmatprep.subr.bf16.mxu0 0
        %6774 = vmatpush1.bf16.msra.mxu0 0
        %6775 = vmatprep.subr.bf16.mxu0 0
        %6776 = vmatpush1.bf16.msra.mxu0 0
        %6777 = vmatprep.subr.bf16.mxu0 0
        %6778 = vmatpush1.bf16.msra.mxu0 0
        %6779 = vmatprep.subr.bf16.mxu0 0
        %6780 = vmatpush1.bf16.msra.mxu0 0
        %6781 = vmatprep.subr.bf16.mxu0 0
        %6782 = vmatpush1.bf16.msra.mxu0 0
        %6783 = vmatprep.subr.bf16.mxu0 0
        %6784 = vmatpush1.bf16.msra.mxu0 0
        %6785 = vmatprep.subr.bf16.mxu0 0
        %6786 = vmatpush1.bf16.msra.mxu0 0
        %6787 = vmatprep.subr.bf16.mxu0 0
        %6788 = vmatpush1.bf16.msra.mxu0 0
        %6789 = vmatprep.subr.bf16.mxu0 0
        %6790 = vmatpush1.bf16.msra.mxu0 0
        %6791 = vmatprep.subr.bf16.mxu0 0
        %6792 = vmatpush1.bf16.msra.mxu0 0
        %6793 = vmatprep.subr.bf16.mxu0 0
        %6794 = vmatpush1.bf16.msra.mxu0 0
        %6795 = vmatprep.mubr.bf16.mxu0 0
        %6796 = vmatmul.mubr.bf16.gmra.mrb[0].mxu0 %v6761
        %v6797 = vpop.f32.mrb[0].mxu0
        %v6798 = vadd.f32 0.0, %v6797
        %v6799 = vpop.f32.mrb[0].mxu0
        %v6800 = vpop.f32.mrb[0].mxu0
        %v6801 = vpop.f32.mrb[0].mxu0
        %6802 = vdwg.mxu0
        %v6803 = vlaneseq
        %v6804 = vshrl.u32 %v6803, 7
        %v6805 = vsub.s32 0, %v6804
        %v6806 = vrot.slane %v6739, %v6805
        %v6807 = vmul.f32 %v6798, %v6806
        %s6808 = scalar_lea.vmem %s43, 2
        %v6809 = vld [vmem:[%s6808] sm:$0x3]
        %v6811 = vsel %vm5845, %v6809, 0
        %6813 = vmatprep.subr.bf16.mxu0 0
        %6814 = vmatpush1.bf16.msra.mxu0 %v6738
        %6815 = vmatprep.subr.bf16.mxu0 0
        %6816 = vmatpush1.bf16.msra.mxu0 0
        %6817 = vmatprep.subr.bf16.mxu0 0
        %6818 = vmatpush1.bf16.msra.mxu0 0
        %6819 = vmatprep.subr.bf16.mxu0 0
        %6820 = vmatpush1.bf16.msra.mxu0 0
        %6821 = vmatprep.subr.bf16.mxu0 0
        %6822 = vmatpush1.bf16.msra.mxu0 0
        %6823 = vmatprep.subr.bf16.mxu0 0
        %6824 = vmatpush1.bf16.msra.mxu0 0
        %6825 = vmatprep.subr.bf16.mxu0 0
        %6826 = vmatpush1.bf16.msra.mxu0 0
        %6827 = vmatprep.subr.bf16.mxu0 0
        %6828 = vmatpush1.bf16.msra.mxu0 0
        %6829 = vmatprep.subr.bf16.mxu0 0
        %6830 = vmatpush1.bf16.msra.mxu0 0
        %6831 = vmatprep.subr.bf16.mxu0 0
        %6832 = vmatpush1.bf16.msra.mxu0 0
        %6833 = vmatprep.subr.bf16.mxu0 0
        %6834 = vmatpush1.bf16.msra.mxu0 0
        %6835 = vmatprep.subr.bf16.mxu0 0
        %6836 = vmatpush1.bf16.msra.mxu0 0
        %6837 = vmatprep.subr.bf16.mxu0 0
        %6838 = vmatpush1.bf16.msra.mxu0 0
        %6839 = vmatprep.subr.bf16.mxu0 0
        %6840 = vmatpush1.bf16.msra.mxu0 0
        %6841 = vmatprep.subr.bf16.mxu0 0
        %6842 = vmatpush1.bf16.msra.mxu0 0
        %6843 = vmatprep.subr.bf16.mxu0 0
        %6844 = vmatpush1.bf16.msra.mxu0 0
        %6845 = vmatprep.mubr.bf16.mxu0 0
        %6846 = vmatmul.mubr.bf16.gmra.mrb[0].mxu0 %v6811
        %v6847 = vpop.f32.mrb[0].mxu0
        %v6848 = vadd.f32 0.0, %v6847
        %v6849 = vpop.f32.mrb[0].mxu0
        %v6850 = vpop.f32.mrb[0].mxu0
        %v6851 = vpop.f32.mrb[0].mxu0
        %6852 = vdwg.mxu0
        %v6853 = vlaneseq
        %v6854 = vshrl.u32 %v6853, 7
        %v6855 = vsub.s32 1, %v6854
        %v6856 = vrot.slane %v6739, %v6855
        %v6857 = vmul.f32 %v6848, %v6856
        %v6858 = vadd.f32 %v6807, %v6857
        %s6859 = scalar_lea.vmem %s43, 4
        %v6860 = vld [vmem:[%s6859] sm:$0x3]
        %v6862 = vsel %vm5845, %v6860, 0
        %6864 = vmatprep.subr.bf16.mxu0 0
        %6865 = vmatpush1.bf16.msra.mxu0 %v6738
        %6866 = vmatprep.subr.bf16.mxu0 0
        %6867 = vmatpush1.bf16.msra.mxu0 0
        %6868 = vmatprep.subr.bf16.mxu0 0
        %6869 = vmatpush1.bf16.msra.mxu0 0
        %6870 = vmatprep.subr.bf16.mxu0 0
        %6871 = vmatpush1.bf16.msra.mxu0 0
        %6872 = vmatprep.subr.bf16.mxu0 0
        %6873 = vmatpush1.bf16.msra.mxu0 0
        %6874 = vmatprep.subr.bf16.mxu0 0
        %6875 = vmatpush1.bf16.msra.mxu0 0
        %6876 = vmatprep.subr.bf16.mxu0 0
        %6877 = vmatpush1.bf16.msra.mxu0 0
        %6878 = vmatprep.subr.bf16.mxu0 0
        %6879 = vmatpush1.bf16.msra.mxu0 0
        %6880 = vmatprep.subr.bf16.mxu0 0
        %6881 = vmatpush1.bf16.msra.mxu0 0
        %6882 = vmatprep.subr.bf16.mxu0 0
        %6883 = vmatpush1.bf16.msra.mxu0 0
        %6884 = vmatprep.subr.bf16.mxu0 0
        %6885 = vmatpush1.bf16.msra.mxu0 0
        %6886 = vmatprep.subr.bf16.mxu0 0
        %6887 = vmatpush1.bf16.msra.mxu0 0
        %6888 = vmatprep.subr.bf16.mxu0 0
        %6889 = vmatpush1.bf16.msra.mxu0 0
        %6890 = vmatprep.subr.bf16.mxu0 0
        %6891 = vmatpush1.bf16.msra.mxu0 0
        %6892 = vmatprep.subr.bf16.mxu0 0
        %6893 = vmatpush1.bf16.msra.mxu0 0
        %6894 = vmatprep.subr.bf16.mxu0 0
        %6895 = vmatpush1.bf16.msra.mxu0 0
        %6896 = vmatprep.mubr.bf16.mxu0 0
        %6897 = vmatmul.mubr.bf16.gmra.mrb[0].mxu0 %v6862
        %v6898 = vpop.f32.mrb[0].mxu0
        %v6899 = vadd.f32 0.0, %v6898
        %v6900 = vpop.f32.mrb[0].mxu0
        %v6901 = vpop.f32.mrb[0].mxu0
        %v6902 = vpop.f32.mrb[0].mxu0
        %6903 = vdwg.mxu0
        %v6904 = vlaneseq
        %v6905 = vshrl.u32 %v6904, 7
        %v6906 = vsub.s32 2, %v6905
        %v6907 = vrot.slane %v6739, %v6906
        %v6908 = vmul.f32 %v6899, %v6907
        %v6909 = vadd.f32 %v6858, %v6908
        %s6910 = scalar_lea.vmem %s43, 6
        %v6911 = vld [vmem:[%s6910] sm:$0x3]
        %v6913 = vsel %vm5845, %v6911, 0
        %6915 = vmatprep.subr.bf16.mxu0 0
        %6916 = vmatpush1.bf16.msra.mxu0 %v6738
        %6917 = vmatprep.subr.bf16.mxu0 0
        %6918 = vmatpush1.bf16.msra.mxu0 0
        %6919 = vmatprep.subr.bf16.mxu0 0
        %6920 = vmatpush1.bf16.msra.mxu0 0
        %6921 = vmatprep.subr.bf16.mxu0 0
        %6922 = vmatpush1.bf16.msra.mxu0 0
        %6923 = vmatprep.subr.bf16.mxu0 0
        %6924 = vmatpush1.bf16.msra.mxu0 0
        %6925 = vmatprep.subr.bf16.mxu0 0
        %6926 = vmatpush1.bf16.msra.mxu0 0
        %6927 = vmatprep.subr.bf16.mxu0 0
        %6928 = vmatpush1.bf16.msra.mxu0 0
        %6929 = vmatprep.subr.bf16.mxu0 0
        %6930 = vmatpush1.bf16.msra.mxu0 0
        %6931 = vmatprep.subr.bf16.mxu0 0
        %6932 = vmatpush1.bf16.msra.mxu0 0
        %6933 = vmatprep.subr.bf16.mxu0 0
        %6934 = vmatpush1.bf16.msra.mxu0 0
        %6935 = vmatprep.subr.bf16.mxu0 0
        %6936 = vmatpush1.bf16.msra.mxu0 0
        %6937 = vmatprep.subr.bf16.mxu0 0
        %6938 = vmatpush1.bf16.msra.mxu0 0
        %6939 = vmatprep.subr.bf16.mxu0 0
        %6940 = vmatpush1.bf16.msra.mxu0 0
        %6941 = vmatprep.subr.bf16.mxu0 0
        %6942 = vmatpush1.bf16.msra.mxu0 0
        %6943 = vmatprep.subr.bf16.mxu0 0
        %6944 = vmatpush1.bf16.msra.mxu0 0
        %6945 = vmatprep.subr.bf16.mxu0 0
        %6946 = vmatpush1.bf16.msra.mxu0 0
        %6947 = vmatprep.mubr.bf16.mxu0 0
        %6948 = vmatmul.mubr.bf16.gmra.mrb[0].mxu0 %v6913
        %v6949 = vpop.f32.mrb[0].mxu0
        %v6950 = vadd.f32 0.0, %v6949
        %v6951 = vpop.f32.mrb[0].mxu0
        %v6952 = vpop.f32.mrb[0].mxu0
        %v6953 = vpop.f32.mrb[0].mxu0
        %6954 = vdwg.mxu0
        %v6955 = vlaneseq
        %v6956 = vshrl.u32 %v6955, 7
        %v6957 = vsub.s32 3, %v6956
        %v6958 = vrot.slane %v6739, %v6957
        %v6959 = vmul.f32 %v6950, %v6958
        %s6960 = scalar_lea.vmem %s43, 8
        %v6961 = vld [vmem:[%s6960] sm:$0x3]
        %v6963 = vsel %vm5845, %v6961, 0
        %6965 = vmatprep.subr.bf16.mxu0 0
        %6966 = vmatpush1.bf16.msra.mxu0 %v6738
        %6967 = vmatprep.subr.bf16.mxu0 0
        %6968 = vmatpush1.bf16.msra.mxu0 0
        %6969 = vmatprep.subr.bf16.mxu0 0
        %6970 = vmatpush1.bf16.msra.mxu0 0
        %6971 = vmatprep.subr.bf16.mxu0 0
        %6972 = vmatpush1.bf16.msra.mxu0 0
        %6973 = vmatprep.subr.bf16.mxu0 0
        %6974 = vmatpush1.bf16.msra.mxu0 0
        %6975 = vmatprep.subr.bf16.mxu0 0
        %6976 = vmatpush1.bf16.msra.mxu0 0
        %6977 = vmatprep.subr.bf16.mxu0 0
        %6978 = vmatpush1.bf16.msra.mxu0 0
        %6979 = vmatprep.subr.bf16.mxu0 0
        %6980 = vmatpush1.bf16.msra.mxu0 0
        %6981 = vmatprep.subr.bf16.mxu0 0
        %6982 = vmatpush1.bf16.msra.mxu0 0
        %6983 = vmatprep.subr.bf16.mxu0 0
        %6984 = vmatpush1.bf16.msra.mxu0 0
        %6985 = vmatprep.subr.bf16.mxu0 0
        %6986 = vmatpush1.bf16.msra.mxu0 0
        %6987 = vmatprep.subr.bf16.mxu0 0
        %6988 = vmatpush1.bf16.msra.mxu0 0
        %6989 = vmatprep.subr.bf16.mxu0 0
        %6990 = vmatpush1.bf16.msra.mxu0 0
        %6991 = vmatprep.subr.bf16.mxu0 0
        %6992 = vmatpush1.bf16.msra.mxu0 0
        %6993 = vmatprep.subr.bf16.mxu0 0
        %6994 = vmatpush1.bf16.msra.mxu0 0
        %6995 = vmatprep.subr.bf16.mxu0 0
        %6996 = vmatpush1.bf16.msra.mxu0 0
        %6997 = vmatprep.mubr.bf16.mxu0 0
        %6998 = vmatmul.mubr.bf16.gmra.mrb[0].mxu0 %v6963
        %v6999 = vpop.f32.mrb[0].mxu0
        %v7000 = vadd.f32 0.0, %v6999
        %v7001 = vpop.f32.mrb[0].mxu0
        %v7002 = vpop.f32.mrb[0].mxu0
        %v7003 = vpop.f32.mrb[0].mxu0
        %7004 = vdwg.mxu0
        %v7005 = vlaneseq
        %v7006 = vshrl.u32 %v7005, 7
        %v7007 = vsub.s32 4, %v7006
        %v7008 = vrot.slane %v6739, %v7007
        %v7009 = vmul.f32 %v7000, %v7008
        %v7010 = vadd.f32 %v6959, %v7009
        %s7011 = scalar_lea.vmem %s43, 10
        %v7012 = vld [vmem:[%s7011] sm:$0x3]
        %v7014 = vsel %vm5845, %v7012, 0
        %7016 = vmatprep.subr.bf16.mxu0 0
        %7017 = vmatpush1.bf16.msra.mxu0 %v6738
        %7018 = vmatprep.subr.bf16.mxu0 0
        %7019 = vmatpush1.bf16.msra.mxu0 0
        %7020 = vmatprep.subr.bf16.mxu0 0
        %7021 = vmatpush1.bf16.msra.mxu0 0
        %7022 = vmatprep.subr.bf16.mxu0 0
        %7023 = vmatpush1.bf16.msra.mxu0 0
        %7024 = vmatprep.subr.bf16.mxu0 0
        %7025 = vmatpush1.bf16.msra.mxu0 0
        %7026 = vmatprep.subr.bf16.mxu0 0
        %7027 = vmatpush1.bf16.msra.mxu0 0
        %7028 = vmatprep.subr.bf16.mxu0 0
        %7029 = vmatpush1.bf16.msra.mxu0 0
        %7030 = vmatprep.subr.bf16.mxu0 0
        %7031 = vmatpush1.bf16.msra.mxu0 0
        %7032 = vmatprep.subr.bf16.mxu0 0
        %7033 = vmatpush1.bf16.msra.mxu0 0
        %7034 = vmatprep.subr.bf16.mxu0 0
        %7035 = vmatpush1.bf16.msra.mxu0 0
        %7036 = vmatprep.subr.bf16.mxu0 0
        %7037 = vmatpush1.bf16.msra.mxu0 0
        %7038 = vmatprep.subr.bf16.mxu0 0
        %7039 = vmatpush1.bf16.msra.mxu0 0
        %7040 = vmatprep.subr.bf16.mxu0 0
        %7041 = vmatpush1.bf16.msra.mxu0 0
        %7042 = vmatprep.subr.bf16.mxu0 0
        %7043 = vmatpush1.bf16.msra.mxu0 0
        %7044 = vmatprep.subr.bf16.mxu0 0
        %7045 = vmatpush1.bf16.msra.mxu0 0
        %7046 = vmatprep.subr.bf16.mxu0 0
        %7047 = vmatpush1.bf16.msra.mxu0 0
        %7048 = vmatprep.mubr.bf16.mxu0 0
        %7049 = vmatmul.mubr.bf16.gmra.mrb[0].mxu0 %v7014
        %v7050 = vpop.f32.mrb[0].mxu0
        %v7051 = vadd.f32 0.0, %v7050
        %v7052 = vpop.f32.mrb[0].mxu0
        %v7053 = vpop.f32.mrb[0].mxu0
        %v7054 = vpop.f32.mrb[0].mxu0
        %7055 = vdwg.mxu0
        %v7056 = vlaneseq
        %v7057 = vshrl.u32 %v7056, 7
        %v7058 = vsub.s32 5, %v7057
        %v7059 = vrot.slane %v6739, %v7058
        %v7060 = vmul.f32 %v7051, %v7059
        %v7061 = vadd.f32 %v7010, %v7060
        %s7062 = scalar_lea.vmem %s43, 12
        %v7063 = vld [vmem:[%s7062] sm:$0x3]
        %v7065 = vsel %vm5845, %v7063, 0
        %7067 = vmatprep.subr.bf16.mxu0 0
        %7068 = vmatpush1.bf16.msra.mxu0 %v6738
        %7069 = vmatprep.subr.bf16.mxu0 0
        %7070 = vmatpush1.bf16.msra.mxu0 0
        %7071 = vmatprep.subr.bf16.mxu0 0
        %7072 = vmatpush1.bf16.msra.mxu0 0
        %7073 = vmatprep.subr.bf16.mxu0 0
        %7074 = vmatpush1.bf16.msra.mxu0 0
        %7075 = vmatprep.subr.bf16.mxu0 0
        %7076 = vmatpush1.bf16.msra.mxu0 0
        %7077 = vmatprep.subr.bf16.mxu0 0
        %7078 = vmatpush1.bf16.msra.mxu0 0
        %7079 = vmatprep.subr.bf16.mxu0 0
        %7080 = vmatpush1.bf16.msra.mxu0 0
        %7081 = vmatprep.subr.bf16.mxu0 0
        %7082 = vmatpush1.bf16.msra.mxu0 0
        %7083 = vmatprep.subr.bf16.mxu0 0
        %7084 = vmatpush1.bf16.msra.mxu0 0
        %7085 = vmatprep.subr.bf16.mxu0 0
        %7086 = vmatpush1.bf16.msra.mxu0 0
        %7087 = vmatprep.subr.bf16.mxu0 0
        %7088 = vmatpush1.bf16.msra.mxu0 0
        %7089 = vmatprep.subr.bf16.mxu0 0
        %7090 = vmatpush1.bf16.msra.mxu0 0
        %7091 = vmatprep.subr.bf16.mxu0 0
        %7092 = vmatpush1.bf16.msra.mxu0 0
        %7093 = vmatprep.subr.bf16.mxu0 0
        %7094 = vmatpush1.bf16.msra.mxu0 0
        %7095 = vmatprep.subr.bf16.mxu0 0
        %7096 = vmatpush1.bf16.msra.mxu0 0
        %7097 = vmatprep.subr.bf16.mxu0 0
        %7098 = vmatpush1.bf16.msra.mxu0 0
        %7099 = vmatprep.mubr.bf16.mxu0 0
        %7100 = vmatmul.mubr.bf16.gmra.mrb[0].mxu0 %v7065
        %v7101 = vpop.f32.mrb[0].mxu0
        %v7102 = vadd.f32 0.0, %v7101
        %v7103 = vpop.f32.mrb[0].mxu0
        %v7104 = vpop.f32.mrb[0].mxu0
        %v7105 = vpop.f32.mrb[0].mxu0
        %7106 = vdwg.mxu0
        %v7107 = vlaneseq
        %v7108 = vshrl.u32 %v7107, 7
        %v7109 = vsub.s32 6, %v7108
        %v7110 = vrot.slane %v6739, %v7109
        %v7111 = vmul.f32 %v7102, %v7110
        %s7112 = scalar_lea.vmem %s43, 14
        %v7113 = vld [vmem:[%s7112] sm:$0x3]
        %v7115 = vsel %vm5845, %v7113, 0
        %7117 = vmatprep.subr.bf16.mxu0 0
        %7118 = vmatpush1.bf16.msra.mxu0 %v6738
        %7119 = vmatprep.subr.bf16.mxu0 0
        %7120 = vmatpush1.bf16.msra.mxu0 0
        %7121 = vmatprep.subr.bf16.mxu0 0
        %7122 = vmatpush1.bf16.msra.mxu0 0
        %7123 = vmatprep.subr.bf16.mxu0 0
        %7124 = vmatpush1.bf16.msra.mxu0 0
        %7125 = vmatprep.subr.bf16.mxu0 0
        %7126 = vmatpush1.bf16.msra.mxu0 0
        %7127 = vmatprep.subr.bf16.mxu0 0
        %7128 = vmatpush1.bf16.msra.mxu0 0
        %7129 = vmatprep.subr.bf16.mxu0 0
        %7130 = vmatpush1.bf16.msra.mxu0 0
        %7131 = vmatprep.subr.bf16.mxu0 0
        %7132 = vmatpush1.bf16.msra.mxu0 0
        %7133 = vmatprep.subr.bf16.mxu0 0
        %7134 = vmatpush1.bf16.msra.mxu0 0
        %7135 = vmatprep.subr.bf16.mxu0 0
        %7136 = vmatpush1.bf16.msra.mxu0 0
        %7137 = vmatprep.subr.bf16.mxu0 0
        %7138 = vmatpush1.bf16.msra.mxu0 0
        %7139 = vmatprep.subr.bf16.mxu0 0
        %7140 = vmatpush1.bf16.msra.mxu0 0
        %7141 = vmatprep.subr.bf16.mxu0 0
        %7142 = vmatpush1.bf16.msra.mxu0 0
        %7143 = vmatprep.subr.bf16.mxu0 0
        %7144 = vmatpush1.bf16.msra.mxu0 0
        %7145 = vmatprep.subr.bf16.mxu0 0
        %7146 = vmatpush1.bf16.msra.mxu0 0
        %7147 = vmatprep.subr.bf16.mxu0 0
        %7148 = vmatpush1.bf16.msra.mxu0 0
        %7149 = vmatprep.mubr.bf16.mxu0 0
        %7150 = vmatmul.mubr.bf16.gmra.mrb[0].mxu0 %v7115
        %v7151 = vpop.f32.mrb[0].mxu0
        %v7152 = vadd.f32 0.0, %v7151
        %v7153 = vpop.f32.mrb[0].mxu0
        %v7154 = vpop.f32.mrb[0].mxu0
        %v7155 = vpop.f32.mrb[0].mxu0
        %7156 = vdwg.mxu0
        %v7157 = vlaneseq
        %v7158 = vshrl.u32 %v7157, 7
        %v7159 = vsub.s32 7, %v7158
        %v7160 = vrot.slane %v6739, %v7159
        %v7161 = vmul.f32 %v7152, %v7160
        %v7162 = vadd.f32 %v7111, %v7161
        %s7163 = scalar_lea.vmem %s43, 16
        %v7164 = vld [vmem:[%s7163] sm:$0x3]
        %v7166 = vsel %vm5845, %v7164, 0
        %7168 = vmatprep.subr.bf16.mxu0 0
        %7169 = vmatpush1.bf16.msra.mxu0 %v6738
        %7170 = vmatprep.subr.bf16.mxu0 0
        %7171 = vmatpush1.bf16.msra.mxu0 0
        %7172 = vmatprep.subr.bf16.mxu0 0
        %7173 = vmatpush1.bf16.msra.mxu0 0
        %7174 = vmatprep.subr.bf16.mxu0 0
        %7175 = vmatpush1.bf16.msra.mxu0 0
        %7176 = vmatprep.subr.bf16.mxu0 0
        %7177 = vmatpush1.bf16.msra.mxu0 0
        %7178 = vmatprep.subr.bf16.mxu0 0
        %7179 = vmatpush1.bf16.msra.mxu0 0
        %7180 = vmatprep.subr.bf16.mxu0 0
        %7181 = vmatpush1.bf16.msra.mxu0 0
        %7182 = vmatprep.subr.bf16.mxu0 0
        %7183 = vmatpush1.bf16.msra.mxu0 0
        %7184 = vmatprep.subr.bf16.mxu0 0
        %7185 = vmatpush1.bf16.msra.mxu0 0
        %7186 = vmatprep.subr.bf16.mxu0 0
        %7187 = vmatpush1.bf16.msra.mxu0 0
        %7188 = vmatprep.subr.bf16.mxu0 0
        %7189 = vmatpush1.bf16.msra.mxu0 0
        %7190 = vmatprep.subr.bf16.mxu0 0
        %7191 = vmatpush1.bf16.msra.mxu0 0
        %7192 = vmatprep.subr.bf16.mxu0 0
        %7193 = vmatpush1.bf16.msra.mxu0 0
        %7194 = vmatprep.subr.bf16.mxu0 0
        %7195 = vmatpush1.bf16.msra.mxu0 0
        %7196 = vmatprep.subr.bf16.mxu0 0
        %7197 = vmatpush1.bf16.msra.mxu0 0
        %7198 = vmatprep.subr.bf16.mxu0 0
        %7199 = vmatpush1.bf16.msra.mxu0 0
        %7200 = vmatprep.mubr.bf16.mxu0 0
        %7201 = vmatmul.mubr.bf16.gmra.mrb[0].mxu0 %v7166
        %v7202 = vpop.f32.mrb[0].mxu0
        %v7203 = vadd.f32 0.0, %v7202
        %v7204 = vpop.f32.mrb[0].mxu0
        %v7205 = vpop.f32.mrb[0].mxu0
        %v7206 = vpop.f32.mrb[0].mxu0
        %7207 = vdwg.mxu0
        %v7208 = vlaneseq
        %v7209 = vshrl.u32 %v7208, 7
        %v7210 = vsub.s32 0, %v7209
        %v7211 = vrot.slane %v6740, %v7210
        %v7212 = vmul.f32 %v7203, %v7211
        %v7213 = vadd.f32 %v7162, %v7212
        %v7214 = vadd.f32 %v6909, %v7061
        %v7215 = vadd.f32 %v7214, %v7213
        %v7216 = vlaneseq
        %v7217 = vshrl.u32 %v7216, 7
        %v7218 = vsub.s32 0, %v7217
        %v7219 = vrot.slane %v6741, %v7218
        %v7220 = vmul.f32 %v7215, %v7219
        %v7221 = vlaneseq
        %v7222 = vshrl.u32 %v7221, 7
        %v7223 = vsub.s32 1, %v7222
        %v7224 = vrot.slane %v6741, %v7223
        %v7225 = vadd.f32 %v7220, %v7224
        %v7226 = vmax.f32 %v7225, 0.0
        %v7227 = vmin.f32 %v7226, 6.0
        %v7228 = vpack.c.bf16 %v7227, %v7227
        %v7245 = vunpack.c.l.b16 %v6743
        %v7246 = vunpack.c.h.b16 %v6743
        %v7247 = vunpack.c.l.b16 %v6744
        %v7248 = vunpack.c.h.b16 %v6744
        %v7249 = vunpack.c.l.b16 %v6745
        %v7250 = vunpack.c.h.b16 %v6745
        %v7251 = vunpack.c.l.b16 %v6746
        %v7252 = vunpack.c.h.b16 %v6746
        %v7253 = vunpack.c.l.b16 %v6747
        %v7254 = vunpack.c.h.b16 %v6747
        %v7255 = vunpack.c.l.b16 %v6748
        %v7256 = vunpack.c.h.b16 %v6748
        %v7257 = vunpack.c.l.b16 %v6749
        %v7258 = vunpack.c.h.b16 %v6749
        %v7259 = vunpack.c.l.b16 %v6750
        %v7260 = vunpack.c.h.b16 %v6750
        %v7261 = vunpack.c.l.b16 %v6751
        %v7262 = vunpack.c.h.b16 %v6751
        %v7263 = vunpack.c.l.b16 %v6752
        %v7264 = vunpack.c.h.b16 %v6752
        %v7265 = vunpack.c.l.b16 %v6753
        %v7266 = vunpack.c.h.b16 %v6753
        %v7267 = vunpack.c.l.b16 %v6754
        %v7268 = vunpack.c.h.b16 %v6754
        %v7269 = vunpack.c.l.b16 %v6755
        %v7270 = vunpack.c.h.b16 %v6755
        %v7271 = vunpack.c.l.b16 %v6756
        %v7272 = vunpack.c.h.b16 %v6756
        %v7273 = vunpack.c.l.b16 %v6757
        %v7274 = vunpack.c.h.b16 %v6757
        %v7275 = vunpack.c.l.b16 %v6758
        %v7276 = vunpack.c.h.b16 %v6758
        %v7277 = vpack.c.b16 %v7247, %v7245
        %v7278 = vpack.c.b16 %v7248, %v7246
        %v7279 = vpack.c.b16 %v7251, %v7249
        %v7280 = vpack.c.b16 %v7252, %v7250
        %v7281 = vpack.c.b16 %v7255, %v7253
        %v7282 = vpack.c.b16 %v7256, %v7254
        %v7283 = vpack.c.b16 %v7259, %v7257
        %v7284 = vpack.c.b16 %v7260, %v7258
        %v7285 = vpack.c.b16 %v7263, %v7261
        %v7286 = vpack.c.b16 %v7264, %v7262
        %v7287 = vpack.c.b16 %v7267, %v7265
        %v7288 = vpack.c.b16 %v7268, %v7266
        %v7289 = vpack.c.b16 %v7271, %v7269
        %v7290 = vpack.c.b16 %v7272, %v7270
        %v7291 = vpack.c.b16 %v7275, %v7273
        %v7292 = vpack.c.b16 %v7276, %v7274
        %7309 = vmatprep.subr.bf16.mxu0 %v7278
        %7310 = vmatpush1.bf16.msra.mxu0 %v7277
        %7311 = vmatprep.subr.bf16.mxu0 %v7280
        %7312 = vmatpush1.bf16.msra.mxu0 %v7279
        %7313 = vmatprep.subr.bf16.mxu0 %v7282
        %7314 = vmatpush1.bf16.msra.mxu0 %v7281
        %7315 = vmatprep.subr.bf16.mxu0 %v7284
        %7316 = vmatpush1.bf16.msra.mxu0 %v7283
        %7317 = vmatprep.subr.bf16.mxu0 %v7286
        %7318 = vmatpush1.bf16.msra.mxu0 %v7285
        %7319 = vmatprep.subr.bf16.mxu0 %v7288
        %7320 = vmatpush1.bf16.msra.mxu0 %v7287
        %7321 = vmatprep.subr.bf16.mxu0 %v7290
        %7322 = vmatpush1.bf16.msra.mxu0 %v7289
        %7323 = vmatprep.subr.bf16.mxu0 %v7292
        %7324 = vmatpush1.bf16.msra.mxu0 %v7291
        %7325 = vmatprep.subr.bf16.mxu0 0
        %7326 = vmatpush1.bf16.msra.mxu0 0
        %7327 = vmatprep.subr.bf16.mxu0 0
        %7328 = vmatpush1.bf16.msra.mxu0 0
        %7329 = vmatprep.subr.bf16.mxu0 0
        %7330 = vmatpush1.bf16.msra.mxu0 0
        %7331 = vmatprep.subr.bf16.mxu0 0
        %7332 = vmatpush1.bf16.msra.mxu0 0
        %7333 = vmatprep.subr.bf16.mxu0 0
        %7334 = vmatpush1.bf16.msra.mxu0 0
        %7335 = vmatprep.subr.bf16.mxu0 0
        %7336 = vmatpush1.bf16.msra.mxu0 0
        %7337 = vmatprep.subr.bf16.mxu0 0
        %7338 = vmatpush1.bf16.msra.mxu0 0
        %7339 = vmatprep.subr.bf16.mxu0 0
        %7340 = vmatpush1.bf16.msra.mxu0 0
        %7341 = vmatprep.mubr.bf16.mxu0 0
        %7342 = vmatmul.mubr.bf16.gmra.mrb[0].mxu0 %v7228
        %v7343 = vpop.f32.mrb[0].mxu0
        %v7344 = vadd.f32 0.0, %v7343
        %v7345 = vpop.f32.mrb[0].mxu0
        %v7346 = vadd.f32 0.0, %v7345
        %v7347 = vpop.f32.mrb[0].mxu0
        %v7348 = vpop.f32.mrb[0].mxu0
        %7349 = vdwg.mxu0
        %v7351 = vlaneseq
        %v7352 = vshrl.u32 %v7351, 7
        %v7353 = vsub.s32 0, %v7352
        %v7354 = vrot.slane %v6742, %v7353
        %v7355 = vlaneseq
        %v7356 = vshrl.u32 %v7355, 7
        %v7357 = vsub.s32 2, %v7356
        %v7358 = vrot.slane %v6742, %v7357
        %v7361 = vlaneseq
        %v7362 = vshrl.u32 %v7361, 7
        %v7363 = vsub.s32 0, %v7362
        %v7364 = vrot.slane %v7354, %v7363
        %v7365 = vlaneseq
        %v7366 = vshrl.u32 %v7365, 7
        %v7367 = vsub.s32 0, %v7366
        %v7368 = vrot.slane %v7358, %v7367
        %v7369 = vmul.f32 %v7344, %v7364
        %v7370 = vmul.f32 %v7346, %v7368
        %v7371 = vlaneseq
        %v7372 = vshrl.u32 %v7371, 7
        %v7373 = vsub.s32 1, %v7372
        %v7374 = vrot.slane %v6742, %v7373
        %v7375 = vlaneseq
        %v7376 = vshrl.u32 %v7375, 7
        %v7377 = vsub.s32 3, %v7376
        %v7378 = vrot.slane %v6742, %v7377
        %v7381 = vlaneseq
        %v7382 = vshrl.u32 %v7381, 7
        %v7383 = vsub.s32 1, %v7382
        %v7384 = vrot.slane %v7374, %v7383
        %v7385 = vlaneseq
        %v7386 = vshrl.u32 %v7385, 7
        %v7387 = vsub.s32 1, %v7386
        %v7388 = vrot.slane %v7378, %v7387
        %v7389 = vadd.f32 %v7369, %v7384
        %v7390 = vadd.f32 %v7370, %v7388
        %v7391 = vmax.f32 %v7389, 0.0
        %v7392 = vmax.f32 %v7390, 0.0
        %v7393 = vmin.f32 %v7391, 6.0
        %v7394 = vmin.f32 %v7392, 6.0
        %v7395 = vpack.c.bf16 %v7393, %v7393
        %v7396 = vpack.c.bf16 %v7394, %v7394
        %v7397 = vld [vmem:[%s55] sm:$0xff]
        %v7398 = vld [vmem:[%s55 + $0x8] sm:$0xff]
        %v7399 = vld [vmem:[%s55 + $0x10] sm:$0x1]
        %v7400 = vld [vmem:[%s55 + $0x18] sm:$0x1]
        %v7401 = vld [vmem:[%s59] sm:$0xf]
        %v7402 = vld [vmem:[%s61] sm:$0xf]
        %v7403 = vld [vmem:[%s57] sm:$0xff]
        %v7404 = vld [vmem:[%s57 + $0x8] sm:$0xff]
        %v7405 = vld [vmem:[%s57 + $0x10] sm:$0xff]
        %v7406 = vld [vmem:[%s57 + $0x18] sm:$0xff]
        %v7407 = vld [vmem:[%s57 + $0x20] sm:$0xff]
        %v7408 = vld [vmem:[%s57 + $0x28] sm:$0xff]
        %v7409 = vld [vmem:[%s57 + $0x30] sm:$0xff]
        %v7410 = vld [vmem:[%s57 + $0x38] sm:$0xff]
        %v7411 = vld [vmem:[%s57 + $0x40] sm:$0xff]
        %v7412 = vld [vmem:[%s57 + $0x48] sm:$0xff]
        %v7413 = vld [vmem:[%s57 + $0x50] sm:$0xff]
        %v7414 = vld [vmem:[%s57 + $0x58] sm:$0xff]
        %v7415 = vld [vmem:[%s57 + $0x60] sm:$0xff]
        %v7416 = vld [vmem:[%s57 + $0x68] sm:$0xff]
        %v7417 = vld [vmem:[%s57 + $0x70] sm:$0xff]
        %v7418 = vld [vmem:[%s57 + $0x78] sm:$0xff]
        %v7419 = vld [vmem:[%s57 + $0x80] sm:$0xff]
        %v7420 = vld [vmem:[%s57 + $0x88] sm:$0xff]
        %v7421 = vld [vmem:[%s57 + $0x90] sm:$0xff]
        %v7422 = vld [vmem:[%s57 + $0x98] sm:$0xff]
        %v7423 = vld [vmem:[%s57 + $0xa0] sm:$0xff]
        %v7424 = vld [vmem:[%s57 + $0xa8] sm:$0xff]
        %v7425 = vld [vmem:[%s57 + $0xb0] sm:$0xff]
        %v7426 = vld [vmem:[%s57 + $0xb8] sm:$0xff]
        %v7427 = vld [vmem:[%s57 + $0xc0] sm:$0xff]
        %v7428 = vld [vmem:[%s57 + $0xc8] sm:$0xff]
        %v7429 = vld [vmem:[%s57 + $0xd0] sm:$0xff]
        %v7430 = vld [vmem:[%s57 + $0xd8] sm:$0xff]
        %v7431 = vld [vmem:[%s57 + $0xe0] sm:$0xff]
        %v7432 = vld [vmem:[%s57 + $0xe8] sm:$0xff]
        %v7433 = vld [vmem:[%s57 + $0xf0] sm:$0xff]
        %v7434 = vld [vmem:[%s57 + $0xf8] sm:$0xff]
        %v7435 = vld [vmem:[%s53] sm:$0x3]
        %vm7436 = vcmask 31744
        %v7438 = vsel %vm7436, %v7435, 0
        %vm7440 = vcmask 1041408
        %v7442 = vsel %vm7440, %v7395, 0
        %v7445 = vsel %vm7440, %v7396, 0
        %7447 = vmatprep.subr.bf16.mxu0 %v7445
        %7448 = vmatpush1.bf16.msra.mxu0 %v7442
        %7449 = vmatprep.subr.bf16.mxu0 0
        %7450 = vmatpush1.bf16.msra.mxu0 0
        %7451 = vmatprep.subr.bf16.mxu0 0
        %7452 = vmatpush1.bf16.msra.mxu0 0
        %7453 = vmatprep.subr.bf16.mxu0 0
        %7454 = vmatpush1.bf16.msra.mxu0 0
        %7455 = vmatprep.subr.bf16.mxu0 0
        %7456 = vmatpush1.bf16.msra.mxu0 0
        %7457 = vmatprep.subr.bf16.mxu0 0
        %7458 = vmatpush1.bf16.msra.mxu0 0
        %7459 = vmatprep.subr.bf16.mxu0 0
        %7460 = vmatpush1.bf16.msra.mxu0 0
        %7461 = vmatprep.subr.bf16.mxu0 0
        %7462 = vmatpush1.bf16.msra.mxu0 0
        %7463 = vmatprep.subr.bf16.mxu0 0
        %7464 = vmatpush1.bf16.msra.mxu0 0
        %7465 = vmatprep.subr.bf16.mxu0 0
        %7466 = vmatpush1.bf16.msra.mxu0 0
        %7467 = vmatprep.subr.bf16.mxu0 0
        %7468 = vmatpush1.bf16.msra.mxu0 0
        %7469 = vmatprep.subr.bf16.mxu0 0
        %7470 = vmatpush1.bf16.msra.mxu0 0
        %7471 = vmatprep.subr.bf16.mxu0 0
        %7472 = vmatpush1.bf16.msra.mxu0 0
        %7473 = vmatprep.subr.bf16.mxu0 0
        %7474 = vmatpush1.bf16.msra.mxu0 0
        %7475 = vmatprep.subr.bf16.mxu0 0
        %7476 = vmatpush1.bf16.msra.mxu0 0
        %7477 = vmatprep.subr.bf16.mxu0 0
        %7478 = vmatpush1.bf16.msra.mxu0 0
        %7479 = vmatprep.mubr.bf16.mxu0 0
        %7480 = vmatmul.mubr.bf16.gmra.mrb[0].mxu0 %v7438
        %v7481 = vpop.f32.mrb[0].mxu0
        %v7482 = vadd.f32 0.0, %v7481
        %v7483 = vpop.f32.mrb[0].mxu0
        %v7484 = vadd.f32 0.0, %v7483
        %v7485 = vpop.f32.mrb[0].mxu0
        %v7486 = vpop.f32.mrb[0].mxu0
        %7487 = vdwg.mxu0
        %v7488 = vlaneseq
        %v7489 = vshrl.u32 %v7488, 7
        %v7490 = vsub.s32 0, %v7489
        %v7491 = vrot.slane %v7397, %v7490
        %v7492 = vlaneseq
        %v7493 = vshrl.u32 %v7492, 7
        %v7494 = vsub.s32 0, %v7493
        %v7495 = vrot.slane %v7398, %v7494
        %v7496 = vmul.f32 %v7482, %v7491
        %v7497 = vmul.f32 %v7484, %v7495
        %s7498 = scalar_lea.vmem %s53, 2
        %v7499 = vld [vmem:[%s7498] sm:$0x3]
        %v7501 = vsel %vm7436, %v7499, 0
        %7503 = vmatprep.subr.bf16.mxu0 %v7445
        %7504 = vmatpush1.bf16.msra.mxu0 %v7442
        %7505 = vmatprep.subr.bf16.mxu0 0
        %7506 = vmatpush1.bf16.msra.mxu0 0
        %7507 = vmatprep.subr.bf16.mxu0 0
        %7508 = vmatpush1.bf16.msra.mxu0 0
        %7509 = vmatprep.subr.bf16.mxu0 0
        %7510 = vmatpush1.bf16.msra.mxu0 0
        %7511 = vmatprep.subr.bf16.mxu0 0
        %7512 = vmatpush1.bf16.msra.mxu0 0
        %7513 = vmatprep.subr.bf16.mxu0 0
        %7514 = vmatpush1.bf16.msra.mxu0 0
        %7515 = vmatprep.subr.bf16.mxu0 0
        %7516 = vmatpush1.bf16.msra.mxu0 0
        %7517 = vmatprep.subr.bf16.mxu0 0
        %7518 = vmatpush1.bf16.msra.mxu0 0
        %7519 = vmatprep.subr.bf16.mxu0 0
        %7520 = vmatpush1.bf16.msra.mxu0 0
        %7521 = vmatprep.subr.bf16.mxu0 0
        %7522 = vmatpush1.bf16.msra.mxu0 0
        %7523 = vmatprep.subr.bf16.mxu0 0
        %7524 = vmatpush1.bf16.msra.mxu0 0
        %7525 = vmatprep.subr.bf16.mxu0 0
        %7526 = vmatpush1.bf16.msra.mxu0 0
        %7527 = vmatprep.subr.bf16.mxu0 0
        %7528 = vmatpush1.bf16.msra.mxu0 0
        %7529 = vmatprep.subr.bf16.mxu0 0
        %7530 = vmatpush1.bf16.msra.mxu0 0
        %7531 = vmatprep.subr.bf16.mxu0 0
        %7532 = vmatpush1.bf16.msra.mxu0 0
        %7533 = vmatprep.subr.bf16.mxu0 0
        %7534 = vmatpush1.bf16.msra.mxu0 0
        %7535 = vmatprep.mubr.bf16.mxu0 0
        %7536 = vmatmul.mubr.bf16.gmra.mrb[0].mxu0 %v7501
        %v7537 = vpop.f32.mrb[0].mxu0
        %v7538 = vadd.f32 0.0, %v7537
        %v7539 = vpop.f32.mrb[0].mxu0
        %v7540 = vadd.f32 0.0, %v7539
        %v7541 = vpop.f32.mrb[0].mxu0
        %v7542 = vpop.f32.mrb[0].mxu0
        %7543 = vdwg.mxu0
        %v7544 = vlaneseq
        %v7545 = vshrl.u32 %v7544, 7
        %v7546 = vsub.s32 1, %v7545
        %v7547 = vrot.slane %v7397, %v7546
        %v7548 = vlaneseq
        %v7549 = vshrl.u32 %v7548, 7
        %v7550 = vsub.s32 1, %v7549
        %v7551 = vrot.slane %v7398, %v7550
        %v7552 = vmul.f32 %v7538, %v7547
        %v7553 = vmul.f32 %v7540, %v7551
        %v7554 = vadd.f32 %v7496, %v7552
        %v7555 = vadd.f32 %v7497, %v7553
        %s7556 = scalar_lea.vmem %s53, 4
        %v7557 = vld [vmem:[%s7556] sm:$0x3]
        %v7559 = vsel %vm7436, %v7557, 0
        %7561 = vmatprep.subr.bf16.mxu0 %v7445
        %7562 = vmatpush1.bf16.msra.mxu0 %v7442
        %7563 = vmatprep.subr.bf16.mxu0 0
        %7564 = vmatpush1.bf16.msra.mxu0 0
        %7565 = vmatprep.subr.bf16.mxu0 0
        %7566 = vmatpush1.bf16.msra.mxu0 0
        %7567 = vmatprep.subr.bf16.mxu0 0
        %7568 = vmatpush1.bf16.msra.mxu0 0
        %7569 = vmatprep.subr.bf16.mxu0 0
        %7570 = vmatpush1.bf16.msra.mxu0 0
        %7571 = vmatprep.subr.bf16.mxu0 0
        %7572 = vmatpush1.bf16.msra.mxu0 0
        %7573 = vmatprep.subr.bf16.mxu0 0
        %7574 = vmatpush1.bf16.msra.mxu0 0
        %7575 = vmatprep.subr.bf16.mxu0 0
        %7576 = vmatpush1.bf16.msra.mxu0 0
        %7577 = vmatprep.subr.bf16.mxu0 0
        %7578 = vmatpush1.bf16.msra.mxu0 0
        %7579 = vmatprep.subr.bf16.mxu0 0
        %7580 = vmatpush1.bf16.msra.mxu0 0
        %7581 = vmatprep.subr.bf16.mxu0 0
        %7582 = vmatpush1.bf16.msra.mxu0 0
        %7583 = vmatprep.subr.bf16.mxu0 0
        %7584 = vmatpush1.bf16.msra.mxu0 0
        %7585 = vmatprep.subr.bf16.mxu0 0
        %7586 = vmatpush1.bf16.msra.mxu0 0
        %7587 = vmatprep.subr.bf16.mxu0 0
        %7588 = vmatpush1.bf16.msra.mxu0 0
        %7589 = vmatprep.subr.bf16.mxu0 0
        %7590 = vmatpush1.bf16.msra.mxu0 0
        %7591 = vmatprep.subr.bf16.mxu0 0
        %7592 = vmatpush1.bf16.msra.mxu0 0
        %7593 = vmatprep.mubr.bf16.mxu0 0
        %7594 = vmatmul.mubr.bf16.gmra.mrb[0].mxu0 %v7559
        %v7595 = vpop.f32.mrb[0].mxu0
        %v7596 = vadd.f32 0.0, %v7595
        %v7597 = vpop.f32.mrb[0].mxu0
        %v7598 = vadd.f32 0.0, %v7597
        %v7599 = vpop.f32.mrb[0].mxu0
        %v7600 = vpop.f32.mrb[0].mxu0
        %7601 = vdwg.mxu0
        %v7602 = vlaneseq
        %v7603 = vshrl.u32 %v7602, 7
        %v7604 = vsub.s32 2, %v7603
        %v7605 = vrot.slane %v7397, %v7604
        %v7606 = vlaneseq
        %v7607 = vshrl.u32 %v7606, 7
        %v7608 = vsub.s32 2, %v7607
        %v7609 = vrot.slane %v7398, %v7608
        %v7610 = vmul.f32 %v7596, %v7605
        %v7611 = vmul.f32 %v7598, %v7609
        %v7612 = vadd.f32 %v7554, %v7610
        %v7613 = vadd.f32 %v7555, %v7611
        %s7614 = scalar_lea.vmem %s53, 6
        %v7615 = vld [vmem:[%s7614] sm:$0x3]
        %v7617 = vsel %vm7436, %v7615, 0
        %7619 = vmatprep.subr.bf16.mxu0 %v7445
        %7620 = vmatpush1.bf16.msra.mxu0 %v7442
        %7621 = vmatprep.subr.bf16.mxu0 0
        %7622 = vmatpush1.bf16.msra.mxu0 0
        %7623 = vmatprep.subr.bf16.mxu0 0
        %7624 = vmatpush1.bf16.msra.mxu0 0
        %7625 = vmatprep.subr.bf16.mxu0 0
        %7626 = vmatpush1.bf16.msra.mxu0 0
        %7627 = vmatprep.subr.bf16.mxu0 0
        %7628 = vmatpush1.bf16.msra.mxu0 0
        %7629 = vmatprep.subr.bf16.mxu0 0
        %7630 = vmatpush1.bf16.msra.mxu0 0
        %7631 = vmatprep.subr.bf16.mxu0 0
        %7632 = vmatpush1.bf16.msra.mxu0 0
        %7633 = vmatprep.subr.bf16.mxu0 0
        %7634 = vmatpush1.bf16.msra.mxu0 0
        %7635 = vmatprep.subr.bf16.mxu0 0
        %7636 = vmatpush1.bf16.msra.mxu0 0
        %7637 = vmatprep.subr.bf16.mxu0 0
        %7638 = vmatpush1.bf16.msra.mxu0 0
        %7639 = vmatprep.subr.bf16.mxu0 0
        %7640 = vmatpush1.bf16.msra.mxu0 0
        %7641 = vmatprep.subr.bf16.mxu0 0
        %7642 = vmatpush1.bf16.msra.mxu0 0
        %7643 = vmatprep.subr.bf16.mxu0 0
        %7644 = vmatpush1.bf16.msra.mxu0 0
        %7645 = vmatprep.subr.bf16.mxu0 0
        %7646 = vmatpush1.bf16.msra.mxu0 0
        %7647 = vmatprep.subr.bf16.mxu0 0
        %7648 = vmatpush1.bf16.msra.mxu0 0
        %7649 = vmatprep.subr.bf16.mxu0 0
        %7650 = vmatpush1.bf16.msra.mxu0 0
        %7651 = vmatprep.mubr.bf16.mxu0 0
        %7652 = vmatmul.mubr.bf16.gmra.mrb[0].mxu0 %v7617
        %v7653 = vpop.f32.mrb[0].mxu0
        %v7654 = vadd.f32 0.0, %v7653
        %v7655 = vpop.f32.mrb[0].mxu0
        %v7656 = vadd.f32 0.0, %v7655
        %v7657 = vpop.f32.mrb[0].mxu0
        %v7658 = vpop.f32.mrb[0].mxu0
        %7659 = vdwg.mxu0
        %v7660 = vlaneseq
        %v7661 = vshrl.u32 %v7660, 7
        %v7662 = vsub.s32 3, %v7661
        %v7663 = vrot.slane %v7397, %v7662
        %v7664 = vlaneseq
        %v7665 = vshrl.u32 %v7664, 7
        %v7666 = vsub.s32 3, %v7665
        %v7667 = vrot.slane %v7398, %v7666
        %v7668 = vmul.f32 %v7654, %v7663
        %v7669 = vmul.f32 %v7656, %v7667
        %s7670 = scalar_lea.vmem %s53, 8
        %v7671 = vld [vmem:[%s7670] sm:$0x3]
        %v7673 = vsel %vm7436, %v7671, 0
        %7675 = vmatprep.subr.bf16.mxu0 %v7445
        %7676 = vmatpush1.bf16.msra.mxu0 %v7442
        %7677 = vmatprep.subr.bf16.mxu0 0
        %7678 = vmatpush1.bf16.msra.mxu0 0
        %7679 = vmatprep.subr.bf16.mxu0 0
        %7680 = vmatpush1.bf16.msra.mxu0 0
        %7681 = vmatprep.subr.bf16.mxu0 0
        %7682 = vmatpush1.bf16.msra.mxu0 0
        %7683 = vmatprep.subr.bf16.mxu0 0
        %7684 = vmatpush1.bf16.msra.mxu0 0
        %7685 = vmatprep.subr.bf16.mxu0 0
        %7686 = vmatpush1.bf16.msra.mxu0 0
        %7687 = vmatprep.subr.bf16.mxu0 0
        %7688 = vmatpush1.bf16.msra.mxu0 0
        %7689 = vmatprep.subr.bf16.mxu0 0
        %7690 = vmatpush1.bf16.msra.mxu0 0
        %7691 = vmatprep.subr.bf16.mxu0 0
        %7692 = vmatpush1.bf16.msra.mxu0 0
        %7693 = vmatprep.subr.bf16.mxu0 0
        %7694 = vmatpush1.bf16.msra.mxu0 0
        %7695 = vmatprep.subr.bf16.mxu0 0
        %7696 = vmatpush1.bf16.msra.mxu0 0
        %7697 = vmatprep.subr.bf16.mxu0 0
        %7698 = vmatpush1.bf16.msra.mxu0 0
        %7699 = vmatprep.subr.bf16.mxu0 0
        %7700 = vmatpush1.bf16.msra.mxu0 0
        %7701 = vmatprep.subr.bf16.mxu0 0
        %7702 = vmatpush1.bf16.msra.mxu0 0
        %7703 = vmatprep.subr.bf16.mxu0 0
        %7704 = vmatpush1.bf16.msra.mxu0 0
        %7705 = vmatprep.subr.bf16.mxu0 0
        %7706 = vmatpush1.bf16.msra.mxu0 0
        %7707 = vmatprep.mubr.bf16.mxu0 0
        %7708 = vmatmul.mubr.bf16.gmra.mrb[0].mxu0 %v7673
        %v7709 = vpop.f32.mrb[0].mxu0
        %v7710 = vadd.f32 0.0, %v7709
        %v7711 = vpop.f32.mrb[0].mxu0
        %v7712 = vadd.f32 0.0, %v7711
        %v7713 = vpop.f32.mrb[0].mxu0
        %v7714 = vpop.f32.mrb[0].mxu0
        %7715 = vdwg.mxu0
        %v7716 = vlaneseq
        %v7717 = vshrl.u32 %v7716, 7
        %v7718 = vsub.s32 4, %v7717
        %v7719 = vrot.slane %v7397, %v7718
        %v7720 = vlaneseq
        %v7721 = vshrl.u32 %v7720, 7
        %v7722 = vsub.s32 4, %v7721
        %v7723 = vrot.slane %v7398, %v7722
        %v7724 = vmul.f32 %v7710, %v7719
        %v7725 = vmul.f32 %v7712, %v7723
        %v7726 = vadd.f32 %v7668, %v7724
        %v7727 = vadd.f32 %v7669, %v7725
        %s7728 = scalar_lea.vmem %s53, 10
        %v7729 = vld [vmem:[%s7728] sm:$0x3]
        %v7731 = vsel %vm7436, %v7729, 0
        %7733 = vmatprep.subr.bf16.mxu0 %v7445
        %7734 = vmatpush1.bf16.msra.mxu0 %v7442
        %7735 = vmatprep.subr.bf16.mxu0 0
        %7736 = vmatpush1.bf16.msra.mxu0 0
        %7737 = vmatprep.subr.bf16.mxu0 0
        %7738 = vmatpush1.bf16.msra.mxu0 0
        %7739 = vmatprep.subr.bf16.mxu0 0
        %7740 = vmatpush1.bf16.msra.mxu0 0
        %7741 = vmatprep.subr.bf16.mxu0 0
        %7742 = vmatpush1.bf16.msra.mxu0 0
        %7743 = vmatprep.subr.bf16.mxu0 0
        %7744 = vmatpush1.bf16.msra.mxu0 0
        %7745 = vmatprep.subr.bf16.mxu0 0
        %7746 = vmatpush1.bf16.msra.mxu0 0
        %7747 = vmatprep.subr.bf16.mxu0 0
        %7748 = vmatpush1.bf16.msra.mxu0 0
        %7749 = vmatprep.subr.bf16.mxu0 0
        %7750 = vmatpush1.bf16.msra.mxu0 0
        %7751 = vmatprep.subr.bf16.mxu0 0
        %7752 = vmatpush1.bf16.msra.mxu0 0
        %7753 = vmatprep.subr.bf16.mxu0 0
        %7754 = vmatpush1.bf16.msra.mxu0 0
        %7755 = vmatprep.subr.bf16.mxu0 0
        %7756 = vmatpush1.bf16.msra.mxu0 0
        %7757 = vmatprep.subr.bf16.mxu0 0
        %7758 = vmatpush1.bf16.msra.mxu0 0
        %7759 = vmatprep.subr.bf16.mxu0 0
        %7760 = vmatpush1.bf16.msra.mxu0 0
        %7761 = vmatprep.subr.bf16.mxu0 0
        %7762 = vmatpush1.bf16.msra.mxu0 0
        %7763 = vmatprep.subr.bf16.mxu0 0
        %7764 = vmatpush1.bf16.msra.mxu0 0
        %7765 = vmatprep.mubr.bf16.mxu0 0
        %7766 = vmatmul.mubr.bf16.gmra.mrb[0].mxu0 %v7731
        %v7767 = vpop.f32.mrb[0].mxu0
        %v7768 = vadd.f32 0.0, %v7767
        %v7769 = vpop.f32.mrb[0].mxu0
        %v7770 = vadd.f32 0.0, %v7769
        %v7771 = vpop.f32.mrb[0].mxu0
        %v7772 = vpop.f32.mrb[0].mxu0
        %7773 = vdwg.mxu0
        %v7774 = vlaneseq
        %v7775 = vshrl.u32 %v7774, 7
        %v7776 = vsub.s32 5, %v7775
        %v7777 = vrot.slane %v7397, %v7776
        %v7778 = vlaneseq
        %v7779 = vshrl.u32 %v7778, 7
        %v7780 = vsub.s32 5, %v7779
        %v7781 = vrot.slane %v7398, %v7780
        %v7782 = vmul.f32 %v7768, %v7777
        %v7783 = vmul.f32 %v7770, %v7781
        %v7784 = vadd.f32 %v7726, %v7782
        %v7785 = vadd.f32 %v7727, %v7783
        %s7786 = scalar_lea.vmem %s53, 12
        %v7787 = vld [vmem:[%s7786] sm:$0x3]
        %v7789 = vsel %vm7436, %v7787, 0
        %7791 = vmatprep.subr.bf16.mxu0 %v7445
        %7792 = vmatpush1.bf16.msra.mxu0 %v7442
        %7793 = vmatprep.subr.bf16.mxu0 0
        %7794 = vmatpush1.bf16.msra.mxu0 0
        %7795 = vmatprep.subr.bf16.mxu0 0
        %7796 = vmatpush1.bf16.msra.mxu0 0
        %7797 = vmatprep.subr.bf16.mxu0 0
        %7798 = vmatpush1.bf16.msra.mxu0 0
        %7799 = vmatprep.subr.bf16.mxu0 0
        %7800 = vmatpush1.bf16.msra.mxu0 0
        %7801 = vmatprep.subr.bf16.mxu0 0
        %7802 = vmatpush1.bf16.msra.mxu0 0
        %7803 = vmatprep.subr.bf16.mxu0 0
        %7804 = vmatpush1.bf16.msra.mxu0 0
        %7805 = vmatprep.subr.bf16.mxu0 0
        %7806 = vmatpush1.bf16.msra.mxu0 0
        %7807 = vmatprep.subr.bf16.mxu0 0
        %7808 = vmatpush1.bf16.msra.mxu0 0
        %7809 = vmatprep.subr.bf16.mxu0 0
        %7810 = vmatpush1.bf16.msra.mxu0 0
        %7811 = vmatprep.subr.bf16.mxu0 0
        %7812 = vmatpush1.bf16.msra.mxu0 0
        %7813 = vmatprep.subr.bf16.mxu0 0
        %7814 = vmatpush1.bf16.msra.mxu0 0
        %7815 = vmatprep.subr.bf16.mxu0 0
        %7816 = vmatpush1.bf16.msra.mxu0 0
        %7817 = vmatprep.subr.bf16.mxu0 0
        %7818 = vmatpush1.bf16.msra.mxu0 0
        %7819 = vmatprep.subr.bf16.mxu0 0
        %7820 = vmatpush1.bf16.msra.mxu0 0
        %7821 = vmatprep.subr.bf16.mxu0 0
        %7822 = vmatpush1.bf16.msra.mxu0 0
        %7823 = vmatprep.mubr.bf16.mxu0 0
        %7824 = vmatmul.mubr.bf16.gmra.mrb[0].mxu0 %v7789
        %v7825 = vpop.f32.mrb[0].mxu0
        %v7826 = vadd.f32 0.0, %v7825
        %v7827 = vpop.f32.mrb[0].mxu0
        %v7828 = vadd.f32 0.0, %v7827
        %v7829 = vpop.f32.mrb[0].mxu0
        %v7830 = vpop.f32.mrb[0].mxu0
        %7831 = vdwg.mxu0
        %v7832 = vlaneseq
        %v7833 = vshrl.u32 %v7832, 7
        %v7834 = vsub.s32 6, %v7833
        %v7835 = vrot.slane %v7397, %v7834
        %v7836 = vlaneseq
        %v7837 = vshrl.u32 %v7836, 7
        %v7838 = vsub.s32 6, %v7837
        %v7839 = vrot.slane %v7398, %v7838
        %v7840 = vmul.f32 %v7826, %v7835
        %v7841 = vmul.f32 %v7828, %v7839
        %s7842 = scalar_lea.vmem %s53, 14
        %v7843 = vld [vmem:[%s7842] sm:$0x3]
        %v7845 = vsel %vm7436, %v7843, 0
        %7847 = vmatprep.subr.bf16.mxu0 %v7445
        %7848 = vmatpush1.bf16.msra.mxu0 %v7442
        %7849 = vmatprep.subr.bf16.mxu0 0
        %7850 = vmatpush1.bf16.msra.mxu0 0
        %7851 = vmatprep.subr.bf16.mxu0 0
        %7852 = vmatpush1.bf16.msra.mxu0 0
        %7853 = vmatprep.subr.bf16.mxu0 0
        %7854 = vmatpush1.bf16.msra.mxu0 0
        %7855 = vmatprep.subr.bf16.mxu0 0
        %7856 = vmatpush1.bf16.msra.mxu0 0
        %7857 = vmatprep.subr.bf16.mxu0 0
        %7858 = vmatpush1.bf16.msra.mxu0 0
        %7859 = vmatprep.subr.bf16.mxu0 0
        %7860 = vmatpush1.bf16.msra.mxu0 0
        %7861 = vmatprep.subr.bf16.mxu0 0
        %7862 = vmatpush1.bf16.msra.mxu0 0
        %7863 = vmatprep.subr.bf16.mxu0 0
        %7864 = vmatpush1.bf16.msra.mxu0 0
        %7865 = vmatprep.subr.bf16.mxu0 0
        %7866 = vmatpush1.bf16.msra.mxu0 0
        %7867 = vmatprep.subr.bf16.mxu0 0
        %7868 = vmatpush1.bf16.msra.mxu0 0
        %7869 = vmatprep.subr.bf16.mxu0 0
        %7870 = vmatpush1.bf16.msra.mxu0 0
        %7871 = vmatprep.subr.bf16.mxu0 0
        %7872 = vmatpush1.bf16.msra.mxu0 0
        %7873 = vmatprep.subr.bf16.mxu0 0
        %7874 = vmatpush1.bf16.msra.mxu0 0
        %7875 = vmatprep.subr.bf16.mxu0 0
        %7876 = vmatpush1.bf16.msra.mxu0 0
        %7877 = vmatprep.subr.bf16.mxu0 0
        %7878 = vmatpush1.bf16.msra.mxu0 0
        %7879 = vmatprep.mubr.bf16.mxu0 0
        %7880 = vmatmul.mubr.bf16.gmra.mrb[0].mxu0 %v7845
        %v7881 = vpop.f32.mrb[0].mxu0
        %v7882 = vadd.f32 0.0, %v7881
        %v7883 = vpop.f32.mrb[0].mxu0
        %v7884 = vadd.f32 0.0, %v7883
        %v7885 = vpop.f32.mrb[0].mxu0
        %v7886 = vpop.f32.mrb[0].mxu0
        %7887 = vdwg.mxu0
        %v7888 = vlaneseq
        %v7889 = vshrl.u32 %v7888, 7
        %v7890 = vsub.s32 7, %v7889
        %v7891 = vrot.slane %v7397, %v7890
        %v7892 = vlaneseq
        %v7893 = vshrl.u32 %v7892, 7
        %v7894 = vsub.s32 7, %v7893
        %v7895 = vrot.slane %v7398, %v7894
        %v7896 = vmul.f32 %v7882, %v7891
        %v7897 = vmul.f32 %v7884, %v7895
        %v7898 = vadd.f32 %v7840, %v7896
        %v7899 = vadd.f32 %v7841, %v7897
        %s7900 = scalar_lea.vmem %s53, 16
        %v7901 = vld [vmem:[%s7900] sm:$0x3]
        %v7903 = vsel %vm7436, %v7901, 0
        %7905 = vmatprep.subr.bf16.mxu0 %v7445
        %7906 = vmatpush1.bf16.msra.mxu0 %v7442
        %7907 = vmatprep.subr.bf16.mxu0 0
        %7908 = vmatpush1.bf16.msra.mxu0 0
        %7909 = vmatprep.subr.bf16.mxu0 0
        %7910 = vmatpush1.bf16.msra.mxu0 0
        %7911 = vmatprep.subr.bf16.mxu0 0
        %7912 = vmatpush1.bf16.msra.mxu0 0
        %7913 = vmatprep.subr.bf16.mxu0 0
        %7914 = vmatpush1.bf16.msra.mxu0 0
        %7915 = vmatprep.subr.bf16.mxu0 0
        %7916 = vmatpush1.bf16.msra.mxu0 0
        %7917 = vmatprep.subr.bf16.mxu0 0
        %7918 = vmatpush1.bf16.msra.mxu0 0
        %7919 = vmatprep.subr.bf16.mxu0 0
        %7920 = vmatpush1.bf16.msra.mxu0 0
        %7921 = vmatprep.subr.bf16.mxu0 0
        %7922 = vmatpush1.bf16.msra.mxu0 0
        %7923 = vmatprep.subr.bf16.mxu0 0
        %7924 = vmatpush1.bf16.msra.mxu0 0
        %7925 = vmatprep.subr.bf16.mxu0 0
        %7926 = vmatpush1.bf16.msra.mxu0 0
        %7927 = vmatprep.subr.bf16.mxu0 0
        %7928 = vmatpush1.bf16.msra.mxu0 0
        %7929 = vmatprep.subr.bf16.mxu0 0
        %7930 = vmatpush1.bf16.msra.mxu0 0
        %7931 = vmatprep.subr.bf16.mxu0 0
        %7932 = vmatpush1.bf16.msra.mxu0 0
        %7933 = vmatprep.subr.bf16.mxu0 0
        %7934 = vmatpush1.bf16.msra.mxu0 0
        %7935 = vmatprep.subr.bf16.mxu0 0
        %7936 = vmatpush1.bf16.msra.mxu0 0
        %7937 = vmatprep.mubr.bf16.mxu0 0
        %7938 = vmatmul.mubr.bf16.gmra.mrb[0].mxu0 %v7903
        %v7939 = vpop.f32.mrb[0].mxu0
        %v7940 = vadd.f32 0.0, %v7939
        %v7941 = vpop.f32.mrb[0].mxu0
        %v7942 = vadd.f32 0.0, %v7941
        %v7943 = vpop.f32.mrb[0].mxu0
        %v7944 = vpop.f32.mrb[0].mxu0
        %7945 = vdwg.mxu0
        %v7946 = vlaneseq
        %v7947 = vshrl.u32 %v7946, 7
        %v7948 = vsub.s32 0, %v7947
        %v7949 = vrot.slane %v7399, %v7948
        %v7950 = vlaneseq
        %v7951 = vshrl.u32 %v7950, 7
        %v7952 = vsub.s32 0, %v7951
        %v7953 = vrot.slane %v7400, %v7952
        %v7954 = vmul.f32 %v7940, %v7949
        %v7955 = vmul.f32 %v7942, %v7953
        %v7956 = vadd.f32 %v7898, %v7954
        %v7957 = vadd.f32 %v7899, %v7955
        %v7958 = vadd.f32 %v7612, %v7784
        %v7959 = vadd.f32 %v7613, %v7785
        %v7960 = vadd.f32 %v7958, %v7956
        %v7961 = vadd.f32 %v7959, %v7957
        %v7963 = vlaneseq
        %v7964 = vshrl.u32 %v7963, 7
        %v7965 = vsub.s32 0, %v7964
        %v7966 = vrot.slane %v7401, %v7965
        %v7967 = vlaneseq
        %v7968 = vshrl.u32 %v7967, 7
        %v7969 = vsub.s32 2, %v7968
        %v7970 = vrot.slane %v7401, %v7969
        %v7973 = vlaneseq
        %v7974 = vshrl.u32 %v7973, 7
        %v7975 = vsub.s32 0, %v7974
        %v7976 = vrot.slane %v7966, %v7975
        %v7977 = vlaneseq
        %v7978 = vshrl.u32 %v7977, 7
        %v7979 = vsub.s32 0, %v7978
        %v7980 = vrot.slane %v7970, %v7979
        %v7981 = vmul.f32 %v7960, %v7976
        %v7982 = vmul.f32 %v7961, %v7980
        %v7983 = vlaneseq
        %v7984 = vshrl.u32 %v7983, 7
        %v7985 = vsub.s32 1, %v7984
        %v7986 = vrot.slane %v7401, %v7985
        %v7987 = vlaneseq
        %v7988 = vshrl.u32 %v7987, 7
        %v7989 = vsub.s32 3, %v7988
        %v7990 = vrot.slane %v7401, %v7989
        %v7993 = vlaneseq
        %v7994 = vshrl.u32 %v7993, 7
        %v7995 = vsub.s32 1, %v7994
        %v7996 = vrot.slane %v7986, %v7995
        %v7997 = vlaneseq
        %v7998 = vshrl.u32 %v7997, 7
        %v7999 = vsub.s32 1, %v7998
        %v8000 = vrot.slane %v7990, %v7999
        %v8001 = vadd.f32 %v7981, %v7996
        %v8002 = vadd.f32 %v7982, %v8000
        %v8003 = vmax.f32 %v8001, 0.0
        %v8004 = vmax.f32 %v8002, 0.0
        %v8005 = vmin.f32 %v8003, 6.0
        %v8006 = vmin.f32 %v8004, 6.0
        %v8007 = vpack.c.bf16 %v8005, %v8005
        %v8008 = vpack.c.bf16 %v8006, %v8006
        %v8041 = vunpack.c.l.b16 %v7403
        %v8042 = vunpack.c.h.b16 %v7403
        %v8043 = vunpack.c.l.b16 %v7404
        %v8044 = vunpack.c.h.b16 %v7404
        %v8045 = vunpack.c.l.b16 %v7405
        %v8046 = vunpack.c.h.b16 %v7405
        %v8047 = vunpack.c.l.b16 %v7406
        %v8048 = vunpack.c.h.b16 %v7406
        %v8049 = vunpack.c.l.b16 %v7407
        %v8050 = vunpack.c.h.b16 %v7407
        %v8051 = vunpack.c.l.b16 %v7408
        %v8052 = vunpack.c.h.b16 %v7408
        %v8053 = vunpack.c.l.b16 %v7409
        %v8054 = vunpack.c.h.b16 %v7409
        %v8055 = vunpack.c.l.b16 %v7410
        %v8056 = vunpack.c.h.b16 %v7410
        %v8057 = vunpack.c.l.b16 %v7411
        %v8058 = vunpack.c.h.b16 %v7411
        %v8059 = vunpack.c.l.b16 %v7412
        %v8060 = vunpack.c.h.b16 %v7412
        %v8061 = vunpack.c.l.b16 %v7413
        %v8062 = vunpack.c.h.b16 %v7413
        %v8063 = vunpack.c.l.b16 %v7414
        %v8064 = vunpack.c.h.b16 %v7414
        %v8065 = vunpack.c.l.b16 %v7415
        %v8066 = vunpack.c.h.b16 %v7415
        %v8067 = vunpack.c.l.b16 %v7416
        %v8068 = vunpack.c.h.b16 %v7416
        %v8069 = vunpack.c.l.b16 %v7417
        %v8070 = vunpack.c.h.b16 %v7417
        %v8071 = vunpack.c.l.b16 %v7418
        %v8072 = vunpack.c.h.b16 %v7418
        %v8073 = vunpack.c.l.b16 %v7419
        %v8074 = vunpack.c.h.b16 %v7419
        %v8075 = vunpack.c.l.b16 %v7420
        %v8076 = vunpack.c.h.b16 %v7420
        %v8077 = vunpack.c.l.b16 %v7421
        %v8078 = vunpack.c.h.b16 %v7421
        %v8079 = vunpack.c.l.b16 %v7422
        %v8080 = vunpack.c.h.b16 %v7422
        %v8081 = vunpack.c.l.b16 %v7423
        %v8082 = vunpack.c.h.b16 %v7423
        %v8083 = vunpack.c.l.b16 %v7424
        %v8084 = vunpack.c.h.b16 %v7424
        %v8085 = vunpack.c.l.b16 %v7425
        %v8086 = vunpack.c.h.b16 %v7425
        %v8087 = vunpack.c.l.b16 %v7426
        %v8088 = vunpack.c.h.b16 %v7426
        %v8089 = vunpack.c.l.b16 %v7427
        %v8090 = vunpack.c.h.b16 %v7427
        %v8091 = vunpack.c.l.b16 %v7428
        %v8092 = vunpack.c.h.b16 %v7428
        %v8093 = vunpack.c.l.b16 %v7429
        %v8094 = vunpack.c.h.b16 %v7429
        %v8095 = vunpack.c.l.b16 %v7430
        %v8096 = vunpack.c.h.b16 %v7430
        %v8097 = vunpack.c.l.b16 %v7431
        %v8098 = vunpack.c.h.b16 %v7431
        %v8099 = vunpack.c.l.b16 %v7432
        %v8100 = vunpack.c.h.b16 %v7432
        %v8101 = vunpack.c.l.b16 %v7433
        %v8102 = vunpack.c.h.b16 %v7433
        %v8103 = vunpack.c.l.b16 %v7434
        %v8104 = vunpack.c.h.b16 %v7434
        %v8105 = vpack.c.b16 %v8043, %v8041
        %v8106 = vpack.c.b16 %v8044, %v8042
        %v8107 = vpack.c.b16 %v8047, %v8045
        %v8108 = vpack.c.b16 %v8048, %v8046
        %v8109 = vpack.c.b16 %v8051, %v8049
        %v8110 = vpack.c.b16 %v8052, %v8050
        %v8111 = vpack.c.b16 %v8055, %v8053
        %v8112 = vpack.c.b16 %v8056, %v8054
        %v8113 = vpack.c.b16 %v8059, %v8057
        %v8114 = vpack.c.b16 %v8060, %v8058
        %v8115 = vpack.c.b16 %v8063, %v8061
        %v8116 = vpack.c.b16 %v8064, %v8062
        %v8117 = vpack.c.b16 %v8067, %v8065
        %v8118 = vpack.c.b16 %v8068, %v8066
        %v8119 = vpack.c.b16 %v8071, %v8069
        %v8120 = vpack.c.b16 %v8072, %v8070
        %v8121 = vpack.c.b16 %v8075, %v8073
        %v8122 = vpack.c.b16 %v8076, %v8074
        %v8123 = vpack.c.b16 %v8079, %v8077
        %v8124 = vpack.c.b16 %v8080, %v8078
        %v8125 = vpack.c.b16 %v8083, %v8081
        %v8126 = vpack.c.b16 %v8084, %v8082
        %v8127 = vpack.c.b16 %v8087, %v8085
        %v8128 = vpack.c.b16 %v8088, %v8086
        %v8129 = vpack.c.b16 %v8091, %v8089
        %v8130 = vpack.c.b16 %v8092, %v8090
        %v8131 = vpack.c.b16 %v8095, %v8093
        %v8132 = vpack.c.b16 %v8096, %v8094
        %v8133 = vpack.c.b16 %v8099, %v8097
        %v8134 = vpack.c.b16 %v8100, %v8098
        %v8135 = vpack.c.b16 %v8103, %v8101
        %v8136 = vpack.c.b16 %v8104, %v8102
        %8169 = vmatprep.subr.bf16.mxu0 %v8106
        %8170 = vmatpush1.bf16.msra.mxu0 %v8105
        %8171 = vmatprep.subr.bf16.mxu0 %v8108
        %8172 = vmatpush1.bf16.msra.mxu0 %v8107
        %8173 = vmatprep.subr.bf16.mxu0 %v8110
        %8174 = vmatpush1.bf16.msra.mxu0 %v8109
        %8175 = vmatprep.subr.bf16.mxu0 %v8112
        %8176 = vmatpush1.bf16.msra.mxu0 %v8111
        %8177 = vmatprep.subr.bf16.mxu0 %v8114
        %8178 = vmatpush1.bf16.msra.mxu0 %v8113
        %8179 = vmatprep.subr.bf16.mxu0 %v8116
        %8180 = vmatpush1.bf16.msra.mxu0 %v8115
        %8181 = vmatprep.subr.bf16.mxu0 %v8118
        %8182 = vmatpush1.bf16.msra.mxu0 %v8117
        %8183 = vmatprep.subr.bf16.mxu0 %v8120
        %8184 = vmatpush1.bf16.msra.mxu0 %v8119
        %8185 = vmatprep.subr.bf16.mxu0 %v8122
        %8186 = vmatpush1.bf16.msra.mxu0 %v8121
        %8187 = vmatprep.subr.bf16.mxu0 %v8124
        %8188 = vmatpush1.bf16.msra.mxu0 %v8123
        %8189 = vmatprep.subr.bf16.mxu0 %v8126
        %8190 = vmatpush1.bf16.msra.mxu0 %v8125
        %8191 = vmatprep.subr.bf16.mxu0 %v8128
        %8192 = vmatpush1.bf16.msra.mxu0 %v8127
        %8193 = vmatprep.subr.bf16.mxu0 %v8130
        %8194 = vmatpush1.bf16.msra.mxu0 %v8129
        %8195 = vmatprep.subr.bf16.mxu0 %v8132
        %8196 = vmatpush1.bf16.msra.mxu0 %v8131
        %8197 = vmatprep.subr.bf16.mxu0 %v8134
        %8198 = vmatpush1.bf16.msra.mxu0 %v8133
        %8199 = vmatprep.subr.bf16.mxu0 %v8136
        %8200 = vmatpush1.bf16.msra.mxu0 %v8135
        %8201 = vmatprep.mubr.bf16.mxu0 %v8008
        %8202 = vmatmul.mubr.bf16.gmra.mrb[0].mxu0 %v8007
        %v8203 = vpop.f32.mrb[0].mxu0
        %v8204 = vadd.f32 0.0, %v8203
        %v8205 = vpop.f32.mrb[0].mxu0
        %v8206 = vadd.f32 0.0, %v8205
        %v8207 = vpop.f32.mrb[0].mxu0
        %v8208 = vpop.f32.mrb[0].mxu0
        %8209 = vdwg.mxu0
        %v8211 = vlaneseq
        %v8212 = vshrl.u32 %v8211, 7
        %v8213 = vsub.s32 0, %v8212
        %v8214 = vrot.slane %v7402, %v8213
        %v8215 = vlaneseq
        %v8216 = vshrl.u32 %v8215, 7
        %v8217 = vsub.s32 2, %v8216
        %v8218 = vrot.slane %v7402, %v8217
        %v8221 = vlaneseq
        %v8222 = vshrl.u32 %v8221, 7
        %v8223 = vsub.s32 0, %v8222
        %v8224 = vrot.slane %v8214, %v8223
        %v8225 = vlaneseq
        %v8226 = vshrl.u32 %v8225, 7
        %v8227 = vsub.s32 0, %v8226
        %v8228 = vrot.slane %v8218, %v8227
        %v8229 = vmul.f32 %v8204, %v8224
        %v8230 = vmul.f32 %v8206, %v8228
        %v8231 = vlaneseq
        %v8232 = vshrl.u32 %v8231, 7
        %v8233 = vsub.s32 1, %v8232
        %v8234 = vrot.slane %v7402, %v8233
        %v8235 = vlaneseq
        %v8236 = vshrl.u32 %v8235, 7
        %v8237 = vsub.s32 3, %v8236
        %v8238 = vrot.slane %v7402, %v8237
        %v8241 = vlaneseq
        %v8242 = vshrl.u32 %v8241, 7
        %v8243 = vsub.s32 1, %v8242
        %v8244 = vrot.slane %v8234, %v8243
        %v8245 = vlaneseq
        %v8246 = vshrl.u32 %v8245, 7
        %v8247 = vsub.s32 1, %v8246
        %v8248 = vrot.slane %v8238, %v8247
        %v8249 = vadd.f32 %v8229, %v8244
        %v8250 = vadd.f32 %v8230, %v8248
        %v8251 = vmax.f32 %v8249, 0.0
        %v8252 = vmax.f32 %v8250, 0.0
        %v8253 = vmin.f32 %v8251, 6.0
        %v8254 = vmin.f32 %v8252, 6.0
        %v8255 = vpack.c.bf16 %v8253, %v8253
        %v8256 = vpack.c.bf16 %v8254, %v8254
        %v8257 = vunpack.c.l.bf16 %v8255
        %v8258 = vunpack.c.l.bf16 %v8256
        %v8259 = vld [vmem:[#allocation15] sm:$0x3]
        %v8261 = vlaneseq
        %v8262 = vshrl.u32 %v8261, 7
        %v8263 = vsub.s32 0, %v8262
        %v8264 = vrot.slane %v8259, %v8263
        %v8265 = vlaneseq
        %v8266 = vshrl.u32 %v8265, 7
        %v8267 = vsub.s32 1, %v8266
        %v8268 = vrot.slane %v8259, %v8267
        %v8271 = vmul.f32 %v8257, %v8264
        %v8272 = vmul.f32 %v8258, %v8268
        %v8273 = vsel %vm5097, %v8271, 0.0
        %v8274 = vsel %vm5097, %v8272, 0.0
        %v8275 = vadd.f32 %v8273, %v8274
        %8276 = vadd.xlane.f32.xlu0 %v8275
        %v8277 = vpop.xlane.xlu0 %8276
        %v8278 = vld [vmem:[#allocation5] sm:$0x1]
        %v8280 = vlaneseq
        %v8281 = vshrl.u32 %v8280, 7
        %v8282 = vsub.s32 0, %v8281
        %v8283 = vrot.slane %v8278, %v8282
        %v8285 = vadd.f32 %v8277, %v8283
        %v8286 = vxor.u32 %v8285, 2147483648
        %v8287 = vmul.f32 %v8286, 1.442695
        %v8288 = vpow.pop %v8287
        %v8289 = vadd.f32 %v8288, 1.0
        %v8290 = vrcp.pop %v8289
        %v8291 = vmul.f32 1.0, %v8290
        %8293 = vset.pattern.permute.xlu0 0
        %8294 = vperm.xlu0 %8293, %v8291
        %v8295 = vpop.permute.xlu0 %8294
        %v8297 = vmul.f32 %v8257, %v8295
        %v8298 = vmul.f32 %v8258, %v8295
        %v8299 = vsel %vm5097, %v8297, 0.0
        %v8300 = vrot.slane %v8299, 4
        %v8301 = vadd.f32 %v8299, %v8300
        %v8302 = vrot.slane %v8301, 2
        %v8303 = vadd.f32 %v8301, %v8302
        %v8304 = vrot.slane %v8303, 1
        %v8305 = vadd.f32 %v8303, %v8304
        %v8306 = vsel %vm5097, %v8298, 0.0
        %v8307 = vrot.slane %v8306, 4
        %v8308 = vadd.f32 %v8306, %v8307
        %v8309 = vrot.slane %v8308, 2
        %v8310 = vadd.f32 %v8308, %v8309
        %v8311 = vrot.slane %v8310, 1
        %v8312 = vadd.f32 %v8310, %v8311
        %v8313 = vrcp.pop 4.0
        %v8314 = vmul.f32 %v8305, %v8313
        %v8315 = vmul.f32 %v8312, %v8313
        %v8316 = vsel %vm5097, %v8297, -inf
        %v8317 = vrot.slane %v8316, 4
        %v8318 = vmax.f32 %v8316, %v8317
        %v8319 = vrot.slane %v8318, 2
        %v8320 = vmax.f32 %v8318, %v8319
        %v8321 = vrot.slane %v8320, 1
        %v8322 = vmax.f32 %v8320, %v8321
        %v8323 = vsel %vm5097, %v8298, -inf
        %v8324 = vrot.slane %v8323, 4
        %v8325 = vmax.f32 %v8323, %v8324
        %v8326 = vrot.slane %v8325, 2
        %v8327 = vmax.f32 %v8325, %v8326
        %v8328 = vrot.slane %v8327, 1
        %v8329 = vmax.f32 %v8327, %v8328
        %v8330 = vsel %vm5012, %v8314, %v8322
        %v8331 = vsel %vm5012, %v8315, %v8329
        %v8332 = vpack.c.bf16 %v8330, %v8330
        %v8333 = vpack.c.bf16 %v8331, %v8331
        %v8334 = vld [vmem:[%s97] sm:$0xf]
        %v8335 = vld [vmem:[%s97 + $0x4] sm:$0xf]
        %v8336 = vld [vmem:[%s97 + $0x8] sm:$0xf]
        %v8337 = vld [vmem:[%s97 + $0xc] sm:$0xf]
        %v8338 = vld [vmem:[%s97 + $0x10] sm:$0xf]
        %v8339 = vld [vmem:[%s97 + $0x14] sm:$0xf]
        %v8340 = vld [vmem:[%s97 + $0x18] sm:$0xf]
        %v8341 = vld [vmem:[%s97 + $0x1c] sm:$0xf]
        %v8342 = vld [vmem:[%s97 + $0x20] sm:$0xf]
        %v8343 = vld [vmem:[%s97 + $0x24] sm:$0xf]
        %v8344 = vld [vmem:[%s97 + $0x28] sm:$0xf]
        %v8345 = vld [vmem:[%s97 + $0x2c] sm:$0xf]
        %v8346 = vld [vmem:[%s97 + $0x30] sm:$0xf]
        %v8347 = vld [vmem:[%s97 + $0x34] sm:$0xf]
        %v8348 = vld [vmem:[%s97 + $0x38] sm:$0xf]
        %v8349 = vld [vmem:[%s97 + $0x3c] sm:$0xf]
        %v8350 = vld [vmem:[%s97 + $0x40] sm:$0xf]
        %v8351 = vld [vmem:[%s97 + $0x44] sm:$0xf]
        %v8352 = vld [vmem:[%s97 + $0x48] sm:$0xf]
        %v8353 = vld [vmem:[%s97 + $0x4c] sm:$0xf]
        %v8354 = vld [vmem:[%s97 + $0x50] sm:$0xf]
        %v8355 = vld [vmem:[%s97 + $0x54] sm:$0xf]
        %v8356 = vld [vmem:[%s97 + $0x58] sm:$0xf]
        %v8357 = vld [vmem:[%s97 + $0x5c] sm:$0xf]
        %v8358 = vld [vmem:[%s97 + $0x60] sm:$0xf]
        %v8359 = vld [vmem:[%s97 + $0x64] sm:$0xf]
        %v8360 = vld [vmem:[%s97 + $0x68] sm:$0xf]
        %v8361 = vld [vmem:[%s97 + $0x6c] sm:$0xf]
        %v8362 = vld [vmem:[%s97 + $0x70] sm:$0xf]
        %v8363 = vld [vmem:[%s97 + $0x74] sm:$0xf]
        %v8364 = vld [vmem:[%s97 + $0x78] sm:$0xf]
        %v8365 = vld [vmem:[%s97 + $0x7c] sm:$0xf]
        %v8398 = vunpack.c.l.b16 %v8334
        %v8399 = vunpack.c.l.b16 %v8335
        %v8400 = vunpack.c.l.b16 %v8336
        %v8401 = vunpack.c.l.b16 %v8337
        %v8402 = vunpack.c.l.b16 %v8338
        %v8403 = vunpack.c.l.b16 %v8339
        %v8404 = vunpack.c.l.b16 %v8340
        %v8405 = vunpack.c.l.b16 %v8341
        %v8406 = vunpack.c.l.b16 %v8342
        %v8407 = vunpack.c.l.b16 %v8343
        %v8408 = vunpack.c.l.b16 %v8344
        %v8409 = vunpack.c.l.b16 %v8345
        %v8410 = vunpack.c.l.b16 %v8346
        %v8411 = vunpack.c.l.b16 %v8347
        %v8412 = vunpack.c.l.b16 %v8348
        %v8413 = vunpack.c.l.b16 %v8349
        %v8414 = vunpack.c.l.b16 %v8350
        %v8415 = vunpack.c.l.b16 %v8351
        %v8416 = vunpack.c.l.b16 %v8352
        %v8417 = vunpack.c.l.b16 %v8353
        %v8418 = vunpack.c.l.b16 %v8354
        %v8419 = vunpack.c.l.b16 %v8355
        %v8420 = vunpack.c.l.b16 %v8356
        %v8421 = vunpack.c.l.b16 %v8357
        %v8422 = vunpack.c.l.b16 %v8358
        %v8423 = vunpack.c.l.b16 %v8359
        %v8424 = vunpack.c.l.b16 %v8360
        %v8425 = vunpack.c.l.b16 %v8361
        %v8426 = vunpack.c.l.b16 %v8362
        %v8427 = vunpack.c.l.b16 %v8363
        %v8428 = vunpack.c.l.b16 %v8364
        %v8429 = vunpack.c.l.b16 %v8365
        %v8430 = vpack.c.b16 %v8399, %v8398
        %v8431 = vpack.c.b16 %v8401, %v8400
        %v8432 = vpack.c.b16 %v8403, %v8402
        %v8433 = vpack.c.b16 %v8405, %v8404
        %v8434 = vpack.c.b16 %v8407, %v8406
        %v8435 = vpack.c.b16 %v8409, %v8408
        %v8436 = vpack.c.b16 %v8411, %v8410
        %v8437 = vpack.c.b16 %v8413, %v8412
        %v8438 = vpack.c.b16 %v8415, %v8414
        %v8439 = vpack.c.b16 %v8417, %v8416
        %v8440 = vpack.c.b16 %v8419, %v8418
        %v8441 = vpack.c.b16 %v8421, %v8420
        %v8442 = vpack.c.b16 %v8423, %v8422
        %v8443 = vpack.c.b16 %v8425, %v8424
        %v8444 = vpack.c.b16 %v8427, %v8426
        %v8445 = vpack.c.b16 %v8429, %v8428
        %8462 = vmatprep.subr.bf16.mxu0 0
        %8463 = vmatpush1.bf16.msra.mxu0 %v8430
        %8464 = vmatprep.subr.bf16.mxu0 0
        %8465 = vmatpush1.bf16.msra.mxu0 %v8431
        %8466 = vmatprep.subr.bf16.mxu0 0
        %8467 = vmatpush1.bf16.msra.mxu0 %v8432
        %8468 = vmatprep.subr.bf16.mxu0 0
        %8469 = vmatpush1.bf16.msra.mxu0 %v8433
        %8470 = vmatprep.subr.bf16.mxu0 0
        %8471 = vmatpush1.bf16.msra.mxu0 %v8434
        %8472 = vmatprep.subr.bf16.mxu0 0
        %8473 = vmatpush1.bf16.msra.mxu0 %v8435
        %8474 = vmatprep.subr.bf16.mxu0 0
        %8475 = vmatpush1.bf16.msra.mxu0 %v8436
        %8476 = vmatprep.subr.bf16.mxu0 0
        %8477 = vmatpush1.bf16.msra.mxu0 %v8437
        %8478 = vmatprep.subr.bf16.mxu0 0
        %8479 = vmatpush1.bf16.msra.mxu0 %v8438
        %8480 = vmatprep.subr.bf16.mxu0 0
        %8481 = vmatpush1.bf16.msra.mxu0 %v8439
        %8482 = vmatprep.subr.bf16.mxu0 0
        %8483 = vmatpush1.bf16.msra.mxu0 %v8440
        %8484 = vmatprep.subr.bf16.mxu0 0
        %8485 = vmatpush1.bf16.msra.mxu0 %v8441
        %8486 = vmatprep.subr.bf16.mxu0 0
        %8487 = vmatpush1.bf16.msra.mxu0 %v8442
        %8488 = vmatprep.subr.bf16.mxu0 0
        %8489 = vmatpush1.bf16.msra.mxu0 %v8443
        %8490 = vmatprep.subr.bf16.mxu0 0
        %8491 = vmatpush1.bf16.msra.mxu0 %v8444
        %8492 = vmatprep.subr.bf16.mxu0 0
        %8493 = vmatpush1.bf16.msra.mxu0 %v8445
        %8494 = vmatprep.mubr.bf16.mxu0 %v8333
        %8495 = vmatmul.mubr.bf16.gmra.mrb[0].mxu0 %v8332
        %v8496 = vpop.f32.mrb[0].mxu0
        %v8497 = vadd.f32 0.0, %v8496
        %v8498 = vpop.f32.mrb[0].mxu0
        %v8499 = vpop.f32.mrb[0].mxu0
        %v8500 = vpop.f32.mrb[0].mxu0
        %8501 = vdwg.mxu0
        %v8502 = vmax.f32 %v8497, 0.0
        %v8503 = vpack.c.bf16 %v8502, %v8502
        %v8504 = vld [vmem:[%s99] sm:$0xff]
        %v8505 = vld [vmem:[%s99 + $0x8] sm:$0xff]
        %v8506 = vld [vmem:[%s99 + $0x10] sm:$0xff]
        %v8507 = vld [vmem:[%s99 + $0x18] sm:$0xff]
        %v8512 = vunpack.c.l.b16 %v8504
        %v8513 = vunpack.c.h.b16 %v8504
        %v8514 = vunpack.c.l.b16 %v8505
        %v8515 = vunpack.c.h.b16 %v8505
        %v8516 = vunpack.c.l.b16 %v8506
        %v8517 = vunpack.c.h.b16 %v8506
        %v8518 = vunpack.c.l.b16 %v8507
        %v8519 = vunpack.c.h.b16 %v8507
        %v8520 = vpack.c.b16 %v8514, %v8512
        %v8521 = vpack.c.b16 %v8515, %v8513
        %v8522 = vpack.c.b16 %v8518, %v8516
        %v8523 = vpack.c.b16 %v8519, %v8517
        %v8529 = vsel %vm3359, %v8503, 0
        %8531 = vmatprep.subr.bf16.mxu0 %v8521
        %8532 = vmatpush1.bf16.msra.mxu0 %v8520
        %8533 = vmatprep.subr.bf16.mxu0 %v8523
        %8534 = vmatpush1.bf16.msra.mxu0 %v8522
        %8535 = vmatprep.subr.bf16.mxu0 0
        %8536 = vmatpush1.bf16.msra.mxu0 0
        %8537 = vmatprep.subr.bf16.mxu0 0
        %8538 = vmatpush1.bf16.msra.mxu0 0
        %8539 = vmatprep.subr.bf16.mxu0 0
        %8540 = vmatpush1.bf16.msra.mxu0 0
        %8541 = vmatprep.subr.bf16.mxu0 0
        %8542 = vmatpush1.bf16.msra.mxu0 0
        %8543 = vmatprep.subr.bf16.mxu0 0
        %8544 = vmatpush1.bf16.msra.mxu0 0
        %8545 = vmatprep.subr.bf16.mxu0 0
        %8546 = vmatpush1.bf16.msra.mxu0 0
        %8547 = vmatprep.subr.bf16.mxu0 0
        %8548 = vmatpush1.bf16.msra.mxu0 0
        %8549 = vmatprep.subr.bf16.mxu0 0
        %8550 = vmatpush1.bf16.msra.mxu0 0
        %8551 = vmatprep.subr.bf16.mxu0 0
        %8552 = vmatpush1.bf16.msra.mxu0 0
        %8553 = vmatprep.subr.bf16.mxu0 0
        %8554 = vmatpush1.bf16.msra.mxu0 0
        %8555 = vmatprep.subr.bf16.mxu0 0
        %8556 = vmatpush1.bf16.msra.mxu0 0
        %8557 = vmatprep.subr.bf16.mxu0 0
        %8558 = vmatpush1.bf16.msra.mxu0 0
        %8559 = vmatprep.subr.bf16.mxu0 0
        %8560 = vmatpush1.bf16.msra.mxu0 0
        %8561 = vmatprep.subr.bf16.mxu0 0
        %8562 = vmatpush1.bf16.msra.mxu0 0
        %8563 = vmatprep.mubr.bf16.mxu0 0
        %8564 = vmatmul.mubr.bf16.gmra.mrb[0].mxu0 %v8529
        %v8565 = vpop.f32.mrb[0].mxu0
        %v8566 = vadd.f32 0.0, %v8565
        %v8567 = vpop.f32.mrb[0].mxu0
        %v8568 = vadd.f32 0.0, %v8567
        %v8569 = vpop.f32.mrb[0].mxu0
        %v8570 = vpop.f32.mrb[0].mxu0
        %8571 = vdwg.mxu0
        %v8574 = vrot.slane %v8566, 1
        %v8575 = vrot.slane %v8568, 1
        %v8578 = vadd.f32 %v8566, %v8574
        %v8579 = vadd.f32 %v8568, %v8575
        %v8580 = vxor.u32 %v8578, 2147483648
        %v8581 = vxor.u32 %v8579, 2147483648
        %v8582 = vmul.f32 %v8580, 1.442695
        %v8583 = vpow.pop %v8582
        %v8584 = vmul.f32 %v8581, 1.442695
        %v8585 = vpow.pop %v8584
        %v8586 = vadd.f32 %v8583, 1.0
        %v8587 = vadd.f32 %v8585, 1.0
        %v8588 = vrcp.pop %v8586
        %v8589 = vmul.f32 1.0, %v8588
        %v8590 = vrcp.pop %v8587
        %v8591 = vmul.f32 1.0, %v8590
        %v8592 = vlaneseq
        %v8593 = vshrl.u32 %v8592, 7
        %v8594 = vsub.s32 0, %v8593
        %v8595 = vrot.slane %v8589, %v8594
        %v8596 = vlaneseq
        %v8597 = vshrl.u32 %v8596, 7
        %v8598 = vsub.s32 0, %v8597
        %v8599 = vrot.slane %v8591, %v8598
        %v8600 = vmul.f32 %v8297, %v8595
        %v8601 = vmul.f32 %v8298, %v8599
        %v8602 = vpack.c.bf16 %v8600, %v8600
        %v8603 = vpack.c.bf16 %v8601, %v8601
        %v8604 = vunpack.c.l.bf16 %v8602
        %v8605 = vunpack.c.l.bf16 %v8603
        %v8606 = vld [vmem:[#allocation11] sm:$0x3]
        %v8608 = vlaneseq
        %v8609 = vshrl.u32 %v8608, 7
        %v8610 = vsub.s32 0, %v8609
        %v8611 = vrot.slane %v8606, %v8610
        %v8612 = vlaneseq
        %v8613 = vshrl.u32 %v8612, 7
        %v8614 = vsub.s32 1, %v8613
        %v8615 = vrot.slane %v8606, %v8614
        %v8618 = vmul.f32 %v8604, %v8611
        %v8619 = vmul.f32 %v8605, %v8615
        %v8620 = vsel %vm5097, %v8618, 0.0
        %v8621 = vsel %vm5097, %v8619, 0.0
        %v8622 = vadd.f32 %v8620, %v8621
        %8623 = vadd.xlane.f32.xlu0 %v8622
        %v8624 = vpop.xlane.xlu0 %8623
        %v8625 = vld [vmem:[#allocation2] sm:$0x1]
        %v8627 = vlaneseq
        %v8628 = vshrl.u32 %v8627, 7
        %v8629 = vsub.s32 0, %v8628
        %v8630 = vrot.slane %v8625, %v8629
        %v8632 = vadd.f32 %v8624, %v8630
        %v8633 = vxor.u32 %v8632, 2147483648
        %v8634 = vmul.f32 %v8633, 1.442695
        %v8635 = vpow.pop %v8634
        %v8636 = vadd.f32 %v8635, 1.0
        %v8637 = vrcp.pop %v8636
        %v8638 = vmul.f32 1.0, %v8637
        %8640 = vset.pattern.permute.xlu0 0
        %8641 = vperm.xlu0 %8640, %v8638
        %v8642 = vpop.permute.xlu0 %8641
        %v8644 = vmul.f32 %v8604, %v8642
        %v8645 = vmul.f32 %v8605, %v8642
        %v8646 = vsel %vm5097, %v8644, 0.0
        %v8647 = vrot.slane %v8646, 4
        %v8648 = vadd.f32 %v8646, %v8647
        %v8649 = vrot.slane %v8648, 2
        %v8650 = vadd.f32 %v8648, %v8649
        %v8651 = vrot.slane %v8650, 1
        %v8652 = vadd.f32 %v8650, %v8651
        %v8653 = vsel %vm5097, %v8645, 0.0
        %v8654 = vrot.slane %v8653, 4
        %v8655 = vadd.f32 %v8653, %v8654
        %v8656 = vrot.slane %v8655, 2
        %v8657 = vadd.f32 %v8655, %v8656
        %v8658 = vrot.slane %v8657, 1
        %v8659 = vadd.f32 %v8657, %v8658
        %v8660 = vmul.f32 %v8652, %v8313
        %v8661 = vmul.f32 %v8659, %v8313
        %v8662 = vsel %vm5097, %v8644, -inf
        %v8663 = vrot.slane %v8662, 4
        %v8664 = vmax.f32 %v8662, %v8663
        %v8665 = vrot.slane %v8664, 2
        %v8666 = vmax.f32 %v8664, %v8665
        %v8667 = vrot.slane %v8666, 1
        %v8668 = vmax.f32 %v8666, %v8667
        %v8669 = vsel %vm5097, %v8645, -inf
        %v8670 = vrot.slane %v8669, 4
        %v8671 = vmax.f32 %v8669, %v8670
        %v8672 = vrot.slane %v8671, 2
        %v8673 = vmax.f32 %v8671, %v8672
        %v8674 = vrot.slane %v8673, 1
        %v8675 = vmax.f32 %v8673, %v8674
        %v8676 = vsel %vm5012, %v8660, %v8668
        %v8677 = vsel %vm5012, %v8661, %v8675
        %v8678 = vpack.c.bf16 %v8676, %v8676
        %v8679 = vpack.c.bf16 %v8677, %v8677
        %v8680 = vld [vmem:[%s73] sm:$0xf]
        %v8681 = vld [vmem:[%s73 + $0x4] sm:$0xf]
        %v8682 = vld [vmem:[%s73 + $0x8] sm:$0xf]
        %v8683 = vld [vmem:[%s73 + $0xc] sm:$0xf]
        %v8684 = vld [vmem:[%s73 + $0x10] sm:$0xf]
        %v8685 = vld [vmem:[%s73 + $0x14] sm:$0xf]
        %v8686 = vld [vmem:[%s73 + $0x18] sm:$0xf]
        %v8687 = vld [vmem:[%s73 + $0x1c] sm:$0xf]
        %v8688 = vld [vmem:[%s73 + $0x20] sm:$0xf]
        %v8689 = vld [vmem:[%s73 + $0x24] sm:$0xf]
        %v8690 = vld [vmem:[%s73 + $0x28] sm:$0xf]
        %v8691 = vld [vmem:[%s73 + $0x2c] sm:$0xf]
        %v8692 = vld [vmem:[%s73 + $0x30] sm:$0xf]
        %v8693 = vld [vmem:[%s73 + $0x34] sm:$0xf]
        %v8694 = vld [vmem:[%s73 + $0x38] sm:$0xf]
        %v8695 = vld [vmem:[%s73 + $0x3c] sm:$0xf]
        %v8696 = vld [vmem:[%s73 + $0x40] sm:$0xf]
        %v8697 = vld [vmem:[%s73 + $0x44] sm:$0xf]
        %v8698 = vld [vmem:[%s73 + $0x48] sm:$0xf]
        %v8699 = vld [vmem:[%s73 + $0x4c] sm:$0xf]
        %v8700 = vld [vmem:[%s73 + $0x50] sm:$0xf]
        %v8701 = vld [vmem:[%s73 + $0x54] sm:$0xf]
        %v8702 = vld [vmem:[%s73 + $0x58] sm:$0xf]
        %v8703 = vld [vmem:[%s73 + $0x5c] sm:$0xf]
        %v8704 = vld [vmem:[%s73 + $0x60] sm:$0xf]
        %v8705 = vld [vmem:[%s73 + $0x64] sm:$0xf]
        %v8706 = vld [vmem:[%s73 + $0x68] sm:$0xf]
        %v8707 = vld [vmem:[%s73 + $0x6c] sm:$0xf]
        %v8708 = vld [vmem:[%s73 + $0x70] sm:$0xf]
        %v8709 = vld [vmem:[%s73 + $0x74] sm:$0xf]
        %v8710 = vld [vmem:[%s73 + $0x78] sm:$0xf]
        %v8711 = vld [vmem:[%s73 + $0x7c] sm:$0xf]
        %v8744 = vunpack.c.l.b16 %v8680
        %v8745 = vunpack.c.l.b16 %v8681
        %v8746 = vunpack.c.l.b16 %v8682
        %v8747 = vunpack.c.l.b16 %v8683
        %v8748 = vunpack.c.l.b16 %v8684
        %v8749 = vunpack.c.l.b16 %v8685
        %v8750 = vunpack.c.l.b16 %v8686
        %v8751 = vunpack.c.l.b16 %v8687
        %v8752 = vunpack.c.l.b16 %v8688
        %v8753 = vunpack.c.l.b16 %v8689
        %v8754 = vunpack.c.l.b16 %v8690
        %v8755 = vunpack.c.l.b16 %v8691
        %v8756 = vunpack.c.l.b16 %v8692
        %v8757 = vunpack.c.l.b16 %v8693
        %v8758 = vunpack.c.l.b16 %v8694
        %v8759 = vunpack.c.l.b16 %v8695
        %v8760 = vunpack.c.l.b16 %v8696
        %v8761 = vunpack.c.l.b16 %v8697
        %v8762 = vunpack.c.l.b16 %v8698
        %v8763 = vunpack.c.l.b16 %v8699
        %v8764 = vunpack.c.l.b16 %v8700
        %v8765 = vunpack.c.l.b16 %v8701
        %v8766 = vunpack.c.l.b16 %v8702
        %v8767 = vunpack.c.l.b16 %v8703
        %v8768 = vunpack.c.l.b16 %v8704
        %v8769 = vunpack.c.l.b16 %v8705
        %v8770 = vunpack.c.l.b16 %v8706
        %v8771 = vunpack.c.l.b16 %v8707
        %v8772 = vunpack.c.l.b16 %v8708
        %v8773 = vunpack.c.l.b16 %v8709
        %v8774 = vunpack.c.l.b16 %v8710
        %v8775 = vunpack.c.l.b16 %v8711
        %v8776 = vpack.c.b16 %v8745, %v8744
        %v8777 = vpack.c.b16 %v8747, %v8746
        %v8778 = vpack.c.b16 %v8749, %v8748
        %v8779 = vpack.c.b16 %v8751, %v8750
        %v8780 = vpack.c.b16 %v8753, %v8752
        %v8781 = vpack.c.b16 %v8755, %v8754
        %v8782 = vpack.c.b16 %v8757, %v8756
        %v8783 = vpack.c.b16 %v8759, %v8758
        %v8784 = vpack.c.b16 %v8761, %v8760
        %v8785 = vpack.c.b16 %v8763, %v8762
        %v8786 = vpack.c.b16 %v8765, %v8764
        %v8787 = vpack.c.b16 %v8767, %v8766
        %v8788 = vpack.c.b16 %v8769, %v8768
        %v8789 = vpack.c.b16 %v8771, %v8770
        %v8790 = vpack.c.b16 %v8773, %v8772
        %v8791 = vpack.c.b16 %v8775, %v8774
        %8808 = vmatprep.subr.bf16.mxu0 0
        %8809 = vmatpush1.bf16.msra.mxu0 %v8776
        %8810 = vmatprep.subr.bf16.mxu0 0
        %8811 = vmatpush1.bf16.msra.mxu0 %v8777
        %8812 = vmatprep.subr.bf16.mxu0 0
        %8813 = vmatpush1.bf16.msra.mxu0 %v8778
        %8814 = vmatprep.subr.bf16.mxu0 0
        %8815 = vmatpush1.bf16.msra.mxu0 %v8779
        %8816 = vmatprep.subr.bf16.mxu0 0
        %8817 = vmatpush1.bf16.msra.mxu0 %v8780
        %8818 = vmatprep.subr.bf16.mxu0 0
        %8819 = vmatpush1.bf16.msra.mxu0 %v8781
        %8820 = vmatprep.subr.bf16.mxu0 0
        %8821 = vmatpush1.bf16.msra.mxu0 %v8782
        %8822 = vmatprep.subr.bf16.mxu0 0
        %8823 = vmatpush1.bf16.msra.mxu0 %v8783
        %8824 = vmatprep.subr.bf16.mxu0 0
        %8825 = vmatpush1.bf16.msra.mxu0 %v8784
        %8826 = vmatprep.subr.bf16.mxu0 0
        %8827 = vmatpush1.bf16.msra.mxu0 %v8785
        %8828 = vmatprep.subr.bf16.mxu0 0
        %8829 = vmatpush1.bf16.msra.mxu0 %v8786
        %8830 = vmatprep.subr.bf16.mxu0 0
        %8831 = vmatpush1.bf16.msra.mxu0 %v8787
        %8832 = vmatprep.subr.bf16.mxu0 0
        %8833 = vmatpush1.bf16.msra.mxu0 %v8788
        %8834 = vmatprep.subr.bf16.mxu0 0
        %8835 = vmatpush1.bf16.msra.mxu0 %v8789
        %8836 = vmatprep.subr.bf16.mxu0 0
        %8837 = vmatpush1.bf16.msra.mxu0 %v8790
        %8838 = vmatprep.subr.bf16.mxu0 0
        %8839 = vmatpush1.bf16.msra.mxu0 %v8791
        %8840 = vmatprep.mubr.bf16.mxu0 %v8679
        %8841 = vmatmul.mubr.bf16.gmra.mrb[0].mxu0 %v8678
        %v8842 = vpop.f32.mrb[0].mxu0
        %v8843 = vadd.f32 0.0, %v8842
        %v8844 = vpop.f32.mrb[0].mxu0
        %v8845 = vpop.f32.mrb[0].mxu0
        %v8846 = vpop.f32.mrb[0].mxu0
        %8847 = vdwg.mxu0
        %v8848 = vmax.f32 %v8843, 0.0
        %v8849 = vpack.c.bf16 %v8848, %v8848
        %v8850 = vld [vmem:[%s75] sm:$0xff]
        %v8851 = vld [vmem:[%s75 + $0x8] sm:$0xff]
        %v8852 = vld [vmem:[%s75 + $0x10] sm:$0xff]
        %v8853 = vld [vmem:[%s75 + $0x18] sm:$0xff]
        %v8858 = vunpack.c.l.b16 %v8850
        %v8859 = vunpack.c.h.b16 %v8850
        %v8860 = vunpack.c.l.b16 %v8851
        %v8861 = vunpack.c.h.b16 %v8851
        %v8862 = vunpack.c.l.b16 %v8852
        %v8863 = vunpack.c.h.b16 %v8852
        %v8864 = vunpack.c.l.b16 %v8853
        %v8865 = vunpack.c.h.b16 %v8853
        %v8866 = vpack.c.b16 %v8860, %v8858
        %v8867 = vpack.c.b16 %v8861, %v8859
        %v8868 = vpack.c.b16 %v8864, %v8862
        %v8869 = vpack.c.b16 %v8865, %v8863
        %v8875 = vsel %vm3359, %v8849, 0
        %8877 = vmatprep.subr.bf16.mxu0 %v8867
        %8878 = vmatpush1.bf16.msra.mxu0 %v8866
        %8879 = vmatprep.subr.bf16.mxu0 %v8869
        %8880 = vmatpush1.bf16.msra.mxu0 %v8868
        %8881 = vmatprep.subr.bf16.mxu0 0
        %8882 = vmatpush1.bf16.msra.mxu0 0
        %8883 = vmatprep.subr.bf16.mxu0 0
        %8884 = vmatpush1.bf16.msra.mxu0 0
        %8885 = vmatprep.subr.bf16.mxu0 0
        %8886 = vmatpush1.bf16.msra.mxu0 0
        %8887 = vmatprep.subr.bf16.mxu0 0
        %8888 = vmatpush1.bf16.msra.mxu0 0
        %8889 = vmatprep.subr.bf16.mxu0 0
        %8890 = vmatpush1.bf16.msra.mxu0 0
        %8891 = vmatprep.subr.bf16.mxu0 0
        %8892 = vmatpush1.bf16.msra.mxu0 0
        %8893 = vmatprep.subr.bf16.mxu0 0
        %8894 = vmatpush1.bf16.msra.mxu0 0
        %8895 = vmatprep.subr.bf16.mxu0 0
        %8896 = vmatpush1.bf16.msra.mxu0 0
        %8897 = vmatprep.subr.bf16.mxu0 0
        %8898 = vmatpush1.bf16.msra.mxu0 0
        %8899 = vmatprep.subr.bf16.mxu0 0
        %8900 = vmatpush1.bf16.msra.mxu0 0
        %8901 = vmatprep.subr.bf16.mxu0 0
        %8902 = vmatpush1.bf16.msra.mxu0 0
        %8903 = vmatprep.subr.bf16.mxu0 0
        %8904 = vmatpush1.bf16.msra.mxu0 0
        %8905 = vmatprep.subr.bf16.mxu0 0
        %8906 = vmatpush1.bf16.msra.mxu0 0
        %8907 = vmatprep.subr.bf16.mxu0 0
        %8908 = vmatpush1.bf16.msra.mxu0 0
        %8909 = vmatprep.mubr.bf16.mxu0 0
        %8910 = vmatmul.mubr.bf16.gmra.mrb[0].mxu0 %v8875
        %v8911 = vpop.f32.mrb[0].mxu0
        %v8912 = vadd.f32 0.0, %v8911
        %v8913 = vpop.f32.mrb[0].mxu0
        %v8914 = vadd.f32 0.0, %v8913
        %v8915 = vpop.f32.mrb[0].mxu0
        %v8916 = vpop.f32.mrb[0].mxu0
        %8917 = vdwg.mxu0
        %v8920 = vrot.slane %v8912, 1
        %v8921 = vrot.slane %v8914, 1
        %v8924 = vadd.f32 %v8912, %v8920
        %v8925 = vadd.f32 %v8914, %v8921
        %v8926 = vxor.u32 %v8924, 2147483648
        %v8927 = vxor.u32 %v8925, 2147483648
        %v8928 = vmul.f32 %v8926, 1.442695
        %v8929 = vpow.pop %v8928
        %v8930 = vmul.f32 %v8927, 1.442695
        %v8931 = vpow.pop %v8930
        %v8932 = vadd.f32 %v8929, 1.0
        %v8933 = vadd.f32 %v8931, 1.0
        %v8934 = vrcp.pop %v8932
        %v8935 = vmul.f32 1.0, %v8934
        %v8936 = vrcp.pop %v8933
        %v8937 = vmul.f32 1.0, %v8936
        %v8938 = vlaneseq
        %v8939 = vshrl.u32 %v8938, 7
        %v8940 = vsub.s32 0, %v8939
        %v8941 = vrot.slane %v8935, %v8940
        %v8942 = vlaneseq
        %v8943 = vshrl.u32 %v8942, 7
        %v8944 = vsub.s32 0, %v8943
        %v8945 = vrot.slane %v8937, %v8944
        %v8946 = vmul.f32 %v8644, %v8941
        %v8947 = vmul.f32 %v8645, %v8945
        %v8948 = vpack.c.bf16 %v8946, %v8946
        %v8949 = vpack.c.bf16 %v8947, %v8947
        %v8950 = vunpack.c.l.bf16 %v8948
        %v8951 = vunpack.c.l.bf16 %v8949
        %v8952 = vsel %vm5097, %v8950, 0.0
        %v8953 = vrot.slane %v8952, 4
        %v8954 = vadd.f32 %v8952, %v8953
        %v8955 = vrot.slane %v8954, 2
        %v8956 = vadd.f32 %v8954, %v8955
        %v8957 = vrot.slane %v8956, 1
        %v8958 = vadd.f32 %v8956, %v8957
        %v8959 = vsel %vm5097, %v8951, 0.0
        %v8960 = vrot.slane %v8959, 4
        %v8961 = vadd.f32 %v8959, %v8960
        %v8962 = vrot.slane %v8961, 2
        %v8963 = vadd.f32 %v8961, %v8962
        %v8964 = vrot.slane %v8963, 1
        %v8965 = vadd.f32 %v8963, %v8964
        %v8966 = vmul.f32 %v8958, %v8313
        %v8967 = vmul.f32 %v8965, %v8313
        %v8968 = vpack.c.bf16 %v8966, %v8966
        %v8969 = vpack.c.bf16 %v8967, %v8967
        %v8970 = vld [vmem:[%s69] sm:$0xf]
        %v8971 = vld [vmem:[%s69 + $0x4] sm:$0xf]
        %v8972 = vld [vmem:[%s69 + $0x8] sm:$0xf]
        %v8973 = vld [vmem:[%s69 + $0xc] sm:$0xf]
        %v8974 = vld [vmem:[%s69 + $0x10] sm:$0xf]
        %v8975 = vld [vmem:[%s69 + $0x14] sm:$0xf]
        %v8976 = vld [vmem:[%s69 + $0x18] sm:$0xf]
        %v8977 = vld [vmem:[%s69 + $0x1c] sm:$0xf]
        %v8978 = vld [vmem:[%s69 + $0x20] sm:$0xf]
        %v8979 = vld [vmem:[%s69 + $0x24] sm:$0xf]
        %v8980 = vld [vmem:[%s69 + $0x28] sm:$0xf]
        %v8981 = vld [vmem:[%s69 + $0x2c] sm:$0xf]
        %v8982 = vld [vmem:[%s69 + $0x30] sm:$0xf]
        %v8983 = vld [vmem:[%s69 + $0x34] sm:$0xf]
        %v8984 = vld [vmem:[%s69 + $0x38] sm:$0xf]
        %v8985 = vld [vmem:[%s69 + $0x3c] sm:$0xf]
        %v8986 = vld [vmem:[%s69 + $0x40] sm:$0xf]
        %v8987 = vld [vmem:[%s69 + $0x44] sm:$0xf]
        %v8988 = vld [vmem:[%s69 + $0x48] sm:$0xf]
        %v8989 = vld [vmem:[%s69 + $0x4c] sm:$0xf]
        %v8990 = vld [vmem:[%s69 + $0x50] sm:$0xf]
        %v8991 = vld [vmem:[%s69 + $0x54] sm:$0xf]
        %v8992 = vld [vmem:[%s69 + $0x58] sm:$0xf]
        %v8993 = vld [vmem:[%s69 + $0x5c] sm:$0xf]
        %v8994 = vld [vmem:[%s69 + $0x60] sm:$0xf]
        %v8995 = vld [vmem:[%s69 + $0x64] sm:$0xf]
        %v8996 = vld [vmem:[%s69 + $0x68] sm:$0xf]
        %v8997 = vld [vmem:[%s69 + $0x6c] sm:$0xf]
        %v8998 = vld [vmem:[%s69 + $0x70] sm:$0xf]
        %v8999 = vld [vmem:[%s69 + $0x74] sm:$0xf]
        %v9000 = vld [vmem:[%s69 + $0x78] sm:$0xf]
        %v9001 = vld [vmem:[%s69 + $0x7c] sm:$0xf]
        %v9002 = vld [vmem:[#allocation9] sm:$0x1]
        %v9035 = vunpack.c.l.b16 %v8970
        %v9036 = vunpack.c.l.b16 %v8971
        %v9037 = vunpack.c.l.b16 %v8972
        %v9038 = vunpack.c.l.b16 %v8973
        %v9039 = vunpack.c.l.b16 %v8974
        %v9040 = vunpack.c.l.b16 %v8975
        %v9041 = vunpack.c.l.b16 %v8976
        %v9042 = vunpack.c.l.b16 %v8977
        %v9043 = vunpack.c.l.b16 %v8978
        %v9044 = vunpack.c.l.b16 %v8979
        %v9045 = vunpack.c.l.b16 %v8980
        %v9046 = vunpack.c.l.b16 %v8981
        %v9047 = vunpack.c.l.b16 %v8982
        %v9048 = vunpack.c.l.b16 %v8983
        %v9049 = vunpack.c.l.b16 %v8984
        %v9050 = vunpack.c.l.b16 %v8985
        %v9051 = vunpack.c.l.b16 %v8986
        %v9052 = vunpack.c.l.b16 %v8987
        %v9053 = vunpack.c.l.b16 %v8988
        %v9054 = vunpack.c.l.b16 %v8989
        %v9055 = vunpack.c.l.b16 %v8990
        %v9056 = vunpack.c.l.b16 %v8991
        %v9057 = vunpack.c.l.b16 %v8992
        %v9058 = vunpack.c.l.b16 %v8993
        %v9059 = vunpack.c.l.b16 %v8994
        %v9060 = vunpack.c.l.b16 %v8995
        %v9061 = vunpack.c.l.b16 %v8996
        %v9062 = vunpack.c.l.b16 %v8997
        %v9063 = vunpack.c.l.b16 %v8998
        %v9064 = vunpack.c.l.b16 %v8999
        %v9065 = vunpack.c.l.b16 %v9000
        %v9066 = vunpack.c.l.b16 %v9001
        %v9067 = vpack.c.b16 %v9036, %v9035
        %v9068 = vpack.c.b16 %v9038, %v9037
        %v9069 = vpack.c.b16 %v9040, %v9039
        %v9070 = vpack.c.b16 %v9042, %v9041
        %v9071 = vpack.c.b16 %v9044, %v9043
        %v9072 = vpack.c.b16 %v9046, %v9045
        %v9073 = vpack.c.b16 %v9048, %v9047
        %v9074 = vpack.c.b16 %v9050, %v9049
        %v9075 = vpack.c.b16 %v9052, %v9051
        %v9076 = vpack.c.b16 %v9054, %v9053
        %v9077 = vpack.c.b16 %v9056, %v9055
        %v9078 = vpack.c.b16 %v9058, %v9057
        %v9079 = vpack.c.b16 %v9060, %v9059
        %v9080 = vpack.c.b16 %v9062, %v9061
        %v9081 = vpack.c.b16 %v9064, %v9063
        %v9082 = vpack.c.b16 %v9066, %v9065
        %9099 = vmatprep.subr.bf16.mxu0 0
        %9100 = vmatpush1.bf16.msra.mxu0 %v9067
        %9101 = vmatprep.subr.bf16.mxu0 0
        %9102 = vmatpush1.bf16.msra.mxu0 %v9068
        %9103 = vmatprep.subr.bf16.mxu0 0
        %9104 = vmatpush1.bf16.msra.mxu0 %v9069
        %9105 = vmatprep.subr.bf16.mxu0 0
        %9106 = vmatpush1.bf16.msra.mxu0 %v9070
        %9107 = vmatprep.subr.bf16.mxu0 0
        %9108 = vmatpush1.bf16.msra.mxu0 %v9071
        %9109 = vmatprep.subr.bf16.mxu0 0
        %9110 = vmatpush1.bf16.msra.mxu0 %v9072
        %9111 = vmatprep.subr.bf16.mxu0 0
        %9112 = vmatpush1.bf16.msra.mxu0 %v9073
        %9113 = vmatprep.subr.bf16.mxu0 0
        %9114 = vmatpush1.bf16.msra.mxu0 %v9074
        %9115 = vmatprep.subr.bf16.mxu0 0
        %9116 = vmatpush1.bf16.msra.mxu0 %v9075
        %9117 = vmatprep.subr.bf16.mxu0 0
        %9118 = vmatpush1.bf16.msra.mxu0 %v9076
        %9119 = vmatprep.subr.bf16.mxu0 0
        %9120 = vmatpush1.bf16.msra.mxu0 %v9077
        %9121 = vmatprep.subr.bf16.mxu0 0
        %9122 = vmatpush1.bf16.msra.mxu0 %v9078
        %9123 = vmatprep.subr.bf16.mxu0 0
        %9124 = vmatpush1.bf16.msra.mxu0 %v9079
        %9125 = vmatprep.subr.bf16.mxu0 0
        %9126 = vmatpush1.bf16.msra.mxu0 %v9080
        %9127 = vmatprep.subr.bf16.mxu0 0
        %9128 = vmatpush1.bf16.msra.mxu0 %v9081
        %9129 = vmatprep.subr.bf16.mxu0 0
        %9130 = vmatpush1.bf16.msra.mxu0 %v9082
        %9131 = vmatprep.mubr.bf16.mxu0 %v8969
        %9132 = vmatmul.mubr.bf16.gmra.mrb[0].mxu0 %v8968
        %v9133 = vpop.f32.mrb[0].mxu0
        %v9134 = vadd.f32 %v9002, %v9133
        %v9135 = vpop.f32.mrb[0].mxu0
        %v9136 = vpop.f32.mrb[0].mxu0
        %v9137 = vpop.f32.mrb[0].mxu0
        %9138 = vdwg.mxu0
        %vm9139 = vcmask 73728
        %9140 = vst.msk [vmem:[%s1594] sm:$0x1] %vm9139, %v9134
        %s9141 = sand.u32 %s1213, 1
        %s9142 = scalar_lea.sflag [#allocation8], %s9141
        %s9143 = sand.u32 %s1213, 1
        %s9144 = scalar_lea.vmem [#allocation17], %s9143
        // Predicated region
        $region249: #{lightcnn_stam_forward.1} parent=223 // pred_check
          %p9145 = pneg %p1223
        $region250: #{lightcnn_stam_forward.1} parent=223 // pred_check_branch
          %9147 = sbr.rel (%p9145) target = $region252
        $region251: #{lightcnn_stam_forward.1} parent=223 // pred_region
          %s9149 = ssub.s32 16, 16
          %9150 = vsyncadd %s9142, %s9149
          %s9151 = smul.addr %s129, 16
          %s9152 = scalar_lea.hbm %s103, %s9151
          %s9154 = sshll.u32 %s9144, 4
          %s9155 = int_to_ptr.vmem [resolvable:$true] %s9154
          %9157 = dma.vmem_to_hbm [thread:$0]  %s9155, 16, %s9152, %s9142
        $region252: #{lightcnn_stam_forward.1} parent=223 // pred_fallthru
          _
      $region224: #{lightcnn_stam_forward.1} parent=5 // pred_fallthru
        _
      %p9158 = scmp.le.s32.totalorder 2, %s124
      // Predicated region
      $region253: #{lightcnn_stam_forward.1} parent=5 // pred_check
        %p9159 = pneg %p9158
      $region254: #{lightcnn_stam_forward.1} parent=5 // pred_check_branch
        %9161 = sbr.rel (%p9159) target = $region256
      $region255: #{lightcnn_stam_forward.1} parent=5 // pred_region
        %s9162 = ssub.s32 %s124, 2
        // Predicated region
        $region257: #{lightcnn_stam_forward.1} parent=255 // pred_check
          %p9163 = pneg %p1229
        $region258: #{lightcnn_stam_forward.1} parent=255 // pred_check_branch
          %9165 = sbr.rel (%p9163) target = $region260
        $region259: #{lightcnn_stam_forward.1} parent=255 // pred_region
          %s9166 = sand.u32 %s1214, 1
          %s9167 = scalar_lea.sflag [#allocation8], %s9166
          %s9168 = sand.u32 %s1214, 1
          %s9169 = scalar_lea.vmem [#allocation17], %s9168
          %9170 = dma.done %s9167, 16
        $region260: #{lightcnn_stam_forward.1} parent=255 // pred_fallthru
          _
      $region256: #{lightcnn_stam_forward.1} parent=5 // pred_fallthru
        _
    $region6: #{lightcnn_stam_forward.1} parent=1 // loop_footer
      %s128 = sadd.s32 1, %s124
    $region7: #{lightcnn_stam_forward.1} parent=1 // loop_footer_branch
      %123 = sbr.rel target = $region3
    $region8: #{lightcnn_stam_forward.1} parent=1 // loop_exit
      _
    %9171 = vsyncpa [#allocation7], 1
    %s9172 = scalar_lea.sflag [#allocation7], 1
    %9173 = vsyncpa %s9172, 1
    %9174 = vsyncpa [#allocation10], 1
    %9175 = vsyncpa [#allocation13], 1
    %9176 = vsyncpa [#allocation16], 1
    %9177 = vsyncpa [#allocation8], 1
    %s9178 = scalar_lea.sflag [#allocation8], 1
    %9179 = vsyncpa %s9178, 1

</llo_original>
